<compile_context>
chip_gen: v6e
topology: v6e:2x2x1
jax: 0.10.0
libtpu: 0.0.40
codegen_flags: <defaults>
</compile_context>

<pallas_src>
import jax
import jax.numpy as jnp
from jax.experimental import pallas as pl
from jax.experimental.pallas import tpu as pltpu


# ---------------------------------------------------------------------------
# Model dimensions
# ---------------------------------------------------------------------------
VISION_DIM = 2048    # resnet50 penultimate dim
TEXT_DIM = 768       # distilbert hidden_size
EMBED_DIM = 512
VOCAB = 1000

SUBLANE = 8          # f32 sublane tile (pad batch to a multiple of this)
NORM_EPS_SQ = 1e-24  # (F.normalize eps=1e-12)**2, clamp on sum-of-squares


def _l2_normalize_rows(h):
    """F.normalize(dim=-1) with eps=1e-12, via EUP rsqrt + VPU multiply."""
    ss = jnp.sum(h * h, axis=-1, keepdims=True)
    inv = jax.lax.rsqrt(jnp.maximum(ss, NORM_EPS_SQ))
    return h * inv


# ---------------------------------------------------------------------------
# Fused kernel: vision backbone matmul + vision head + text head + L2 norms
# ---------------------------------------------------------------------------
def fused_vlm_kernel(x_ref, w1_ref, w2_ref, bv_ref, cls_ref, wt_ref, bt_ref,
                     img_ref, txt_ref):
    """img = l2norm(relu((x @ W1) @ W2 + bv_eff))   (Dropout(0.1) = identity)
       txt = l2norm(relu(cls @ Wt + bt))

    Everything is VMEM-resident; each matmul runs once on the MXU with f32
    accumulation, outputs are written once (no accumulator scratch).
    """
    # ---- vision branch ----
    feat = jnp.dot(x_ref[...], w1_ref[...],
                   preferred_element_type=jnp.float32)          # (B, 2048) f32
    hv = jnp.dot(feat.astype(jnp.bfloat16), w2_ref[...],
                 preferred_element_type=jnp.float32) + bv_ref[...]
    # TODO(synk): training-mode dropout not implemented (inference identity).
    img_ref[...] = _l2_normalize_rows(jnp.maximum(hv, 0.0))

    # ---- text branch ----
    ht = jnp.dot(cls_ref[...], wt_ref[...],
                 preferred_element_type=jnp.float32) + bt_ref[...]
    txt_ref[...] = _l2_normalize_rows(jnp.maximum(ht, 0.0))


def vlm_forward_fused(x_flat, w1, w2, bv_eff, cls, wt, bt):
    """One gridless pallas_call computing both normalized feature sets."""
    B, cin = x_flat.shape
    flops = 2 * B * (cin * VISION_DIM + VISION_DIM * EMBED_DIM
                     + TEXT_DIM * EMBED_DIM)
    bytes_accessed = (x_flat.size * 2 + w1.size * 2 + w2.size * 2
                      + bv_eff.size * 4 + cls.size * 2 + wt.size * 2
                      + bt.size * 4 + 2 * B * EMBED_DIM * 4)
    vmem = lambda: pl.BlockSpec(memory_space=pltpu.MemorySpace.VMEM)
    return pl.pallas_call(
        fused_vlm_kernel,
        out_shape=(jax.ShapeDtypeStruct((B, EMBED_DIM), jnp.float32),
                   jax.ShapeDtypeStruct((B, EMBED_DIM), jnp.float32)),
        in_specs=[vmem() for _ in range(7)],
        out_specs=(vmem(), vmem()),
        compiler_params=pltpu.CompilerParams(vmem_limit_bytes=32 << 20),
        cost_estimate=pl.CostEstimate(flops=flops, transcendentals=2 * B,
                                      bytes_accessed=bytes_accessed),
    )(x_flat, w1, w2, bv_eff, cls, wt, bt)


def _pad_rows(x, multiple=SUBLANE):
    """Pad batch dim up to a full sublane tile (avoids masked stores)."""
    pad = (-x.shape[0]) % multiple
    if pad:
        x = jnp.pad(x, ((0, pad), (0, 0)))
    return x


# ---------------------------------------------------------------------------
# Parameter construction (deterministic, synthetic)
# ---------------------------------------------------------------------------
def init_params(key, image_shape=(3, 16, 16)):
    c, h, w = image_shape
    cin = c * h * w
    ks = jax.random.split(key, 4)

    def lin(k, fin, fout):
        kw, kb = jax.random.split(k)
        # bf16 weights: halve HBM streaming, MXU-native input format.
        wgt = (jax.random.normal(kw, (fin, fout), jnp.float32)
               / jnp.sqrt(fin)).astype(jnp.bfloat16)
        bias = jax.random.normal(kb, (1, fout), jnp.float32) * 0.01
        return wgt, bias

    p = {}
    # TODO(synk): ResNet50 backbone replaced by one deterministic linear
    # feature extractor producing 2048-dim vision features.
    p["vis_feat_w"], p["vis_feat_b"] = lin(ks[0], cin, VISION_DIM)
    # TODO(synk): DistilBERT transformer replaced by a deterministic token
    # embedding table + masked mean pooling as the CLS feature.
    p["txt_embed"] = jax.random.normal(ks[1], (VOCAB, TEXT_DIM), jnp.float32) * 0.02
    p["vis_proj_w"], p["vis_proj_b"] = lin(ks[2], VISION_DIM, EMBED_DIM)
    p["txt_proj_w"], p["txt_proj_b"] = lin(ks[3], TEXT_DIM, EMBED_DIM)
    # Fold the backbone bias through the projection once, in f32:
    #   b_eff = b1 @ W2 + b2   (kernel then only needs one vision bias)
    p["vis_proj_b_eff"] = (
        jnp.dot(p["vis_feat_b"], p["vis_proj_w"].astype(jnp.float32))
        + p["vis_proj_b"])
    p["temperature"] = jnp.log(1.0 / 0.07)   # defined by the module; unused here
    return p


# ---------------------------------------------------------------------------
# Forward pass (mirrors VisionLanguageModel.forward)
# ---------------------------------------------------------------------------
def forward(params, images, input_ids, attention_mask):
    B = images.shape[0]

    # encode_image input: NCHW -> flat (B, C*H*W)
    x_flat = images.reshape(B, -1)

    # encode_text stand-in: embedding lookup + masked mean pool as CLS feature.
    emb = jnp.take(params["txt_embed"], input_ids, axis=0)          # (B, S, 768)
    mask = attention_mask.astype(jnp.float32)[..., None]            # (B, S, 1)
    cls = jnp.sum(emb * mask, axis=1) / jnp.maximum(jnp.sum(mask, axis=1), 1e-9)

    # Pad batch to a full sublane tile and cast activations to bf16 (MXU
    # input format, half the DMA bytes); slice back after the kernel.
    x_pad = _pad_rows(x_flat).astype(jnp.bfloat16)
    cls_pad = _pad_rows(cls).astype(jnp.bfloat16)

    img_f, txt_f = vlm_forward_fused(
        x_pad,
        params["vis_feat_w"], params["vis_proj_w"], params["vis_proj_b_eff"],
        cls_pad,
        params["txt_proj_w"], params["txt_proj_b"])
    return img_f[:B], txt_f[:B]


# ---------------------------------------------------------------------------
if __name__ == "__main__":
    key = jax.random.PRNGKey(0)
    k_param, k_img, k_ids = jax.random.split(key, 3)

    B, C, H, W, S = 2, 3, 16, 16, 8
    params = init_params(k_param, image_shape=(C, H, W))

    images = jax.random.normal(k_img, (B, C, H, W), jnp.float32)     # NCHW
    input_ids = jax.random.randint(k_ids, (B, S), 0, VOCAB, jnp.int32)
    attention_mask = jnp.ones((B, S), jnp.int32).at[:, S - 2:].set(0)

    img_f, txt_f = jax.jit(forward)(params, images, input_ids, attention_mask)
    img_f = jax.block_until_ready(img_f)
    txt_f = jax.block_until_ready(txt_f)

    assert img_f.shape == (B, EMBED_DIM) and txt_f.shape == (B, EMBED_DIM)
    assert bool(jnp.all(jnp.isfinite(img_f))) and bool(jnp.all(jnp.isfinite(txt_f)))
    # normalized outputs -> unit L2 norm rows
    assert bool(jnp.allclose(jnp.linalg.norm(img_f, axis=-1), 1.0, atol=1e-4))
    assert bool(jnp.allclose(jnp.linalg.norm(txt_f, axis=-1), 1.0, atol=1e-4))

    print("KERNEL_OK")
</pallas_src>

<mosaic_0001>
module attributes {stable_mosaic.version = 11 : i64} {
  func.func @fused_vlm_kernel(%arg0: memref<8x768xbf16, #tpu.memory_space<vmem>>, %arg1: memref<768x2048xbf16, #tpu.memory_space<vmem>>, %arg2: memref<2048x512xbf16, #tpu.memory_space<vmem>>, %arg3: memref<1x512xf32, #tpu.memory_space<vmem>>, %arg4: memref<8x768xbf16, #tpu.memory_space<vmem>>, %arg5: memref<768x512xbf16, #tpu.memory_space<vmem>>, %arg6: memref<1x512xf32, #tpu.memory_space<vmem>>, %arg7: memref<8x512xf32, #tpu.memory_space<vmem>>, %arg8: memref<8x512xf32, #tpu.memory_space<vmem>>) attributes {dimension_semantics = [], scalar_prefetch = 0 : i64, scratch_operands = 0 : i64, tpu.core_type = #tpu.core_type<tc>} {
    %c0 = arith.constant 0 : index
    %c0_0 = arith.constant 0 : index
    %0 = vector.load %arg0[%c0, %c0_0] : memref<8x768xbf16, #tpu.memory_space<vmem>>, vector<8x768xbf16>
    %c0_1 = arith.constant 0 : index
    %c0_2 = arith.constant 0 : index
    %1 = vector.load %arg1[%c0_1, %c0_2] : memref<768x2048xbf16, #tpu.memory_space<vmem>>, vector<768x2048xbf16>
    %cst = arith.constant dense<0.000000e+00> : vector<8x2048xf32>
    %2 = tpu.matmul %0, %1, %cst {dimension_numbers = #tpu.dot_dimension_numbers<[1], [0], [0], [1], [0, 0, 1, 1], [], []>} : vector<8x768xbf16>, vector<768x2048xbf16>, vector<8x2048xf32> -> vector<8x2048xf32>
    %3 = arith.truncf %2 : vector<8x2048xf32> to vector<8x2048xbf16>
    %c0_3 = arith.constant 0 : index
    %c0_4 = arith.constant 0 : index
    %4 = vector.load %arg2[%c0_3, %c0_4] : memref<2048x512xbf16, #tpu.memory_space<vmem>>, vector<2048x512xbf16>
    %cst_5 = arith.constant dense<0.000000e+00> : vector<8x512xf32>
    %5 = tpu.matmul %3, %4, %cst_5 {dimension_numbers = #tpu.dot_dimension_numbers<[1], [0], [0], [1], [0, 0, 1, 1], [], []>} : vector<8x2048xbf16>, vector<2048x512xbf16>, vector<8x512xf32> -> vector<8x512xf32>
    %c0_6 = arith.constant 0 : index
    %c0_7 = arith.constant 0 : index
    %6 = vector.load %arg3[%c0_6, %c0_7] : memref<1x512xf32, #tpu.memory_space<vmem>>, vector<1x512xf32>
    %7 = vector.broadcast %6 : vector<1x512xf32> to vector<8x512xf32>
    %8 = arith.addf %5, %7 : vector<8x512xf32>
    %cst_8 = arith.constant 0.000000e+00 : f32
    %9 = vector.broadcast %cst_8 : f32 to vector<8x512xf32>
    %10 = arith.maximumf %8, %9 : vector<8x512xf32>
    %11 = arith.mulf %10, %10 : vector<8x512xf32>
    %cst_9 = arith.constant dense<0.000000e+00> : vector<8xf32>
    %12 = vector.multi_reduction <add>, %11, %cst_9 [1] : vector<8x512xf32> to vector<8xf32>
    %13 = vector.shape_cast %12 : vector<8xf32> to vector<8x1xf32>
    %cst_10 = arith.constant 1.000000e-24 : f32
    %14 = vector.broadcast %cst_10 : f32 to vector<8x1xf32>
    %15 = arith.maximumf %13, %14 : vector<8x1xf32>
    %16 = math.rsqrt %15 : vector<8x1xf32>
    %17 = vector.broadcast %16 : vector<8x1xf32> to vector<8x512xf32>
    %18 = arith.mulf %10, %17 : vector<8x512xf32>
    %c0_11 = arith.constant 0 : index
    %c0_12 = arith.constant 0 : index
    %19 = vector.load %arg7[%c0_11, %c0_12] : memref<8x512xf32, #tpu.memory_space<vmem>>, vector<8x512xf32>
    tpu.vector_store %arg7[%c0_11, %c0_12], %18 {strides = array<i32>} : memref<8x512xf32, #tpu.memory_space<vmem>>, vector<8x512xf32>,
    %c0_13 = arith.constant 0 : index
    %c0_14 = arith.constant 0 : index
    %20 = vector.load %arg4[%c0_13, %c0_14] : memref<8x768xbf16, #tpu.memory_space<vmem>>, vector<8x768xbf16>
    %c0_15 = arith.constant 0 : index
    %c0_16 = arith.constant 0 : index
    %21 = vector.load %arg5[%c0_15, %c0_16] : memref<768x512xbf16, #tpu.memory_space<vmem>>, vector<768x512xbf16>
    %cst_17 = arith.constant dense<0.000000e+00> : vector<8x512xf32>
    %22 = tpu.matmul %20, %21, %cst_17 {dimension_numbers = #tpu.dot_dimension_numbers<[1], [0], [0], [1], [0, 0, 1, 1], [], []>} : vector<8x768xbf16>, vector<768x512xbf16>, vector<8x512xf32> -> vector<8x512xf32>
    %c0_18 = arith.constant 0 : index
    %c0_19 = arith.constant 0 : index
    %23 = vector.load %arg6[%c0_18, %c0_19] : memref<1x512xf32, #tpu.memory_space<vmem>>, vector<1x512xf32>
    %24 = vector.broadcast %23 : vector<1x512xf32> to vector<8x512xf32>
    %25 = arith.addf %22, %24 : vector<8x512xf32>
    %cst_20 = arith.constant 0.000000e+00 : f32
    %26 = vector.broadcast %cst_20 : f32 to vector<8x512xf32>
    %27 = arith.maximumf %25, %26 : vector<8x512xf32>
    %28 = arith.mulf %27, %27 : vector<8x512xf32>
    %cst_21 = arith.constant dense<0.000000e+00> : vector<8xf32>
    %29 = vector.multi_reduction <add>, %28, %cst_21 [1] : vector<8x512xf32> to vector<8xf32>
    %30 = vector.shape_cast %29 : vector<8xf32> to vector<8x1xf32>
    %cst_22 = arith.constant 1.000000e-24 : f32
    %31 = vector.broadcast %cst_22 : f32 to vector<8x1xf32>
    %32 = arith.maximumf %30, %31 : vector<8x1xf32>
    %33 = math.rsqrt %32 : vector<8x1xf32>
    %34 = vector.broadcast %33 : vector<8x1xf32> to vector<8x512xf32>
    %35 = arith.mulf %27, %34 : vector<8x512xf32>
    %c0_23 = arith.constant 0 : index
    %c0_24 = arith.constant 0 : index
    %36 = vector.load %arg8[%c0_23, %c0_24] : memref<8x512xf32, #tpu.memory_space<vmem>>, vector<8x512xf32>
    tpu.vector_store %arg8[%c0_23, %c0_24], %35 {strides = array<i32>} : memref<8x512xf32, #tpu.memory_space<vmem>>, vector<8x512xf32>,
    return
  }
}

</mosaic_0001>

<llo_original>
// kernel: forward.1
$region0: #{forward.1}
  #allocation0 [shape = 'u32[]', space=smem, size = 0x4, offset = 0x4, fixed_abs, tag = 'smem constant byte address 0x4 - core index']
  #allocation1 [shape = 'u32[144,128]{1,0:T(1,128)}', space=vmem, size = 0x12000, scoped, tag = 'internal scratch']
  %s0 = inlined_call_operand.vmem [shape: bf16[8,768], index: 0, kind: input, shape index: {}]
  %s1 = inlined_call_operand.hbm [shape: bf16[768,2048], index: 1, kind: input, shape index: {}]
  %s2 = inlined_call_operand.hbm [shape: bf16[2048,512], index: 2, kind: input, shape index: {}]
  %s3 = inlined_call_operand.hbm [shape: f32[1,512], index: 3, kind: input, shape index: {}]
  %s4 = inlined_call_operand.vmem [shape: bf16[8,768], index: 4, kind: input, shape index: {}]
  %s5 = inlined_call_operand.hbm [shape: bf16[768,512], index: 5, kind: input, shape index: {}]
  %s6 = inlined_call_operand.hbm [shape: f32[1,512], index: 6, kind: input, shape index: {}]
  %s7 = inlined_call_operand.vmem [shape: f32[8,512], index: 7, kind: output, shape index: {0}]
  %s8 = inlined_call_operand.vmem [shape: f32[8,512], index: 8, kind: output, shape index: {1}]
  %9 = xla_tuple %s7, %s8
  %s10 = sld [smem:[#allocation0]]
  $region66: #{forward.1} parent=0
    _
  %s12 = ssub.s32 1, %s10
  %s13 = scalar_select 0, %s12, %s10
  $region1: #{forward.1} parent=0
    #allocation2 [shape = 'u8[3145728]{0}', space=vmem, size = 0x300000, scoped, tag = 'input window, operand 1, single buffered']
    #allocation3 [shape = 's32[1]{0}', space=sflag, size = 0x4, scoped, tag = 'scoped memory for forward.1']
    #allocation4 [shape = 'u8[2097152]{0}', space=vmem, size = 0x200000, scoped, tag = 'input window, operand 2, single buffered']
    #allocation5 [shape = 's32[1]{0}', space=sflag, size = 0x4, scoped, tag = 'scoped memory for forward.1']
    #allocation6 [shape = 'u8[2048]{0}', space=vmem, size = 0x800, scoped, tag = 'input window, operand 3, single buffered']
    #allocation7 [shape = 'u8[786432]{0}', space=vmem, size = 0xc0000, scoped, tag = 'input window, operand 5, single buffered']
    #allocation8 [shape = 's32[1]{0}', space=sflag, size = 0x4, scoped, tag = 'scoped memory for forward.1']
    #allocation9 [shape = 'u8[2048]{0}', space=vmem, size = 0x800, scoped, tag = 'input window, operand 6, single buffered']
    %14 = vsyncpa [#allocation3], 0
    %15 = vsyncpa [#allocation5], 0
    %16 = vsyncpa [#allocation8], 0
    // Predicated region
    $region2: #{forward.1} parent=1 // pred_check
      _
    $region3: #{forward.1} parent=1 // pred_check_branch
      %18 = sbr.rel (0) target = $region5
    $region4: #{forward.1} parent=1 // pred_region
      _
    $region5: #{forward.1} parent=1 // pred_fallthru
      _
    // Predicated region
    $region6: #{forward.1} parent=1 // pred_check
      _
    $region7: #{forward.1} parent=1 // pred_check_branch
      %20 = sbr.rel (0) target = $region9
    $region8: #{forward.1} parent=1 // pred_region
      %s22 = ssub.s32 98304, 98304
      %23 = vsyncadd [#allocation3], %s22
      %s24 = sshll.u32 [#allocation2], 4
      %s25 = int_to_ptr.vmem [resolvable:$true] %s24
      %30 = dma.hbm_to_vmem [thread:$0]  %s1, 98304, %s25, [#allocation3], 1024, 1024, 64
    $region9: #{forward.1} parent=1 // pred_fallthru
      _
    // Predicated region
    $region10: #{forward.1} parent=1 // pred_check
      _
    $region11: #{forward.1} parent=1 // pred_check_branch
      %32 = sbr.rel (0) target = $region13
    $region12: #{forward.1} parent=1 // pred_region
      %s34 = ssub.s32 65536, 65536
      %35 = vsyncadd [#allocation5], %s34
      %s36 = sshll.u32 [#allocation4], 4
      %s37 = int_to_ptr.vmem [resolvable:$true] %s36
      %42 = dma.hbm_to_vmem [thread:$0]  %s2, 65536, %s37, [#allocation5], 256, 256, 16
    $region13: #{forward.1} parent=1 // pred_fallthru
      _
    // Predicated region
    $region14: #{forward.1} parent=1 // pred_check
      _
    $region15: #{forward.1} parent=1 // pred_check_branch
      %44 = sbr.rel (0) target = $region17
    $region16: #{forward.1} parent=1 // pred_region
      %s46 = ssub.s32 64, 64
      %47 = vsyncadd [#allocation5], %s46
      %s49 = sshll.u32 [#allocation6], 4
      %s50 = int_to_ptr.vmem [resolvable:$true] %s49
      %52 = dma.hbm_to_vmem [thread:$0]  %s3, 64, %s50, [#allocation5]
    $region17: #{forward.1} parent=1 // pred_fallthru
      _
    // Predicated region
    $region18: #{forward.1} parent=1 // pred_check
      _
    $region19: #{forward.1} parent=1 // pred_check_branch
      %54 = sbr.rel (0) target = $region21
    $region20: #{forward.1} parent=1 // pred_region
      _
    $region21: #{forward.1} parent=1 // pred_fallthru
      _
    // Predicated region
    $region22: #{forward.1} parent=1 // pred_check
      _
    $region23: #{forward.1} parent=1 // pred_check_branch
      %56 = sbr.rel (0) target = $region25
    $region24: #{forward.1} parent=1 // pred_region
      %s58 = ssub.s32 24576, 24576
      %59 = vsyncadd [#allocation8], %s58
      %s60 = sshll.u32 [#allocation7], 4
      %s61 = int_to_ptr.vmem [resolvable:$true] %s60
      %66 = dma.hbm_to_vmem [thread:$0]  %s5, 24576, %s61, [#allocation8], 256, 256, 16
    $region25: #{forward.1} parent=1 // pred_fallthru
      _
    // Predicated region
    $region26: #{forward.1} parent=1 // pred_check
      _
    $region27: #{forward.1} parent=1 // pred_check_branch
      %68 = sbr.rel (0) target = $region29
    $region28: #{forward.1} parent=1 // pred_region
      %s70 = ssub.s32 64, 64
      %71 = vsyncadd [#allocation8], %s70
      %s73 = sshll.u32 [#allocation9], 4
      %s74 = int_to_ptr.vmem [resolvable:$true] %s73
      %76 = dma.hbm_to_vmem [thread:$0]  %s6, 64, %s74, [#allocation8]
    $region29: #{forward.1} parent=1 // pred_fallthru
      _
    // Predicated region
    $region30: #{forward.1} parent=1 // pred_check
      _
    $region31: #{forward.1} parent=1 // pred_check_branch
      %78 = sbr.rel (0) target = $region33
    $region32: #{forward.1} parent=1 // pred_region
      %79 = dma.done [#allocation3], 98304
    $region33: #{forward.1} parent=1 // pred_fallthru
      _
    // Predicated region
    $region34: #{forward.1} parent=1 // pred_check
      _
    $region35: #{forward.1} parent=1 // pred_check_branch
      %81 = sbr.rel (0) target = $region37
    $region36: #{forward.1} parent=1 // pred_region
      %82 = dma.done [#allocation5], 65536
    $region37: #{forward.1} parent=1 // pred_fallthru
      _
    // Predicated region
    $region38: #{forward.1} parent=1 // pred_check
      _
    $region39: #{forward.1} parent=1 // pred_check_branch
      %84 = sbr.rel (0) target = $region41
    $region40: #{forward.1} parent=1 // pred_region
      %85 = dma.done [#allocation5], 64
    $region41: #{forward.1} parent=1 // pred_fallthru
      _
    // Predicated region
    $region42: #{forward.1} parent=1 // pred_check
      _
    $region43: #{forward.1} parent=1 // pred_check_branch
      %87 = sbr.rel (0) target = $region45
    $region44: #{forward.1} parent=1 // pred_region
      %88 = dma.done [#allocation8], 24576
    $region45: #{forward.1} parent=1 // pred_fallthru
      _
    // Predicated region
    $region46: #{forward.1} parent=1 // pred_check
      _
    $region47: #{forward.1} parent=1 // pred_check_branch
      %90 = sbr.rel (0) target = $region49
    $region48: #{forward.1} parent=1 // pred_region
      %91 = dma.done [#allocation8], 64
    $region49: #{forward.1} parent=1 // pred_fallthru
      _
    %v92 = vld [vmem:[%s0] sm:$0xff]
    %v93 = vld [vmem:[%s0 + $0x8] sm:$0xff]
    %v94 = vld [vmem:[%s0 + $0x10] sm:$0xff]
    %v95 = vld [vmem:[#allocation2] sm:$0xff]
    %v96 = vld [vmem:[#allocation2 + $0x8] sm:$0xff]
    %v97 = vld [vmem:[#allocation2 + $0x10] sm:$0xff]
    %v98 = vld [vmem:[#allocation2 + $0x18] sm:$0xff]
    %v99 = vld [vmem:[#allocation2 + $0x20] sm:$0xff]
    %v100 = vld [vmem:[#allocation2 + $0x28] sm:$0xff]
    %v101 = vld [vmem:[#allocation2 + $0x30] sm:$0xff]
    %v102 = vld [vmem:[#allocation2 + $0x38] sm:$0xff]
    %v103 = vld [vmem:[#allocation2 + $0x40] sm:$0xff]
    %v104 = vld [vmem:[#allocation2 + $0x48] sm:$0xff]
    %v105 = vld [vmem:[#allocation2 + $0x50] sm:$0xff]
    %v106 = vld [vmem:[#allocation2 + $0x58] sm:$0xff]
    %v107 = vld [vmem:[#allocation2 + $0x60] sm:$0xff]
    %v108 = vld [vmem:[#allocation2 + $0x68] sm:$0xff]
    %v109 = vld [vmem:[#allocation2 + $0x70] sm:$0xff]
    %v110 = vld [vmem:[#allocation2 + $0x78] sm:$0xff]
    %v111 = vld [vmem:[#allocation2 + $0x80] sm:$0xff]
    %v112 = vld [vmem:[#allocation2 + $0x88] sm:$0xff]
    %v113 = vld [vmem:[#allocation2 + $0x90] sm:$0xff]
    %v114 = vld [vmem:[#allocation2 + $0x98] sm:$0xff]
    %v115 = vld [vmem:[#allocation2 + $0xa0] sm:$0xff]
    %v116 = vld [vmem:[#allocation2 + $0xa8] sm:$0xff]
    %v117 = vld [vmem:[#allocation2 + $0xb0] sm:$0xff]
    %v118 = vld [vmem:[#allocation2 + $0xb8] sm:$0xff]
    %v119 = vld [vmem:[#allocation2 + $0xc0] sm:$0xff]
    %v120 = vld [vmem:[#allocation2 + $0xc8] sm:$0xff]
    %v121 = vld [vmem:[#allocation2 + $0xd0] sm:$0xff]
    %v122 = vld [vmem:[#allocation2 + $0xd8] sm:$0xff]
    %v123 = vld [vmem:[#allocation2 + $0xe0] sm:$0xff]
    %v124 = vld [vmem:[#allocation2 + $0xe8] sm:$0xff]
    %v125 = vld [vmem:[#allocation2 + $0xf0] sm:$0xff]
    %v126 = vld [vmem:[#allocation2 + $0xf8] sm:$0xff]
    %v127 = vld [vmem:[#allocation2 + $0x100] sm:$0xff]
    %v128 = vld [vmem:[#allocation2 + $0x108] sm:$0xff]
    %v129 = vld [vmem:[#allocation2 + $0x110] sm:$0xff]
    %v130 = vld [vmem:[#allocation2 + $0x118] sm:$0xff]
    %v131 = vld [vmem:[#allocation2 + $0x120] sm:$0xff]
    %v132 = vld [vmem:[#allocation2 + $0x128] sm:$0xff]
    %v133 = vld [vmem:[#allocation2 + $0x130] sm:$0xff]
    %v134 = vld [vmem:[#allocation2 + $0x138] sm:$0xff]
    %v135 = vld [vmem:[#allocation2 + $0x140] sm:$0xff]
    %v136 = vld [vmem:[#allocation2 + $0x148] sm:$0xff]
    %v137 = vld [vmem:[#allocation2 + $0x150] sm:$0xff]
    %v138 = vld [vmem:[#allocation2 + $0x158] sm:$0xff]
    %v139 = vld [vmem:[#allocation2 + $0x160] sm:$0xff]
    %v140 = vld [vmem:[#allocation2 + $0x168] sm:$0xff]
    %v141 = vld [vmem:[#allocation2 + $0x170] sm:$0xff]
    %v142 = vld [vmem:[#allocation2 + $0x178] sm:$0xff]
    %v143 = vld [vmem:[#allocation2 + $0x180] sm:$0xff]
    %v144 = vld [vmem:[#allocation2 + $0x188] sm:$0xff]
    %v145 = vld [vmem:[#allocation2 + $0x190] sm:$0xff]
    %v146 = vld [vmem:[#allocation2 + $0x198] sm:$0xff]
    %v147 = vld [vmem:[#allocation2 + $0x1a0] sm:$0xff]
    %v148 = vld [vmem:[#allocation2 + $0x1a8] sm:$0xff]
    %v149 = vld [vmem:[#allocation2 + $0x1b0] sm:$0xff]
    %v150 = vld [vmem:[#allocation2 + $0x1b8] sm:$0xff]
    %v151 = vld [vmem:[#allocation2 + $0x1c0] sm:$0xff]
    %v152 = vld [vmem:[#allocation2 + $0x1c8] sm:$0xff]
    %v153 = vld [vmem:[#allocation2 + $0x1d0] sm:$0xff]
    %v154 = vld [vmem:[#allocation2 + $0x1d8] sm:$0xff]
    %v155 = vld [vmem:[#allocation2 + $0x1e0] sm:$0xff]
    %v156 = vld [vmem:[#allocation2 + $0x1e8] sm:$0xff]
    %v157 = vld [vmem:[#allocation2 + $0x1f0] sm:$0xff]
    %v158 = vld [vmem:[#allocation2 + $0x1f8] sm:$0xff]
    %v159 = vld [vmem:[#allocation2 + $0x200] sm:$0xff]
    %v160 = vld [vmem:[#allocation2 + $0x208] sm:$0xff]
    %v161 = vld [vmem:[#allocation2 + $0x210] sm:$0xff]
    %v162 = vld [vmem:[#allocation2 + $0x218] sm:$0xff]
    %v163 = vld [vmem:[#allocation2 + $0x220] sm:$0xff]
    %v164 = vld [vmem:[#allocation2 + $0x228] sm:$0xff]
    %v165 = vld [vmem:[#allocation2 + $0x230] sm:$0xff]
    %v166 = vld [vmem:[#allocation2 + $0x238] sm:$0xff]
    %v167 = vld [vmem:[#allocation2 + $0x240] sm:$0xff]
    %v168 = vld [vmem:[#allocation2 + $0x248] sm:$0xff]
    %v169 = vld [vmem:[#allocation2 + $0x250] sm:$0xff]
    %v170 = vld [vmem:[#allocation2 + $0x258] sm:$0xff]
    %v171 = vld [vmem:[#allocation2 + $0x260] sm:$0xff]
    %v172 = vld [vmem:[#allocation2 + $0x268] sm:$0xff]
    %v173 = vld [vmem:[#allocation2 + $0x270] sm:$0xff]
    %v174 = vld [vmem:[#allocation2 + $0x278] sm:$0xff]
    %v175 = vld [vmem:[#allocation2 + $0x280] sm:$0xff]
    %v176 = vld [vmem:[#allocation2 + $0x288] sm:$0xff]
    %v177 = vld [vmem:[#allocation2 + $0x290] sm:$0xff]
    %v178 = vld [vmem:[#allocation2 + $0x298] sm:$0xff]
    %v179 = vld [vmem:[#allocation2 + $0x2a0] sm:$0xff]
    %v180 = vld [vmem:[#allocation2 + $0x2a8] sm:$0xff]
    %v181 = vld [vmem:[#allocation2 + $0x2b0] sm:$0xff]
    %v182 = vld [vmem:[#allocation2 + $0x2b8] sm:$0xff]
    %v183 = vld [vmem:[#allocation2 + $0x2c0] sm:$0xff]
    %v184 = vld [vmem:[#allocation2 + $0x2c8] sm:$0xff]
    %v185 = vld [vmem:[#allocation2 + $0x2d0] sm:$0xff]
    %v186 = vld [vmem:[#allocation2 + $0x2d8] sm:$0xff]
    %v187 = vld [vmem:[#allocation2 + $0x2e0] sm:$0xff]
    %v188 = vld [vmem:[#allocation2 + $0x2e8] sm:$0xff]
    %v189 = vld [vmem:[#allocation2 + $0x2f0] sm:$0xff]
    %v190 = vld [vmem:[#allocation2 + $0x2f8] sm:$0xff]
    %v191 = vld [vmem:[#allocation2 + $0x300] sm:$0xff]
    %v192 = vld [vmem:[#allocation2 + $0x308] sm:$0xff]
    %v193 = vld [vmem:[#allocation2 + $0x310] sm:$0xff]
    %v194 = vld [vmem:[#allocation2 + $0x318] sm:$0xff]
    %v195 = vld [vmem:[#allocation2 + $0x320] sm:$0xff]
    %v196 = vld [vmem:[#allocation2 + $0x328] sm:$0xff]
    %v197 = vld [vmem:[#allocation2 + $0x330] sm:$0xff]
    %v198 = vld [vmem:[#allocation2 + $0x338] sm:$0xff]
    %v199 = vld [vmem:[#allocation2 + $0x340] sm:$0xff]
    %v200 = vld [vmem:[#allocation2 + $0x348] sm:$0xff]
    %v201 = vld [vmem:[#allocation2 + $0x350] sm:$0xff]
    %v202 = vld [vmem:[#allocation2 + $0x358] sm:$0xff]
    %v203 = vld [vmem:[#allocation2 + $0x360] sm:$0xff]
    %v204 = vld [vmem:[#allocation2 + $0x368] sm:$0xff]
    %v205 = vld [vmem:[#allocation2 + $0x370] sm:$0xff]
    %v206 = vld [vmem:[#allocation2 + $0x378] sm:$0xff]
    %v207 = vld [vmem:[#allocation2 + $0x380] sm:$0xff]
    %v208 = vld [vmem:[#allocation2 + $0x388] sm:$0xff]
    %v209 = vld [vmem:[#allocation2 + $0x390] sm:$0xff]
    %v210 = vld [vmem:[#allocation2 + $0x398] sm:$0xff]
    %v211 = vld [vmem:[#allocation2 + $0x3a0] sm:$0xff]
    %v212 = vld [vmem:[#allocation2 + $0x3a8] sm:$0xff]
    %v213 = vld [vmem:[#allocation2 + $0x3b0] sm:$0xff]
    %v214 = vld [vmem:[#allocation2 + $0x3b8] sm:$0xff]
    %v215 = vld [vmem:[#allocation2 + $0x3c0] sm:$0xff]
    %v216 = vld [vmem:[#allocation2 + $0x3c8] sm:$0xff]
    %v217 = vld [vmem:[#allocation2 + $0x3d0] sm:$0xff]
    %v218 = vld [vmem:[#allocation2 + $0x3d8] sm:$0xff]
    %v219 = vld [vmem:[#allocation2 + $0x3e0] sm:$0xff]
    %v220 = vld [vmem:[#allocation2 + $0x3e8] sm:$0xff]
    %v221 = vld [vmem:[#allocation2 + $0x3f0] sm:$0xff]
    %v222 = vld [vmem:[#allocation2 + $0x3f8] sm:$0xff]
    %v223 = vld [vmem:[#allocation2 + $0x400] sm:$0xff]
    %v224 = vld [vmem:[#allocation2 + $0x408] sm:$0xff]
    %v225 = vld [vmem:[#allocation2 + $0x410] sm:$0xff]
    %v226 = vld [vmem:[#allocation2 + $0x418] sm:$0xff]
    %v227 = vld [vmem:[#allocation2 + $0x420] sm:$0xff]
    %v228 = vld [vmem:[#allocation2 + $0x428] sm:$0xff]
    %v229 = vld [vmem:[#allocation2 + $0x430] sm:$0xff]
    %v230 = vld [vmem:[#allocation2 + $0x438] sm:$0xff]
    %v231 = vld [vmem:[#allocation2 + $0x440] sm:$0xff]
    %v232 = vld [vmem:[#allocation2 + $0x448] sm:$0xff]
    %v233 = vld [vmem:[#allocation2 + $0x450] sm:$0xff]
    %v234 = vld [vmem:[#allocation2 + $0x458] sm:$0xff]
    %v235 = vld [vmem:[#allocation2 + $0x460] sm:$0xff]
    %v236 = vld [vmem:[#allocation2 + $0x468] sm:$0xff]
    %v237 = vld [vmem:[#allocation2 + $0x470] sm:$0xff]
    %v238 = vld [vmem:[#allocation2 + $0x478] sm:$0xff]
    %v239 = vld [vmem:[#allocation2 + $0x480] sm:$0xff]
    %v240 = vld [vmem:[#allocation2 + $0x488] sm:$0xff]
    %v241 = vld [vmem:[#allocation2 + $0x490] sm:$0xff]
    %v242 = vld [vmem:[#allocation2 + $0x498] sm:$0xff]
    %v243 = vld [vmem:[#allocation2 + $0x4a0] sm:$0xff]
    %v244 = vld [vmem:[#allocation2 + $0x4a8] sm:$0xff]
    %v245 = vld [vmem:[#allocation2 + $0x4b0] sm:$0xff]
    %v246 = vld [vmem:[#allocation2 + $0x4b8] sm:$0xff]
    %v247 = vld [vmem:[#allocation2 + $0x4c0] sm:$0xff]
    %v248 = vld [vmem:[#allocation2 + $0x4c8] sm:$0xff]
    %v249 = vld [vmem:[#allocation2 + $0x4d0] sm:$0xff]
    %v250 = vld [vmem:[#allocation2 + $0x4d8] sm:$0xff]
    %v251 = vld [vmem:[#allocation2 + $0x4e0] sm:$0xff]
    %v252 = vld [vmem:[#allocation2 + $0x4e8] sm:$0xff]
    %v253 = vld [vmem:[#allocation2 + $0x4f0] sm:$0xff]
    %v254 = vld [vmem:[#allocation2 + $0x4f8] sm:$0xff]
    %v255 = vld [vmem:[#allocation2 + $0x500] sm:$0xff]
    %v256 = vld [vmem:[#allocation2 + $0x508] sm:$0xff]
    %v257 = vld [vmem:[#allocation2 + $0x510] sm:$0xff]
    %v258 = vld [vmem:[#allocation2 + $0x518] sm:$0xff]
    %v259 = vld [vmem:[#allocation2 + $0x520] sm:$0xff]
    %v260 = vld [vmem:[#allocation2 + $0x528] sm:$0xff]
    %v261 = vld [vmem:[#allocation2 + $0x530] sm:$0xff]
    %v262 = vld [vmem:[#allocation2 + $0x538] sm:$0xff]
    %v263 = vld [vmem:[#allocation2 + $0x540] sm:$0xff]
    %v264 = vld [vmem:[#allocation2 + $0x548] sm:$0xff]
    %v265 = vld [vmem:[#allocation2 + $0x550] sm:$0xff]
    %v266 = vld [vmem:[#allocation2 + $0x558] sm:$0xff]
    %v267 = vld [vmem:[#allocation2 + $0x560] sm:$0xff]
    %v268 = vld [vmem:[#allocation2 + $0x568] sm:$0xff]
    %v269 = vld [vmem:[#allocation2 + $0x570] sm:$0xff]
    %v270 = vld [vmem:[#allocation2 + $0x578] sm:$0xff]
    %v271 = vld [vmem:[#allocation2 + $0x580] sm:$0xff]
    %v272 = vld [vmem:[#allocation2 + $0x588] sm:$0xff]
    %v273 = vld [vmem:[#allocation2 + $0x590] sm:$0xff]
    %v274 = vld [vmem:[#allocation2 + $0x598] sm:$0xff]
    %v275 = vld [vmem:[#allocation2 + $0x5a0] sm:$0xff]
    %v276 = vld [vmem:[#allocation2 + $0x5a8] sm:$0xff]
    %v277 = vld [vmem:[#allocation2 + $0x5b0] sm:$0xff]
    %v278 = vld [vmem:[#allocation2 + $0x5b8] sm:$0xff]
    %v279 = vld [vmem:[#allocation2 + $0x5c0] sm:$0xff]
    %v280 = vld [vmem:[#allocation2 + $0x5c8] sm:$0xff]
    %v281 = vld [vmem:[#allocation2 + $0x5d0] sm:$0xff]
    %v282 = vld [vmem:[#allocation2 + $0x5d8] sm:$0xff]
    %v283 = vld [vmem:[#allocation2 + $0x5e0] sm:$0xff]
    %v284 = vld [vmem:[#allocation2 + $0x5e8] sm:$0xff]
    %v285 = vld [vmem:[#allocation2 + $0x5f0] sm:$0xff]
    %v286 = vld [vmem:[#allocation2 + $0x5f8] sm:$0xff]
    %v287 = vld [vmem:[#allocation2 + $0x600] sm:$0xff]
    %v288 = vld [vmem:[#allocation2 + $0x608] sm:$0xff]
    %v289 = vld [vmem:[#allocation2 + $0x610] sm:$0xff]
    %v290 = vld [vmem:[#allocation2 + $0x618] sm:$0xff]
    %v291 = vld [vmem:[#allocation2 + $0x620] sm:$0xff]
    %v292 = vld [vmem:[#allocation2 + $0x628] sm:$0xff]
    %v293 = vld [vmem:[#allocation2 + $0x630] sm:$0xff]
    %v294 = vld [vmem:[#allocation2 + $0x638] sm:$0xff]
    %v295 = vld [vmem:[#allocation2 + $0x640] sm:$0xff]
    %v296 = vld [vmem:[#allocation2 + $0x648] sm:$0xff]
    %v297 = vld [vmem:[#allocation2 + $0x650] sm:$0xff]
    %v298 = vld [vmem:[#allocation2 + $0x658] sm:$0xff]
    %v299 = vld [vmem:[#allocation2 + $0x660] sm:$0xff]
    %v300 = vld [vmem:[#allocation2 + $0x668] sm:$0xff]
    %v301 = vld [vmem:[#allocation2 + $0x670] sm:$0xff]
    %v302 = vld [vmem:[#allocation2 + $0x678] sm:$0xff]
    %v303 = vld [vmem:[#allocation2 + $0x680] sm:$0xff]
    %v304 = vld [vmem:[#allocation2 + $0x688] sm:$0xff]
    %v305 = vld [vmem:[#allocation2 + $0x690] sm:$0xff]
    %v306 = vld [vmem:[#allocation2 + $0x698] sm:$0xff]
    %v307 = vld [vmem:[#allocation2 + $0x6a0] sm:$0xff]
    %v308 = vld [vmem:[#allocation2 + $0x6a8] sm:$0xff]
    %v309 = vld [vmem:[#allocation2 + $0x6b0] sm:$0xff]
    %v310 = vld [vmem:[#allocation2 + $0x6b8] sm:$0xff]
    %v311 = vld [vmem:[#allocation2 + $0x6c0] sm:$0xff]
    %v312 = vld [vmem:[#allocation2 + $0x6c8] sm:$0xff]
    %v313 = vld [vmem:[#allocation2 + $0x6d0] sm:$0xff]
    %v314 = vld [vmem:[#allocation2 + $0x6d8] sm:$0xff]
    %v315 = vld [vmem:[#allocation2 + $0x6e0] sm:$0xff]
    %v316 = vld [vmem:[#allocation2 + $0x6e8] sm:$0xff]
    %v317 = vld [vmem:[#allocation2 + $0x6f0] sm:$0xff]
    %v318 = vld [vmem:[#allocation2 + $0x6f8] sm:$0xff]
    %v319 = vld [vmem:[#allocation2 + $0x700] sm:$0xff]
    %v320 = vld [vmem:[#allocation2 + $0x708] sm:$0xff]
    %v321 = vld [vmem:[#allocation2 + $0x710] sm:$0xff]
    %v322 = vld [vmem:[#allocation2 + $0x718] sm:$0xff]
    %v323 = vld [vmem:[#allocation2 + $0x720] sm:$0xff]
    %v324 = vld [vmem:[#allocation2 + $0x728] sm:$0xff]
    %v325 = vld [vmem:[#allocation2 + $0x730] sm:$0xff]
    %v326 = vld [vmem:[#allocation2 + $0x738] sm:$0xff]
    %v327 = vld [vmem:[#allocation2 + $0x740] sm:$0xff]
    %v328 = vld [vmem:[#allocation2 + $0x748] sm:$0xff]
    %v329 = vld [vmem:[#allocation2 + $0x750] sm:$0xff]
    %v330 = vld [vmem:[#allocation2 + $0x758] sm:$0xff]
    %v331 = vld [vmem:[#allocation2 + $0x760] sm:$0xff]
    %v332 = vld [vmem:[#allocation2 + $0x768] sm:$0xff]
    %v333 = vld [vmem:[#allocation2 + $0x770] sm:$0xff]
    %v334 = vld [vmem:[#allocation2 + $0x778] sm:$0xff]
    %v335 = vld [vmem:[#allocation2 + $0x780] sm:$0xff]
    %v336 = vld [vmem:[#allocation2 + $0x788] sm:$0xff]
    %v337 = vld [vmem:[#allocation2 + $0x790] sm:$0xff]
    %v338 = vld [vmem:[#allocation2 + $0x798] sm:$0xff]
    %v339 = vld [vmem:[#allocation2 + $0x7a0] sm:$0xff]
    %v340 = vld [vmem:[#allocation2 + $0x7a8] sm:$0xff]
    %v341 = vld [vmem:[#allocation2 + $0x7b0] sm:$0xff]
    %v342 = vld [vmem:[#allocation2 + $0x7b8] sm:$0xff]
    %v343 = vld [vmem:[#allocation2 + $0x7c0] sm:$0xff]
    %v344 = vld [vmem:[#allocation2 + $0x7c8] sm:$0xff]
    %v345 = vld [vmem:[#allocation2 + $0x7d0] sm:$0xff]
    %v346 = vld [vmem:[#allocation2 + $0x7d8] sm:$0xff]
    %v347 = vld [vmem:[#allocation2 + $0x7e0] sm:$0xff]
    %v348 = vld [vmem:[#allocation2 + $0x7e8] sm:$0xff]
    %v349 = vld [vmem:[#allocation2 + $0x7f0] sm:$0xff]
    %v350 = vld [vmem:[#allocation2 + $0x7f8] sm:$0xff]
    %v351 = vld [vmem:[#allocation2 + $0x800] sm:$0xff]
    %v352 = vld [vmem:[#allocation2 + $0x808] sm:$0xff]
    %v353 = vld [vmem:[#allocation2 + $0x810] sm:$0xff]
    %v354 = vld [vmem:[#allocation2 + $0x818] sm:$0xff]
    %v355 = vld [vmem:[#allocation2 + $0x820] sm:$0xff]
    %v356 = vld [vmem:[#allocation2 + $0x828] sm:$0xff]
    %v357 = vld [vmem:[#allocation2 + $0x830] sm:$0xff]
    %v358 = vld [vmem:[#allocation2 + $0x838] sm:$0xff]
    %v359 = vld [vmem:[#allocation2 + $0x840] sm:$0xff]
    %v360 = vld [vmem:[#allocation2 + $0x848] sm:$0xff]
    %v361 = vld [vmem:[#allocation2 + $0x850] sm:$0xff]
    %v362 = vld [vmem:[#allocation2 + $0x858] sm:$0xff]
    %v363 = vld [vmem:[#allocation2 + $0x860] sm:$0xff]
    %v364 = vld [vmem:[#allocation2 + $0x868] sm:$0xff]
    %v365 = vld [vmem:[#allocation2 + $0x870] sm:$0xff]
    %v366 = vld [vmem:[#allocation2 + $0x878] sm:$0xff]
    %v367 = vld [vmem:[#allocation2 + $0x880] sm:$0xff]
    %v368 = vld [vmem:[#allocation2 + $0x888] sm:$0xff]
    %v369 = vld [vmem:[#allocation2 + $0x890] sm:$0xff]
    %v370 = vld [vmem:[#allocation2 + $0x898] sm:$0xff]
    %v371 = vld [vmem:[#allocation2 + $0x8a0] sm:$0xff]
    %v372 = vld [vmem:[#allocation2 + $0x8a8] sm:$0xff]
    %v373 = vld [vmem:[#allocation2 + $0x8b0] sm:$0xff]
    %v374 = vld [vmem:[#allocation2 + $0x8b8] sm:$0xff]
    %v375 = vld [vmem:[#allocation2 + $0x8c0] sm:$0xff]
    %v376 = vld [vmem:[#allocation2 + $0x8c8] sm:$0xff]
    %v377 = vld [vmem:[#allocation2 + $0x8d0] sm:$0xff]
    %v378 = vld [vmem:[#allocation2 + $0x8d8] sm:$0xff]
    %v379 = vld [vmem:[#allocation2 + $0x8e0] sm:$0xff]
    %v380 = vld [vmem:[#allocation2 + $0x8e8] sm:$0xff]
    %v381 = vld [vmem:[#allocation2 + $0x8f0] sm:$0xff]
    %v382 = vld [vmem:[#allocation2 + $0x8f8] sm:$0xff]
    %v383 = vld [vmem:[#allocation2 + $0x900] sm:$0xff]
    %v384 = vld [vmem:[#allocation2 + $0x908] sm:$0xff]
    %v385 = vld [vmem:[#allocation2 + $0x910] sm:$0xff]
    %v386 = vld [vmem:[#allocation2 + $0x918] sm:$0xff]
    %v387 = vld [vmem:[#allocation2 + $0x920] sm:$0xff]
    %v388 = vld [vmem:[#allocation2 + $0x928] sm:$0xff]
    %v389 = vld [vmem:[#allocation2 + $0x930] sm:$0xff]
    %v390 = vld [vmem:[#allocation2 + $0x938] sm:$0xff]
    %v391 = vld [vmem:[#allocation2 + $0x940] sm:$0xff]
    %v392 = vld [vmem:[#allocation2 + $0x948] sm:$0xff]
    %v393 = vld [vmem:[#allocation2 + $0x950] sm:$0xff]
    %v394 = vld [vmem:[#allocation2 + $0x958] sm:$0xff]
    %v395 = vld [vmem:[#allocation2 + $0x960] sm:$0xff]
    %v396 = vld [vmem:[#allocation2 + $0x968] sm:$0xff]
    %v397 = vld [vmem:[#allocation2 + $0x970] sm:$0xff]
    %v398 = vld [vmem:[#allocation2 + $0x978] sm:$0xff]
    %v399 = vld [vmem:[#allocation2 + $0x980] sm:$0xff]
    %v400 = vld [vmem:[#allocation2 + $0x988] sm:$0xff]
    %v401 = vld [vmem:[#allocation2 + $0x990] sm:$0xff]
    %v402 = vld [vmem:[#allocation2 + $0x998] sm:$0xff]
    %v403 = vld [vmem:[#allocation2 + $0x9a0] sm:$0xff]
    %v404 = vld [vmem:[#allocation2 + $0x9a8] sm:$0xff]
    %v405 = vld [vmem:[#allocation2 + $0x9b0] sm:$0xff]
    %v406 = vld [vmem:[#allocation2 + $0x9b8] sm:$0xff]
    %v407 = vld [vmem:[#allocation2 + $0x9c0] sm:$0xff]
    %v408 = vld [vmem:[#allocation2 + $0x9c8] sm:$0xff]
    %v409 = vld [vmem:[#allocation2 + $0x9d0] sm:$0xff]
    %v410 = vld [vmem:[#allocation2 + $0x9d8] sm:$0xff]
    %v411 = vld [vmem:[#allocation2 + $0x9e0] sm:$0xff]
    %v412 = vld [vmem:[#allocation2 + $0x9e8] sm:$0xff]
    %v413 = vld [vmem:[#allocation2 + $0x9f0] sm:$0xff]
    %v414 = vld [vmem:[#allocation2 + $0x9f8] sm:$0xff]
    %v415 = vld [vmem:[#allocation2 + $0xa00] sm:$0xff]
    %v416 = vld [vmem:[#allocation2 + $0xa08] sm:$0xff]
    %v417 = vld [vmem:[#allocation2 + $0xa10] sm:$0xff]
    %v418 = vld [vmem:[#allocation2 + $0xa18] sm:$0xff]
    %v419 = vld [vmem:[#allocation2 + $0xa20] sm:$0xff]
    %v420 = vld [vmem:[#allocation2 + $0xa28] sm:$0xff]
    %v421 = vld [vmem:[#allocation2 + $0xa30] sm:$0xff]
    %v422 = vld [vmem:[#allocation2 + $0xa38] sm:$0xff]
    %v423 = vld [vmem:[#allocation2 + $0xa40] sm:$0xff]
    %v424 = vld [vmem:[#allocation2 + $0xa48] sm:$0xff]
    %v425 = vld [vmem:[#allocation2 + $0xa50] sm:$0xff]
    %v426 = vld [vmem:[#allocation2 + $0xa58] sm:$0xff]
    %v427 = vld [vmem:[#allocation2 + $0xa60] sm:$0xff]
    %v428 = vld [vmem:[#allocation2 + $0xa68] sm:$0xff]
    %v429 = vld [vmem:[#allocation2 + $0xa70] sm:$0xff]
    %v430 = vld [vmem:[#allocation2 + $0xa78] sm:$0xff]
    %v431 = vld [vmem:[#allocation2 + $0xa80] sm:$0xff]
    %v432 = vld [vmem:[#allocation2 + $0xa88] sm:$0xff]
    %v433 = vld [vmem:[#allocation2 + $0xa90] sm:$0xff]
    %v434 = vld [vmem:[#allocation2 + $0xa98] sm:$0xff]
    %v435 = vld [vmem:[#allocation2 + $0xaa0] sm:$0xff]
    %v436 = vld [vmem:[#allocation2 + $0xaa8] sm:$0xff]
    %v437 = vld [vmem:[#allocation2 + $0xab0] sm:$0xff]
    %v438 = vld [vmem:[#allocation2 + $0xab8] sm:$0xff]
    %v439 = vld [vmem:[#allocation2 + $0xac0] sm:$0xff]
    %v440 = vld [vmem:[#allocation2 + $0xac8] sm:$0xff]
    %v441 = vld [vmem:[#allocation2 + $0xad0] sm:$0xff]
    %v442 = vld [vmem:[#allocation2 + $0xad8] sm:$0xff]
    %v443 = vld [vmem:[#allocation2 + $0xae0] sm:$0xff]
    %v444 = vld [vmem:[#allocation2 + $0xae8] sm:$0xff]
    %v445 = vld [vmem:[#allocation2 + $0xaf0] sm:$0xff]
    %v446 = vld [vmem:[#allocation2 + $0xaf8] sm:$0xff]
    %v447 = vld [vmem:[#allocation2 + $0xb00] sm:$0xff]
    %v448 = vld [vmem:[#allocation2 + $0xb08] sm:$0xff]
    %v449 = vld [vmem:[#allocation2 + $0xb10] sm:$0xff]
    %v450 = vld [vmem:[#allocation2 + $0xb18] sm:$0xff]
    %v451 = vld [vmem:[#allocation2 + $0xb20] sm:$0xff]
    %v452 = vld [vmem:[#allocation2 + $0xb28] sm:$0xff]
    %v453 = vld [vmem:[#allocation2 + $0xb30] sm:$0xff]
    %v454 = vld [vmem:[#allocation2 + $0xb38] sm:$0xff]
    %v455 = vld [vmem:[#allocation2 + $0xb40] sm:$0xff]
    %v456 = vld [vmem:[#allocation2 + $0xb48] sm:$0xff]
    %v457 = vld [vmem:[#allocation2 + $0xb50] sm:$0xff]
    %v458 = vld [vmem:[#allocation2 + $0xb58] sm:$0xff]
    %v459 = vld [vmem:[#allocation2 + $0xb60] sm:$0xff]
    %v460 = vld [vmem:[#allocation2 + $0xb68] sm:$0xff]
    %v461 = vld [vmem:[#allocation2 + $0xb70] sm:$0xff]
    %v462 = vld [vmem:[#allocation2 + $0xb78] sm:$0xff]
    %v463 = vld [vmem:[#allocation2 + $0xb80] sm:$0xff]
    %v464 = vld [vmem:[#allocation2 + $0xb88] sm:$0xff]
    %v465 = vld [vmem:[#allocation2 + $0xb90] sm:$0xff]
    %v466 = vld [vmem:[#allocation2 + $0xb98] sm:$0xff]
    %v467 = vld [vmem:[#allocation2 + $0xba0] sm:$0xff]
    %v468 = vld [vmem:[#allocation2 + $0xba8] sm:$0xff]
    %v469 = vld [vmem:[#allocation2 + $0xbb0] sm:$0xff]
    %v470 = vld [vmem:[#allocation2 + $0xbb8] sm:$0xff]
    %v471 = vld [vmem:[#allocation2 + $0xbc0] sm:$0xff]
    %v472 = vld [vmem:[#allocation2 + $0xbc8] sm:$0xff]
    %v473 = vld [vmem:[#allocation2 + $0xbd0] sm:$0xff]
    %v474 = vld [vmem:[#allocation2 + $0xbd8] sm:$0xff]
    %v475 = vld [vmem:[#allocation2 + $0xbe0] sm:$0xff]
    %v476 = vld [vmem:[#allocation2 + $0xbe8] sm:$0xff]
    %v477 = vld [vmem:[#allocation2 + $0xbf0] sm:$0xff]
    %v478 = vld [vmem:[#allocation2 + $0xbf8] sm:$0xff]
    %v479 = vld [vmem:[#allocation2 + $0xc00] sm:$0xff]
    %v480 = vld [vmem:[#allocation2 + $0xc08] sm:$0xff]
    %v481 = vld [vmem:[#allocation2 + $0xc10] sm:$0xff]
    %v482 = vld [vmem:[#allocation2 + $0xc18] sm:$0xff]
    %v483 = vld [vmem:[#allocation2 + $0xc20] sm:$0xff]
    %v484 = vld [vmem:[#allocation2 + $0xc28] sm:$0xff]
    %v485 = vld [vmem:[#allocation2 + $0xc30] sm:$0xff]
    %v486 = vld [vmem:[#allocation2 + $0xc38] sm:$0xff]
    %v487 = vld [vmem:[#allocation2 + $0xc40] sm:$0xff]
    %v488 = vld [vmem:[#allocation2 + $0xc48] sm:$0xff]
    %v489 = vld [vmem:[#allocation2 + $0xc50] sm:$0xff]
    %v490 = vld [vmem:[#allocation2 + $0xc58] sm:$0xff]
    %v491 = vld [vmem:[#allocation2 + $0xc60] sm:$0xff]
    %v492 = vld [vmem:[#allocation2 + $0xc68] sm:$0xff]
    %v493 = vld [vmem:[#allocation2 + $0xc70] sm:$0xff]
    %v494 = vld [vmem:[#allocation2 + $0xc78] sm:$0xff]
    %v495 = vld [vmem:[#allocation2 + $0xc80] sm:$0xff]
    %v496 = vld [vmem:[#allocation2 + $0xc88] sm:$0xff]
    %v497 = vld [vmem:[#allocation2 + $0xc90] sm:$0xff]
    %v498 = vld [vmem:[#allocation2 + $0xc98] sm:$0xff]
    %v499 = vld [vmem:[#allocation2 + $0xca0] sm:$0xff]
    %v500 = vld [vmem:[#allocation2 + $0xca8] sm:$0xff]
    %v501 = vld [vmem:[#allocation2 + $0xcb0] sm:$0xff]
    %v502 = vld [vmem:[#allocation2 + $0xcb8] sm:$0xff]
    %v503 = vld [vmem:[#allocation2 + $0xcc0] sm:$0xff]
    %v504 = vld [vmem:[#allocation2 + $0xcc8] sm:$0xff]
    %v505 = vld [vmem:[#allocation2 + $0xcd0] sm:$0xff]
    %v506 = vld [vmem:[#allocation2 + $0xcd8] sm:$0xff]
    %v507 = vld [vmem:[#allocation2 + $0xce0] sm:$0xff]
    %v508 = vld [vmem:[#allocation2 + $0xce8] sm:$0xff]
    %v509 = vld [vmem:[#allocation2 + $0xcf0] sm:$0xff]
    %v510 = vld [vmem:[#allocation2 + $0xcf8] sm:$0xff]
    %v511 = vld [vmem:[#allocation2 + $0xd00] sm:$0xff]
    %v512 = vld [vmem:[#allocation2 + $0xd08] sm:$0xff]
    %v513 = vld [vmem:[#allocation2 + $0xd10] sm:$0xff]
    %v514 = vld [vmem:[#allocation2 + $0xd18] sm:$0xff]
    %v515 = vld [vmem:[#allocation2 + $0xd20] sm:$0xff]
    %v516 = vld [vmem:[#allocation2 + $0xd28] sm:$0xff]
    %v517 = vld [vmem:[#allocation2 + $0xd30] sm:$0xff]
    %v518 = vld [vmem:[#allocation2 + $0xd38] sm:$0xff]
    %v519 = vld [vmem:[#allocation2 + $0xd40] sm:$0xff]
    %v520 = vld [vmem:[#allocation2 + $0xd48] sm:$0xff]
    %v521 = vld [vmem:[#allocation2 + $0xd50] sm:$0xff]
    %v522 = vld [vmem:[#allocation2 + $0xd58] sm:$0xff]
    %v523 = vld [vmem:[#allocation2 + $0xd60] sm:$0xff]
    %v524 = vld [vmem:[#allocation2 + $0xd68] sm:$0xff]
    %v525 = vld [vmem:[#allocation2 + $0xd70] sm:$0xff]
    %v526 = vld [vmem:[#allocation2 + $0xd78] sm:$0xff]
    %v527 = vld [vmem:[#allocation2 + $0xd80] sm:$0xff]
    %v528 = vld [vmem:[#allocation2 + $0xd88] sm:$0xff]
    %v529 = vld [vmem:[#allocation2 + $0xd90] sm:$0xff]
    %v530 = vld [vmem:[#allocation2 + $0xd98] sm:$0xff]
    %v531 = vld [vmem:[#allocation2 + $0xda0] sm:$0xff]
    %v532 = vld [vmem:[#allocation2 + $0xda8] sm:$0xff]
    %v533 = vld [vmem:[#allocation2 + $0xdb0] sm:$0xff]
    %v534 = vld [vmem:[#allocation2 + $0xdb8] sm:$0xff]
    %v535 = vld [vmem:[#allocation2 + $0xdc0] sm:$0xff]
    %v536 = vld [vmem:[#allocation2 + $0xdc8] sm:$0xff]
    %v537 = vld [vmem:[#allocation2 + $0xdd0] sm:$0xff]
    %v538 = vld [vmem:[#allocation2 + $0xdd8] sm:$0xff]
    %v539 = vld [vmem:[#allocation2 + $0xde0] sm:$0xff]
    %v540 = vld [vmem:[#allocation2 + $0xde8] sm:$0xff]
    %v541 = vld [vmem:[#allocation2 + $0xdf0] sm:$0xff]
    %v542 = vld [vmem:[#allocation2 + $0xdf8] sm:$0xff]
    %v543 = vld [vmem:[#allocation2 + $0xe00] sm:$0xff]
    %v544 = vld [vmem:[#allocation2 + $0xe08] sm:$0xff]
    %v545 = vld [vmem:[#allocation2 + $0xe10] sm:$0xff]
    %v546 = vld [vmem:[#allocation2 + $0xe18] sm:$0xff]
    %v547 = vld [vmem:[#allocation2 + $0xe20] sm:$0xff]
    %v548 = vld [vmem:[#allocation2 + $0xe28] sm:$0xff]
    %v549 = vld [vmem:[#allocation2 + $0xe30] sm:$0xff]
    %v550 = vld [vmem:[#allocation2 + $0xe38] sm:$0xff]
    %v551 = vld [vmem:[#allocation2 + $0xe40] sm:$0xff]
    %v552 = vld [vmem:[#allocation2 + $0xe48] sm:$0xff]
    %v553 = vld [vmem:[#allocation2 + $0xe50] sm:$0xff]
    %v554 = vld [vmem:[#allocation2 + $0xe58] sm:$0xff]
    %v555 = vld [vmem:[#allocation2 + $0xe60] sm:$0xff]
    %v556 = vld [vmem:[#allocation2 + $0xe68] sm:$0xff]
    %v557 = vld [vmem:[#allocation2 + $0xe70] sm:$0xff]
    %v558 = vld [vmem:[#allocation2 + $0xe78] sm:$0xff]
    %v559 = vld [vmem:[#allocation2 + $0xe80] sm:$0xff]
    %v560 = vld [vmem:[#allocation2 + $0xe88] sm:$0xff]
    %v561 = vld [vmem:[#allocation2 + $0xe90] sm:$0xff]
    %v562 = vld [vmem:[#allocation2 + $0xe98] sm:$0xff]
    %v563 = vld [vmem:[#allocation2 + $0xea0] sm:$0xff]
    %v564 = vld [vmem:[#allocation2 + $0xea8] sm:$0xff]
    %v565 = vld [vmem:[#allocation2 + $0xeb0] sm:$0xff]
    %v566 = vld [vmem:[#allocation2 + $0xeb8] sm:$0xff]
    %v567 = vld [vmem:[#allocation2 + $0xec0] sm:$0xff]
    %v568 = vld [vmem:[#allocation2 + $0xec8] sm:$0xff]
    %v569 = vld [vmem:[#allocation2 + $0xed0] sm:$0xff]
    %v570 = vld [vmem:[#allocation2 + $0xed8] sm:$0xff]
    %v571 = vld [vmem:[#allocation2 + $0xee0] sm:$0xff]
    %v572 = vld [vmem:[#allocation2 + $0xee8] sm:$0xff]
    %v573 = vld [vmem:[#allocation2 + $0xef0] sm:$0xff]
    %v574 = vld [vmem:[#allocation2 + $0xef8] sm:$0xff]
    %v575 = vld [vmem:[#allocation2 + $0xf00] sm:$0xff]
    %v576 = vld [vmem:[#allocation2 + $0xf08] sm:$0xff]
    %v577 = vld [vmem:[#allocation2 + $0xf10] sm:$0xff]
    %v578 = vld [vmem:[#allocation2 + $0xf18] sm:$0xff]
    %v579 = vld [vmem:[#allocation2 + $0xf20] sm:$0xff]
    %v580 = vld [vmem:[#allocation2 + $0xf28] sm:$0xff]
    %v581 = vld [vmem:[#allocation2 + $0xf30] sm:$0xff]
    %v582 = vld [vmem:[#allocation2 + $0xf38] sm:$0xff]
    %v583 = vld [vmem:[#allocation2 + $0xf40] sm:$0xff]
    %v584 = vld [vmem:[#allocation2 + $0xf48] sm:$0xff]
    %v585 = vld [vmem:[#allocation2 + $0xf50] sm:$0xff]
    %v586 = vld [vmem:[#allocation2 + $0xf58] sm:$0xff]
    %v587 = vld [vmem:[#allocation2 + $0xf60] sm:$0xff]
    %v588 = vld [vmem:[#allocation2 + $0xf68] sm:$0xff]
    %v589 = vld [vmem:[#allocation2 + $0xf70] sm:$0xff]
    %v590 = vld [vmem:[#allocation2 + $0xf78] sm:$0xff]
    %v591 = vld [vmem:[#allocation2 + $0xf80] sm:$0xff]
    %v592 = vld [vmem:[#allocation2 + $0xf88] sm:$0xff]
    %v593 = vld [vmem:[#allocation2 + $0xf90] sm:$0xff]
    %v594 = vld [vmem:[#allocation2 + $0xf98] sm:$0xff]
    %v595 = vld [vmem:[#allocation2 + $0xfa0] sm:$0xff]
    %v596 = vld [vmem:[#allocation2 + $0xfa8] sm:$0xff]
    %v597 = vld [vmem:[#allocation2 + $0xfb0] sm:$0xff]
    %v598 = vld [vmem:[#allocation2 + $0xfb8] sm:$0xff]
    %v599 = vld [vmem:[#allocation2 + $0xfc0] sm:$0xff]
    %v600 = vld [vmem:[#allocation2 + $0xfc8] sm:$0xff]
    %v601 = vld [vmem:[#allocation2 + $0xfd0] sm:$0xff]
    %v602 = vld [vmem:[#allocation2 + $0xfd8] sm:$0xff]
    %v603 = vld [vmem:[#allocation2 + $0xfe0] sm:$0xff]
    %v604 = vld [vmem:[#allocation2 + $0xfe8] sm:$0xff]
    %v605 = vld [vmem:[#allocation2 + $0xff0] sm:$0xff]
    %v606 = vld [vmem:[#allocation2 + $0xff8] sm:$0xff]
    %v607 = vld [vmem:[#allocation2 + $0x1000] sm:$0xff]
    %v608 = vld [vmem:[#allocation2 + $0x1008] sm:$0xff]
    %v609 = vld [vmem:[#allocation2 + $0x1010] sm:$0xff]
    %v610 = vld [vmem:[#allocation2 + $0x1018] sm:$0xff]
    %v611 = vld [vmem:[#allocation2 + $0x1020] sm:$0xff]
    %v612 = vld [vmem:[#allocation2 + $0x1028] sm:$0xff]
    %v613 = vld [vmem:[#allocation2 + $0x1030] sm:$0xff]
    %v614 = vld [vmem:[#allocation2 + $0x1038] sm:$0xff]
    %v615 = vld [vmem:[#allocation2 + $0x1040] sm:$0xff]
    %v616 = vld [vmem:[#allocation2 + $0x1048] sm:$0xff]
    %v617 = vld [vmem:[#allocation2 + $0x1050] sm:$0xff]
    %v618 = vld [vmem:[#allocation2 + $0x1058] sm:$0xff]
    %v619 = vld [vmem:[#allocation2 + $0x1060] sm:$0xff]
    %v620 = vld [vmem:[#allocation2 + $0x1068] sm:$0xff]
    %v621 = vld [vmem:[#allocation2 + $0x1070] sm:$0xff]
    %v622 = vld [vmem:[#allocation2 + $0x1078] sm:$0xff]
    %v623 = vld [vmem:[#allocation2 + $0x1080] sm:$0xff]
    %v624 = vld [vmem:[#allocation2 + $0x1088] sm:$0xff]
    %v625 = vld [vmem:[#allocation2 + $0x1090] sm:$0xff]
    %v626 = vld [vmem:[#allocation2 + $0x1098] sm:$0xff]
    %v627 = vld [vmem:[#allocation2 + $0x10a0] sm:$0xff]
    %v628 = vld [vmem:[#allocation2 + $0x10a8] sm:$0xff]
    %v629 = vld [vmem:[#allocation2 + $0x10b0] sm:$0xff]
    %v630 = vld [vmem:[#allocation2 + $0x10b8] sm:$0xff]
    %v631 = vld [vmem:[#allocation2 + $0x10c0] sm:$0xff]
    %v632 = vld [vmem:[#allocation2 + $0x10c8] sm:$0xff]
    %v633 = vld [vmem:[#allocation2 + $0x10d0] sm:$0xff]
    %v634 = vld [vmem:[#allocation2 + $0x10d8] sm:$0xff]
    %v635 = vld [vmem:[#allocation2 + $0x10e0] sm:$0xff]
    %v636 = vld [vmem:[#allocation2 + $0x10e8] sm:$0xff]
    %v637 = vld [vmem:[#allocation2 + $0x10f0] sm:$0xff]
    %v638 = vld [vmem:[#allocation2 + $0x10f8] sm:$0xff]
    %v639 = vld [vmem:[#allocation2 + $0x1100] sm:$0xff]
    %v640 = vld [vmem:[#allocation2 + $0x1108] sm:$0xff]
    %v641 = vld [vmem:[#allocation2 + $0x1110] sm:$0xff]
    %v642 = vld [vmem:[#allocation2 + $0x1118] sm:$0xff]
    %v643 = vld [vmem:[#allocation2 + $0x1120] sm:$0xff]
    %v644 = vld [vmem:[#allocation2 + $0x1128] sm:$0xff]
    %v645 = vld [vmem:[#allocation2 + $0x1130] sm:$0xff]
    %v646 = vld [vmem:[#allocation2 + $0x1138] sm:$0xff]
    %v647 = vld [vmem:[#allocation2 + $0x1140] sm:$0xff]
    %v648 = vld [vmem:[#allocation2 + $0x1148] sm:$0xff]
    %v649 = vld [vmem:[#allocation2 + $0x1150] sm:$0xff]
    %v650 = vld [vmem:[#allocation2 + $0x1158] sm:$0xff]
    %v651 = vld [vmem:[#allocation2 + $0x1160] sm:$0xff]
    %v652 = vld [vmem:[#allocation2 + $0x1168] sm:$0xff]
    %v653 = vld [vmem:[#allocation2 + $0x1170] sm:$0xff]
    %v654 = vld [vmem:[#allocation2 + $0x1178] sm:$0xff]
    %v655 = vld [vmem:[#allocation2 + $0x1180] sm:$0xff]
    %v656 = vld [vmem:[#allocation2 + $0x1188] sm:$0xff]
    %v657 = vld [vmem:[#allocation2 + $0x1190] sm:$0xff]
    %v658 = vld [vmem:[#allocation2 + $0x1198] sm:$0xff]
    %v659 = vld [vmem:[#allocation2 + $0x11a0] sm:$0xff]
    %v660 = vld [vmem:[#allocation2 + $0x11a8] sm:$0xff]
    %v661 = vld [vmem:[#allocation2 + $0x11b0] sm:$0xff]
    %v662 = vld [vmem:[#allocation2 + $0x11b8] sm:$0xff]
    %v663 = vld [vmem:[#allocation2 + $0x11c0] sm:$0xff]
    %v664 = vld [vmem:[#allocation2 + $0x11c8] sm:$0xff]
    %v665 = vld [vmem:[#allocation2 + $0x11d0] sm:$0xff]
    %v666 = vld [vmem:[#allocation2 + $0x11d8] sm:$0xff]
    %v667 = vld [vmem:[#allocation2 + $0x11e0] sm:$0xff]
    %v668 = vld [vmem:[#allocation2 + $0x11e8] sm:$0xff]
    %v669 = vld [vmem:[#allocation2 + $0x11f0] sm:$0xff]
    %v670 = vld [vmem:[#allocation2 + $0x11f8] sm:$0xff]
    %v671 = vld [vmem:[#allocation2 + $0x1200] sm:$0xff]
    %v672 = vld [vmem:[#allocation2 + $0x1208] sm:$0xff]
    %v673 = vld [vmem:[#allocation2 + $0x1210] sm:$0xff]
    %v674 = vld [vmem:[#allocation2 + $0x1218] sm:$0xff]
    %v675 = vld [vmem:[#allocation2 + $0x1220] sm:$0xff]
    %v676 = vld [vmem:[#allocation2 + $0x1228] sm:$0xff]
    %v677 = vld [vmem:[#allocation2 + $0x1230] sm:$0xff]
    %v678 = vld [vmem:[#allocation2 + $0x1238] sm:$0xff]
    %v679 = vld [vmem:[#allocation2 + $0x1240] sm:$0xff]
    %v680 = vld [vmem:[#allocation2 + $0x1248] sm:$0xff]
    %v681 = vld [vmem:[#allocation2 + $0x1250] sm:$0xff]
    %v682 = vld [vmem:[#allocation2 + $0x1258] sm:$0xff]
    %v683 = vld [vmem:[#allocation2 + $0x1260] sm:$0xff]
    %v684 = vld [vmem:[#allocation2 + $0x1268] sm:$0xff]
    %v685 = vld [vmem:[#allocation2 + $0x1270] sm:$0xff]
    %v686 = vld [vmem:[#allocation2 + $0x1278] sm:$0xff]
    %v687 = vld [vmem:[#allocation2 + $0x1280] sm:$0xff]
    %v688 = vld [vmem:[#allocation2 + $0x1288] sm:$0xff]
    %v689 = vld [vmem:[#allocation2 + $0x1290] sm:$0xff]
    %v690 = vld [vmem:[#allocation2 + $0x1298] sm:$0xff]
    %v691 = vld [vmem:[#allocation2 + $0x12a0] sm:$0xff]
    %v692 = vld [vmem:[#allocation2 + $0x12a8] sm:$0xff]
    %v693 = vld [vmem:[#allocation2 + $0x12b0] sm:$0xff]
    %v694 = vld [vmem:[#allocation2 + $0x12b8] sm:$0xff]
    %v695 = vld [vmem:[#allocation2 + $0x12c0] sm:$0xff]
    %v696 = vld [vmem:[#allocation2 + $0x12c8] sm:$0xff]
    %v697 = vld [vmem:[#allocation2 + $0x12d0] sm:$0xff]
    %v698 = vld [vmem:[#allocation2 + $0x12d8] sm:$0xff]
    %v699 = vld [vmem:[#allocation2 + $0x12e0] sm:$0xff]
    %v700 = vld [vmem:[#allocation2 + $0x12e8] sm:$0xff]
    %v701 = vld [vmem:[#allocation2 + $0x12f0] sm:$0xff]
    %v702 = vld [vmem:[#allocation2 + $0x12f8] sm:$0xff]
    %v703 = vld [vmem:[#allocation2 + $0x1300] sm:$0xff]
    %v704 = vld [vmem:[#allocation2 + $0x1308] sm:$0xff]
    %v705 = vld [vmem:[#allocation2 + $0x1310] sm:$0xff]
    %v706 = vld [vmem:[#allocation2 + $0x1318] sm:$0xff]
    %v707 = vld [vmem:[#allocation2 + $0x1320] sm:$0xff]
    %v708 = vld [vmem:[#allocation2 + $0x1328] sm:$0xff]
    %v709 = vld [vmem:[#allocation2 + $0x1330] sm:$0xff]
    %v710 = vld [vmem:[#allocation2 + $0x1338] sm:$0xff]
    %v711 = vld [vmem:[#allocation2 + $0x1340] sm:$0xff]
    %v712 = vld [vmem:[#allocation2 + $0x1348] sm:$0xff]
    %v713 = vld [vmem:[#allocation2 + $0x1350] sm:$0xff]
    %v714 = vld [vmem:[#allocation2 + $0x1358] sm:$0xff]
    %v715 = vld [vmem:[#allocation2 + $0x1360] sm:$0xff]
    %v716 = vld [vmem:[#allocation2 + $0x1368] sm:$0xff]
    %v717 = vld [vmem:[#allocation2 + $0x1370] sm:$0xff]
    %v718 = vld [vmem:[#allocation2 + $0x1378] sm:$0xff]
    %v719 = vld [vmem:[#allocation2 + $0x1380] sm:$0xff]
    %v720 = vld [vmem:[#allocation2 + $0x1388] sm:$0xff]
    %v721 = vld [vmem:[#allocation2 + $0x1390] sm:$0xff]
    %v722 = vld [vmem:[#allocation2 + $0x1398] sm:$0xff]
    %v723 = vld [vmem:[#allocation2 + $0x13a0] sm:$0xff]
    %v724 = vld [vmem:[#allocation2 + $0x13a8] sm:$0xff]
    %v725 = vld [vmem:[#allocation2 + $0x13b0] sm:$0xff]
    %v726 = vld [vmem:[#allocation2 + $0x13b8] sm:$0xff]
    %v727 = vld [vmem:[#allocation2 + $0x13c0] sm:$0xff]
    %v728 = vld [vmem:[#allocation2 + $0x13c8] sm:$0xff]
    %v729 = vld [vmem:[#allocation2 + $0x13d0] sm:$0xff]
    %v730 = vld [vmem:[#allocation2 + $0x13d8] sm:$0xff]
    %v731 = vld [vmem:[#allocation2 + $0x13e0] sm:$0xff]
    %v732 = vld [vmem:[#allocation2 + $0x13e8] sm:$0xff]
    %v733 = vld [vmem:[#allocation2 + $0x13f0] sm:$0xff]
    %v734 = vld [vmem:[#allocation2 + $0x13f8] sm:$0xff]
    %v735 = vld [vmem:[#allocation2 + $0x1400] sm:$0xff]
    %v736 = vld [vmem:[#allocation2 + $0x1408] sm:$0xff]
    %v737 = vld [vmem:[#allocation2 + $0x1410] sm:$0xff]
    %v738 = vld [vmem:[#allocation2 + $0x1418] sm:$0xff]
    %v739 = vld [vmem:[#allocation2 + $0x1420] sm:$0xff]
    %v740 = vld [vmem:[#allocation2 + $0x1428] sm:$0xff]
    %v741 = vld [vmem:[#allocation2 + $0x1430] sm:$0xff]
    %v742 = vld [vmem:[#allocation2 + $0x1438] sm:$0xff]
    %v743 = vld [vmem:[#allocation2 + $0x1440] sm:$0xff]
    %v744 = vld [vmem:[#allocation2 + $0x1448] sm:$0xff]
    %v745 = vld [vmem:[#allocation2 + $0x1450] sm:$0xff]
    %v746 = vld [vmem:[#allocation2 + $0x1458] sm:$0xff]
    %v747 = vld [vmem:[#allocation2 + $0x1460] sm:$0xff]
    %v748 = vld [vmem:[#allocation2 + $0x1468] sm:$0xff]
    %v749 = vld [vmem:[#allocation2 + $0x1470] sm:$0xff]
    %v750 = vld [vmem:[#allocation2 + $0x1478] sm:$0xff]
    %v751 = vld [vmem:[#allocation2 + $0x1480] sm:$0xff]
    %v752 = vld [vmem:[#allocation2 + $0x1488] sm:$0xff]
    %v753 = vld [vmem:[#allocation2 + $0x1490] sm:$0xff]
    %v754 = vld [vmem:[#allocation2 + $0x1498] sm:$0xff]
    %v755 = vld [vmem:[#allocation2 + $0x14a0] sm:$0xff]
    %v756 = vld [vmem:[#allocation2 + $0x14a8] sm:$0xff]
    %v757 = vld [vmem:[#allocation2 + $0x14b0] sm:$0xff]
    %v758 = vld [vmem:[#allocation2 + $0x14b8] sm:$0xff]
    %v759 = vld [vmem:[#allocation2 + $0x14c0] sm:$0xff]
    %v760 = vld [vmem:[#allocation2 + $0x14c8] sm:$0xff]
    %v761 = vld [vmem:[#allocation2 + $0x14d0] sm:$0xff]
    %v762 = vld [vmem:[#allocation2 + $0x14d8] sm:$0xff]
    %v763 = vld [vmem:[#allocation2 + $0x14e0] sm:$0xff]
    %v764 = vld [vmem:[#allocation2 + $0x14e8] sm:$0xff]
    %v765 = vld [vmem:[#allocation2 + $0x14f0] sm:$0xff]
    %v766 = vld [vmem:[#allocation2 + $0x14f8] sm:$0xff]
    %v767 = vld [vmem:[#allocation2 + $0x1500] sm:$0xff]
    %v768 = vld [vmem:[#allocation2 + $0x1508] sm:$0xff]
    %v769 = vld [vmem:[#allocation2 + $0x1510] sm:$0xff]
    %v770 = vld [vmem:[#allocation2 + $0x1518] sm:$0xff]
    %v771 = vld [vmem:[#allocation2 + $0x1520] sm:$0xff]
    %v772 = vld [vmem:[#allocation2 + $0x1528] sm:$0xff]
    %v773 = vld [vmem:[#allocation2 + $0x1530] sm:$0xff]
    %v774 = vld [vmem:[#allocation2 + $0x1538] sm:$0xff]
    %v775 = vld [vmem:[#allocation2 + $0x1540] sm:$0xff]
    %v776 = vld [vmem:[#allocation2 + $0x1548] sm:$0xff]
    %v777 = vld [vmem:[#allocation2 + $0x1550] sm:$0xff]
    %v778 = vld [vmem:[#allocation2 + $0x1558] sm:$0xff]
    %v779 = vld [vmem:[#allocation2 + $0x1560] sm:$0xff]
    %v780 = vld [vmem:[#allocation2 + $0x1568] sm:$0xff]
    %v781 = vld [vmem:[#allocation2 + $0x1570] sm:$0xff]
    %v782 = vld [vmem:[#allocation2 + $0x1578] sm:$0xff]
    %v783 = vld [vmem:[#allocation2 + $0x1580] sm:$0xff]
    %v784 = vld [vmem:[#allocation2 + $0x1588] sm:$0xff]
    %v785 = vld [vmem:[#allocation2 + $0x1590] sm:$0xff]
    %v786 = vld [vmem:[#allocation2 + $0x1598] sm:$0xff]
    %v787 = vld [vmem:[#allocation2 + $0x15a0] sm:$0xff]
    %v788 = vld [vmem:[#allocation2 + $0x15a8] sm:$0xff]
    %v789 = vld [vmem:[#allocation2 + $0x15b0] sm:$0xff]
    %v790 = vld [vmem:[#allocation2 + $0x15b8] sm:$0xff]
    %v791 = vld [vmem:[#allocation2 + $0x15c0] sm:$0xff]
    %v792 = vld [vmem:[#allocation2 + $0x15c8] sm:$0xff]
    %v793 = vld [vmem:[#allocation2 + $0x15d0] sm:$0xff]
    %v794 = vld [vmem:[#allocation2 + $0x15d8] sm:$0xff]
    %v795 = vld [vmem:[#allocation2 + $0x15e0] sm:$0xff]
    %v796 = vld [vmem:[#allocation2 + $0x15e8] sm:$0xff]
    %v797 = vld [vmem:[#allocation2 + $0x15f0] sm:$0xff]
    %v798 = vld [vmem:[#allocation2 + $0x15f8] sm:$0xff]
    %v799 = vld [vmem:[#allocation2 + $0x1600] sm:$0xff]
    %v800 = vld [vmem:[#allocation2 + $0x1608] sm:$0xff]
    %v801 = vld [vmem:[#allocation2 + $0x1610] sm:$0xff]
    %v802 = vld [vmem:[#allocation2 + $0x1618] sm:$0xff]
    %v803 = vld [vmem:[#allocation2 + $0x1620] sm:$0xff]
    %v804 = vld [vmem:[#allocation2 + $0x1628] sm:$0xff]
    %v805 = vld [vmem:[#allocation2 + $0x1630] sm:$0xff]
    %v806 = vld [vmem:[#allocation2 + $0x1638] sm:$0xff]
    %v807 = vld [vmem:[#allocation2 + $0x1640] sm:$0xff]
    %v808 = vld [vmem:[#allocation2 + $0x1648] sm:$0xff]
    %v809 = vld [vmem:[#allocation2 + $0x1650] sm:$0xff]
    %v810 = vld [vmem:[#allocation2 + $0x1658] sm:$0xff]
    %v811 = vld [vmem:[#allocation2 + $0x1660] sm:$0xff]
    %v812 = vld [vmem:[#allocation2 + $0x1668] sm:$0xff]
    %v813 = vld [vmem:[#allocation2 + $0x1670] sm:$0xff]
    %v814 = vld [vmem:[#allocation2 + $0x1678] sm:$0xff]
    %v815 = vld [vmem:[#allocation2 + $0x1680] sm:$0xff]
    %v816 = vld [vmem:[#allocation2 + $0x1688] sm:$0xff]
    %v817 = vld [vmem:[#allocation2 + $0x1690] sm:$0xff]
    %v818 = vld [vmem:[#allocation2 + $0x1698] sm:$0xff]
    %v819 = vld [vmem:[#allocation2 + $0x16a0] sm:$0xff]
    %v820 = vld [vmem:[#allocation2 + $0x16a8] sm:$0xff]
    %v821 = vld [vmem:[#allocation2 + $0x16b0] sm:$0xff]
    %v822 = vld [vmem:[#allocation2 + $0x16b8] sm:$0xff]
    %v823 = vld [vmem:[#allocation2 + $0x16c0] sm:$0xff]
    %v824 = vld [vmem:[#allocation2 + $0x16c8] sm:$0xff]
    %v825 = vld [vmem:[#allocation2 + $0x16d0] sm:$0xff]
    %v826 = vld [vmem:[#allocation2 + $0x16d8] sm:$0xff]
    %v827 = vld [vmem:[#allocation2 + $0x16e0] sm:$0xff]
    %v828 = vld [vmem:[#allocation2 + $0x16e8] sm:$0xff]
    %v829 = vld [vmem:[#allocation2 + $0x16f0] sm:$0xff]
    %v830 = vld [vmem:[#allocation2 + $0x16f8] sm:$0xff]
    %v831 = vld [vmem:[#allocation2 + $0x1700] sm:$0xff]
    %v832 = vld [vmem:[#allocation2 + $0x1708] sm:$0xff]
    %v833 = vld [vmem:[#allocation2 + $0x1710] sm:$0xff]
    %v834 = vld [vmem:[#allocation2 + $0x1718] sm:$0xff]
    %v835 = vld [vmem:[#allocation2 + $0x1720] sm:$0xff]
    %v836 = vld [vmem:[#allocation2 + $0x1728] sm:$0xff]
    %v837 = vld [vmem:[#allocation2 + $0x1730] sm:$0xff]
    %v838 = vld [vmem:[#allocation2 + $0x1738] sm:$0xff]
    %v839 = vld [vmem:[#allocation2 + $0x1740] sm:$0xff]
    %v840 = vld [vmem:[#allocation2 + $0x1748] sm:$0xff]
    %v841 = vld [vmem:[#allocation2 + $0x1750] sm:$0xff]
    %v842 = vld [vmem:[#allocation2 + $0x1758] sm:$0xff]
    %v843 = vld [vmem:[#allocation2 + $0x1760] sm:$0xff]
    %v844 = vld [vmem:[#allocation2 + $0x1768] sm:$0xff]
    %v845 = vld [vmem:[#allocation2 + $0x1770] sm:$0xff]
    %v846 = vld [vmem:[#allocation2 + $0x1778] sm:$0xff]
    %v847 = vld [vmem:[#allocation2 + $0x1780] sm:$0xff]
    %v848 = vld [vmem:[#allocation2 + $0x1788] sm:$0xff]
    %v849 = vld [vmem:[#allocation2 + $0x1790] sm:$0xff]
    %v850 = vld [vmem:[#allocation2 + $0x1798] sm:$0xff]
    %v851 = vld [vmem:[#allocation2 + $0x17a0] sm:$0xff]
    %v852 = vld [vmem:[#allocation2 + $0x17a8] sm:$0xff]
    %v853 = vld [vmem:[#allocation2 + $0x17b0] sm:$0xff]
    %v854 = vld [vmem:[#allocation2 + $0x17b8] sm:$0xff]
    %v855 = vld [vmem:[#allocation2 + $0x17c0] sm:$0xff]
    %v856 = vld [vmem:[#allocation2 + $0x17c8] sm:$0xff]
    %v857 = vld [vmem:[#allocation2 + $0x17d0] sm:$0xff]
    %v858 = vld [vmem:[#allocation2 + $0x17d8] sm:$0xff]
    %v859 = vld [vmem:[#allocation2 + $0x17e0] sm:$0xff]
    %v860 = vld [vmem:[#allocation2 + $0x17e8] sm:$0xff]
    %v861 = vld [vmem:[#allocation2 + $0x17f0] sm:$0xff]
    %v862 = vld [vmem:[#allocation2 + $0x17f8] sm:$0xff]
    %v866 = vunpack.c.l.b16 %v92
    %v867 = vunpack.c.h.b16 %v92
    %v868 = vunpack.c.l.b16 %v93
    %v869 = vunpack.c.h.b16 %v93
    %v870 = vunpack.c.l.b16 %v94
    %v871 = vunpack.c.h.b16 %v94
    %v872 = vpack.c.b16 %v866, %v866
    %v873 = vpack.c.b16 %v867, %v867
    %v874 = vpack.c.b16 %v868, %v868
    %v875 = vpack.c.b16 %v869, %v869
    %v876 = vpack.c.b16 %v870, %v870
    %v877 = vpack.c.b16 %v871, %v871
    %v1652 = vunpack.c.l.b16 %v95
    %v1653 = vunpack.c.h.b16 %v95
    %v1654 = vunpack.c.l.b16 %v96
    %v1655 = vunpack.c.h.b16 %v96
    %v1656 = vunpack.c.l.b16 %v97
    %v1657 = vunpack.c.h.b16 %v97
    %v1658 = vunpack.c.l.b16 %v98
    %v1659 = vunpack.c.h.b16 %v98
    %v1660 = vunpack.c.l.b16 %v99
    %v1661 = vunpack.c.h.b16 %v99
    %v1662 = vunpack.c.l.b16 %v100
    %v1663 = vunpack.c.h.b16 %v100
    %v1664 = vunpack.c.l.b16 %v101
    %v1665 = vunpack.c.h.b16 %v101
    %v1666 = vunpack.c.l.b16 %v102
    %v1667 = vunpack.c.h.b16 %v102
    %v1668 = vunpack.c.l.b16 %v103
    %v1669 = vunpack.c.h.b16 %v103
    %v1670 = vunpack.c.l.b16 %v104
    %v1671 = vunpack.c.h.b16 %v104
    %v1672 = vunpack.c.l.b16 %v105
    %v1673 = vunpack.c.h.b16 %v105
    %v1674 = vunpack.c.l.b16 %v106
    %v1675 = vunpack.c.h.b16 %v106
    %v1676 = vunpack.c.l.b16 %v107
    %v1677 = vunpack.c.h.b16 %v107
    %v1678 = vunpack.c.l.b16 %v108
    %v1679 = vunpack.c.h.b16 %v108
    %v1680 = vunpack.c.l.b16 %v109
    %v1681 = vunpack.c.h.b16 %v109
    %v1682 = vunpack.c.l.b16 %v110
    %v1683 = vunpack.c.h.b16 %v110
    %v1684 = vunpack.c.l.b16 %v111
    %v1685 = vunpack.c.h.b16 %v111
    %v1686 = vunpack.c.l.b16 %v112
    %v1687 = vunpack.c.h.b16 %v112
    %v1688 = vunpack.c.l.b16 %v113
    %v1689 = vunpack.c.h.b16 %v113
    %v1690 = vunpack.c.l.b16 %v114
    %v1691 = vunpack.c.h.b16 %v114
    %v1692 = vunpack.c.l.b16 %v115
    %v1693 = vunpack.c.h.b16 %v115
    %v1694 = vunpack.c.l.b16 %v116
    %v1695 = vunpack.c.h.b16 %v116
    %v1696 = vunpack.c.l.b16 %v117
    %v1697 = vunpack.c.h.b16 %v117
    %v1698 = vunpack.c.l.b16 %v118
    %v1699 = vunpack.c.h.b16 %v118
    %v1700 = vunpack.c.l.b16 %v119
    %v1701 = vunpack.c.h.b16 %v119
    %v1702 = vunpack.c.l.b16 %v120
    %v1703 = vunpack.c.h.b16 %v120
    %v1704 = vunpack.c.l.b16 %v121
    %v1705 = vunpack.c.h.b16 %v121
    %v1706 = vunpack.c.l.b16 %v122
    %v1707 = vunpack.c.h.b16 %v122
    %v1708 = vunpack.c.l.b16 %v123
    %v1709 = vunpack.c.h.b16 %v123
    %v1710 = vunpack.c.l.b16 %v124
    %v1711 = vunpack.c.h.b16 %v124
    %v1712 = vunpack.c.l.b16 %v125
    %v1713 = vunpack.c.h.b16 %v125
    %v1714 = vunpack.c.l.b16 %v126
    %v1715 = vunpack.c.h.b16 %v126
    %v1716 = vunpack.c.l.b16 %v127
    %v1717 = vunpack.c.h.b16 %v127
    %v1718 = vunpack.c.l.b16 %v128
    %v1719 = vunpack.c.h.b16 %v128
    %v1720 = vunpack.c.l.b16 %v129
    %v1721 = vunpack.c.h.b16 %v129
    %v1722 = vunpack.c.l.b16 %v130
    %v1723 = vunpack.c.h.b16 %v130
    %v1724 = vunpack.c.l.b16 %v131
    %v1725 = vunpack.c.h.b16 %v131
    %v1726 = vunpack.c.l.b16 %v132
    %v1727 = vunpack.c.h.b16 %v132
    %v1728 = vunpack.c.l.b16 %v133
    %v1729 = vunpack.c.h.b16 %v133
    %v1730 = vunpack.c.l.b16 %v134
    %v1731 = vunpack.c.h.b16 %v134
    %v1732 = vunpack.c.l.b16 %v135
    %v1733 = vunpack.c.h.b16 %v135
    %v1734 = vunpack.c.l.b16 %v136
    %v1735 = vunpack.c.h.b16 %v136
    %v1736 = vunpack.c.l.b16 %v137
    %v1737 = vunpack.c.h.b16 %v137
    %v1738 = vunpack.c.l.b16 %v138
    %v1739 = vunpack.c.h.b16 %v138
    %v1740 = vunpack.c.l.b16 %v139
    %v1741 = vunpack.c.h.b16 %v139
    %v1742 = vunpack.c.l.b16 %v140
    %v1743 = vunpack.c.h.b16 %v140
    %v1744 = vunpack.c.l.b16 %v141
    %v1745 = vunpack.c.h.b16 %v141
    %v1746 = vunpack.c.l.b16 %v142
    %v1747 = vunpack.c.h.b16 %v142
    %v1748 = vunpack.c.l.b16 %v143
    %v1749 = vunpack.c.h.b16 %v143
    %v1750 = vunpack.c.l.b16 %v144
    %v1751 = vunpack.c.h.b16 %v144
    %v1752 = vunpack.c.l.b16 %v145
    %v1753 = vunpack.c.h.b16 %v145
    %v1754 = vunpack.c.l.b16 %v146
    %v1755 = vunpack.c.h.b16 %v146
    %v1756 = vunpack.c.l.b16 %v147
    %v1757 = vunpack.c.h.b16 %v147
    %v1758 = vunpack.c.l.b16 %v148
    %v1759 = vunpack.c.h.b16 %v148
    %v1760 = vunpack.c.l.b16 %v149
    %v1761 = vunpack.c.h.b16 %v149
    %v1762 = vunpack.c.l.b16 %v150
    %v1763 = vunpack.c.h.b16 %v150
    %v1764 = vunpack.c.l.b16 %v151
    %v1765 = vunpack.c.h.b16 %v151
    %v1766 = vunpack.c.l.b16 %v152
    %v1767 = vunpack.c.h.b16 %v152
    %v1768 = vunpack.c.l.b16 %v153
    %v1769 = vunpack.c.h.b16 %v153
    %v1770 = vunpack.c.l.b16 %v154
    %v1771 = vunpack.c.h.b16 %v154
    %v1772 = vunpack.c.l.b16 %v155
    %v1773 = vunpack.c.h.b16 %v155
    %v1774 = vunpack.c.l.b16 %v156
    %v1775 = vunpack.c.h.b16 %v156
    %v1776 = vunpack.c.l.b16 %v157
    %v1777 = vunpack.c.h.b16 %v157
    %v1778 = vunpack.c.l.b16 %v158
    %v1779 = vunpack.c.h.b16 %v158
    %v1780 = vunpack.c.l.b16 %v159
    %v1781 = vunpack.c.h.b16 %v159
    %v1782 = vunpack.c.l.b16 %v160
    %v1783 = vunpack.c.h.b16 %v160
    %v1784 = vunpack.c.l.b16 %v161
    %v1785 = vunpack.c.h.b16 %v161
    %v1786 = vunpack.c.l.b16 %v162
    %v1787 = vunpack.c.h.b16 %v162
    %v1788 = vunpack.c.l.b16 %v163
    %v1789 = vunpack.c.h.b16 %v163
    %v1790 = vunpack.c.l.b16 %v164
    %v1791 = vunpack.c.h.b16 %v164
    %v1792 = vunpack.c.l.b16 %v165
    %v1793 = vunpack.c.h.b16 %v165
    %v1794 = vunpack.c.l.b16 %v166
    %v1795 = vunpack.c.h.b16 %v166
    %v1796 = vunpack.c.l.b16 %v167
    %v1797 = vunpack.c.h.b16 %v167
    %v1798 = vunpack.c.l.b16 %v168
    %v1799 = vunpack.c.h.b16 %v168
    %v1800 = vunpack.c.l.b16 %v169
    %v1801 = vunpack.c.h.b16 %v169
    %v1802 = vunpack.c.l.b16 %v170
    %v1803 = vunpack.c.h.b16 %v170
    %v1804 = vunpack.c.l.b16 %v171
    %v1805 = vunpack.c.h.b16 %v171
    %v1806 = vunpack.c.l.b16 %v172
    %v1807 = vunpack.c.h.b16 %v172
    %v1808 = vunpack.c.l.b16 %v173
    %v1809 = vunpack.c.h.b16 %v173
    %v1810 = vunpack.c.l.b16 %v174
    %v1811 = vunpack.c.h.b16 %v174
    %v1812 = vunpack.c.l.b16 %v175
    %v1813 = vunpack.c.h.b16 %v175
    %v1814 = vunpack.c.l.b16 %v176
    %v1815 = vunpack.c.h.b16 %v176
    %v1816 = vunpack.c.l.b16 %v177
    %v1817 = vunpack.c.h.b16 %v177
    %v1818 = vunpack.c.l.b16 %v178
    %v1819 = vunpack.c.h.b16 %v178
    %v1820 = vunpack.c.l.b16 %v179
    %v1821 = vunpack.c.h.b16 %v179
    %v1822 = vunpack.c.l.b16 %v180
    %v1823 = vunpack.c.h.b16 %v180
    %v1824 = vunpack.c.l.b16 %v181
    %v1825 = vunpack.c.h.b16 %v181
    %v1826 = vunpack.c.l.b16 %v182
    %v1827 = vunpack.c.h.b16 %v182
    %v1828 = vunpack.c.l.b16 %v183
    %v1829 = vunpack.c.h.b16 %v183
    %v1830 = vunpack.c.l.b16 %v184
    %v1831 = vunpack.c.h.b16 %v184
    %v1832 = vunpack.c.l.b16 %v185
    %v1833 = vunpack.c.h.b16 %v185
    %v1834 = vunpack.c.l.b16 %v186
    %v1835 = vunpack.c.h.b16 %v186
    %v1836 = vunpack.c.l.b16 %v187
    %v1837 = vunpack.c.h.b16 %v187
    %v1838 = vunpack.c.l.b16 %v188
    %v1839 = vunpack.c.h.b16 %v188
    %v1840 = vunpack.c.l.b16 %v189
    %v1841 = vunpack.c.h.b16 %v189
    %v1842 = vunpack.c.l.b16 %v190
    %v1843 = vunpack.c.h.b16 %v190
    %v1844 = vunpack.c.l.b16 %v191
    %v1845 = vunpack.c.h.b16 %v191
    %v1846 = vunpack.c.l.b16 %v192
    %v1847 = vunpack.c.h.b16 %v192
    %v1848 = vunpack.c.l.b16 %v193
    %v1849 = vunpack.c.h.b16 %v193
    %v1850 = vunpack.c.l.b16 %v194
    %v1851 = vunpack.c.h.b16 %v194
    %v1852 = vunpack.c.l.b16 %v195
    %v1853 = vunpack.c.h.b16 %v195
    %v1854 = vunpack.c.l.b16 %v196
    %v1855 = vunpack.c.h.b16 %v196
    %v1856 = vunpack.c.l.b16 %v197
    %v1857 = vunpack.c.h.b16 %v197
    %v1858 = vunpack.c.l.b16 %v198
    %v1859 = vunpack.c.h.b16 %v198
    %v1860 = vunpack.c.l.b16 %v199
    %v1861 = vunpack.c.h.b16 %v199
    %v1862 = vunpack.c.l.b16 %v200
    %v1863 = vunpack.c.h.b16 %v200
    %v1864 = vunpack.c.l.b16 %v201
    %v1865 = vunpack.c.h.b16 %v201
    %v1866 = vunpack.c.l.b16 %v202
    %v1867 = vunpack.c.h.b16 %v202
    %v1868 = vunpack.c.l.b16 %v203
    %v1869 = vunpack.c.h.b16 %v203
    %v1870 = vunpack.c.l.b16 %v204
    %v1871 = vunpack.c.h.b16 %v204
    %v1872 = vunpack.c.l.b16 %v205
    %v1873 = vunpack.c.h.b16 %v205
    %v1874 = vunpack.c.l.b16 %v206
    %v1875 = vunpack.c.h.b16 %v206
    %v1876 = vunpack.c.l.b16 %v207
    %v1877 = vunpack.c.h.b16 %v207
    %v1878 = vunpack.c.l.b16 %v208
    %v1879 = vunpack.c.h.b16 %v208
    %v1880 = vunpack.c.l.b16 %v209
    %v1881 = vunpack.c.h.b16 %v209
    %v1882 = vunpack.c.l.b16 %v210
    %v1883 = vunpack.c.h.b16 %v210
    %v1884 = vunpack.c.l.b16 %v211
    %v1885 = vunpack.c.h.b16 %v211
    %v1886 = vunpack.c.l.b16 %v212
    %v1887 = vunpack.c.h.b16 %v212
    %v1888 = vunpack.c.l.b16 %v213
    %v1889 = vunpack.c.h.b16 %v213
    %v1890 = vunpack.c.l.b16 %v214
    %v1891 = vunpack.c.h.b16 %v214
    %v1892 = vunpack.c.l.b16 %v215
    %v1893 = vunpack.c.h.b16 %v215
    %v1894 = vunpack.c.l.b16 %v216
    %v1895 = vunpack.c.h.b16 %v216
    %v1896 = vunpack.c.l.b16 %v217
    %v1897 = vunpack.c.h.b16 %v217
    %v1898 = vunpack.c.l.b16 %v218
    %v1899 = vunpack.c.h.b16 %v218
    %v1900 = vunpack.c.l.b16 %v219
    %v1901 = vunpack.c.h.b16 %v219
    %v1902 = vunpack.c.l.b16 %v220
    %v1903 = vunpack.c.h.b16 %v220
    %v1904 = vunpack.c.l.b16 %v221
    %v1905 = vunpack.c.h.b16 %v221
    %v1906 = vunpack.c.l.b16 %v222
    %v1907 = vunpack.c.h.b16 %v222
    %v1908 = vunpack.c.l.b16 %v223
    %v1909 = vunpack.c.h.b16 %v223
    %v1910 = vunpack.c.l.b16 %v224
    %v1911 = vunpack.c.h.b16 %v224
    %v1912 = vunpack.c.l.b16 %v225
    %v1913 = vunpack.c.h.b16 %v225
    %v1914 = vunpack.c.l.b16 %v226
    %v1915 = vunpack.c.h.b16 %v226
    %v1916 = vunpack.c.l.b16 %v227
    %v1917 = vunpack.c.h.b16 %v227
    %v1918 = vunpack.c.l.b16 %v228
    %v1919 = vunpack.c.h.b16 %v228
    %v1920 = vunpack.c.l.b16 %v229
    %v1921 = vunpack.c.h.b16 %v229
    %v1922 = vunpack.c.l.b16 %v230
    %v1923 = vunpack.c.h.b16 %v230
    %v1924 = vunpack.c.l.b16 %v231
    %v1925 = vunpack.c.h.b16 %v231
    %v1926 = vunpack.c.l.b16 %v232
    %v1927 = vunpack.c.h.b16 %v232
    %v1928 = vunpack.c.l.b16 %v233
    %v1929 = vunpack.c.h.b16 %v233
    %v1930 = vunpack.c.l.b16 %v234
    %v1931 = vunpack.c.h.b16 %v234
    %v1932 = vunpack.c.l.b16 %v235
    %v1933 = vunpack.c.h.b16 %v235
    %v1934 = vunpack.c.l.b16 %v236
    %v1935 = vunpack.c.h.b16 %v236
    %v1936 = vunpack.c.l.b16 %v237
    %v1937 = vunpack.c.h.b16 %v237
    %v1938 = vunpack.c.l.b16 %v238
    %v1939 = vunpack.c.h.b16 %v238
    %v1940 = vunpack.c.l.b16 %v239
    %v1941 = vunpack.c.h.b16 %v239
    %v1942 = vunpack.c.l.b16 %v240
    %v1943 = vunpack.c.h.b16 %v240
    %v1944 = vunpack.c.l.b16 %v241
    %v1945 = vunpack.c.h.b16 %v241
    %v1946 = vunpack.c.l.b16 %v242
    %v1947 = vunpack.c.h.b16 %v242
    %v1948 = vunpack.c.l.b16 %v243
    %v1949 = vunpack.c.h.b16 %v243
    %v1950 = vunpack.c.l.b16 %v244
    %v1951 = vunpack.c.h.b16 %v244
    %v1952 = vunpack.c.l.b16 %v245
    %v1953 = vunpack.c.h.b16 %v245
    %v1954 = vunpack.c.l.b16 %v246
    %v1955 = vunpack.c.h.b16 %v246
    %v1956 = vunpack.c.l.b16 %v247
    %v1957 = vunpack.c.h.b16 %v247
    %v1958 = vunpack.c.l.b16 %v248
    %v1959 = vunpack.c.h.b16 %v248
    %v1960 = vunpack.c.l.b16 %v249
    %v1961 = vunpack.c.h.b16 %v249
    %v1962 = vunpack.c.l.b16 %v250
    %v1963 = vunpack.c.h.b16 %v250
    %v1964 = vunpack.c.l.b16 %v251
    %v1965 = vunpack.c.h.b16 %v251
    %v1966 = vunpack.c.l.b16 %v252
    %v1967 = vunpack.c.h.b16 %v252
    %v1968 = vunpack.c.l.b16 %v253
    %v1969 = vunpack.c.h.b16 %v253
    %v1970 = vunpack.c.l.b16 %v254
    %v1971 = vunpack.c.h.b16 %v254
    %v1972 = vunpack.c.l.b16 %v255
    %v1973 = vunpack.c.h.b16 %v255
    %v1974 = vunpack.c.l.b16 %v256
    %v1975 = vunpack.c.h.b16 %v256
    %v1976 = vunpack.c.l.b16 %v257
    %v1977 = vunpack.c.h.b16 %v257
    %v1978 = vunpack.c.l.b16 %v258
    %v1979 = vunpack.c.h.b16 %v258
    %v1980 = vunpack.c.l.b16 %v259
    %v1981 = vunpack.c.h.b16 %v259
    %v1982 = vunpack.c.l.b16 %v260
    %v1983 = vunpack.c.h.b16 %v260
    %v1984 = vunpack.c.l.b16 %v261
    %v1985 = vunpack.c.h.b16 %v261
    %v1986 = vunpack.c.l.b16 %v262
    %v1987 = vunpack.c.h.b16 %v262
    %v1988 = vunpack.c.l.b16 %v263
    %v1989 = vunpack.c.h.b16 %v263
    %v1990 = vunpack.c.l.b16 %v264
    %v1991 = vunpack.c.h.b16 %v264
    %v1992 = vunpack.c.l.b16 %v265
    %v1993 = vunpack.c.h.b16 %v265
    %v1994 = vunpack.c.l.b16 %v266
    %v1995 = vunpack.c.h.b16 %v266
    %v1996 = vunpack.c.l.b16 %v267
    %v1997 = vunpack.c.h.b16 %v267
    %v1998 = vunpack.c.l.b16 %v268
    %v1999 = vunpack.c.h.b16 %v268
    %v2000 = vunpack.c.l.b16 %v269
    %v2001 = vunpack.c.h.b16 %v269
    %v2002 = vunpack.c.l.b16 %v270
    %v2003 = vunpack.c.h.b16 %v270
    %v2004 = vunpack.c.l.b16 %v271
    %v2005 = vunpack.c.h.b16 %v271
    %v2006 = vunpack.c.l.b16 %v272
    %v2007 = vunpack.c.h.b16 %v272
    %v2008 = vunpack.c.l.b16 %v273
    %v2009 = vunpack.c.h.b16 %v273
    %v2010 = vunpack.c.l.b16 %v274
    %v2011 = vunpack.c.h.b16 %v274
    %v2012 = vunpack.c.l.b16 %v275
    %v2013 = vunpack.c.h.b16 %v275
    %v2014 = vunpack.c.l.b16 %v276
    %v2015 = vunpack.c.h.b16 %v276
    %v2016 = vunpack.c.l.b16 %v277
    %v2017 = vunpack.c.h.b16 %v277
    %v2018 = vunpack.c.l.b16 %v278
    %v2019 = vunpack.c.h.b16 %v278
    %v2020 = vunpack.c.l.b16 %v279
    %v2021 = vunpack.c.h.b16 %v279
    %v2022 = vunpack.c.l.b16 %v280
    %v2023 = vunpack.c.h.b16 %v280
    %v2024 = vunpack.c.l.b16 %v281
    %v2025 = vunpack.c.h.b16 %v281
    %v2026 = vunpack.c.l.b16 %v282
    %v2027 = vunpack.c.h.b16 %v282
    %v2028 = vunpack.c.l.b16 %v283
    %v2029 = vunpack.c.h.b16 %v283
    %v2030 = vunpack.c.l.b16 %v284
    %v2031 = vunpack.c.h.b16 %v284
    %v2032 = vunpack.c.l.b16 %v285
    %v2033 = vunpack.c.h.b16 %v285
    %v2034 = vunpack.c.l.b16 %v286
    %v2035 = vunpack.c.h.b16 %v286
    %v2036 = vunpack.c.l.b16 %v287
    %v2037 = vunpack.c.h.b16 %v287
    %v2038 = vunpack.c.l.b16 %v288
    %v2039 = vunpack.c.h.b16 %v288
    %v2040 = vunpack.c.l.b16 %v289
    %v2041 = vunpack.c.h.b16 %v289
    %v2042 = vunpack.c.l.b16 %v290
    %v2043 = vunpack.c.h.b16 %v290
    %v2044 = vunpack.c.l.b16 %v291
    %v2045 = vunpack.c.h.b16 %v291
    %v2046 = vunpack.c.l.b16 %v292
    %v2047 = vunpack.c.h.b16 %v292
    %v2048 = vunpack.c.l.b16 %v293
    %v2049 = vunpack.c.h.b16 %v293
    %v2050 = vunpack.c.l.b16 %v294
    %v2051 = vunpack.c.h.b16 %v294
    %v2052 = vunpack.c.l.b16 %v295
    %v2053 = vunpack.c.h.b16 %v295
    %v2054 = vunpack.c.l.b16 %v296
    %v2055 = vunpack.c.h.b16 %v296
    %v2056 = vunpack.c.l.b16 %v297
    %v2057 = vunpack.c.h.b16 %v297
    %v2058 = vunpack.c.l.b16 %v298
    %v2059 = vunpack.c.h.b16 %v298
    %v2060 = vunpack.c.l.b16 %v299
    %v2061 = vunpack.c.h.b16 %v299
    %v2062 = vunpack.c.l.b16 %v300
    %v2063 = vunpack.c.h.b16 %v300
    %v2064 = vunpack.c.l.b16 %v301
    %v2065 = vunpack.c.h.b16 %v301
    %v2066 = vunpack.c.l.b16 %v302
    %v2067 = vunpack.c.h.b16 %v302
    %v2068 = vunpack.c.l.b16 %v303
    %v2069 = vunpack.c.h.b16 %v303
    %v2070 = vunpack.c.l.b16 %v304
    %v2071 = vunpack.c.h.b16 %v304
    %v2072 = vunpack.c.l.b16 %v305
    %v2073 = vunpack.c.h.b16 %v305
    %v2074 = vunpack.c.l.b16 %v306
    %v2075 = vunpack.c.h.b16 %v306
    %v2076 = vunpack.c.l.b16 %v307
    %v2077 = vunpack.c.h.b16 %v307
    %v2078 = vunpack.c.l.b16 %v308
    %v2079 = vunpack.c.h.b16 %v308
    %v2080 = vunpack.c.l.b16 %v309
    %v2081 = vunpack.c.h.b16 %v309
    %v2082 = vunpack.c.l.b16 %v310
    %v2083 = vunpack.c.h.b16 %v310
    %v2084 = vunpack.c.l.b16 %v311
    %v2085 = vunpack.c.h.b16 %v311
    %v2086 = vunpack.c.l.b16 %v312
    %v2087 = vunpack.c.h.b16 %v312
    %v2088 = vunpack.c.l.b16 %v313
    %v2089 = vunpack.c.h.b16 %v313
    %v2090 = vunpack.c.l.b16 %v314
    %v2091 = vunpack.c.h.b16 %v314
    %v2092 = vunpack.c.l.b16 %v315
    %v2093 = vunpack.c.h.b16 %v315
    %v2094 = vunpack.c.l.b16 %v316
    %v2095 = vunpack.c.h.b16 %v316
    %v2096 = vunpack.c.l.b16 %v317
    %v2097 = vunpack.c.h.b16 %v317
    %v2098 = vunpack.c.l.b16 %v318
    %v2099 = vunpack.c.h.b16 %v318
    %v2100 = vunpack.c.l.b16 %v319
    %v2101 = vunpack.c.h.b16 %v319
    %v2102 = vunpack.c.l.b16 %v320
    %v2103 = vunpack.c.h.b16 %v320
    %v2104 = vunpack.c.l.b16 %v321
    %v2105 = vunpack.c.h.b16 %v321
    %v2106 = vunpack.c.l.b16 %v322
    %v2107 = vunpack.c.h.b16 %v322
    %v2108 = vunpack.c.l.b16 %v323
    %v2109 = vunpack.c.h.b16 %v323
    %v2110 = vunpack.c.l.b16 %v324
    %v2111 = vunpack.c.h.b16 %v324
    %v2112 = vunpack.c.l.b16 %v325
    %v2113 = vunpack.c.h.b16 %v325
    %v2114 = vunpack.c.l.b16 %v326
    %v2115 = vunpack.c.h.b16 %v326
    %v2116 = vunpack.c.l.b16 %v327
    %v2117 = vunpack.c.h.b16 %v327
    %v2118 = vunpack.c.l.b16 %v328
    %v2119 = vunpack.c.h.b16 %v328
    %v2120 = vunpack.c.l.b16 %v329
    %v2121 = vunpack.c.h.b16 %v329
    %v2122 = vunpack.c.l.b16 %v330
    %v2123 = vunpack.c.h.b16 %v330
    %v2124 = vunpack.c.l.b16 %v331
    %v2125 = vunpack.c.h.b16 %v331
    %v2126 = vunpack.c.l.b16 %v332
    %v2127 = vunpack.c.h.b16 %v332
    %v2128 = vunpack.c.l.b16 %v333
    %v2129 = vunpack.c.h.b16 %v333
    %v2130 = vunpack.c.l.b16 %v334
    %v2131 = vunpack.c.h.b16 %v334
    %v2132 = vunpack.c.l.b16 %v335
    %v2133 = vunpack.c.h.b16 %v335
    %v2134 = vunpack.c.l.b16 %v336
    %v2135 = vunpack.c.h.b16 %v336
    %v2136 = vunpack.c.l.b16 %v337
    %v2137 = vunpack.c.h.b16 %v337
    %v2138 = vunpack.c.l.b16 %v338
    %v2139 = vunpack.c.h.b16 %v338
    %v2140 = vunpack.c.l.b16 %v339
    %v2141 = vunpack.c.h.b16 %v339
    %v2142 = vunpack.c.l.b16 %v340
    %v2143 = vunpack.c.h.b16 %v340
    %v2144 = vunpack.c.l.b16 %v341
    %v2145 = vunpack.c.h.b16 %v341
    %v2146 = vunpack.c.l.b16 %v342
    %v2147 = vunpack.c.h.b16 %v342
    %v2148 = vunpack.c.l.b16 %v343
    %v2149 = vunpack.c.h.b16 %v343
    %v2150 = vunpack.c.l.b16 %v344
    %v2151 = vunpack.c.h.b16 %v344
    %v2152 = vunpack.c.l.b16 %v345
    %v2153 = vunpack.c.h.b16 %v345
    %v2154 = vunpack.c.l.b16 %v346
    %v2155 = vunpack.c.h.b16 %v346
    %v2156 = vunpack.c.l.b16 %v347
    %v2157 = vunpack.c.h.b16 %v347
    %v2158 = vunpack.c.l.b16 %v348
    %v2159 = vunpack.c.h.b16 %v348
    %v2160 = vunpack.c.l.b16 %v349
    %v2161 = vunpack.c.h.b16 %v349
    %v2162 = vunpack.c.l.b16 %v350
    %v2163 = vunpack.c.h.b16 %v350
    %v2164 = vunpack.c.l.b16 %v351
    %v2165 = vunpack.c.h.b16 %v351
    %v2166 = vunpack.c.l.b16 %v352
    %v2167 = vunpack.c.h.b16 %v352
    %v2168 = vunpack.c.l.b16 %v353
    %v2169 = vunpack.c.h.b16 %v353
    %v2170 = vunpack.c.l.b16 %v354
    %v2171 = vunpack.c.h.b16 %v354
    %v2172 = vunpack.c.l.b16 %v355
    %v2173 = vunpack.c.h.b16 %v355
    %v2174 = vunpack.c.l.b16 %v356
    %v2175 = vunpack.c.h.b16 %v356
    %v2176 = vunpack.c.l.b16 %v357
    %v2177 = vunpack.c.h.b16 %v357
    %v2178 = vunpack.c.l.b16 %v358
    %v2179 = vunpack.c.h.b16 %v358
    %v2180 = vunpack.c.l.b16 %v359
    %v2181 = vunpack.c.h.b16 %v359
    %v2182 = vunpack.c.l.b16 %v360
    %v2183 = vunpack.c.h.b16 %v360
    %v2184 = vunpack.c.l.b16 %v361
    %v2185 = vunpack.c.h.b16 %v361
    %v2186 = vunpack.c.l.b16 %v362
    %v2187 = vunpack.c.h.b16 %v362
    %v2188 = vunpack.c.l.b16 %v363
    %v2189 = vunpack.c.h.b16 %v363
    %v2190 = vunpack.c.l.b16 %v364
    %v2191 = vunpack.c.h.b16 %v364
    %v2192 = vunpack.c.l.b16 %v365
    %v2193 = vunpack.c.h.b16 %v365
    %v2194 = vunpack.c.l.b16 %v366
    %v2195 = vunpack.c.h.b16 %v366
    %v2196 = vunpack.c.l.b16 %v367
    %v2197 = vunpack.c.h.b16 %v367
    %v2198 = vunpack.c.l.b16 %v368
    %v2199 = vunpack.c.h.b16 %v368
    %v2200 = vunpack.c.l.b16 %v369
    %v2201 = vunpack.c.h.b16 %v369
    %v2202 = vunpack.c.l.b16 %v370
    %v2203 = vunpack.c.h.b16 %v370
    %v2204 = vunpack.c.l.b16 %v371
    %v2205 = vunpack.c.h.b16 %v371
    %v2206 = vunpack.c.l.b16 %v372
    %v2207 = vunpack.c.h.b16 %v372
    %v2208 = vunpack.c.l.b16 %v373
    %v2209 = vunpack.c.h.b16 %v373
    %v2210 = vunpack.c.l.b16 %v374
    %v2211 = vunpack.c.h.b16 %v374
    %v2212 = vunpack.c.l.b16 %v375
    %v2213 = vunpack.c.h.b16 %v375
    %v2214 = vunpack.c.l.b16 %v376
    %v2215 = vunpack.c.h.b16 %v376
    %v2216 = vunpack.c.l.b16 %v377
    %v2217 = vunpack.c.h.b16 %v377
    %v2218 = vunpack.c.l.b16 %v378
    %v2219 = vunpack.c.h.b16 %v378
    %v2220 = vunpack.c.l.b16 %v379
    %v2221 = vunpack.c.h.b16 %v379
    %v2222 = vunpack.c.l.b16 %v380
    %v2223 = vunpack.c.h.b16 %v380
    %v2224 = vunpack.c.l.b16 %v381
    %v2225 = vunpack.c.h.b16 %v381
    %v2226 = vunpack.c.l.b16 %v382
    %v2227 = vunpack.c.h.b16 %v382
    %v2228 = vunpack.c.l.b16 %v383
    %v2229 = vunpack.c.h.b16 %v383
    %v2230 = vunpack.c.l.b16 %v384
    %v2231 = vunpack.c.h.b16 %v384
    %v2232 = vunpack.c.l.b16 %v385
    %v2233 = vunpack.c.h.b16 %v385
    %v2234 = vunpack.c.l.b16 %v386
    %v2235 = vunpack.c.h.b16 %v386
    %v2236 = vunpack.c.l.b16 %v387
    %v2237 = vunpack.c.h.b16 %v387
    %v2238 = vunpack.c.l.b16 %v388
    %v2239 = vunpack.c.h.b16 %v388
    %v2240 = vunpack.c.l.b16 %v389
    %v2241 = vunpack.c.h.b16 %v389
    %v2242 = vunpack.c.l.b16 %v390
    %v2243 = vunpack.c.h.b16 %v390
    %v2244 = vunpack.c.l.b16 %v391
    %v2245 = vunpack.c.h.b16 %v391
    %v2246 = vunpack.c.l.b16 %v392
    %v2247 = vunpack.c.h.b16 %v392
    %v2248 = vunpack.c.l.b16 %v393
    %v2249 = vunpack.c.h.b16 %v393
    %v2250 = vunpack.c.l.b16 %v394
    %v2251 = vunpack.c.h.b16 %v394
    %v2252 = vunpack.c.l.b16 %v395
    %v2253 = vunpack.c.h.b16 %v395
    %v2254 = vunpack.c.l.b16 %v396
    %v2255 = vunpack.c.h.b16 %v396
    %v2256 = vunpack.c.l.b16 %v397
    %v2257 = vunpack.c.h.b16 %v397
    %v2258 = vunpack.c.l.b16 %v398
    %v2259 = vunpack.c.h.b16 %v398
    %v2260 = vunpack.c.l.b16 %v399
    %v2261 = vunpack.c.h.b16 %v399
    %v2262 = vunpack.c.l.b16 %v400
    %v2263 = vunpack.c.h.b16 %v400
    %v2264 = vunpack.c.l.b16 %v401
    %v2265 = vunpack.c.h.b16 %v401
    %v2266 = vunpack.c.l.b16 %v402
    %v2267 = vunpack.c.h.b16 %v402
    %v2268 = vunpack.c.l.b16 %v403
    %v2269 = vunpack.c.h.b16 %v403
    %v2270 = vunpack.c.l.b16 %v404
    %v2271 = vunpack.c.h.b16 %v404
    %v2272 = vunpack.c.l.b16 %v405
    %v2273 = vunpack.c.h.b16 %v405
    %v2274 = vunpack.c.l.b16 %v406
    %v2275 = vunpack.c.h.b16 %v406
    %v2276 = vunpack.c.l.b16 %v407
    %v2277 = vunpack.c.h.b16 %v407
    %v2278 = vunpack.c.l.b16 %v408
    %v2279 = vunpack.c.h.b16 %v408
    %v2280 = vunpack.c.l.b16 %v409
    %v2281 = vunpack.c.h.b16 %v409
    %v2282 = vunpack.c.l.b16 %v410
    %v2283 = vunpack.c.h.b16 %v410
    %v2284 = vunpack.c.l.b16 %v411
    %v2285 = vunpack.c.h.b16 %v411
    %v2286 = vunpack.c.l.b16 %v412
    %v2287 = vunpack.c.h.b16 %v412
    %v2288 = vunpack.c.l.b16 %v413
    %v2289 = vunpack.c.h.b16 %v413
    %v2290 = vunpack.c.l.b16 %v414
    %v2291 = vunpack.c.h.b16 %v414
    %v2292 = vunpack.c.l.b16 %v415
    %v2293 = vunpack.c.h.b16 %v415
    %v2294 = vunpack.c.l.b16 %v416
    %v2295 = vunpack.c.h.b16 %v416
    %v2296 = vunpack.c.l.b16 %v417
    %v2297 = vunpack.c.h.b16 %v417
    %v2298 = vunpack.c.l.b16 %v418
    %v2299 = vunpack.c.h.b16 %v418
    %v2300 = vunpack.c.l.b16 %v419
    %v2301 = vunpack.c.h.b16 %v419
    %v2302 = vunpack.c.l.b16 %v420
    %v2303 = vunpack.c.h.b16 %v420
    %v2304 = vunpack.c.l.b16 %v421
    %v2305 = vunpack.c.h.b16 %v421
    %v2306 = vunpack.c.l.b16 %v422
    %v2307 = vunpack.c.h.b16 %v422
    %v2308 = vunpack.c.l.b16 %v423
    %v2309 = vunpack.c.h.b16 %v423
    %v2310 = vunpack.c.l.b16 %v424
    %v2311 = vunpack.c.h.b16 %v424
    %v2312 = vunpack.c.l.b16 %v425
    %v2313 = vunpack.c.h.b16 %v425
    %v2314 = vunpack.c.l.b16 %v426
    %v2315 = vunpack.c.h.b16 %v426
    %v2316 = vunpack.c.l.b16 %v427
    %v2317 = vunpack.c.h.b16 %v427
    %v2318 = vunpack.c.l.b16 %v428
    %v2319 = vunpack.c.h.b16 %v428
    %v2320 = vunpack.c.l.b16 %v429
    %v2321 = vunpack.c.h.b16 %v429
    %v2322 = vunpack.c.l.b16 %v430
    %v2323 = vunpack.c.h.b16 %v430
    %v2324 = vunpack.c.l.b16 %v431
    %v2325 = vunpack.c.h.b16 %v431
    %v2326 = vunpack.c.l.b16 %v432
    %v2327 = vunpack.c.h.b16 %v432
    %v2328 = vunpack.c.l.b16 %v433
    %v2329 = vunpack.c.h.b16 %v433
    %v2330 = vunpack.c.l.b16 %v434
    %v2331 = vunpack.c.h.b16 %v434
    %v2332 = vunpack.c.l.b16 %v435
    %v2333 = vunpack.c.h.b16 %v435
    %v2334 = vunpack.c.l.b16 %v436
    %v2335 = vunpack.c.h.b16 %v436
    %v2336 = vunpack.c.l.b16 %v437
    %v2337 = vunpack.c.h.b16 %v437
    %v2338 = vunpack.c.l.b16 %v438
    %v2339 = vunpack.c.h.b16 %v438
    %v2340 = vunpack.c.l.b16 %v439
    %v2341 = vunpack.c.h.b16 %v439
    %v2342 = vunpack.c.l.b16 %v440
    %v2343 = vunpack.c.h.b16 %v440
    %v2344 = vunpack.c.l.b16 %v441
    %v2345 = vunpack.c.h.b16 %v441
    %v2346 = vunpack.c.l.b16 %v442
    %v2347 = vunpack.c.h.b16 %v442
    %v2348 = vunpack.c.l.b16 %v443
    %v2349 = vunpack.c.h.b16 %v443
    %v2350 = vunpack.c.l.b16 %v444
    %v2351 = vunpack.c.h.b16 %v444
    %v2352 = vunpack.c.l.b16 %v445
    %v2353 = vunpack.c.h.b16 %v445
    %v2354 = vunpack.c.l.b16 %v446
    %v2355 = vunpack.c.h.b16 %v446
    %v2356 = vunpack.c.l.b16 %v447
    %v2357 = vunpack.c.h.b16 %v447
    %v2358 = vunpack.c.l.b16 %v448
    %v2359 = vunpack.c.h.b16 %v448
    %v2360 = vunpack.c.l.b16 %v449
    %v2361 = vunpack.c.h.b16 %v449
    %v2362 = vunpack.c.l.b16 %v450
    %v2363 = vunpack.c.h.b16 %v450
    %v2364 = vunpack.c.l.b16 %v451
    %v2365 = vunpack.c.h.b16 %v451
    %v2366 = vunpack.c.l.b16 %v452
    %v2367 = vunpack.c.h.b16 %v452
    %v2368 = vunpack.c.l.b16 %v453
    %v2369 = vunpack.c.h.b16 %v453
    %v2370 = vunpack.c.l.b16 %v454
    %v2371 = vunpack.c.h.b16 %v454
    %v2372 = vunpack.c.l.b16 %v455
    %v2373 = vunpack.c.h.b16 %v455
    %v2374 = vunpack.c.l.b16 %v456
    %v2375 = vunpack.c.h.b16 %v456
    %v2376 = vunpack.c.l.b16 %v457
    %v2377 = vunpack.c.h.b16 %v457
    %v2378 = vunpack.c.l.b16 %v458
    %v2379 = vunpack.c.h.b16 %v458
    %v2380 = vunpack.c.l.b16 %v459
    %v2381 = vunpack.c.h.b16 %v459
    %v2382 = vunpack.c.l.b16 %v460
    %v2383 = vunpack.c.h.b16 %v460
    %v2384 = vunpack.c.l.b16 %v461
    %v2385 = vunpack.c.h.b16 %v461
    %v2386 = vunpack.c.l.b16 %v462
    %v2387 = vunpack.c.h.b16 %v462
    %v2388 = vunpack.c.l.b16 %v463
    %v2389 = vunpack.c.h.b16 %v463
    %v2390 = vunpack.c.l.b16 %v464
    %v2391 = vunpack.c.h.b16 %v464
    %v2392 = vunpack.c.l.b16 %v465
    %v2393 = vunpack.c.h.b16 %v465
    %v2394 = vunpack.c.l.b16 %v466
    %v2395 = vunpack.c.h.b16 %v466
    %v2396 = vunpack.c.l.b16 %v467
    %v2397 = vunpack.c.h.b16 %v467
    %v2398 = vunpack.c.l.b16 %v468
    %v2399 = vunpack.c.h.b16 %v468
    %v2400 = vunpack.c.l.b16 %v469
    %v2401 = vunpack.c.h.b16 %v469
    %v2402 = vunpack.c.l.b16 %v470
    %v2403 = vunpack.c.h.b16 %v470
    %v2404 = vunpack.c.l.b16 %v471
    %v2405 = vunpack.c.h.b16 %v471
    %v2406 = vunpack.c.l.b16 %v472
    %v2407 = vunpack.c.h.b16 %v472
    %v2408 = vunpack.c.l.b16 %v473
    %v2409 = vunpack.c.h.b16 %v473
    %v2410 = vunpack.c.l.b16 %v474
    %v2411 = vunpack.c.h.b16 %v474
    %v2412 = vunpack.c.l.b16 %v475
    %v2413 = vunpack.c.h.b16 %v475
    %v2414 = vunpack.c.l.b16 %v476
    %v2415 = vunpack.c.h.b16 %v476
    %v2416 = vunpack.c.l.b16 %v477
    %v2417 = vunpack.c.h.b16 %v477
    %v2418 = vunpack.c.l.b16 %v478
    %v2419 = vunpack.c.h.b16 %v478
    %v2420 = vunpack.c.l.b16 %v479
    %v2421 = vunpack.c.h.b16 %v479
    %v2422 = vunpack.c.l.b16 %v480
    %v2423 = vunpack.c.h.b16 %v480
    %v2424 = vunpack.c.l.b16 %v481
    %v2425 = vunpack.c.h.b16 %v481
    %v2426 = vunpack.c.l.b16 %v482
    %v2427 = vunpack.c.h.b16 %v482
    %v2428 = vunpack.c.l.b16 %v483
    %v2429 = vunpack.c.h.b16 %v483
    %v2430 = vunpack.c.l.b16 %v484
    %v2431 = vunpack.c.h.b16 %v484
    %v2432 = vunpack.c.l.b16 %v485
    %v2433 = vunpack.c.h.b16 %v485
    %v2434 = vunpack.c.l.b16 %v486
    %v2435 = vunpack.c.h.b16 %v486
    %v2436 = vunpack.c.l.b16 %v487
    %v2437 = vunpack.c.h.b16 %v487
    %v2438 = vunpack.c.l.b16 %v488
    %v2439 = vunpack.c.h.b16 %v488
    %v2440 = vunpack.c.l.b16 %v489
    %v2441 = vunpack.c.h.b16 %v489
    %v2442 = vunpack.c.l.b16 %v490
    %v2443 = vunpack.c.h.b16 %v490
    %v2444 = vunpack.c.l.b16 %v491
    %v2445 = vunpack.c.h.b16 %v491
    %v2446 = vunpack.c.l.b16 %v492
    %v2447 = vunpack.c.h.b16 %v492
    %v2448 = vunpack.c.l.b16 %v493
    %v2449 = vunpack.c.h.b16 %v493
    %v2450 = vunpack.c.l.b16 %v494
    %v2451 = vunpack.c.h.b16 %v494
    %v2452 = vunpack.c.l.b16 %v495
    %v2453 = vunpack.c.h.b16 %v495
    %v2454 = vunpack.c.l.b16 %v496
    %v2455 = vunpack.c.h.b16 %v496
    %v2456 = vunpack.c.l.b16 %v497
    %v2457 = vunpack.c.h.b16 %v497
    %v2458 = vunpack.c.l.b16 %v498
    %v2459 = vunpack.c.h.b16 %v498
    %v2460 = vunpack.c.l.b16 %v499
    %v2461 = vunpack.c.h.b16 %v499
    %v2462 = vunpack.c.l.b16 %v500
    %v2463 = vunpack.c.h.b16 %v500
    %v2464 = vunpack.c.l.b16 %v501
    %v2465 = vunpack.c.h.b16 %v501
    %v2466 = vunpack.c.l.b16 %v502
    %v2467 = vunpack.c.h.b16 %v502
    %v2468 = vunpack.c.l.b16 %v503
    %v2469 = vunpack.c.h.b16 %v503
    %v2470 = vunpack.c.l.b16 %v504
    %v2471 = vunpack.c.h.b16 %v504
    %v2472 = vunpack.c.l.b16 %v505
    %v2473 = vunpack.c.h.b16 %v505
    %v2474 = vunpack.c.l.b16 %v506
    %v2475 = vunpack.c.h.b16 %v506
    %v2476 = vunpack.c.l.b16 %v507
    %v2477 = vunpack.c.h.b16 %v507
    %v2478 = vunpack.c.l.b16 %v508
    %v2479 = vunpack.c.h.b16 %v508
    %v2480 = vunpack.c.l.b16 %v509
    %v2481 = vunpack.c.h.b16 %v509
    %v2482 = vunpack.c.l.b16 %v510
    %v2483 = vunpack.c.h.b16 %v510
    %v2484 = vunpack.c.l.b16 %v511
    %v2485 = vunpack.c.h.b16 %v511
    %v2486 = vunpack.c.l.b16 %v512
    %v2487 = vunpack.c.h.b16 %v512
    %v2488 = vunpack.c.l.b16 %v513
    %v2489 = vunpack.c.h.b16 %v513
    %v2490 = vunpack.c.l.b16 %v514
    %v2491 = vunpack.c.h.b16 %v514
    %v2492 = vunpack.c.l.b16 %v515
    %v2493 = vunpack.c.h.b16 %v515
    %v2494 = vunpack.c.l.b16 %v516
    %v2495 = vunpack.c.h.b16 %v516
    %v2496 = vunpack.c.l.b16 %v517
    %v2497 = vunpack.c.h.b16 %v517
    %v2498 = vunpack.c.l.b16 %v518
    %v2499 = vunpack.c.h.b16 %v518
    %v2500 = vunpack.c.l.b16 %v519
    %v2501 = vunpack.c.h.b16 %v519
    %v2502 = vunpack.c.l.b16 %v520
    %v2503 = vunpack.c.h.b16 %v520
    %v2504 = vunpack.c.l.b16 %v521
    %v2505 = vunpack.c.h.b16 %v521
    %v2506 = vunpack.c.l.b16 %v522
    %v2507 = vunpack.c.h.b16 %v522
    %v2508 = vunpack.c.l.b16 %v523
    %v2509 = vunpack.c.h.b16 %v523
    %v2510 = vunpack.c.l.b16 %v524
    %v2511 = vunpack.c.h.b16 %v524
    %v2512 = vunpack.c.l.b16 %v525
    %v2513 = vunpack.c.h.b16 %v525
    %v2514 = vunpack.c.l.b16 %v526
    %v2515 = vunpack.c.h.b16 %v526
    %v2516 = vunpack.c.l.b16 %v527
    %v2517 = vunpack.c.h.b16 %v527
    %v2518 = vunpack.c.l.b16 %v528
    %v2519 = vunpack.c.h.b16 %v528
    %v2520 = vunpack.c.l.b16 %v529
    %v2521 = vunpack.c.h.b16 %v529
    %v2522 = vunpack.c.l.b16 %v530
    %v2523 = vunpack.c.h.b16 %v530
    %v2524 = vunpack.c.l.b16 %v531
    %v2525 = vunpack.c.h.b16 %v531
    %v2526 = vunpack.c.l.b16 %v532
    %v2527 = vunpack.c.h.b16 %v532
    %v2528 = vunpack.c.l.b16 %v533
    %v2529 = vunpack.c.h.b16 %v533
    %v2530 = vunpack.c.l.b16 %v534
    %v2531 = vunpack.c.h.b16 %v534
    %v2532 = vunpack.c.l.b16 %v535
    %v2533 = vunpack.c.h.b16 %v535
    %v2534 = vunpack.c.l.b16 %v536
    %v2535 = vunpack.c.h.b16 %v536
    %v2536 = vunpack.c.l.b16 %v537
    %v2537 = vunpack.c.h.b16 %v537
    %v2538 = vunpack.c.l.b16 %v538
    %v2539 = vunpack.c.h.b16 %v538
    %v2540 = vunpack.c.l.b16 %v539
    %v2541 = vunpack.c.h.b16 %v539
    %v2542 = vunpack.c.l.b16 %v540
    %v2543 = vunpack.c.h.b16 %v540
    %v2544 = vunpack.c.l.b16 %v541
    %v2545 = vunpack.c.h.b16 %v541
    %v2546 = vunpack.c.l.b16 %v542
    %v2547 = vunpack.c.h.b16 %v542
    %v2548 = vunpack.c.l.b16 %v543
    %v2549 = vunpack.c.h.b16 %v543
    %v2550 = vunpack.c.l.b16 %v544
    %v2551 = vunpack.c.h.b16 %v544
    %v2552 = vunpack.c.l.b16 %v545
    %v2553 = vunpack.c.h.b16 %v545
    %v2554 = vunpack.c.l.b16 %v546
    %v2555 = vunpack.c.h.b16 %v546
    %v2556 = vunpack.c.l.b16 %v547
    %v2557 = vunpack.c.h.b16 %v547
    %v2558 = vunpack.c.l.b16 %v548
    %v2559 = vunpack.c.h.b16 %v548
    %v2560 = vunpack.c.l.b16 %v549
    %v2561 = vunpack.c.h.b16 %v549
    %v2562 = vunpack.c.l.b16 %v550
    %v2563 = vunpack.c.h.b16 %v550
    %v2564 = vunpack.c.l.b16 %v551
    %v2565 = vunpack.c.h.b16 %v551
    %v2566 = vunpack.c.l.b16 %v552
    %v2567 = vunpack.c.h.b16 %v552
    %v2568 = vunpack.c.l.b16 %v553
    %v2569 = vunpack.c.h.b16 %v553
    %v2570 = vunpack.c.l.b16 %v554
    %v2571 = vunpack.c.h.b16 %v554
    %v2572 = vunpack.c.l.b16 %v555
    %v2573 = vunpack.c.h.b16 %v555
    %v2574 = vunpack.c.l.b16 %v556
    %v2575 = vunpack.c.h.b16 %v556
    %v2576 = vunpack.c.l.b16 %v557
    %v2577 = vunpack.c.h.b16 %v557
    %v2578 = vunpack.c.l.b16 %v558
    %v2579 = vunpack.c.h.b16 %v558
    %v2580 = vunpack.c.l.b16 %v559
    %v2581 = vunpack.c.h.b16 %v559
    %v2582 = vunpack.c.l.b16 %v560
    %v2583 = vunpack.c.h.b16 %v560
    %v2584 = vunpack.c.l.b16 %v561
    %v2585 = vunpack.c.h.b16 %v561
    %v2586 = vunpack.c.l.b16 %v562
    %v2587 = vunpack.c.h.b16 %v562
    %v2588 = vunpack.c.l.b16 %v563
    %v2589 = vunpack.c.h.b16 %v563
    %v2590 = vunpack.c.l.b16 %v564
    %v2591 = vunpack.c.h.b16 %v564
    %v2592 = vunpack.c.l.b16 %v565
    %v2593 = vunpack.c.h.b16 %v565
    %v2594 = vunpack.c.l.b16 %v566
    %v2595 = vunpack.c.h.b16 %v566
    %v2596 = vunpack.c.l.b16 %v567
    %v2597 = vunpack.c.h.b16 %v567
    %v2598 = vunpack.c.l.b16 %v568
    %v2599 = vunpack.c.h.b16 %v568
    %v2600 = vunpack.c.l.b16 %v569
    %v2601 = vunpack.c.h.b16 %v569
    %v2602 = vunpack.c.l.b16 %v570
    %v2603 = vunpack.c.h.b16 %v570
    %v2604 = vunpack.c.l.b16 %v571
    %v2605 = vunpack.c.h.b16 %v571
    %v2606 = vunpack.c.l.b16 %v572
    %v2607 = vunpack.c.h.b16 %v572
    %v2608 = vunpack.c.l.b16 %v573
    %v2609 = vunpack.c.h.b16 %v573
    %v2610 = vunpack.c.l.b16 %v574
    %v2611 = vunpack.c.h.b16 %v574
    %v2612 = vunpack.c.l.b16 %v575
    %v2613 = vunpack.c.h.b16 %v575
    %v2614 = vunpack.c.l.b16 %v576
    %v2615 = vunpack.c.h.b16 %v576
    %v2616 = vunpack.c.l.b16 %v577
    %v2617 = vunpack.c.h.b16 %v577
    %v2618 = vunpack.c.l.b16 %v578
    %v2619 = vunpack.c.h.b16 %v578
    %v2620 = vunpack.c.l.b16 %v579
    %v2621 = vunpack.c.h.b16 %v579
    %v2622 = vunpack.c.l.b16 %v580
    %v2623 = vunpack.c.h.b16 %v580
    %v2624 = vunpack.c.l.b16 %v581
    %v2625 = vunpack.c.h.b16 %v581
    %v2626 = vunpack.c.l.b16 %v582
    %v2627 = vunpack.c.h.b16 %v582
    %v2628 = vunpack.c.l.b16 %v583
    %v2629 = vunpack.c.h.b16 %v583
    %v2630 = vunpack.c.l.b16 %v584
    %v2631 = vunpack.c.h.b16 %v584
    %v2632 = vunpack.c.l.b16 %v585
    %v2633 = vunpack.c.h.b16 %v585
    %v2634 = vunpack.c.l.b16 %v586
    %v2635 = vunpack.c.h.b16 %v586
    %v2636 = vunpack.c.l.b16 %v587
    %v2637 = vunpack.c.h.b16 %v587
    %v2638 = vunpack.c.l.b16 %v588
    %v2639 = vunpack.c.h.b16 %v588
    %v2640 = vunpack.c.l.b16 %v589
    %v2641 = vunpack.c.h.b16 %v589
    %v2642 = vunpack.c.l.b16 %v590
    %v2643 = vunpack.c.h.b16 %v590
    %v2644 = vunpack.c.l.b16 %v591
    %v2645 = vunpack.c.h.b16 %v591
    %v2646 = vunpack.c.l.b16 %v592
    %v2647 = vunpack.c.h.b16 %v592
    %v2648 = vunpack.c.l.b16 %v593
    %v2649 = vunpack.c.h.b16 %v593
    %v2650 = vunpack.c.l.b16 %v594
    %v2651 = vunpack.c.h.b16 %v594
    %v2652 = vunpack.c.l.b16 %v595
    %v2653 = vunpack.c.h.b16 %v595
    %v2654 = vunpack.c.l.b16 %v596
    %v2655 = vunpack.c.h.b16 %v596
    %v2656 = vunpack.c.l.b16 %v597
    %v2657 = vunpack.c.h.b16 %v597
    %v2658 = vunpack.c.l.b16 %v598
    %v2659 = vunpack.c.h.b16 %v598
    %v2660 = vunpack.c.l.b16 %v599
    %v2661 = vunpack.c.h.b16 %v599
    %v2662 = vunpack.c.l.b16 %v600
    %v2663 = vunpack.c.h.b16 %v600
    %v2664 = vunpack.c.l.b16 %v601
    %v2665 = vunpack.c.h.b16 %v601
    %v2666 = vunpack.c.l.b16 %v602
    %v2667 = vunpack.c.h.b16 %v602
    %v2668 = vunpack.c.l.b16 %v603
    %v2669 = vunpack.c.h.b16 %v603
    %v2670 = vunpack.c.l.b16 %v604
    %v2671 = vunpack.c.h.b16 %v604
    %v2672 = vunpack.c.l.b16 %v605
    %v2673 = vunpack.c.h.b16 %v605
    %v2674 = vunpack.c.l.b16 %v606
    %v2675 = vunpack.c.h.b16 %v606
    %v2676 = vunpack.c.l.b16 %v607
    %v2677 = vunpack.c.h.b16 %v607
    %v2678 = vunpack.c.l.b16 %v608
    %v2679 = vunpack.c.h.b16 %v608
    %v2680 = vunpack.c.l.b16 %v609
    %v2681 = vunpack.c.h.b16 %v609
    %v2682 = vunpack.c.l.b16 %v610
    %v2683 = vunpack.c.h.b16 %v610
    %v2684 = vunpack.c.l.b16 %v611
    %v2685 = vunpack.c.h.b16 %v611
    %v2686 = vunpack.c.l.b16 %v612
    %v2687 = vunpack.c.h.b16 %v612
    %v2688 = vunpack.c.l.b16 %v613
    %v2689 = vunpack.c.h.b16 %v613
    %v2690 = vunpack.c.l.b16 %v614
    %v2691 = vunpack.c.h.b16 %v614
    %v2692 = vunpack.c.l.b16 %v615
    %v2693 = vunpack.c.h.b16 %v615
    %v2694 = vunpack.c.l.b16 %v616
    %v2695 = vunpack.c.h.b16 %v616
    %v2696 = vunpack.c.l.b16 %v617
    %v2697 = vunpack.c.h.b16 %v617
    %v2698 = vunpack.c.l.b16 %v618
    %v2699 = vunpack.c.h.b16 %v618
    %v2700 = vunpack.c.l.b16 %v619
    %v2701 = vunpack.c.h.b16 %v619
    %v2702 = vunpack.c.l.b16 %v620
    %v2703 = vunpack.c.h.b16 %v620
    %v2704 = vunpack.c.l.b16 %v621
    %v2705 = vunpack.c.h.b16 %v621
    %v2706 = vunpack.c.l.b16 %v622
    %v2707 = vunpack.c.h.b16 %v622
    %v2708 = vunpack.c.l.b16 %v623
    %v2709 = vunpack.c.h.b16 %v623
    %v2710 = vunpack.c.l.b16 %v624
    %v2711 = vunpack.c.h.b16 %v624
    %v2712 = vunpack.c.l.b16 %v625
    %v2713 = vunpack.c.h.b16 %v625
    %v2714 = vunpack.c.l.b16 %v626
    %v2715 = vunpack.c.h.b16 %v626
    %v2716 = vunpack.c.l.b16 %v627
    %v2717 = vunpack.c.h.b16 %v627
    %v2718 = vunpack.c.l.b16 %v628
    %v2719 = vunpack.c.h.b16 %v628
    %v2720 = vunpack.c.l.b16 %v629
    %v2721 = vunpack.c.h.b16 %v629
    %v2722 = vunpack.c.l.b16 %v630
    %v2723 = vunpack.c.h.b16 %v630
    %v2724 = vunpack.c.l.b16 %v631
    %v2725 = vunpack.c.h.b16 %v631
    %v2726 = vunpack.c.l.b16 %v632
    %v2727 = vunpack.c.h.b16 %v632
    %v2728 = vunpack.c.l.b16 %v633
    %v2729 = vunpack.c.h.b16 %v633
    %v2730 = vunpack.c.l.b16 %v634
    %v2731 = vunpack.c.h.b16 %v634
    %v2732 = vunpack.c.l.b16 %v635
    %v2733 = vunpack.c.h.b16 %v635
    %v2734 = vunpack.c.l.b16 %v636
    %v2735 = vunpack.c.h.b16 %v636
    %v2736 = vunpack.c.l.b16 %v637
    %v2737 = vunpack.c.h.b16 %v637
    %v2738 = vunpack.c.l.b16 %v638
    %v2739 = vunpack.c.h.b16 %v638
    %v2740 = vunpack.c.l.b16 %v639
    %v2741 = vunpack.c.h.b16 %v639
    %v2742 = vunpack.c.l.b16 %v640
    %v2743 = vunpack.c.h.b16 %v640
    %v2744 = vunpack.c.l.b16 %v641
    %v2745 = vunpack.c.h.b16 %v641
    %v2746 = vunpack.c.l.b16 %v642
    %v2747 = vunpack.c.h.b16 %v642
    %v2748 = vunpack.c.l.b16 %v643
    %v2749 = vunpack.c.h.b16 %v643
    %v2750 = vunpack.c.l.b16 %v644
    %v2751 = vunpack.c.h.b16 %v644
    %v2752 = vunpack.c.l.b16 %v645
    %v2753 = vunpack.c.h.b16 %v645
    %v2754 = vunpack.c.l.b16 %v646
    %v2755 = vunpack.c.h.b16 %v646
    %v2756 = vunpack.c.l.b16 %v647
    %v2757 = vunpack.c.h.b16 %v647
    %v2758 = vunpack.c.l.b16 %v648
    %v2759 = vunpack.c.h.b16 %v648
    %v2760 = vunpack.c.l.b16 %v649
    %v2761 = vunpack.c.h.b16 %v649
    %v2762 = vunpack.c.l.b16 %v650
    %v2763 = vunpack.c.h.b16 %v650
    %v2764 = vunpack.c.l.b16 %v651
    %v2765 = vunpack.c.h.b16 %v651
    %v2766 = vunpack.c.l.b16 %v652
    %v2767 = vunpack.c.h.b16 %v652
    %v2768 = vunpack.c.l.b16 %v653
    %v2769 = vunpack.c.h.b16 %v653
    %v2770 = vunpack.c.l.b16 %v654
    %v2771 = vunpack.c.h.b16 %v654
    %v2772 = vunpack.c.l.b16 %v655
    %v2773 = vunpack.c.h.b16 %v655
    %v2774 = vunpack.c.l.b16 %v656
    %v2775 = vunpack.c.h.b16 %v656
    %v2776 = vunpack.c.l.b16 %v657
    %v2777 = vunpack.c.h.b16 %v657
    %v2778 = vunpack.c.l.b16 %v658
    %v2779 = vunpack.c.h.b16 %v658
    %v2780 = vunpack.c.l.b16 %v659
    %v2781 = vunpack.c.h.b16 %v659
    %v2782 = vunpack.c.l.b16 %v660
    %v2783 = vunpack.c.h.b16 %v660
    %v2784 = vunpack.c.l.b16 %v661
    %v2785 = vunpack.c.h.b16 %v661
    %v2786 = vunpack.c.l.b16 %v662
    %v2787 = vunpack.c.h.b16 %v662
    %v2788 = vunpack.c.l.b16 %v663
    %v2789 = vunpack.c.h.b16 %v663
    %v2790 = vunpack.c.l.b16 %v664
    %v2791 = vunpack.c.h.b16 %v664
    %v2792 = vunpack.c.l.b16 %v665
    %v2793 = vunpack.c.h.b16 %v665
    %v2794 = vunpack.c.l.b16 %v666
    %v2795 = vunpack.c.h.b16 %v666
    %v2796 = vunpack.c.l.b16 %v667
    %v2797 = vunpack.c.h.b16 %v667
    %v2798 = vunpack.c.l.b16 %v668
    %v2799 = vunpack.c.h.b16 %v668
    %v2800 = vunpack.c.l.b16 %v669
    %v2801 = vunpack.c.h.b16 %v669
    %v2802 = vunpack.c.l.b16 %v670
    %v2803 = vunpack.c.h.b16 %v670
    %v2804 = vunpack.c.l.b16 %v671
    %v2805 = vunpack.c.h.b16 %v671
    %v2806 = vunpack.c.l.b16 %v672
    %v2807 = vunpack.c.h.b16 %v672
    %v2808 = vunpack.c.l.b16 %v673
    %v2809 = vunpack.c.h.b16 %v673
    %v2810 = vunpack.c.l.b16 %v674
    %v2811 = vunpack.c.h.b16 %v674
    %v2812 = vunpack.c.l.b16 %v675
    %v2813 = vunpack.c.h.b16 %v675
    %v2814 = vunpack.c.l.b16 %v676
    %v2815 = vunpack.c.h.b16 %v676
    %v2816 = vunpack.c.l.b16 %v677
    %v2817 = vunpack.c.h.b16 %v677
    %v2818 = vunpack.c.l.b16 %v678
    %v2819 = vunpack.c.h.b16 %v678
    %v2820 = vunpack.c.l.b16 %v679
    %v2821 = vunpack.c.h.b16 %v679
    %v2822 = vunpack.c.l.b16 %v680
    %v2823 = vunpack.c.h.b16 %v680
    %v2824 = vunpack.c.l.b16 %v681
    %v2825 = vunpack.c.h.b16 %v681
    %v2826 = vunpack.c.l.b16 %v682
    %v2827 = vunpack.c.h.b16 %v682
    %v2828 = vunpack.c.l.b16 %v683
    %v2829 = vunpack.c.h.b16 %v683
    %v2830 = vunpack.c.l.b16 %v684
    %v2831 = vunpack.c.h.b16 %v684
    %v2832 = vunpack.c.l.b16 %v685
    %v2833 = vunpack.c.h.b16 %v685
    %v2834 = vunpack.c.l.b16 %v686
    %v2835 = vunpack.c.h.b16 %v686
    %v2836 = vunpack.c.l.b16 %v687
    %v2837 = vunpack.c.h.b16 %v687
    %v2838 = vunpack.c.l.b16 %v688
    %v2839 = vunpack.c.h.b16 %v688
    %v2840 = vunpack.c.l.b16 %v689
    %v2841 = vunpack.c.h.b16 %v689
    %v2842 = vunpack.c.l.b16 %v690
    %v2843 = vunpack.c.h.b16 %v690
    %v2844 = vunpack.c.l.b16 %v691
    %v2845 = vunpack.c.h.b16 %v691
    %v2846 = vunpack.c.l.b16 %v692
    %v2847 = vunpack.c.h.b16 %v692
    %v2848 = vunpack.c.l.b16 %v693
    %v2849 = vunpack.c.h.b16 %v693
    %v2850 = vunpack.c.l.b16 %v694
    %v2851 = vunpack.c.h.b16 %v694
    %v2852 = vunpack.c.l.b16 %v695
    %v2853 = vunpack.c.h.b16 %v695
    %v2854 = vunpack.c.l.b16 %v696
    %v2855 = vunpack.c.h.b16 %v696
    %v2856 = vunpack.c.l.b16 %v697
    %v2857 = vunpack.c.h.b16 %v697
    %v2858 = vunpack.c.l.b16 %v698
    %v2859 = vunpack.c.h.b16 %v698
    %v2860 = vunpack.c.l.b16 %v699
    %v2861 = vunpack.c.h.b16 %v699
    %v2862 = vunpack.c.l.b16 %v700
    %v2863 = vunpack.c.h.b16 %v700
    %v2864 = vunpack.c.l.b16 %v701
    %v2865 = vunpack.c.h.b16 %v701
    %v2866 = vunpack.c.l.b16 %v702
    %v2867 = vunpack.c.h.b16 %v702
    %v2868 = vunpack.c.l.b16 %v703
    %v2869 = vunpack.c.h.b16 %v703
    %v2870 = vunpack.c.l.b16 %v704
    %v2871 = vunpack.c.h.b16 %v704
    %v2872 = vunpack.c.l.b16 %v705
    %v2873 = vunpack.c.h.b16 %v705
    %v2874 = vunpack.c.l.b16 %v706
    %v2875 = vunpack.c.h.b16 %v706
    %v2876 = vunpack.c.l.b16 %v707
    %v2877 = vunpack.c.h.b16 %v707
    %v2878 = vunpack.c.l.b16 %v708
    %v2879 = vunpack.c.h.b16 %v708
    %v2880 = vunpack.c.l.b16 %v709
    %v2881 = vunpack.c.h.b16 %v709
    %v2882 = vunpack.c.l.b16 %v710
    %v2883 = vunpack.c.h.b16 %v710
    %v2884 = vunpack.c.l.b16 %v711
    %v2885 = vunpack.c.h.b16 %v711
    %v2886 = vunpack.c.l.b16 %v712
    %v2887 = vunpack.c.h.b16 %v712
    %v2888 = vunpack.c.l.b16 %v713
    %v2889 = vunpack.c.h.b16 %v713
    %v2890 = vunpack.c.l.b16 %v714
    %v2891 = vunpack.c.h.b16 %v714
    %v2892 = vunpack.c.l.b16 %v715
    %v2893 = vunpack.c.h.b16 %v715
    %v2894 = vunpack.c.l.b16 %v716
    %v2895 = vunpack.c.h.b16 %v716
    %v2896 = vunpack.c.l.b16 %v717
    %v2897 = vunpack.c.h.b16 %v717
    %v2898 = vunpack.c.l.b16 %v718
    %v2899 = vunpack.c.h.b16 %v718
    %v2900 = vunpack.c.l.b16 %v719
    %v2901 = vunpack.c.h.b16 %v719
    %v2902 = vunpack.c.l.b16 %v720
    %v2903 = vunpack.c.h.b16 %v720
    %v2904 = vunpack.c.l.b16 %v721
    %v2905 = vunpack.c.h.b16 %v721
    %v2906 = vunpack.c.l.b16 %v722
    %v2907 = vunpack.c.h.b16 %v722
    %v2908 = vunpack.c.l.b16 %v723
    %v2909 = vunpack.c.h.b16 %v723
    %v2910 = vunpack.c.l.b16 %v724
    %v2911 = vunpack.c.h.b16 %v724
    %v2912 = vunpack.c.l.b16 %v725
    %v2913 = vunpack.c.h.b16 %v725
    %v2914 = vunpack.c.l.b16 %v726
    %v2915 = vunpack.c.h.b16 %v726
    %v2916 = vunpack.c.l.b16 %v727
    %v2917 = vunpack.c.h.b16 %v727
    %v2918 = vunpack.c.l.b16 %v728
    %v2919 = vunpack.c.h.b16 %v728
    %v2920 = vunpack.c.l.b16 %v729
    %v2921 = vunpack.c.h.b16 %v729
    %v2922 = vunpack.c.l.b16 %v730
    %v2923 = vunpack.c.h.b16 %v730
    %v2924 = vunpack.c.l.b16 %v731
    %v2925 = vunpack.c.h.b16 %v731
    %v2926 = vunpack.c.l.b16 %v732
    %v2927 = vunpack.c.h.b16 %v732
    %v2928 = vunpack.c.l.b16 %v733
    %v2929 = vunpack.c.h.b16 %v733
    %v2930 = vunpack.c.l.b16 %v734
    %v2931 = vunpack.c.h.b16 %v734
    %v2932 = vunpack.c.l.b16 %v735
    %v2933 = vunpack.c.h.b16 %v735
    %v2934 = vunpack.c.l.b16 %v736
    %v2935 = vunpack.c.h.b16 %v736
    %v2936 = vunpack.c.l.b16 %v737
    %v2937 = vunpack.c.h.b16 %v737
    %v2938 = vunpack.c.l.b16 %v738
    %v2939 = vunpack.c.h.b16 %v738
    %v2940 = vunpack.c.l.b16 %v739
    %v2941 = vunpack.c.h.b16 %v739
    %v2942 = vunpack.c.l.b16 %v740
    %v2943 = vunpack.c.h.b16 %v740
    %v2944 = vunpack.c.l.b16 %v741
    %v2945 = vunpack.c.h.b16 %v741
    %v2946 = vunpack.c.l.b16 %v742
    %v2947 = vunpack.c.h.b16 %v742
    %v2948 = vunpack.c.l.b16 %v743
    %v2949 = vunpack.c.h.b16 %v743
    %v2950 = vunpack.c.l.b16 %v744
    %v2951 = vunpack.c.h.b16 %v744
    %v2952 = vunpack.c.l.b16 %v745
    %v2953 = vunpack.c.h.b16 %v745
    %v2954 = vunpack.c.l.b16 %v746
    %v2955 = vunpack.c.h.b16 %v746
    %v2956 = vunpack.c.l.b16 %v747
    %v2957 = vunpack.c.h.b16 %v747
    %v2958 = vunpack.c.l.b16 %v748
    %v2959 = vunpack.c.h.b16 %v748
    %v2960 = vunpack.c.l.b16 %v749
    %v2961 = vunpack.c.h.b16 %v749
    %v2962 = vunpack.c.l.b16 %v750
    %v2963 = vunpack.c.h.b16 %v750
    %v2964 = vunpack.c.l.b16 %v751
    %v2965 = vunpack.c.h.b16 %v751
    %v2966 = vunpack.c.l.b16 %v752
    %v2967 = vunpack.c.h.b16 %v752
    %v2968 = vunpack.c.l.b16 %v753
    %v2969 = vunpack.c.h.b16 %v753
    %v2970 = vunpack.c.l.b16 %v754
    %v2971 = vunpack.c.h.b16 %v754
    %v2972 = vunpack.c.l.b16 %v755
    %v2973 = vunpack.c.h.b16 %v755
    %v2974 = vunpack.c.l.b16 %v756
    %v2975 = vunpack.c.h.b16 %v756
    %v2976 = vunpack.c.l.b16 %v757
    %v2977 = vunpack.c.h.b16 %v757
    %v2978 = vunpack.c.l.b16 %v758
    %v2979 = vunpack.c.h.b16 %v758
    %v2980 = vunpack.c.l.b16 %v759
    %v2981 = vunpack.c.h.b16 %v759
    %v2982 = vunpack.c.l.b16 %v760
    %v2983 = vunpack.c.h.b16 %v760
    %v2984 = vunpack.c.l.b16 %v761
    %v2985 = vunpack.c.h.b16 %v761
    %v2986 = vunpack.c.l.b16 %v762
    %v2987 = vunpack.c.h.b16 %v762
    %v2988 = vunpack.c.l.b16 %v763
    %v2989 = vunpack.c.h.b16 %v763
    %v2990 = vunpack.c.l.b16 %v764
    %v2991 = vunpack.c.h.b16 %v764
    %v2992 = vunpack.c.l.b16 %v765
    %v2993 = vunpack.c.h.b16 %v765
    %v2994 = vunpack.c.l.b16 %v766
    %v2995 = vunpack.c.h.b16 %v766
    %v2996 = vunpack.c.l.b16 %v767
    %v2997 = vunpack.c.h.b16 %v767
    %v2998 = vunpack.c.l.b16 %v768
    %v2999 = vunpack.c.h.b16 %v768
    %v3000 = vunpack.c.l.b16 %v769
    %v3001 = vunpack.c.h.b16 %v769
    %v3002 = vunpack.c.l.b16 %v770
    %v3003 = vunpack.c.h.b16 %v770
    %v3004 = vunpack.c.l.b16 %v771
    %v3005 = vunpack.c.h.b16 %v771
    %v3006 = vunpack.c.l.b16 %v772
    %v3007 = vunpack.c.h.b16 %v772
    %v3008 = vunpack.c.l.b16 %v773
    %v3009 = vunpack.c.h.b16 %v773
    %v3010 = vunpack.c.l.b16 %v774
    %v3011 = vunpack.c.h.b16 %v774
    %v3012 = vunpack.c.l.b16 %v775
    %v3013 = vunpack.c.h.b16 %v775
    %v3014 = vunpack.c.l.b16 %v776
    %v3015 = vunpack.c.h.b16 %v776
    %v3016 = vunpack.c.l.b16 %v777
    %v3017 = vunpack.c.h.b16 %v777
    %v3018 = vunpack.c.l.b16 %v778
    %v3019 = vunpack.c.h.b16 %v778
    %v3020 = vunpack.c.l.b16 %v779
    %v3021 = vunpack.c.h.b16 %v779
    %v3022 = vunpack.c.l.b16 %v780
    %v3023 = vunpack.c.h.b16 %v780
    %v3024 = vunpack.c.l.b16 %v781
    %v3025 = vunpack.c.h.b16 %v781
    %v3026 = vunpack.c.l.b16 %v782
    %v3027 = vunpack.c.h.b16 %v782
    %v3028 = vunpack.c.l.b16 %v783
    %v3029 = vunpack.c.h.b16 %v783
    %v3030 = vunpack.c.l.b16 %v784
    %v3031 = vunpack.c.h.b16 %v784
    %v3032 = vunpack.c.l.b16 %v785
    %v3033 = vunpack.c.h.b16 %v785
    %v3034 = vunpack.c.l.b16 %v786
    %v3035 = vunpack.c.h.b16 %v786
    %v3036 = vunpack.c.l.b16 %v787
    %v3037 = vunpack.c.h.b16 %v787
    %v3038 = vunpack.c.l.b16 %v788
    %v3039 = vunpack.c.h.b16 %v788
    %v3040 = vunpack.c.l.b16 %v789
    %v3041 = vunpack.c.h.b16 %v789
    %v3042 = vunpack.c.l.b16 %v790
    %v3043 = vunpack.c.h.b16 %v790
    %v3044 = vunpack.c.l.b16 %v791
    %v3045 = vunpack.c.h.b16 %v791
    %v3046 = vunpack.c.l.b16 %v792
    %v3047 = vunpack.c.h.b16 %v792
    %v3048 = vunpack.c.l.b16 %v793
    %v3049 = vunpack.c.h.b16 %v793
    %v3050 = vunpack.c.l.b16 %v794
    %v3051 = vunpack.c.h.b16 %v794
    %v3052 = vunpack.c.l.b16 %v795
    %v3053 = vunpack.c.h.b16 %v795
    %v3054 = vunpack.c.l.b16 %v796
    %v3055 = vunpack.c.h.b16 %v796
    %v3056 = vunpack.c.l.b16 %v797
    %v3057 = vunpack.c.h.b16 %v797
    %v3058 = vunpack.c.l.b16 %v798
    %v3059 = vunpack.c.h.b16 %v798
    %v3060 = vunpack.c.l.b16 %v799
    %v3061 = vunpack.c.h.b16 %v799
    %v3062 = vunpack.c.l.b16 %v800
    %v3063 = vunpack.c.h.b16 %v800
    %v3064 = vunpack.c.l.b16 %v801
    %v3065 = vunpack.c.h.b16 %v801
    %v3066 = vunpack.c.l.b16 %v802
    %v3067 = vunpack.c.h.b16 %v802
    %v3068 = vunpack.c.l.b16 %v803
    %v3069 = vunpack.c.h.b16 %v803
    %v3070 = vunpack.c.l.b16 %v804
    %v3071 = vunpack.c.h.b16 %v804
    %v3072 = vunpack.c.l.b16 %v805
    %v3073 = vunpack.c.h.b16 %v805
    %v3074 = vunpack.c.l.b16 %v806
    %v3075 = vunpack.c.h.b16 %v806
    %v3076 = vunpack.c.l.b16 %v807
    %v3077 = vunpack.c.h.b16 %v807
    %v3078 = vunpack.c.l.b16 %v808
    %v3079 = vunpack.c.h.b16 %v808
    %v3080 = vunpack.c.l.b16 %v809
    %v3081 = vunpack.c.h.b16 %v809
    %v3082 = vunpack.c.l.b16 %v810
    %v3083 = vunpack.c.h.b16 %v810
    %v3084 = vunpack.c.l.b16 %v811
    %v3085 = vunpack.c.h.b16 %v811
    %v3086 = vunpack.c.l.b16 %v812
    %v3087 = vunpack.c.h.b16 %v812
    %v3088 = vunpack.c.l.b16 %v813
    %v3089 = vunpack.c.h.b16 %v813
    %v3090 = vunpack.c.l.b16 %v814
    %v3091 = vunpack.c.h.b16 %v814
    %v3092 = vunpack.c.l.b16 %v815
    %v3093 = vunpack.c.h.b16 %v815
    %v3094 = vunpack.c.l.b16 %v816
    %v3095 = vunpack.c.h.b16 %v816
    %v3096 = vunpack.c.l.b16 %v817
    %v3097 = vunpack.c.h.b16 %v817
    %v3098 = vunpack.c.l.b16 %v818
    %v3099 = vunpack.c.h.b16 %v818
    %v3100 = vunpack.c.l.b16 %v819
    %v3101 = vunpack.c.h.b16 %v819
    %v3102 = vunpack.c.l.b16 %v820
    %v3103 = vunpack.c.h.b16 %v820
    %v3104 = vunpack.c.l.b16 %v821
    %v3105 = vunpack.c.h.b16 %v821
    %v3106 = vunpack.c.l.b16 %v822
    %v3107 = vunpack.c.h.b16 %v822
    %v3108 = vunpack.c.l.b16 %v823
    %v3109 = vunpack.c.h.b16 %v823
    %v3110 = vunpack.c.l.b16 %v824
    %v3111 = vunpack.c.h.b16 %v824
    %v3112 = vunpack.c.l.b16 %v825
    %v3113 = vunpack.c.h.b16 %v825
    %v3114 = vunpack.c.l.b16 %v826
    %v3115 = vunpack.c.h.b16 %v826
    %v3116 = vunpack.c.l.b16 %v827
    %v3117 = vunpack.c.h.b16 %v827
    %v3118 = vunpack.c.l.b16 %v828
    %v3119 = vunpack.c.h.b16 %v828
    %v3120 = vunpack.c.l.b16 %v829
    %v3121 = vunpack.c.h.b16 %v829
    %v3122 = vunpack.c.l.b16 %v830
    %v3123 = vunpack.c.h.b16 %v830
    %v3124 = vunpack.c.l.b16 %v831
    %v3125 = vunpack.c.h.b16 %v831
    %v3126 = vunpack.c.l.b16 %v832
    %v3127 = vunpack.c.h.b16 %v832
    %v3128 = vunpack.c.l.b16 %v833
    %v3129 = vunpack.c.h.b16 %v833
    %v3130 = vunpack.c.l.b16 %v834
    %v3131 = vunpack.c.h.b16 %v834
    %v3132 = vunpack.c.l.b16 %v835
    %v3133 = vunpack.c.h.b16 %v835
    %v3134 = vunpack.c.l.b16 %v836
    %v3135 = vunpack.c.h.b16 %v836
    %v3136 = vunpack.c.l.b16 %v837
    %v3137 = vunpack.c.h.b16 %v837
    %v3138 = vunpack.c.l.b16 %v838
    %v3139 = vunpack.c.h.b16 %v838
    %v3140 = vunpack.c.l.b16 %v839
    %v3141 = vunpack.c.h.b16 %v839
    %v3142 = vunpack.c.l.b16 %v840
    %v3143 = vunpack.c.h.b16 %v840
    %v3144 = vunpack.c.l.b16 %v841
    %v3145 = vunpack.c.h.b16 %v841
    %v3146 = vunpack.c.l.b16 %v842
    %v3147 = vunpack.c.h.b16 %v842
    %v3148 = vunpack.c.l.b16 %v843
    %v3149 = vunpack.c.h.b16 %v843
    %v3150 = vunpack.c.l.b16 %v844
    %v3151 = vunpack.c.h.b16 %v844
    %v3152 = vunpack.c.l.b16 %v845
    %v3153 = vunpack.c.h.b16 %v845
    %v3154 = vunpack.c.l.b16 %v846
    %v3155 = vunpack.c.h.b16 %v846
    %v3156 = vunpack.c.l.b16 %v847
    %v3157 = vunpack.c.h.b16 %v847
    %v3158 = vunpack.c.l.b16 %v848
    %v3159 = vunpack.c.h.b16 %v848
    %v3160 = vunpack.c.l.b16 %v849
    %v3161 = vunpack.c.h.b16 %v849
    %v3162 = vunpack.c.l.b16 %v850
    %v3163 = vunpack.c.h.b16 %v850
    %v3164 = vunpack.c.l.b16 %v851
    %v3165 = vunpack.c.h.b16 %v851
    %v3166 = vunpack.c.l.b16 %v852
    %v3167 = vunpack.c.h.b16 %v852
    %v3168 = vunpack.c.l.b16 %v853
    %v3169 = vunpack.c.h.b16 %v853
    %v3170 = vunpack.c.l.b16 %v854
    %v3171 = vunpack.c.h.b16 %v854
    %v3172 = vunpack.c.l.b16 %v855
    %v3173 = vunpack.c.h.b16 %v855
    %v3174 = vunpack.c.l.b16 %v856
    %v3175 = vunpack.c.h.b16 %v856
    %v3176 = vunpack.c.l.b16 %v857
    %v3177 = vunpack.c.h.b16 %v857
    %v3178 = vunpack.c.l.b16 %v858
    %v3179 = vunpack.c.h.b16 %v858
    %v3180 = vunpack.c.l.b16 %v859
    %v3181 = vunpack.c.h.b16 %v859
    %v3182 = vunpack.c.l.b16 %v860
    %v3183 = vunpack.c.h.b16 %v860
    %v3184 = vunpack.c.l.b16 %v861
    %v3185 = vunpack.c.h.b16 %v861
    %v3186 = vunpack.c.l.b16 %v862
    %v3187 = vunpack.c.h.b16 %v862
    %v3188 = vpack.c.b16 %v1668, %v1652
    %v3189 = vpack.c.b16 %v1669, %v1653
    %v3190 = vpack.c.b16 %v1670, %v1654
    %v3191 = vpack.c.b16 %v1671, %v1655
    %v3192 = vpack.c.b16 %v1672, %v1656
    %v3193 = vpack.c.b16 %v1673, %v1657
    %v3194 = vpack.c.b16 %v1674, %v1658
    %v3195 = vpack.c.b16 %v1675, %v1659
    %v3196 = vpack.c.b16 %v1676, %v1660
    %v3197 = vpack.c.b16 %v1677, %v1661
    %v3198 = vpack.c.b16 %v1678, %v1662
    %v3199 = vpack.c.b16 %v1679, %v1663
    %v3200 = vpack.c.b16 %v1680, %v1664
    %v3201 = vpack.c.b16 %v1681, %v1665
    %v3202 = vpack.c.b16 %v1682, %v1666
    %v3203 = vpack.c.b16 %v1683, %v1667
    %v3204 = vpack.c.b16 %v1700, %v1684
    %v3205 = vpack.c.b16 %v1701, %v1685
    %v3206 = vpack.c.b16 %v1702, %v1686
    %v3207 = vpack.c.b16 %v1703, %v1687
    %v3208 = vpack.c.b16 %v1704, %v1688
    %v3209 = vpack.c.b16 %v1705, %v1689
    %v3210 = vpack.c.b16 %v1706, %v1690
    %v3211 = vpack.c.b16 %v1707, %v1691
    %v3212 = vpack.c.b16 %v1708, %v1692
    %v3213 = vpack.c.b16 %v1709, %v1693
    %v3214 = vpack.c.b16 %v1710, %v1694
    %v3215 = vpack.c.b16 %v1711, %v1695
    %v3216 = vpack.c.b16 %v1712, %v1696
    %v3217 = vpack.c.b16 %v1713, %v1697
    %v3218 = vpack.c.b16 %v1714, %v1698
    %v3219 = vpack.c.b16 %v1715, %v1699
    %v3220 = vpack.c.b16 %v1732, %v1716
    %v3221 = vpack.c.b16 %v1733, %v1717
    %v3222 = vpack.c.b16 %v1734, %v1718
    %v3223 = vpack.c.b16 %v1735, %v1719
    %v3224 = vpack.c.b16 %v1736, %v1720
    %v3225 = vpack.c.b16 %v1737, %v1721
    %v3226 = vpack.c.b16 %v1738, %v1722
    %v3227 = vpack.c.b16 %v1739, %v1723
    %v3228 = vpack.c.b16 %v1740, %v1724
    %v3229 = vpack.c.b16 %v1741, %v1725
    %v3230 = vpack.c.b16 %v1742, %v1726
    %v3231 = vpack.c.b16 %v1743, %v1727
    %v3232 = vpack.c.b16 %v1744, %v1728
    %v3233 = vpack.c.b16 %v1745, %v1729
    %v3234 = vpack.c.b16 %v1746, %v1730
    %v3235 = vpack.c.b16 %v1747, %v1731
    %v3236 = vpack.c.b16 %v1764, %v1748
    %v3237 = vpack.c.b16 %v1765, %v1749
    %v3238 = vpack.c.b16 %v1766, %v1750
    %v3239 = vpack.c.b16 %v1767, %v1751
    %v3240 = vpack.c.b16 %v1768, %v1752
    %v3241 = vpack.c.b16 %v1769, %v1753
    %v3242 = vpack.c.b16 %v1770, %v1754
    %v3243 = vpack.c.b16 %v1771, %v1755
    %v3244 = vpack.c.b16 %v1772, %v1756
    %v3245 = vpack.c.b16 %v1773, %v1757
    %v3246 = vpack.c.b16 %v1774, %v1758
    %v3247 = vpack.c.b16 %v1775, %v1759
    %v3248 = vpack.c.b16 %v1776, %v1760
    %v3249 = vpack.c.b16 %v1777, %v1761
    %v3250 = vpack.c.b16 %v1778, %v1762
    %v3251 = vpack.c.b16 %v1779, %v1763
    %v3252 = vpack.c.b16 %v1796, %v1780
    %v3253 = vpack.c.b16 %v1797, %v1781
    %v3254 = vpack.c.b16 %v1798, %v1782
    %v3255 = vpack.c.b16 %v1799, %v1783
    %v3256 = vpack.c.b16 %v1800, %v1784
    %v3257 = vpack.c.b16 %v1801, %v1785
    %v3258 = vpack.c.b16 %v1802, %v1786
    %v3259 = vpack.c.b16 %v1803, %v1787
    %v3260 = vpack.c.b16 %v1804, %v1788
    %v3261 = vpack.c.b16 %v1805, %v1789
    %v3262 = vpack.c.b16 %v1806, %v1790
    %v3263 = vpack.c.b16 %v1807, %v1791
    %v3264 = vpack.c.b16 %v1808, %v1792
    %v3265 = vpack.c.b16 %v1809, %v1793
    %v3266 = vpack.c.b16 %v1810, %v1794
    %v3267 = vpack.c.b16 %v1811, %v1795
    %v3268 = vpack.c.b16 %v1828, %v1812
    %v3269 = vpack.c.b16 %v1829, %v1813
    %v3270 = vpack.c.b16 %v1830, %v1814
    %v3271 = vpack.c.b16 %v1831, %v1815
    %v3272 = vpack.c.b16 %v1832, %v1816
    %v3273 = vpack.c.b16 %v1833, %v1817
    %v3274 = vpack.c.b16 %v1834, %v1818
    %v3275 = vpack.c.b16 %v1835, %v1819
    %v3276 = vpack.c.b16 %v1836, %v1820
    %v3277 = vpack.c.b16 %v1837, %v1821
    %v3278 = vpack.c.b16 %v1838, %v1822
    %v3279 = vpack.c.b16 %v1839, %v1823
    %v3280 = vpack.c.b16 %v1840, %v1824
    %v3281 = vpack.c.b16 %v1841, %v1825
    %v3282 = vpack.c.b16 %v1842, %v1826
    %v3283 = vpack.c.b16 %v1843, %v1827
    %v3284 = vpack.c.b16 %v1860, %v1844
    %v3285 = vpack.c.b16 %v1861, %v1845
    %v3286 = vpack.c.b16 %v1862, %v1846
    %v3287 = vpack.c.b16 %v1863, %v1847
    %v3288 = vpack.c.b16 %v1864, %v1848
    %v3289 = vpack.c.b16 %v1865, %v1849
    %v3290 = vpack.c.b16 %v1866, %v1850
    %v3291 = vpack.c.b16 %v1867, %v1851
    %v3292 = vpack.c.b16 %v1868, %v1852
    %v3293 = vpack.c.b16 %v1869, %v1853
    %v3294 = vpack.c.b16 %v1870, %v1854
    %v3295 = vpack.c.b16 %v1871, %v1855
    %v3296 = vpack.c.b16 %v1872, %v1856
    %v3297 = vpack.c.b16 %v1873, %v1857
    %v3298 = vpack.c.b16 %v1874, %v1858
    %v3299 = vpack.c.b16 %v1875, %v1859
    %v3300 = vpack.c.b16 %v1892, %v1876
    %v3301 = vpack.c.b16 %v1893, %v1877
    %v3302 = vpack.c.b16 %v1894, %v1878
    %v3303 = vpack.c.b16 %v1895, %v1879
    %v3304 = vpack.c.b16 %v1896, %v1880
    %v3305 = vpack.c.b16 %v1897, %v1881
    %v3306 = vpack.c.b16 %v1898, %v1882
    %v3307 = vpack.c.b16 %v1899, %v1883
    %v3308 = vpack.c.b16 %v1900, %v1884
    %v3309 = vpack.c.b16 %v1901, %v1885
    %v3310 = vpack.c.b16 %v1902, %v1886
    %v3311 = vpack.c.b16 %v1903, %v1887
    %v3312 = vpack.c.b16 %v1904, %v1888
    %v3313 = vpack.c.b16 %v1905, %v1889
    %v3314 = vpack.c.b16 %v1906, %v1890
    %v3315 = vpack.c.b16 %v1907, %v1891
    %v3316 = vpack.c.b16 %v1924, %v1908
    %v3317 = vpack.c.b16 %v1925, %v1909
    %v3318 = vpack.c.b16 %v1926, %v1910
    %v3319 = vpack.c.b16 %v1927, %v1911
    %v3320 = vpack.c.b16 %v1928, %v1912
    %v3321 = vpack.c.b16 %v1929, %v1913
    %v3322 = vpack.c.b16 %v1930, %v1914
    %v3323 = vpack.c.b16 %v1931, %v1915
    %v3324 = vpack.c.b16 %v1932, %v1916
    %v3325 = vpack.c.b16 %v1933, %v1917
    %v3326 = vpack.c.b16 %v1934, %v1918
    %v3327 = vpack.c.b16 %v1935, %v1919
    %v3328 = vpack.c.b16 %v1936, %v1920
    %v3329 = vpack.c.b16 %v1937, %v1921
    %v3330 = vpack.c.b16 %v1938, %v1922
    %v3331 = vpack.c.b16 %v1939, %v1923
    %v3332 = vpack.c.b16 %v1956, %v1940
    %v3333 = vpack.c.b16 %v1957, %v1941
    %v3334 = vpack.c.b16 %v1958, %v1942
    %v3335 = vpack.c.b16 %v1959, %v1943
    %v3336 = vpack.c.b16 %v1960, %v1944
    %v3337 = vpack.c.b16 %v1961, %v1945
    %v3338 = vpack.c.b16 %v1962, %v1946
    %v3339 = vpack.c.b16 %v1963, %v1947
    %v3340 = vpack.c.b16 %v1964, %v1948
    %v3341 = vpack.c.b16 %v1965, %v1949
    %v3342 = vpack.c.b16 %v1966, %v1950
    %v3343 = vpack.c.b16 %v1967, %v1951
    %v3344 = vpack.c.b16 %v1968, %v1952
    %v3345 = vpack.c.b16 %v1969, %v1953
    %v3346 = vpack.c.b16 %v1970, %v1954
    %v3347 = vpack.c.b16 %v1971, %v1955
    %v3348 = vpack.c.b16 %v1988, %v1972
    %v3349 = vpack.c.b16 %v1989, %v1973
    %v3350 = vpack.c.b16 %v1990, %v1974
    %v3351 = vpack.c.b16 %v1991, %v1975
    %v3352 = vpack.c.b16 %v1992, %v1976
    %v3353 = vpack.c.b16 %v1993, %v1977
    %v3354 = vpack.c.b16 %v1994, %v1978
    %v3355 = vpack.c.b16 %v1995, %v1979
    %v3356 = vpack.c.b16 %v1996, %v1980
    %v3357 = vpack.c.b16 %v1997, %v1981
    %v3358 = vpack.c.b16 %v1998, %v1982
    %v3359 = vpack.c.b16 %v1999, %v1983
    %v3360 = vpack.c.b16 %v2000, %v1984
    %v3361 = vpack.c.b16 %v2001, %v1985
    %v3362 = vpack.c.b16 %v2002, %v1986
    %v3363 = vpack.c.b16 %v2003, %v1987
    %v3364 = vpack.c.b16 %v2020, %v2004
    %v3365 = vpack.c.b16 %v2021, %v2005
    %v3366 = vpack.c.b16 %v2022, %v2006
    %v3367 = vpack.c.b16 %v2023, %v2007
    %v3368 = vpack.c.b16 %v2024, %v2008
    %v3369 = vpack.c.b16 %v2025, %v2009
    %v3370 = vpack.c.b16 %v2026, %v2010
    %v3371 = vpack.c.b16 %v2027, %v2011
    %v3372 = vpack.c.b16 %v2028, %v2012
    %v3373 = vpack.c.b16 %v2029, %v2013
    %v3374 = vpack.c.b16 %v2030, %v2014
    %v3375 = vpack.c.b16 %v2031, %v2015
    %v3376 = vpack.c.b16 %v2032, %v2016
    %v3377 = vpack.c.b16 %v2033, %v2017
    %v3378 = vpack.c.b16 %v2034, %v2018
    %v3379 = vpack.c.b16 %v2035, %v2019
    %v3380 = vpack.c.b16 %v2052, %v2036
    %v3381 = vpack.c.b16 %v2053, %v2037
    %v3382 = vpack.c.b16 %v2054, %v2038
    %v3383 = vpack.c.b16 %v2055, %v2039
    %v3384 = vpack.c.b16 %v2056, %v2040
    %v3385 = vpack.c.b16 %v2057, %v2041
    %v3386 = vpack.c.b16 %v2058, %v2042
    %v3387 = vpack.c.b16 %v2059, %v2043
    %v3388 = vpack.c.b16 %v2060, %v2044
    %v3389 = vpack.c.b16 %v2061, %v2045
    %v3390 = vpack.c.b16 %v2062, %v2046
    %v3391 = vpack.c.b16 %v2063, %v2047
    %v3392 = vpack.c.b16 %v2064, %v2048
    %v3393 = vpack.c.b16 %v2065, %v2049
    %v3394 = vpack.c.b16 %v2066, %v2050
    %v3395 = vpack.c.b16 %v2067, %v2051
    %v3396 = vpack.c.b16 %v2084, %v2068
    %v3397 = vpack.c.b16 %v2085, %v2069
    %v3398 = vpack.c.b16 %v2086, %v2070
    %v3399 = vpack.c.b16 %v2087, %v2071
    %v3400 = vpack.c.b16 %v2088, %v2072
    %v3401 = vpack.c.b16 %v2089, %v2073
    %v3402 = vpack.c.b16 %v2090, %v2074
    %v3403 = vpack.c.b16 %v2091, %v2075
    %v3404 = vpack.c.b16 %v2092, %v2076
    %v3405 = vpack.c.b16 %v2093, %v2077
    %v3406 = vpack.c.b16 %v2094, %v2078
    %v3407 = vpack.c.b16 %v2095, %v2079
    %v3408 = vpack.c.b16 %v2096, %v2080
    %v3409 = vpack.c.b16 %v2097, %v2081
    %v3410 = vpack.c.b16 %v2098, %v2082
    %v3411 = vpack.c.b16 %v2099, %v2083
    %v3412 = vpack.c.b16 %v2116, %v2100
    %v3413 = vpack.c.b16 %v2117, %v2101
    %v3414 = vpack.c.b16 %v2118, %v2102
    %v3415 = vpack.c.b16 %v2119, %v2103
    %v3416 = vpack.c.b16 %v2120, %v2104
    %v3417 = vpack.c.b16 %v2121, %v2105
    %v3418 = vpack.c.b16 %v2122, %v2106
    %v3419 = vpack.c.b16 %v2123, %v2107
    %v3420 = vpack.c.b16 %v2124, %v2108
    %v3421 = vpack.c.b16 %v2125, %v2109
    %v3422 = vpack.c.b16 %v2126, %v2110
    %v3423 = vpack.c.b16 %v2127, %v2111
    %v3424 = vpack.c.b16 %v2128, %v2112
    %v3425 = vpack.c.b16 %v2129, %v2113
    %v3426 = vpack.c.b16 %v2130, %v2114
    %v3427 = vpack.c.b16 %v2131, %v2115
    %v3428 = vpack.c.b16 %v2148, %v2132
    %v3429 = vpack.c.b16 %v2149, %v2133
    %v3430 = vpack.c.b16 %v2150, %v2134
    %v3431 = vpack.c.b16 %v2151, %v2135
    %v3432 = vpack.c.b16 %v2152, %v2136
    %v3433 = vpack.c.b16 %v2153, %v2137
    %v3434 = vpack.c.b16 %v2154, %v2138
    %v3435 = vpack.c.b16 %v2155, %v2139
    %v3436 = vpack.c.b16 %v2156, %v2140
    %v3437 = vpack.c.b16 %v2157, %v2141
    %v3438 = vpack.c.b16 %v2158, %v2142
    %v3439 = vpack.c.b16 %v2159, %v2143
    %v3440 = vpack.c.b16 %v2160, %v2144
    %v3441 = vpack.c.b16 %v2161, %v2145
    %v3442 = vpack.c.b16 %v2162, %v2146
    %v3443 = vpack.c.b16 %v2163, %v2147
    %v3444 = vpack.c.b16 %v2180, %v2164
    %v3445 = vpack.c.b16 %v2181, %v2165
    %v3446 = vpack.c.b16 %v2182, %v2166
    %v3447 = vpack.c.b16 %v2183, %v2167
    %v3448 = vpack.c.b16 %v2184, %v2168
    %v3449 = vpack.c.b16 %v2185, %v2169
    %v3450 = vpack.c.b16 %v2186, %v2170
    %v3451 = vpack.c.b16 %v2187, %v2171
    %v3452 = vpack.c.b16 %v2188, %v2172
    %v3453 = vpack.c.b16 %v2189, %v2173
    %v3454 = vpack.c.b16 %v2190, %v2174
    %v3455 = vpack.c.b16 %v2191, %v2175
    %v3456 = vpack.c.b16 %v2192, %v2176
    %v3457 = vpack.c.b16 %v2193, %v2177
    %v3458 = vpack.c.b16 %v2194, %v2178
    %v3459 = vpack.c.b16 %v2195, %v2179
    %v3460 = vpack.c.b16 %v2212, %v2196
    %v3461 = vpack.c.b16 %v2213, %v2197
    %v3462 = vpack.c.b16 %v2214, %v2198
    %v3463 = vpack.c.b16 %v2215, %v2199
    %v3464 = vpack.c.b16 %v2216, %v2200
    %v3465 = vpack.c.b16 %v2217, %v2201
    %v3466 = vpack.c.b16 %v2218, %v2202
    %v3467 = vpack.c.b16 %v2219, %v2203
    %v3468 = vpack.c.b16 %v2220, %v2204
    %v3469 = vpack.c.b16 %v2221, %v2205
    %v3470 = vpack.c.b16 %v2222, %v2206
    %v3471 = vpack.c.b16 %v2223, %v2207
    %v3472 = vpack.c.b16 %v2224, %v2208
    %v3473 = vpack.c.b16 %v2225, %v2209
    %v3474 = vpack.c.b16 %v2226, %v2210
    %v3475 = vpack.c.b16 %v2227, %v2211
    %v3476 = vpack.c.b16 %v2244, %v2228
    %v3477 = vpack.c.b16 %v2245, %v2229
    %v3478 = vpack.c.b16 %v2246, %v2230
    %v3479 = vpack.c.b16 %v2247, %v2231
    %v3480 = vpack.c.b16 %v2248, %v2232
    %v3481 = vpack.c.b16 %v2249, %v2233
    %v3482 = vpack.c.b16 %v2250, %v2234
    %v3483 = vpack.c.b16 %v2251, %v2235
    %v3484 = vpack.c.b16 %v2252, %v2236
    %v3485 = vpack.c.b16 %v2253, %v2237
    %v3486 = vpack.c.b16 %v2254, %v2238
    %v3487 = vpack.c.b16 %v2255, %v2239
    %v3488 = vpack.c.b16 %v2256, %v2240
    %v3489 = vpack.c.b16 %v2257, %v2241
    %v3490 = vpack.c.b16 %v2258, %v2242
    %v3491 = vpack.c.b16 %v2259, %v2243
    %v3492 = vpack.c.b16 %v2276, %v2260
    %v3493 = vpack.c.b16 %v2277, %v2261
    %v3494 = vpack.c.b16 %v2278, %v2262
    %v3495 = vpack.c.b16 %v2279, %v2263
    %v3496 = vpack.c.b16 %v2280, %v2264
    %v3497 = vpack.c.b16 %v2281, %v2265
    %v3498 = vpack.c.b16 %v2282, %v2266
    %v3499 = vpack.c.b16 %v2283, %v2267
    %v3500 = vpack.c.b16 %v2284, %v2268
    %v3501 = vpack.c.b16 %v2285, %v2269
    %v3502 = vpack.c.b16 %v2286, %v2270
    %v3503 = vpack.c.b16 %v2287, %v2271
    %v3504 = vpack.c.b16 %v2288, %v2272
    %v3505 = vpack.c.b16 %v2289, %v2273
    %v3506 = vpack.c.b16 %v2290, %v2274
    %v3507 = vpack.c.b16 %v2291, %v2275
    %v3508 = vpack.c.b16 %v2308, %v2292
    %v3509 = vpack.c.b16 %v2309, %v2293
    %v3510 = vpack.c.b16 %v2310, %v2294
    %v3511 = vpack.c.b16 %v2311, %v2295
    %v3512 = vpack.c.b16 %v2312, %v2296
    %v3513 = vpack.c.b16 %v2313, %v2297
    %v3514 = vpack.c.b16 %v2314, %v2298
    %v3515 = vpack.c.b16 %v2315, %v2299
    %v3516 = vpack.c.b16 %v2316, %v2300
    %v3517 = vpack.c.b16 %v2317, %v2301
    %v3518 = vpack.c.b16 %v2318, %v2302
    %v3519 = vpack.c.b16 %v2319, %v2303
    %v3520 = vpack.c.b16 %v2320, %v2304
    %v3521 = vpack.c.b16 %v2321, %v2305
    %v3522 = vpack.c.b16 %v2322, %v2306
    %v3523 = vpack.c.b16 %v2323, %v2307
    %v3524 = vpack.c.b16 %v2340, %v2324
    %v3525 = vpack.c.b16 %v2341, %v2325
    %v3526 = vpack.c.b16 %v2342, %v2326
    %v3527 = vpack.c.b16 %v2343, %v2327
    %v3528 = vpack.c.b16 %v2344, %v2328
    %v3529 = vpack.c.b16 %v2345, %v2329
    %v3530 = vpack.c.b16 %v2346, %v2330
    %v3531 = vpack.c.b16 %v2347, %v2331
    %v3532 = vpack.c.b16 %v2348, %v2332
    %v3533 = vpack.c.b16 %v2349, %v2333
    %v3534 = vpack.c.b16 %v2350, %v2334
    %v3535 = vpack.c.b16 %v2351, %v2335
    %v3536 = vpack.c.b16 %v2352, %v2336
    %v3537 = vpack.c.b16 %v2353, %v2337
    %v3538 = vpack.c.b16 %v2354, %v2338
    %v3539 = vpack.c.b16 %v2355, %v2339
    %v3540 = vpack.c.b16 %v2372, %v2356
    %v3541 = vpack.c.b16 %v2373, %v2357
    %v3542 = vpack.c.b16 %v2374, %v2358
    %v3543 = vpack.c.b16 %v2375, %v2359
    %v3544 = vpack.c.b16 %v2376, %v2360
    %v3545 = vpack.c.b16 %v2377, %v2361
    %v3546 = vpack.c.b16 %v2378, %v2362
    %v3547 = vpack.c.b16 %v2379, %v2363
    %v3548 = vpack.c.b16 %v2380, %v2364
    %v3549 = vpack.c.b16 %v2381, %v2365
    %v3550 = vpack.c.b16 %v2382, %v2366
    %v3551 = vpack.c.b16 %v2383, %v2367
    %v3552 = vpack.c.b16 %v2384, %v2368
    %v3553 = vpack.c.b16 %v2385, %v2369
    %v3554 = vpack.c.b16 %v2386, %v2370
    %v3555 = vpack.c.b16 %v2387, %v2371
    %v3556 = vpack.c.b16 %v2404, %v2388
    %v3557 = vpack.c.b16 %v2405, %v2389
    %v3558 = vpack.c.b16 %v2406, %v2390
    %v3559 = vpack.c.b16 %v2407, %v2391
    %v3560 = vpack.c.b16 %v2408, %v2392
    %v3561 = vpack.c.b16 %v2409, %v2393
    %v3562 = vpack.c.b16 %v2410, %v2394
    %v3563 = vpack.c.b16 %v2411, %v2395
    %v3564 = vpack.c.b16 %v2412, %v2396
    %v3565 = vpack.c.b16 %v2413, %v2397
    %v3566 = vpack.c.b16 %v2414, %v2398
    %v3567 = vpack.c.b16 %v2415, %v2399
    %v3568 = vpack.c.b16 %v2416, %v2400
    %v3569 = vpack.c.b16 %v2417, %v2401
    %v3570 = vpack.c.b16 %v2418, %v2402
    %v3571 = vpack.c.b16 %v2419, %v2403
    %v3572 = vpack.c.b16 %v2436, %v2420
    %v3573 = vpack.c.b16 %v2437, %v2421
    %v3574 = vpack.c.b16 %v2438, %v2422
    %v3575 = vpack.c.b16 %v2439, %v2423
    %v3576 = vpack.c.b16 %v2440, %v2424
    %v3577 = vpack.c.b16 %v2441, %v2425
    %v3578 = vpack.c.b16 %v2442, %v2426
    %v3579 = vpack.c.b16 %v2443, %v2427
    %v3580 = vpack.c.b16 %v2444, %v2428
    %v3581 = vpack.c.b16 %v2445, %v2429
    %v3582 = vpack.c.b16 %v2446, %v2430
    %v3583 = vpack.c.b16 %v2447, %v2431
    %v3584 = vpack.c.b16 %v2448, %v2432
    %v3585 = vpack.c.b16 %v2449, %v2433
    %v3586 = vpack.c.b16 %v2450, %v2434
    %v3587 = vpack.c.b16 %v2451, %v2435
    %v3588 = vpack.c.b16 %v2468, %v2452
    %v3589 = vpack.c.b16 %v2469, %v2453
    %v3590 = vpack.c.b16 %v2470, %v2454
    %v3591 = vpack.c.b16 %v2471, %v2455
    %v3592 = vpack.c.b16 %v2472, %v2456
    %v3593 = vpack.c.b16 %v2473, %v2457
    %v3594 = vpack.c.b16 %v2474, %v2458
    %v3595 = vpack.c.b16 %v2475, %v2459
    %v3596 = vpack.c.b16 %v2476, %v2460
    %v3597 = vpack.c.b16 %v2477, %v2461
    %v3598 = vpack.c.b16 %v2478, %v2462
    %v3599 = vpack.c.b16 %v2479, %v2463
    %v3600 = vpack.c.b16 %v2480, %v2464
    %v3601 = vpack.c.b16 %v2481, %v2465
    %v3602 = vpack.c.b16 %v2482, %v2466
    %v3603 = vpack.c.b16 %v2483, %v2467
    %v3604 = vpack.c.b16 %v2500, %v2484
    %v3605 = vpack.c.b16 %v2501, %v2485
    %v3606 = vpack.c.b16 %v2502, %v2486
    %v3607 = vpack.c.b16 %v2503, %v2487
    %v3608 = vpack.c.b16 %v2504, %v2488
    %v3609 = vpack.c.b16 %v2505, %v2489
    %v3610 = vpack.c.b16 %v2506, %v2490
    %v3611 = vpack.c.b16 %v2507, %v2491
    %v3612 = vpack.c.b16 %v2508, %v2492
    %v3613 = vpack.c.b16 %v2509, %v2493
    %v3614 = vpack.c.b16 %v2510, %v2494
    %v3615 = vpack.c.b16 %v2511, %v2495
    %v3616 = vpack.c.b16 %v2512, %v2496
    %v3617 = vpack.c.b16 %v2513, %v2497
    %v3618 = vpack.c.b16 %v2514, %v2498
    %v3619 = vpack.c.b16 %v2515, %v2499
    %v3620 = vpack.c.b16 %v2532, %v2516
    %v3621 = vpack.c.b16 %v2533, %v2517
    %v3622 = vpack.c.b16 %v2534, %v2518
    %v3623 = vpack.c.b16 %v2535, %v2519
    %v3624 = vpack.c.b16 %v2536, %v2520
    %v3625 = vpack.c.b16 %v2537, %v2521
    %v3626 = vpack.c.b16 %v2538, %v2522
    %v3627 = vpack.c.b16 %v2539, %v2523
    %v3628 = vpack.c.b16 %v2540, %v2524
    %v3629 = vpack.c.b16 %v2541, %v2525
    %v3630 = vpack.c.b16 %v2542, %v2526
    %v3631 = vpack.c.b16 %v2543, %v2527
    %v3632 = vpack.c.b16 %v2544, %v2528
    %v3633 = vpack.c.b16 %v2545, %v2529
    %v3634 = vpack.c.b16 %v2546, %v2530
    %v3635 = vpack.c.b16 %v2547, %v2531
    %v3636 = vpack.c.b16 %v2564, %v2548
    %v3637 = vpack.c.b16 %v2565, %v2549
    %v3638 = vpack.c.b16 %v2566, %v2550
    %v3639 = vpack.c.b16 %v2567, %v2551
    %v3640 = vpack.c.b16 %v2568, %v2552
    %v3641 = vpack.c.b16 %v2569, %v2553
    %v3642 = vpack.c.b16 %v2570, %v2554
    %v3643 = vpack.c.b16 %v2571, %v2555
    %v3644 = vpack.c.b16 %v2572, %v2556
    %v3645 = vpack.c.b16 %v2573, %v2557
    %v3646 = vpack.c.b16 %v2574, %v2558
    %v3647 = vpack.c.b16 %v2575, %v2559
    %v3648 = vpack.c.b16 %v2576, %v2560
    %v3649 = vpack.c.b16 %v2577, %v2561
    %v3650 = vpack.c.b16 %v2578, %v2562
    %v3651 = vpack.c.b16 %v2579, %v2563
    %v3652 = vpack.c.b16 %v2596, %v2580
    %v3653 = vpack.c.b16 %v2597, %v2581
    %v3654 = vpack.c.b16 %v2598, %v2582
    %v3655 = vpack.c.b16 %v2599, %v2583
    %v3656 = vpack.c.b16 %v2600, %v2584
    %v3657 = vpack.c.b16 %v2601, %v2585
    %v3658 = vpack.c.b16 %v2602, %v2586
    %v3659 = vpack.c.b16 %v2603, %v2587
    %v3660 = vpack.c.b16 %v2604, %v2588
    %v3661 = vpack.c.b16 %v2605, %v2589
    %v3662 = vpack.c.b16 %v2606, %v2590
    %v3663 = vpack.c.b16 %v2607, %v2591
    %v3664 = vpack.c.b16 %v2608, %v2592
    %v3665 = vpack.c.b16 %v2609, %v2593
    %v3666 = vpack.c.b16 %v2610, %v2594
    %v3667 = vpack.c.b16 %v2611, %v2595
    %v3668 = vpack.c.b16 %v2628, %v2612
    %v3669 = vpack.c.b16 %v2629, %v2613
    %v3670 = vpack.c.b16 %v2630, %v2614
    %v3671 = vpack.c.b16 %v2631, %v2615
    %v3672 = vpack.c.b16 %v2632, %v2616
    %v3673 = vpack.c.b16 %v2633, %v2617
    %v3674 = vpack.c.b16 %v2634, %v2618
    %v3675 = vpack.c.b16 %v2635, %v2619
    %v3676 = vpack.c.b16 %v2636, %v2620
    %v3677 = vpack.c.b16 %v2637, %v2621
    %v3678 = vpack.c.b16 %v2638, %v2622
    %v3679 = vpack.c.b16 %v2639, %v2623
    %v3680 = vpack.c.b16 %v2640, %v2624
    %v3681 = vpack.c.b16 %v2641, %v2625
    %v3682 = vpack.c.b16 %v2642, %v2626
    %v3683 = vpack.c.b16 %v2643, %v2627
    %v3684 = vpack.c.b16 %v2660, %v2644
    %v3685 = vpack.c.b16 %v2661, %v2645
    %v3686 = vpack.c.b16 %v2662, %v2646
    %v3687 = vpack.c.b16 %v2663, %v2647
    %v3688 = vpack.c.b16 %v2664, %v2648
    %v3689 = vpack.c.b16 %v2665, %v2649
    %v3690 = vpack.c.b16 %v2666, %v2650
    %v3691 = vpack.c.b16 %v2667, %v2651
    %v3692 = vpack.c.b16 %v2668, %v2652
    %v3693 = vpack.c.b16 %v2669, %v2653
    %v3694 = vpack.c.b16 %v2670, %v2654
    %v3695 = vpack.c.b16 %v2671, %v2655
    %v3696 = vpack.c.b16 %v2672, %v2656
    %v3697 = vpack.c.b16 %v2673, %v2657
    %v3698 = vpack.c.b16 %v2674, %v2658
    %v3699 = vpack.c.b16 %v2675, %v2659
    %v3700 = vpack.c.b16 %v2692, %v2676
    %v3701 = vpack.c.b16 %v2693, %v2677
    %v3702 = vpack.c.b16 %v2694, %v2678
    %v3703 = vpack.c.b16 %v2695, %v2679
    %v3704 = vpack.c.b16 %v2696, %v2680
    %v3705 = vpack.c.b16 %v2697, %v2681
    %v3706 = vpack.c.b16 %v2698, %v2682
    %v3707 = vpack.c.b16 %v2699, %v2683
    %v3708 = vpack.c.b16 %v2700, %v2684
    %v3709 = vpack.c.b16 %v2701, %v2685
    %v3710 = vpack.c.b16 %v2702, %v2686
    %v3711 = vpack.c.b16 %v2703, %v2687
    %v3712 = vpack.c.b16 %v2704, %v2688
    %v3713 = vpack.c.b16 %v2705, %v2689
    %v3714 = vpack.c.b16 %v2706, %v2690
    %v3715 = vpack.c.b16 %v2707, %v2691
    %v3716 = vpack.c.b16 %v2724, %v2708
    %v3717 = vpack.c.b16 %v2725, %v2709
    %v3718 = vpack.c.b16 %v2726, %v2710
    %v3719 = vpack.c.b16 %v2727, %v2711
    %v3720 = vpack.c.b16 %v2728, %v2712
    %v3721 = vpack.c.b16 %v2729, %v2713
    %v3722 = vpack.c.b16 %v2730, %v2714
    %v3723 = vpack.c.b16 %v2731, %v2715
    %v3724 = vpack.c.b16 %v2732, %v2716
    %v3725 = vpack.c.b16 %v2733, %v2717
    %v3726 = vpack.c.b16 %v2734, %v2718
    %v3727 = vpack.c.b16 %v2735, %v2719
    %v3728 = vpack.c.b16 %v2736, %v2720
    %v3729 = vpack.c.b16 %v2737, %v2721
    %v3730 = vpack.c.b16 %v2738, %v2722
    %v3731 = vpack.c.b16 %v2739, %v2723
    %v3732 = vpack.c.b16 %v2756, %v2740
    %v3733 = vpack.c.b16 %v2757, %v2741
    %v3734 = vpack.c.b16 %v2758, %v2742
    %v3735 = vpack.c.b16 %v2759, %v2743
    %v3736 = vpack.c.b16 %v2760, %v2744
    %v3737 = vpack.c.b16 %v2761, %v2745
    %v3738 = vpack.c.b16 %v2762, %v2746
    %v3739 = vpack.c.b16 %v2763, %v2747
    %v3740 = vpack.c.b16 %v2764, %v2748
    %v3741 = vpack.c.b16 %v2765, %v2749
    %v3742 = vpack.c.b16 %v2766, %v2750
    %v3743 = vpack.c.b16 %v2767, %v2751
    %v3744 = vpack.c.b16 %v2768, %v2752
    %v3745 = vpack.c.b16 %v2769, %v2753
    %v3746 = vpack.c.b16 %v2770, %v2754
    %v3747 = vpack.c.b16 %v2771, %v2755
    %v3748 = vpack.c.b16 %v2788, %v2772
    %v3749 = vpack.c.b16 %v2789, %v2773
    %v3750 = vpack.c.b16 %v2790, %v2774
    %v3751 = vpack.c.b16 %v2791, %v2775
    %v3752 = vpack.c.b16 %v2792, %v2776
    %v3753 = vpack.c.b16 %v2793, %v2777
    %v3754 = vpack.c.b16 %v2794, %v2778
    %v3755 = vpack.c.b16 %v2795, %v2779
    %v3756 = vpack.c.b16 %v2796, %v2780
    %v3757 = vpack.c.b16 %v2797, %v2781
    %v3758 = vpack.c.b16 %v2798, %v2782
    %v3759 = vpack.c.b16 %v2799, %v2783
    %v3760 = vpack.c.b16 %v2800, %v2784
    %v3761 = vpack.c.b16 %v2801, %v2785
    %v3762 = vpack.c.b16 %v2802, %v2786
    %v3763 = vpack.c.b16 %v2803, %v2787
    %v3764 = vpack.c.b16 %v2820, %v2804
    %v3765 = vpack.c.b16 %v2821, %v2805
    %v3766 = vpack.c.b16 %v2822, %v2806
    %v3767 = vpack.c.b16 %v2823, %v2807
    %v3768 = vpack.c.b16 %v2824, %v2808
    %v3769 = vpack.c.b16 %v2825, %v2809
    %v3770 = vpack.c.b16 %v2826, %v2810
    %v3771 = vpack.c.b16 %v2827, %v2811
    %v3772 = vpack.c.b16 %v2828, %v2812
    %v3773 = vpack.c.b16 %v2829, %v2813
    %v3774 = vpack.c.b16 %v2830, %v2814
    %v3775 = vpack.c.b16 %v2831, %v2815
    %v3776 = vpack.c.b16 %v2832, %v2816
    %v3777 = vpack.c.b16 %v2833, %v2817
    %v3778 = vpack.c.b16 %v2834, %v2818
    %v3779 = vpack.c.b16 %v2835, %v2819
    %v3780 = vpack.c.b16 %v2852, %v2836
    %v3781 = vpack.c.b16 %v2853, %v2837
    %v3782 = vpack.c.b16 %v2854, %v2838
    %v3783 = vpack.c.b16 %v2855, %v2839
    %v3784 = vpack.c.b16 %v2856, %v2840
    %v3785 = vpack.c.b16 %v2857, %v2841
    %v3786 = vpack.c.b16 %v2858, %v2842
    %v3787 = vpack.c.b16 %v2859, %v2843
    %v3788 = vpack.c.b16 %v2860, %v2844
    %v3789 = vpack.c.b16 %v2861, %v2845
    %v3790 = vpack.c.b16 %v2862, %v2846
    %v3791 = vpack.c.b16 %v2863, %v2847
    %v3792 = vpack.c.b16 %v2864, %v2848
    %v3793 = vpack.c.b16 %v2865, %v2849
    %v3794 = vpack.c.b16 %v2866, %v2850
    %v3795 = vpack.c.b16 %v2867, %v2851
    %v3796 = vpack.c.b16 %v2884, %v2868
    %v3797 = vpack.c.b16 %v2885, %v2869
    %v3798 = vpack.c.b16 %v2886, %v2870
    %v3799 = vpack.c.b16 %v2887, %v2871
    %v3800 = vpack.c.b16 %v2888, %v2872
    %v3801 = vpack.c.b16 %v2889, %v2873
    %v3802 = vpack.c.b16 %v2890, %v2874
    %v3803 = vpack.c.b16 %v2891, %v2875
    %v3804 = vpack.c.b16 %v2892, %v2876
    %v3805 = vpack.c.b16 %v2893, %v2877
    %v3806 = vpack.c.b16 %v2894, %v2878
    %v3807 = vpack.c.b16 %v2895, %v2879
    %v3808 = vpack.c.b16 %v2896, %v2880
    %v3809 = vpack.c.b16 %v2897, %v2881
    %v3810 = vpack.c.b16 %v2898, %v2882
    %v3811 = vpack.c.b16 %v2899, %v2883
    %v3812 = vpack.c.b16 %v2916, %v2900
    %v3813 = vpack.c.b16 %v2917, %v2901
    %v3814 = vpack.c.b16 %v2918, %v2902
    %v3815 = vpack.c.b16 %v2919, %v2903
    %v3816 = vpack.c.b16 %v2920, %v2904
    %v3817 = vpack.c.b16 %v2921, %v2905
    %v3818 = vpack.c.b16 %v2922, %v2906
    %v3819 = vpack.c.b16 %v2923, %v2907
    %v3820 = vpack.c.b16 %v2924, %v2908
    %v3821 = vpack.c.b16 %v2925, %v2909
    %v3822 = vpack.c.b16 %v2926, %v2910
    %v3823 = vpack.c.b16 %v2927, %v2911
    %v3824 = vpack.c.b16 %v2928, %v2912
    %v3825 = vpack.c.b16 %v2929, %v2913
    %v3826 = vpack.c.b16 %v2930, %v2914
    %v3827 = vpack.c.b16 %v2931, %v2915
    %v3828 = vpack.c.b16 %v2948, %v2932
    %v3829 = vpack.c.b16 %v2949, %v2933
    %v3830 = vpack.c.b16 %v2950, %v2934
    %v3831 = vpack.c.b16 %v2951, %v2935
    %v3832 = vpack.c.b16 %v2952, %v2936
    %v3833 = vpack.c.b16 %v2953, %v2937
    %v3834 = vpack.c.b16 %v2954, %v2938
    %v3835 = vpack.c.b16 %v2955, %v2939
    %v3836 = vpack.c.b16 %v2956, %v2940
    %v3837 = vpack.c.b16 %v2957, %v2941
    %v3838 = vpack.c.b16 %v2958, %v2942
    %v3839 = vpack.c.b16 %v2959, %v2943
    %v3840 = vpack.c.b16 %v2960, %v2944
    %v3841 = vpack.c.b16 %v2961, %v2945
    %v3842 = vpack.c.b16 %v2962, %v2946
    %v3843 = vpack.c.b16 %v2963, %v2947
    %v3844 = vpack.c.b16 %v2980, %v2964
    %v3845 = vpack.c.b16 %v2981, %v2965
    %v3846 = vpack.c.b16 %v2982, %v2966
    %v3847 = vpack.c.b16 %v2983, %v2967
    %v3848 = vpack.c.b16 %v2984, %v2968
    %v3849 = vpack.c.b16 %v2985, %v2969
    %v3850 = vpack.c.b16 %v2986, %v2970
    %v3851 = vpack.c.b16 %v2987, %v2971
    %v3852 = vpack.c.b16 %v2988, %v2972
    %v3853 = vpack.c.b16 %v2989, %v2973
    %v3854 = vpack.c.b16 %v2990, %v2974
    %v3855 = vpack.c.b16 %v2991, %v2975
    %v3856 = vpack.c.b16 %v2992, %v2976
    %v3857 = vpack.c.b16 %v2993, %v2977
    %v3858 = vpack.c.b16 %v2994, %v2978
    %v3859 = vpack.c.b16 %v2995, %v2979
    %v3860 = vpack.c.b16 %v3012, %v2996
    %v3861 = vpack.c.b16 %v3013, %v2997
    %v3862 = vpack.c.b16 %v3014, %v2998
    %v3863 = vpack.c.b16 %v3015, %v2999
    %v3864 = vpack.c.b16 %v3016, %v3000
    %v3865 = vpack.c.b16 %v3017, %v3001
    %v3866 = vpack.c.b16 %v3018, %v3002
    %v3867 = vpack.c.b16 %v3019, %v3003
    %v3868 = vpack.c.b16 %v3020, %v3004
    %v3869 = vpack.c.b16 %v3021, %v3005
    %v3870 = vpack.c.b16 %v3022, %v3006
    %v3871 = vpack.c.b16 %v3023, %v3007
    %v3872 = vpack.c.b16 %v3024, %v3008
    %v3873 = vpack.c.b16 %v3025, %v3009
    %v3874 = vpack.c.b16 %v3026, %v3010
    %v3875 = vpack.c.b16 %v3027, %v3011
    %v3876 = vpack.c.b16 %v3044, %v3028
    %v3877 = vpack.c.b16 %v3045, %v3029
    %v3878 = vpack.c.b16 %v3046, %v3030
    %v3879 = vpack.c.b16 %v3047, %v3031
    %v3880 = vpack.c.b16 %v3048, %v3032
    %v3881 = vpack.c.b16 %v3049, %v3033
    %v3882 = vpack.c.b16 %v3050, %v3034
    %v3883 = vpack.c.b16 %v3051, %v3035
    %v3884 = vpack.c.b16 %v3052, %v3036
    %v3885 = vpack.c.b16 %v3053, %v3037
    %v3886 = vpack.c.b16 %v3054, %v3038
    %v3887 = vpack.c.b16 %v3055, %v3039
    %v3888 = vpack.c.b16 %v3056, %v3040
    %v3889 = vpack.c.b16 %v3057, %v3041
    %v3890 = vpack.c.b16 %v3058, %v3042
    %v3891 = vpack.c.b16 %v3059, %v3043
    %v3892 = vpack.c.b16 %v3076, %v3060
    %v3893 = vpack.c.b16 %v3077, %v3061
    %v3894 = vpack.c.b16 %v3078, %v3062
    %v3895 = vpack.c.b16 %v3079, %v3063
    %v3896 = vpack.c.b16 %v3080, %v3064
    %v3897 = vpack.c.b16 %v3081, %v3065
    %v3898 = vpack.c.b16 %v3082, %v3066
    %v3899 = vpack.c.b16 %v3083, %v3067
    %v3900 = vpack.c.b16 %v3084, %v3068
    %v3901 = vpack.c.b16 %v3085, %v3069
    %v3902 = vpack.c.b16 %v3086, %v3070
    %v3903 = vpack.c.b16 %v3087, %v3071
    %v3904 = vpack.c.b16 %v3088, %v3072
    %v3905 = vpack.c.b16 %v3089, %v3073
    %v3906 = vpack.c.b16 %v3090, %v3074
    %v3907 = vpack.c.b16 %v3091, %v3075
    %v3908 = vpack.c.b16 %v3108, %v3092
    %v3909 = vpack.c.b16 %v3109, %v3093
    %v3910 = vpack.c.b16 %v3110, %v3094
    %v3911 = vpack.c.b16 %v3111, %v3095
    %v3912 = vpack.c.b16 %v3112, %v3096
    %v3913 = vpack.c.b16 %v3113, %v3097
    %v3914 = vpack.c.b16 %v3114, %v3098
    %v3915 = vpack.c.b16 %v3115, %v3099
    %v3916 = vpack.c.b16 %v3116, %v3100
    %v3917 = vpack.c.b16 %v3117, %v3101
    %v3918 = vpack.c.b16 %v3118, %v3102
    %v3919 = vpack.c.b16 %v3119, %v3103
    %v3920 = vpack.c.b16 %v3120, %v3104
    %v3921 = vpack.c.b16 %v3121, %v3105
    %v3922 = vpack.c.b16 %v3122, %v3106
    %v3923 = vpack.c.b16 %v3123, %v3107
    %v3924 = vpack.c.b16 %v3140, %v3124
    %v3925 = vpack.c.b16 %v3141, %v3125
    %v3926 = vpack.c.b16 %v3142, %v3126
    %v3927 = vpack.c.b16 %v3143, %v3127
    %v3928 = vpack.c.b16 %v3144, %v3128
    %v3929 = vpack.c.b16 %v3145, %v3129
    %v3930 = vpack.c.b16 %v3146, %v3130
    %v3931 = vpack.c.b16 %v3147, %v3131
    %v3932 = vpack.c.b16 %v3148, %v3132
    %v3933 = vpack.c.b16 %v3149, %v3133
    %v3934 = vpack.c.b16 %v3150, %v3134
    %v3935 = vpack.c.b16 %v3151, %v3135
    %v3936 = vpack.c.b16 %v3152, %v3136
    %v3937 = vpack.c.b16 %v3153, %v3137
    %v3938 = vpack.c.b16 %v3154, %v3138
    %v3939 = vpack.c.b16 %v3155, %v3139
    %v3940 = vpack.c.b16 %v3172, %v3156
    %v3941 = vpack.c.b16 %v3173, %v3157
    %v3942 = vpack.c.b16 %v3174, %v3158
    %v3943 = vpack.c.b16 %v3175, %v3159
    %v3944 = vpack.c.b16 %v3176, %v3160
    %v3945 = vpack.c.b16 %v3177, %v3161
    %v3946 = vpack.c.b16 %v3178, %v3162
    %v3947 = vpack.c.b16 %v3179, %v3163
    %v3948 = vpack.c.b16 %v3180, %v3164
    %v3949 = vpack.c.b16 %v3181, %v3165
    %v3950 = vpack.c.b16 %v3182, %v3166
    %v3951 = vpack.c.b16 %v3183, %v3167
    %v3952 = vpack.c.b16 %v3184, %v3168
    %v3953 = vpack.c.b16 %v3185, %v3169
    %v3954 = vpack.c.b16 %v3186, %v3170
    %v3955 = vpack.c.b16 %v3187, %v3171
    %4724 = vmatprep.subr.bf16.mxu0 %v3301
    %4725 = vmatpush1.bf16.msra.mxu0 %v3300
    %4726 = vmatprep.subr.bf16.mxu0 %v3285
    %4727 = vmatpush1.bf16.msra.mxu0 %v3284
    %4728 = vmatprep.subr.bf16.mxu0 %v3269
    %4729 = vmatpush1.bf16.msra.mxu0 %v3268
    %4730 = vmatprep.subr.bf16.mxu0 %v3253
    %4731 = vmatpush1.bf16.msra.mxu0 %v3252
    %4732 = vmatprep.subr.bf16.mxu0 %v3237
    %4733 = vmatpush1.bf16.msra.mxu0 %v3236
    %4734 = vmatprep.subr.bf16.mxu0 %v3221
    %4735 = vmatpush1.bf16.msra.mxu0 %v3220
    %4736 = vmatprep.subr.bf16.mxu0 %v3205
    %4737 = vmatpush1.bf16.msra.mxu0 %v3204
    %4738 = vmatprep.subr.bf16.mxu0 %v3189
    %4739 = vmatpush1.bf16.msra.mxu0 %v3188
    %4740 = vmatprep.subr.bf16.mxu0 %v3429
    %4741 = vmatpush2.bf16.msra.mxu0 %v3428
    %4742 = vmatprep.subr.bf16.mxu0 %v3413
    %4743 = vmatpush2.bf16.msra.mxu0 %v3412
    %4744 = vmatprep.subr.bf16.mxu0 %v3397
    %4745 = vmatpush2.bf16.msra.mxu0 %v3396
    %4746 = vmatprep.subr.bf16.mxu0 %v3381
    %4747 = vmatpush2.bf16.msra.mxu0 %v3380
    %4748 = vmatprep.subr.bf16.mxu0 %v3365
    %4749 = vmatpush2.bf16.msra.mxu0 %v3364
    %4750 = vmatprep.subr.bf16.mxu0 %v3349
    %4751 = vmatpush2.bf16.msra.mxu0 %v3348
    %4752 = vmatprep.subr.bf16.mxu0 %v3333
    %4753 = vmatpush2.bf16.msra.mxu0 %v3332
    %4754 = vmatprep.subr.bf16.mxu0 %v3317
    %4755 = vmatpush2.bf16.msra.mxu0 %v3316
    %4756 = vmatprep.mubr.bf16.mxu0 %v873
    %4757 = vmatmul.mubr.bf16.gmra.mxu0 %v872
    %v4758 = vpop.f32.mrf.mxu0
    %v4759 = vadd.f32 0.0, %v4758
    %v4760 = vpop.f32.mrf.mxu0
    %v4761 = vadd.f32 0.0, %v4760
    %v4762 = vpop.f32.mrf.mxu0
    %v4763 = vpop.f32.mrf.mxu0
    %4764 = vdwg.mxu0
    %4765 = vmatprep.subr.bf16.mxu0 %v3557
    %4766 = vmatpush1.bf16.msra.mxu0 %v3556
    %4767 = vmatprep.subr.bf16.mxu0 %v3541
    %4768 = vmatpush1.bf16.msra.mxu0 %v3540
    %4769 = vmatprep.subr.bf16.mxu0 %v3525
    %4770 = vmatpush1.bf16.msra.mxu0 %v3524
    %4771 = vmatprep.subr.bf16.mxu0 %v3509
    %4772 = vmatpush1.bf16.msra.mxu0 %v3508
    %4773 = vmatprep.subr.bf16.mxu0 %v3493
    %4774 = vmatpush1.bf16.msra.mxu0 %v3492
    %4775 = vmatprep.subr.bf16.mxu0 %v3477
    %4776 = vmatpush1.bf16.msra.mxu0 %v3476
    %4777 = vmatprep.subr.bf16.mxu0 %v3461
    %4778 = vmatpush1.bf16.msra.mxu0 %v3460
    %4779 = vmatprep.subr.bf16.mxu0 %v3445
    %4780 = vmatpush1.bf16.msra.mxu0 %v3444
    %4781 = vmatprep.subr.bf16.mxu0 %v3685
    %4782 = vmatpush2.bf16.msra.mxu0 %v3684
    %4783 = vmatprep.subr.bf16.mxu0 %v3669
    %4784 = vmatpush2.bf16.msra.mxu0 %v3668
    %4785 = vmatprep.subr.bf16.mxu0 %v3653
    %4786 = vmatpush2.bf16.msra.mxu0 %v3652
    %4787 = vmatprep.subr.bf16.mxu0 %v3637
    %4788 = vmatpush2.bf16.msra.mxu0 %v3636
    %4789 = vmatprep.subr.bf16.mxu0 %v3621
    %4790 = vmatpush2.bf16.msra.mxu0 %v3620
    %4791 = vmatprep.subr.bf16.mxu0 %v3605
    %4792 = vmatpush2.bf16.msra.mxu0 %v3604
    %4793 = vmatprep.subr.bf16.mxu0 %v3589
    %4794 = vmatpush2.bf16.msra.mxu0 %v3588
    %4795 = vmatprep.subr.bf16.mxu0 %v3573
    %4796 = vmatpush2.bf16.msra.mxu0 %v3572
    %4797 = vmatprep.mubr.bf16.mxu0 %v875
    %4798 = vmatmul.mubr.bf16.gmra.mxu0 %v874
    %v4799 = vpop.f32.mrf.mxu0
    %v4800 = vadd.f32 %v4759, %v4799
    %v4801 = vpop.f32.mrf.mxu0
    %v4802 = vadd.f32 %v4761, %v4801
    %v4803 = vpop.f32.mrf.mxu0
    %v4804 = vpop.f32.mrf.mxu0
    %4805 = vdwg.mxu0
    %4806 = vmatprep.subr.bf16.mxu0 %v3813
    %4807 = vmatpush1.bf16.msra.mxu0 %v3812
    %4808 = vmatprep.subr.bf16.mxu0 %v3797
    %4809 = vmatpush1.bf16.msra.mxu0 %v3796
    %4810 = vmatprep.subr.bf16.mxu0 %v3781
    %4811 = vmatpush1.bf16.msra.mxu0 %v3780
    %4812 = vmatprep.subr.bf16.mxu0 %v3765
    %4813 = vmatpush1.bf16.msra.mxu0 %v3764
    %4814 = vmatprep.subr.bf16.mxu0 %v3749
    %4815 = vmatpush1.bf16.msra.mxu0 %v3748
    %4816 = vmatprep.subr.bf16.mxu0 %v3733
    %4817 = vmatpush1.bf16.msra.mxu0 %v3732
    %4818 = vmatprep.subr.bf16.mxu0 %v3717
    %4819 = vmatpush1.bf16.msra.mxu0 %v3716
    %4820 = vmatprep.subr.bf16.mxu0 %v3701
    %4821 = vmatpush1.bf16.msra.mxu0 %v3700
    %4822 = vmatprep.subr.bf16.mxu0 %v3941
    %4823 = vmatpush2.bf16.msra.mxu0 %v3940
    %4824 = vmatprep.subr.bf16.mxu0 %v3925
    %4825 = vmatpush2.bf16.msra.mxu0 %v3924
    %4826 = vmatprep.subr.bf16.mxu0 %v3909
    %4827 = vmatpush2.bf16.msra.mxu0 %v3908
    %4828 = vmatprep.subr.bf16.mxu0 %v3893
    %4829 = vmatpush2.bf16.msra.mxu0 %v3892
    %4830 = vmatprep.subr.bf16.mxu0 %v3877
    %4831 = vmatpush2.bf16.msra.mxu0 %v3876
    %4832 = vmatprep.subr.bf16.mxu0 %v3861
    %4833 = vmatpush2.bf16.msra.mxu0 %v3860
    %4834 = vmatprep.subr.bf16.mxu0 %v3845
    %4835 = vmatpush2.bf16.msra.mxu0 %v3844
    %4836 = vmatprep.subr.bf16.mxu0 %v3829
    %4837 = vmatpush2.bf16.msra.mxu0 %v3828
    %4838 = vmatprep.mubr.bf16.mxu0 %v877
    %4839 = vmatmul.mubr.bf16.gmra.mxu0 %v876
    %v4840 = vpop.f32.mrf.mxu0
    %v4841 = vadd.f32 %v4800, %v4840
    %v4842 = vpop.f32.mrf.mxu0
    %v4843 = vadd.f32 %v4802, %v4842
    %v4844 = vpop.f32.mrf.mxu0
    %v4845 = vpop.f32.mrf.mxu0
    %4846 = vdwg.mxu0
    %4847 = vmatprep.subr.bf16.mxu0 %v3303
    %4848 = vmatpush1.bf16.msra.mxu0 %v3302
    %4849 = vmatprep.subr.bf16.mxu0 %v3287
    %4850 = vmatpush1.bf16.msra.mxu0 %v3286
    %4851 = vmatprep.subr.bf16.mxu0 %v3271
    %4852 = vmatpush1.bf16.msra.mxu0 %v3270
    %4853 = vmatprep.subr.bf16.mxu0 %v3255
    %4854 = vmatpush1.bf16.msra.mxu0 %v3254
    %4855 = vmatprep.subr.bf16.mxu0 %v3239
    %4856 = vmatpush1.bf16.msra.mxu0 %v3238
    %4857 = vmatprep.subr.bf16.mxu0 %v3223
    %4858 = vmatpush1.bf16.msra.mxu0 %v3222
    %4859 = vmatprep.subr.bf16.mxu0 %v3207
    %4860 = vmatpush1.bf16.msra.mxu0 %v3206
    %4861 = vmatprep.subr.bf16.mxu0 %v3191
    %4862 = vmatpush1.bf16.msra.mxu0 %v3190
    %4863 = vmatprep.subr.bf16.mxu0 %v3431
    %4864 = vmatpush2.bf16.msra.mxu0 %v3430
    %4865 = vmatprep.subr.bf16.mxu0 %v3415
    %4866 = vmatpush2.bf16.msra.mxu0 %v3414
    %4867 = vmatprep.subr.bf16.mxu0 %v3399
    %4868 = vmatpush2.bf16.msra.mxu0 %v3398
    %4869 = vmatprep.subr.bf16.mxu0 %v3383
    %4870 = vmatpush2.bf16.msra.mxu0 %v3382
    %4871 = vmatprep.subr.bf16.mxu0 %v3367
    %4872 = vmatpush2.bf16.msra.mxu0 %v3366
    %4873 = vmatprep.subr.bf16.mxu0 %v3351
    %4874 = vmatpush2.bf16.msra.mxu0 %v3350
    %4875 = vmatprep.subr.bf16.mxu0 %v3335
    %4876 = vmatpush2.bf16.msra.mxu0 %v3334
    %4877 = vmatprep.subr.bf16.mxu0 %v3319
    %4878 = vmatpush2.bf16.msra.mxu0 %v3318
    %4879 = vmatprep.mubr.bf16.mxu0 %v873
    %4880 = vmatmul.mubr.bf16.gmra.mxu0 %v872
    %v4881 = vpop.f32.mrf.mxu0
    %v4882 = vadd.f32 0.0, %v4881
    %v4883 = vpop.f32.mrf.mxu0
    %v4884 = vadd.f32 0.0, %v4883
    %v4885 = vpop.f32.mrf.mxu0
    %v4886 = vpop.f32.mrf.mxu0
    %4887 = vdwg.mxu0
    %4888 = vmatprep.subr.bf16.mxu0 %v3559
    %4889 = vmatpush1.bf16.msra.mxu0 %v3558
    %4890 = vmatprep.subr.bf16.mxu0 %v3543
    %4891 = vmatpush1.bf16.msra.mxu0 %v3542
    %4892 = vmatprep.subr.bf16.mxu0 %v3527
    %4893 = vmatpush1.bf16.msra.mxu0 %v3526
    %4894 = vmatprep.subr.bf16.mxu0 %v3511
    %4895 = vmatpush1.bf16.msra.mxu0 %v3510
    %4896 = vmatprep.subr.bf16.mxu0 %v3495
    %4897 = vmatpush1.bf16.msra.mxu0 %v3494
    %4898 = vmatprep.subr.bf16.mxu0 %v3479
    %4899 = vmatpush1.bf16.msra.mxu0 %v3478
    %4900 = vmatprep.subr.bf16.mxu0 %v3463
    %4901 = vmatpush1.bf16.msra.mxu0 %v3462
    %4902 = vmatprep.subr.bf16.mxu0 %v3447
    %4903 = vmatpush1.bf16.msra.mxu0 %v3446
    %4904 = vmatprep.subr.bf16.mxu0 %v3687
    %4905 = vmatpush2.bf16.msra.mxu0 %v3686
    %4906 = vmatprep.subr.bf16.mxu0 %v3671
    %4907 = vmatpush2.bf16.msra.mxu0 %v3670
    %4908 = vmatprep.subr.bf16.mxu0 %v3655
    %4909 = vmatpush2.bf16.msra.mxu0 %v3654
    %4910 = vmatprep.subr.bf16.mxu0 %v3639
    %4911 = vmatpush2.bf16.msra.mxu0 %v3638
    %4912 = vmatprep.subr.bf16.mxu0 %v3623
    %4913 = vmatpush2.bf16.msra.mxu0 %v3622
    %4914 = vmatprep.subr.bf16.mxu0 %v3607
    %4915 = vmatpush2.bf16.msra.mxu0 %v3606
    %4916 = vmatprep.subr.bf16.mxu0 %v3591
    %4917 = vmatpush2.bf16.msra.mxu0 %v3590
    %4918 = vmatprep.subr.bf16.mxu0 %v3575
    %4919 = vmatpush2.bf16.msra.mxu0 %v3574
    %4920 = vmatprep.mubr.bf16.mxu0 %v875
    %4921 = vmatmul.mubr.bf16.gmra.mxu0 %v874
    %v4922 = vpop.f32.mrf.mxu0
    %v4923 = vadd.f32 %v4882, %v4922
    %v4924 = vpop.f32.mrf.mxu0
    %v4925 = vadd.f32 %v4884, %v4924
    %v4926 = vpop.f32.mrf.mxu0
    %v4927 = vpop.f32.mrf.mxu0
    %4928 = vdwg.mxu0
    %4929 = vmatprep.subr.bf16.mxu0 %v3815
    %4930 = vmatpush1.bf16.msra.mxu0 %v3814
    %4931 = vmatprep.subr.bf16.mxu0 %v3799
    %4932 = vmatpush1.bf16.msra.mxu0 %v3798
    %4933 = vmatprep.subr.bf16.mxu0 %v3783
    %4934 = vmatpush1.bf16.msra.mxu0 %v3782
    %4935 = vmatprep.subr.bf16.mxu0 %v3767
    %4936 = vmatpush1.bf16.msra.mxu0 %v3766
    %4937 = vmatprep.subr.bf16.mxu0 %v3751
    %4938 = vmatpush1.bf16.msra.mxu0 %v3750
    %4939 = vmatprep.subr.bf16.mxu0 %v3735
    %4940 = vmatpush1.bf16.msra.mxu0 %v3734
    %4941 = vmatprep.subr.bf16.mxu0 %v3719
    %4942 = vmatpush1.bf16.msra.mxu0 %v3718
    %4943 = vmatprep.subr.bf16.mxu0 %v3703
    %4944 = vmatpush1.bf16.msra.mxu0 %v3702
    %4945 = vmatprep.subr.bf16.mxu0 %v3943
    %4946 = vmatpush2.bf16.msra.mxu0 %v3942
    %4947 = vmatprep.subr.bf16.mxu0 %v3927
    %4948 = vmatpush2.bf16.msra.mxu0 %v3926
    %4949 = vmatprep.subr.bf16.mxu0 %v3911
    %4950 = vmatpush2.bf16.msra.mxu0 %v3910
    %4951 = vmatprep.subr.bf16.mxu0 %v3895
    %4952 = vmatpush2.bf16.msra.mxu0 %v3894
    %4953 = vmatprep.subr.bf16.mxu0 %v3879
    %4954 = vmatpush2.bf16.msra.mxu0 %v3878
    %4955 = vmatprep.subr.bf16.mxu0 %v3863
    %4956 = vmatpush2.bf16.msra.mxu0 %v3862
    %4957 = vmatprep.subr.bf16.mxu0 %v3847
    %4958 = vmatpush2.bf16.msra.mxu0 %v3846
    %4959 = vmatprep.subr.bf16.mxu0 %v3831
    %4960 = vmatpush2.bf16.msra.mxu0 %v3830
    %4961 = vmatprep.mubr.bf16.mxu0 %v877
    %4962 = vmatmul.mubr.bf16.gmra.mxu0 %v876
    %v4963 = vpop.f32.mrf.mxu0
    %v4964 = vadd.f32 %v4923, %v4963
    %v4965 = vpop.f32.mrf.mxu0
    %v4966 = vadd.f32 %v4925, %v4965
    %v4967 = vpop.f32.mrf.mxu0
    %v4968 = vpop.f32.mrf.mxu0
    %4969 = vdwg.mxu0
    %4970 = vmatprep.subr.bf16.mxu0 %v3305
    %4971 = vmatpush1.bf16.msra.mxu0 %v3304
    %4972 = vmatprep.subr.bf16.mxu0 %v3289
    %4973 = vmatpush1.bf16.msra.mxu0 %v3288
    %4974 = vmatprep.subr.bf16.mxu0 %v3273
    %4975 = vmatpush1.bf16.msra.mxu0 %v3272
    %4976 = vmatprep.subr.bf16.mxu0 %v3257
    %4977 = vmatpush1.bf16.msra.mxu0 %v3256
    %4978 = vmatprep.subr.bf16.mxu0 %v3241
    %4979 = vmatpush1.bf16.msra.mxu0 %v3240
    %4980 = vmatprep.subr.bf16.mxu0 %v3225
    %4981 = vmatpush1.bf16.msra.mxu0 %v3224
    %4982 = vmatprep.subr.bf16.mxu0 %v3209
    %4983 = vmatpush1.bf16.msra.mxu0 %v3208
    %4984 = vmatprep.subr.bf16.mxu0 %v3193
    %4985 = vmatpush1.bf16.msra.mxu0 %v3192
    %4986 = vmatprep.subr.bf16.mxu0 %v3433
    %4987 = vmatpush2.bf16.msra.mxu0 %v3432
    %4988 = vmatprep.subr.bf16.mxu0 %v3417
    %4989 = vmatpush2.bf16.msra.mxu0 %v3416
    %4990 = vmatprep.subr.bf16.mxu0 %v3401
    %4991 = vmatpush2.bf16.msra.mxu0 %v3400
    %4992 = vmatprep.subr.bf16.mxu0 %v3385
    %4993 = vmatpush2.bf16.msra.mxu0 %v3384
    %4994 = vmatprep.subr.bf16.mxu0 %v3369
    %4995 = vmatpush2.bf16.msra.mxu0 %v3368
    %4996 = vmatprep.subr.bf16.mxu0 %v3353
    %4997 = vmatpush2.bf16.msra.mxu0 %v3352
    %4998 = vmatprep.subr.bf16.mxu0 %v3337
    %4999 = vmatpush2.bf16.msra.mxu0 %v3336
    %5000 = vmatprep.subr.bf16.mxu0 %v3321
    %5001 = vmatpush2.bf16.msra.mxu0 %v3320
    %5002 = vmatprep.mubr.bf16.mxu0 %v873
    %5003 = vmatmul.mubr.bf16.gmra.mxu0 %v872
    %v5004 = vpop.f32.mrf.mxu0
    %v5005 = vadd.f32 0.0, %v5004
    %v5006 = vpop.f32.mrf.mxu0
    %v5007 = vadd.f32 0.0, %v5006
    %v5008 = vpop.f32.mrf.mxu0
    %v5009 = vpop.f32.mrf.mxu0
    %5010 = vdwg.mxu0
    %5011 = vmatprep.subr.bf16.mxu0 %v3561
    %5012 = vmatpush1.bf16.msra.mxu0 %v3560
    %5013 = vmatprep.subr.bf16.mxu0 %v3545
    %5014 = vmatpush1.bf16.msra.mxu0 %v3544
    %5015 = vmatprep.subr.bf16.mxu0 %v3529
    %5016 = vmatpush1.bf16.msra.mxu0 %v3528
    %5017 = vmatprep.subr.bf16.mxu0 %v3513
    %5018 = vmatpush1.bf16.msra.mxu0 %v3512
    %5019 = vmatprep.subr.bf16.mxu0 %v3497
    %5020 = vmatpush1.bf16.msra.mxu0 %v3496
    %5021 = vmatprep.subr.bf16.mxu0 %v3481
    %5022 = vmatpush1.bf16.msra.mxu0 %v3480
    %5023 = vmatprep.subr.bf16.mxu0 %v3465
    %5024 = vmatpush1.bf16.msra.mxu0 %v3464
    %5025 = vmatprep.subr.bf16.mxu0 %v3449
    %5026 = vmatpush1.bf16.msra.mxu0 %v3448
    %5027 = vmatprep.subr.bf16.mxu0 %v3689
    %5028 = vmatpush2.bf16.msra.mxu0 %v3688
    %5029 = vmatprep.subr.bf16.mxu0 %v3673
    %5030 = vmatpush2.bf16.msra.mxu0 %v3672
    %5031 = vmatprep.subr.bf16.mxu0 %v3657
    %5032 = vmatpush2.bf16.msra.mxu0 %v3656
    %5033 = vmatprep.subr.bf16.mxu0 %v3641
    %5034 = vmatpush2.bf16.msra.mxu0 %v3640
    %5035 = vmatprep.subr.bf16.mxu0 %v3625
    %5036 = vmatpush2.bf16.msra.mxu0 %v3624
    %5037 = vmatprep.subr.bf16.mxu0 %v3609
    %5038 = vmatpush2.bf16.msra.mxu0 %v3608
    %5039 = vmatprep.subr.bf16.mxu0 %v3593
    %5040 = vmatpush2.bf16.msra.mxu0 %v3592
    %5041 = vmatprep.subr.bf16.mxu0 %v3577
    %5042 = vmatpush2.bf16.msra.mxu0 %v3576
    %5043 = vmatprep.mubr.bf16.mxu0 %v875
    %5044 = vmatmul.mubr.bf16.gmra.mxu0 %v874
    %v5045 = vpop.f32.mrf.mxu0
    %v5046 = vadd.f32 %v5005, %v5045
    %v5047 = vpop.f32.mrf.mxu0
    %v5048 = vadd.f32 %v5007, %v5047
    %v5049 = vpop.f32.mrf.mxu0
    %v5050 = vpop.f32.mrf.mxu0
    %5051 = vdwg.mxu0
    %5052 = vmatprep.subr.bf16.mxu0 %v3817
    %5053 = vmatpush1.bf16.msra.mxu0 %v3816
    %5054 = vmatprep.subr.bf16.mxu0 %v3801
    %5055 = vmatpush1.bf16.msra.mxu0 %v3800
    %5056 = vmatprep.subr.bf16.mxu0 %v3785
    %5057 = vmatpush1.bf16.msra.mxu0 %v3784
    %5058 = vmatprep.subr.bf16.mxu0 %v3769
    %5059 = vmatpush1.bf16.msra.mxu0 %v3768
    %5060 = vmatprep.subr.bf16.mxu0 %v3753
    %5061 = vmatpush1.bf16.msra.mxu0 %v3752
    %5062 = vmatprep.subr.bf16.mxu0 %v3737
    %5063 = vmatpush1.bf16.msra.mxu0 %v3736
    %5064 = vmatprep.subr.bf16.mxu0 %v3721
    %5065 = vmatpush1.bf16.msra.mxu0 %v3720
    %5066 = vmatprep.subr.bf16.mxu0 %v3705
    %5067 = vmatpush1.bf16.msra.mxu0 %v3704
    %5068 = vmatprep.subr.bf16.mxu0 %v3945
    %5069 = vmatpush2.bf16.msra.mxu0 %v3944
    %5070 = vmatprep.subr.bf16.mxu0 %v3929
    %5071 = vmatpush2.bf16.msra.mxu0 %v3928
    %5072 = vmatprep.subr.bf16.mxu0 %v3913
    %5073 = vmatpush2.bf16.msra.mxu0 %v3912
    %5074 = vmatprep.subr.bf16.mxu0 %v3897
    %5075 = vmatpush2.bf16.msra.mxu0 %v3896
    %5076 = vmatprep.subr.bf16.mxu0 %v3881
    %5077 = vmatpush2.bf16.msra.mxu0 %v3880
    %5078 = vmatprep.subr.bf16.mxu0 %v3865
    %5079 = vmatpush2.bf16.msra.mxu0 %v3864
    %5080 = vmatprep.subr.bf16.mxu0 %v3849
    %5081 = vmatpush2.bf16.msra.mxu0 %v3848
    %5082 = vmatprep.subr.bf16.mxu0 %v3833
    %5083 = vmatpush2.bf16.msra.mxu0 %v3832
    %5084 = vmatprep.mubr.bf16.mxu0 %v877
    %5085 = vmatmul.mubr.bf16.gmra.mxu0 %v876
    %v5086 = vpop.f32.mrf.mxu0
    %v5087 = vadd.f32 %v5046, %v5086
    %v5088 = vpop.f32.mrf.mxu0
    %v5089 = vadd.f32 %v5048, %v5088
    %v5090 = vpop.f32.mrf.mxu0
    %v5091 = vpop.f32.mrf.mxu0
    %5092 = vdwg.mxu0
    %5093 = vmatprep.subr.bf16.mxu0 %v3307
    %5094 = vmatpush1.bf16.msra.mxu0 %v3306
    %5095 = vmatprep.subr.bf16.mxu0 %v3291
    %5096 = vmatpush1.bf16.msra.mxu0 %v3290
    %5097 = vmatprep.subr.bf16.mxu0 %v3275
    %5098 = vmatpush1.bf16.msra.mxu0 %v3274
    %5099 = vmatprep.subr.bf16.mxu0 %v3259
    %5100 = vmatpush1.bf16.msra.mxu0 %v3258
    %5101 = vmatprep.subr.bf16.mxu0 %v3243
    %5102 = vmatpush1.bf16.msra.mxu0 %v3242
    %5103 = vmatprep.subr.bf16.mxu0 %v3227
    %5104 = vmatpush1.bf16.msra.mxu0 %v3226
    %5105 = vmatprep.subr.bf16.mxu0 %v3211
    %5106 = vmatpush1.bf16.msra.mxu0 %v3210
    %5107 = vmatprep.subr.bf16.mxu0 %v3195
    %5108 = vmatpush1.bf16.msra.mxu0 %v3194
    %5109 = vmatprep.subr.bf16.mxu0 %v3435
    %5110 = vmatpush2.bf16.msra.mxu0 %v3434
    %5111 = vmatprep.subr.bf16.mxu0 %v3419
    %5112 = vmatpush2.bf16.msra.mxu0 %v3418
    %5113 = vmatprep.subr.bf16.mxu0 %v3403
    %5114 = vmatpush2.bf16.msra.mxu0 %v3402
    %5115 = vmatprep.subr.bf16.mxu0 %v3387
    %5116 = vmatpush2.bf16.msra.mxu0 %v3386
    %5117 = vmatprep.subr.bf16.mxu0 %v3371
    %5118 = vmatpush2.bf16.msra.mxu0 %v3370
    %5119 = vmatprep.subr.bf16.mxu0 %v3355
    %5120 = vmatpush2.bf16.msra.mxu0 %v3354
    %5121 = vmatprep.subr.bf16.mxu0 %v3339
    %5122 = vmatpush2.bf16.msra.mxu0 %v3338
    %5123 = vmatprep.subr.bf16.mxu0 %v3323
    %5124 = vmatpush2.bf16.msra.mxu0 %v3322
    %5125 = vmatprep.mubr.bf16.mxu0 %v873
    %5126 = vmatmul.mubr.bf16.gmra.mxu0 %v872
    %v5127 = vpop.f32.mrf.mxu0
    %v5128 = vadd.f32 0.0, %v5127
    %v5129 = vpop.f32.mrf.mxu0
    %v5130 = vadd.f32 0.0, %v5129
    %v5131 = vpop.f32.mrf.mxu0
    %v5132 = vpop.f32.mrf.mxu0
    %5133 = vdwg.mxu0
    %5134 = vmatprep.subr.bf16.mxu0 %v3563
    %5135 = vmatpush1.bf16.msra.mxu0 %v3562
    %5136 = vmatprep.subr.bf16.mxu0 %v3547
    %5137 = vmatpush1.bf16.msra.mxu0 %v3546
    %5138 = vmatprep.subr.bf16.mxu0 %v3531
    %5139 = vmatpush1.bf16.msra.mxu0 %v3530
    %5140 = vmatprep.subr.bf16.mxu0 %v3515
    %5141 = vmatpush1.bf16.msra.mxu0 %v3514
    %5142 = vmatprep.subr.bf16.mxu0 %v3499
    %5143 = vmatpush1.bf16.msra.mxu0 %v3498
    %5144 = vmatprep.subr.bf16.mxu0 %v3483
    %5145 = vmatpush1.bf16.msra.mxu0 %v3482
    %5146 = vmatprep.subr.bf16.mxu0 %v3467
    %5147 = vmatpush1.bf16.msra.mxu0 %v3466
    %5148 = vmatprep.subr.bf16.mxu0 %v3451
    %5149 = vmatpush1.bf16.msra.mxu0 %v3450
    %5150 = vmatprep.subr.bf16.mxu0 %v3691
    %5151 = vmatpush2.bf16.msra.mxu0 %v3690
    %5152 = vmatprep.subr.bf16.mxu0 %v3675
    %5153 = vmatpush2.bf16.msra.mxu0 %v3674
    %5154 = vmatprep.subr.bf16.mxu0 %v3659
    %5155 = vmatpush2.bf16.msra.mxu0 %v3658
    %5156 = vmatprep.subr.bf16.mxu0 %v3643
    %5157 = vmatpush2.bf16.msra.mxu0 %v3642
    %5158 = vmatprep.subr.bf16.mxu0 %v3627
    %5159 = vmatpush2.bf16.msra.mxu0 %v3626
    %5160 = vmatprep.subr.bf16.mxu0 %v3611
    %5161 = vmatpush2.bf16.msra.mxu0 %v3610
    %5162 = vmatprep.subr.bf16.mxu0 %v3595
    %5163 = vmatpush2.bf16.msra.mxu0 %v3594
    %5164 = vmatprep.subr.bf16.mxu0 %v3579
    %5165 = vmatpush2.bf16.msra.mxu0 %v3578
    %5166 = vmatprep.mubr.bf16.mxu0 %v875
    %5167 = vmatmul.mubr.bf16.gmra.mxu0 %v874
    %v5168 = vpop.f32.mrf.mxu0
    %v5169 = vadd.f32 %v5128, %v5168
    %v5170 = vpop.f32.mrf.mxu0
    %v5171 = vadd.f32 %v5130, %v5170
    %v5172 = vpop.f32.mrf.mxu0
    %v5173 = vpop.f32.mrf.mxu0
    %5174 = vdwg.mxu0
    %5175 = vmatprep.subr.bf16.mxu0 %v3819
    %5176 = vmatpush1.bf16.msra.mxu0 %v3818
    %5177 = vmatprep.subr.bf16.mxu0 %v3803
    %5178 = vmatpush1.bf16.msra.mxu0 %v3802
    %5179 = vmatprep.subr.bf16.mxu0 %v3787
    %5180 = vmatpush1.bf16.msra.mxu0 %v3786
    %5181 = vmatprep.subr.bf16.mxu0 %v3771
    %5182 = vmatpush1.bf16.msra.mxu0 %v3770
    %5183 = vmatprep.subr.bf16.mxu0 %v3755
    %5184 = vmatpush1.bf16.msra.mxu0 %v3754
    %5185 = vmatprep.subr.bf16.mxu0 %v3739
    %5186 = vmatpush1.bf16.msra.mxu0 %v3738
    %5187 = vmatprep.subr.bf16.mxu0 %v3723
    %5188 = vmatpush1.bf16.msra.mxu0 %v3722
    %5189 = vmatprep.subr.bf16.mxu0 %v3707
    %5190 = vmatpush1.bf16.msra.mxu0 %v3706
    %5191 = vmatprep.subr.bf16.mxu0 %v3947
    %5192 = vmatpush2.bf16.msra.mxu0 %v3946
    %5193 = vmatprep.subr.bf16.mxu0 %v3931
    %5194 = vmatpush2.bf16.msra.mxu0 %v3930
    %5195 = vmatprep.subr.bf16.mxu0 %v3915
    %5196 = vmatpush2.bf16.msra.mxu0 %v3914
    %5197 = vmatprep.subr.bf16.mxu0 %v3899
    %5198 = vmatpush2.bf16.msra.mxu0 %v3898
    %5199 = vmatprep.subr.bf16.mxu0 %v3883
    %5200 = vmatpush2.bf16.msra.mxu0 %v3882
    %5201 = vmatprep.subr.bf16.mxu0 %v3867
    %5202 = vmatpush2.bf16.msra.mxu0 %v3866
    %5203 = vmatprep.subr.bf16.mxu0 %v3851
    %5204 = vmatpush2.bf16.msra.mxu0 %v3850
    %5205 = vmatprep.subr.bf16.mxu0 %v3835
    %5206 = vmatpush2.bf16.msra.mxu0 %v3834
    %5207 = vmatprep.mubr.bf16.mxu0 %v877
    %5208 = vmatmul.mubr.bf16.gmra.mxu0 %v876
    %v5209 = vpop.f32.mrf.mxu0
    %v5210 = vadd.f32 %v5169, %v5209
    %v5211 = vpop.f32.mrf.mxu0
    %v5212 = vadd.f32 %v5171, %v5211
    %v5213 = vpop.f32.mrf.mxu0
    %v5214 = vpop.f32.mrf.mxu0
    %5215 = vdwg.mxu0
    %5216 = vmatprep.subr.bf16.mxu0 %v3309
    %5217 = vmatpush1.bf16.msra.mxu0 %v3308
    %5218 = vmatprep.subr.bf16.mxu0 %v3293
    %5219 = vmatpush1.bf16.msra.mxu0 %v3292
    %5220 = vmatprep.subr.bf16.mxu0 %v3277
    %5221 = vmatpush1.bf16.msra.mxu0 %v3276
    %5222 = vmatprep.subr.bf16.mxu0 %v3261
    %5223 = vmatpush1.bf16.msra.mxu0 %v3260
    %5224 = vmatprep.subr.bf16.mxu0 %v3245
    %5225 = vmatpush1.bf16.msra.mxu0 %v3244
    %5226 = vmatprep.subr.bf16.mxu0 %v3229
    %5227 = vmatpush1.bf16.msra.mxu0 %v3228
    %5228 = vmatprep.subr.bf16.mxu0 %v3213
    %5229 = vmatpush1.bf16.msra.mxu0 %v3212
    %5230 = vmatprep.subr.bf16.mxu0 %v3197
    %5231 = vmatpush1.bf16.msra.mxu0 %v3196
    %5232 = vmatprep.subr.bf16.mxu0 %v3437
    %5233 = vmatpush2.bf16.msra.mxu0 %v3436
    %5234 = vmatprep.subr.bf16.mxu0 %v3421
    %5235 = vmatpush2.bf16.msra.mxu0 %v3420
    %5236 = vmatprep.subr.bf16.mxu0 %v3405
    %5237 = vmatpush2.bf16.msra.mxu0 %v3404
    %5238 = vmatprep.subr.bf16.mxu0 %v3389
    %5239 = vmatpush2.bf16.msra.mxu0 %v3388
    %5240 = vmatprep.subr.bf16.mxu0 %v3373
    %5241 = vmatpush2.bf16.msra.mxu0 %v3372
    %5242 = vmatprep.subr.bf16.mxu0 %v3357
    %5243 = vmatpush2.bf16.msra.mxu0 %v3356
    %5244 = vmatprep.subr.bf16.mxu0 %v3341
    %5245 = vmatpush2.bf16.msra.mxu0 %v3340
    %5246 = vmatprep.subr.bf16.mxu0 %v3325
    %5247 = vmatpush2.bf16.msra.mxu0 %v3324
    %5248 = vmatprep.mubr.bf16.mxu0 %v873
    %5249 = vmatmul.mubr.bf16.gmra.mxu0 %v872
    %v5250 = vpop.f32.mrf.mxu0
    %v5251 = vadd.f32 0.0, %v5250
    %v5252 = vpop.f32.mrf.mxu0
    %v5253 = vadd.f32 0.0, %v5252
    %v5254 = vpop.f32.mrf.mxu0
    %v5255 = vpop.f32.mrf.mxu0
    %5256 = vdwg.mxu0
    %5257 = vmatprep.subr.bf16.mxu0 %v3565
    %5258 = vmatpush1.bf16.msra.mxu0 %v3564
    %5259 = vmatprep.subr.bf16.mxu0 %v3549
    %5260 = vmatpush1.bf16.msra.mxu0 %v3548
    %5261 = vmatprep.subr.bf16.mxu0 %v3533
    %5262 = vmatpush1.bf16.msra.mxu0 %v3532
    %5263 = vmatprep.subr.bf16.mxu0 %v3517
    %5264 = vmatpush1.bf16.msra.mxu0 %v3516
    %5265 = vmatprep.subr.bf16.mxu0 %v3501
    %5266 = vmatpush1.bf16.msra.mxu0 %v3500
    %5267 = vmatprep.subr.bf16.mxu0 %v3485
    %5268 = vmatpush1.bf16.msra.mxu0 %v3484
    %5269 = vmatprep.subr.bf16.mxu0 %v3469
    %5270 = vmatpush1.bf16.msra.mxu0 %v3468
    %5271 = vmatprep.subr.bf16.mxu0 %v3453
    %5272 = vmatpush1.bf16.msra.mxu0 %v3452
    %5273 = vmatprep.subr.bf16.mxu0 %v3693
    %5274 = vmatpush2.bf16.msra.mxu0 %v3692
    %5275 = vmatprep.subr.bf16.mxu0 %v3677
    %5276 = vmatpush2.bf16.msra.mxu0 %v3676
    %5277 = vmatprep.subr.bf16.mxu0 %v3661
    %5278 = vmatpush2.bf16.msra.mxu0 %v3660
    %5279 = vmatprep.subr.bf16.mxu0 %v3645
    %5280 = vmatpush2.bf16.msra.mxu0 %v3644
    %5281 = vmatprep.subr.bf16.mxu0 %v3629
    %5282 = vmatpush2.bf16.msra.mxu0 %v3628
    %5283 = vmatprep.subr.bf16.mxu0 %v3613
    %5284 = vmatpush2.bf16.msra.mxu0 %v3612
    %5285 = vmatprep.subr.bf16.mxu0 %v3597
    %5286 = vmatpush2.bf16.msra.mxu0 %v3596
    %5287 = vmatprep.subr.bf16.mxu0 %v3581
    %5288 = vmatpush2.bf16.msra.mxu0 %v3580
    %5289 = vmatprep.mubr.bf16.mxu0 %v875
    %5290 = vmatmul.mubr.bf16.gmra.mxu0 %v874
    %v5291 = vpop.f32.mrf.mxu0
    %v5292 = vadd.f32 %v5251, %v5291
    %v5293 = vpop.f32.mrf.mxu0
    %v5294 = vadd.f32 %v5253, %v5293
    %v5295 = vpop.f32.mrf.mxu0
    %v5296 = vpop.f32.mrf.mxu0
    %5297 = vdwg.mxu0
    %5298 = vmatprep.subr.bf16.mxu0 %v3821
    %5299 = vmatpush1.bf16.msra.mxu0 %v3820
    %5300 = vmatprep.subr.bf16.mxu0 %v3805
    %5301 = vmatpush1.bf16.msra.mxu0 %v3804
    %5302 = vmatprep.subr.bf16.mxu0 %v3789
    %5303 = vmatpush1.bf16.msra.mxu0 %v3788
    %5304 = vmatprep.subr.bf16.mxu0 %v3773
    %5305 = vmatpush1.bf16.msra.mxu0 %v3772
    %5306 = vmatprep.subr.bf16.mxu0 %v3757
    %5307 = vmatpush1.bf16.msra.mxu0 %v3756
    %5308 = vmatprep.subr.bf16.mxu0 %v3741
    %5309 = vmatpush1.bf16.msra.mxu0 %v3740
    %5310 = vmatprep.subr.bf16.mxu0 %v3725
    %5311 = vmatpush1.bf16.msra.mxu0 %v3724
    %5312 = vmatprep.subr.bf16.mxu0 %v3709
    %5313 = vmatpush1.bf16.msra.mxu0 %v3708
    %5314 = vmatprep.subr.bf16.mxu0 %v3949
    %5315 = vmatpush2.bf16.msra.mxu0 %v3948
    %5316 = vmatprep.subr.bf16.mxu0 %v3933
    %5317 = vmatpush2.bf16.msra.mxu0 %v3932
    %5318 = vmatprep.subr.bf16.mxu0 %v3917
    %5319 = vmatpush2.bf16.msra.mxu0 %v3916
    %5320 = vmatprep.subr.bf16.mxu0 %v3901
    %5321 = vmatpush2.bf16.msra.mxu0 %v3900
    %5322 = vmatprep.subr.bf16.mxu0 %v3885
    %5323 = vmatpush2.bf16.msra.mxu0 %v3884
    %5324 = vmatprep.subr.bf16.mxu0 %v3869
    %5325 = vmatpush2.bf16.msra.mxu0 %v3868
    %5326 = vmatprep.subr.bf16.mxu0 %v3853
    %5327 = vmatpush2.bf16.msra.mxu0 %v3852
    %5328 = vmatprep.subr.bf16.mxu0 %v3837
    %5329 = vmatpush2.bf16.msra.mxu0 %v3836
    %5330 = vmatprep.mubr.bf16.mxu0 %v877
    %5331 = vmatmul.mubr.bf16.gmra.mxu0 %v876
    %v5332 = vpop.f32.mrf.mxu0
    %v5333 = vadd.f32 %v5292, %v5332
    %v5334 = vpop.f32.mrf.mxu0
    %v5335 = vadd.f32 %v5294, %v5334
    %v5336 = vpop.f32.mrf.mxu0
    %v5337 = vpop.f32.mrf.mxu0
    %5338 = vdwg.mxu0
    %5339 = vmatprep.subr.bf16.mxu0 %v3311
    %5340 = vmatpush1.bf16.msra.mxu0 %v3310
    %5341 = vmatprep.subr.bf16.mxu0 %v3295
    %5342 = vmatpush1.bf16.msra.mxu0 %v3294
    %5343 = vmatprep.subr.bf16.mxu0 %v3279
    %5344 = vmatpush1.bf16.msra.mxu0 %v3278
    %5345 = vmatprep.subr.bf16.mxu0 %v3263
    %5346 = vmatpush1.bf16.msra.mxu0 %v3262
    %5347 = vmatprep.subr.bf16.mxu0 %v3247
    %5348 = vmatpush1.bf16.msra.mxu0 %v3246
    %5349 = vmatprep.subr.bf16.mxu0 %v3231
    %5350 = vmatpush1.bf16.msra.mxu0 %v3230
    %5351 = vmatprep.subr.bf16.mxu0 %v3215
    %5352 = vmatpush1.bf16.msra.mxu0 %v3214
    %5353 = vmatprep.subr.bf16.mxu0 %v3199
    %5354 = vmatpush1.bf16.msra.mxu0 %v3198
    %5355 = vmatprep.subr.bf16.mxu0 %v3439
    %5356 = vmatpush2.bf16.msra.mxu0 %v3438
    %5357 = vmatprep.subr.bf16.mxu0 %v3423
    %5358 = vmatpush2.bf16.msra.mxu0 %v3422
    %5359 = vmatprep.subr.bf16.mxu0 %v3407
    %5360 = vmatpush2.bf16.msra.mxu0 %v3406
    %5361 = vmatprep.subr.bf16.mxu0 %v3391
    %5362 = vmatpush2.bf16.msra.mxu0 %v3390
    %5363 = vmatprep.subr.bf16.mxu0 %v3375
    %5364 = vmatpush2.bf16.msra.mxu0 %v3374
    %5365 = vmatprep.subr.bf16.mxu0 %v3359
    %5366 = vmatpush2.bf16.msra.mxu0 %v3358
    %5367 = vmatprep.subr.bf16.mxu0 %v3343
    %5368 = vmatpush2.bf16.msra.mxu0 %v3342
    %5369 = vmatprep.subr.bf16.mxu0 %v3327
    %5370 = vmatpush2.bf16.msra.mxu0 %v3326
    %5371 = vmatprep.mubr.bf16.mxu0 %v873
    %5372 = vmatmul.mubr.bf16.gmra.mxu0 %v872
    %v5373 = vpop.f32.mrf.mxu0
    %v5374 = vadd.f32 0.0, %v5373
    %v5375 = vpop.f32.mrf.mxu0
    %v5376 = vadd.f32 0.0, %v5375
    %v5377 = vpop.f32.mrf.mxu0
    %v5378 = vpop.f32.mrf.mxu0
    %5379 = vdwg.mxu0
    %5380 = vmatprep.subr.bf16.mxu0 %v3567
    %5381 = vmatpush1.bf16.msra.mxu0 %v3566
    %5382 = vmatprep.subr.bf16.mxu0 %v3551
    %5383 = vmatpush1.bf16.msra.mxu0 %v3550
    %5384 = vmatprep.subr.bf16.mxu0 %v3535
    %5385 = vmatpush1.bf16.msra.mxu0 %v3534
    %5386 = vmatprep.subr.bf16.mxu0 %v3519
    %5387 = vmatpush1.bf16.msra.mxu0 %v3518
    %5388 = vmatprep.subr.bf16.mxu0 %v3503
    %5389 = vmatpush1.bf16.msra.mxu0 %v3502
    %5390 = vmatprep.subr.bf16.mxu0 %v3487
    %5391 = vmatpush1.bf16.msra.mxu0 %v3486
    %5392 = vmatprep.subr.bf16.mxu0 %v3471
    %5393 = vmatpush1.bf16.msra.mxu0 %v3470
    %5394 = vmatprep.subr.bf16.mxu0 %v3455
    %5395 = vmatpush1.bf16.msra.mxu0 %v3454
    %5396 = vmatprep.subr.bf16.mxu0 %v3695
    %5397 = vmatpush2.bf16.msra.mxu0 %v3694
    %5398 = vmatprep.subr.bf16.mxu0 %v3679
    %5399 = vmatpush2.bf16.msra.mxu0 %v3678
    %5400 = vmatprep.subr.bf16.mxu0 %v3663
    %5401 = vmatpush2.bf16.msra.mxu0 %v3662
    %5402 = vmatprep.subr.bf16.mxu0 %v3647
    %5403 = vmatpush2.bf16.msra.mxu0 %v3646
    %5404 = vmatprep.subr.bf16.mxu0 %v3631
    %5405 = vmatpush2.bf16.msra.mxu0 %v3630
    %5406 = vmatprep.subr.bf16.mxu0 %v3615
    %5407 = vmatpush2.bf16.msra.mxu0 %v3614
    %5408 = vmatprep.subr.bf16.mxu0 %v3599
    %5409 = vmatpush2.bf16.msra.mxu0 %v3598
    %5410 = vmatprep.subr.bf16.mxu0 %v3583
    %5411 = vmatpush2.bf16.msra.mxu0 %v3582
    %5412 = vmatprep.mubr.bf16.mxu0 %v875
    %5413 = vmatmul.mubr.bf16.gmra.mxu0 %v874
    %v5414 = vpop.f32.mrf.mxu0
    %v5415 = vadd.f32 %v5374, %v5414
    %v5416 = vpop.f32.mrf.mxu0
    %v5417 = vadd.f32 %v5376, %v5416
    %v5418 = vpop.f32.mrf.mxu0
    %v5419 = vpop.f32.mrf.mxu0
    %5420 = vdwg.mxu0
    %5421 = vmatprep.subr.bf16.mxu0 %v3823
    %5422 = vmatpush1.bf16.msra.mxu0 %v3822
    %5423 = vmatprep.subr.bf16.mxu0 %v3807
    %5424 = vmatpush1.bf16.msra.mxu0 %v3806
    %5425 = vmatprep.subr.bf16.mxu0 %v3791
    %5426 = vmatpush1.bf16.msra.mxu0 %v3790
    %5427 = vmatprep.subr.bf16.mxu0 %v3775
    %5428 = vmatpush1.bf16.msra.mxu0 %v3774
    %5429 = vmatprep.subr.bf16.mxu0 %v3759
    %5430 = vmatpush1.bf16.msra.mxu0 %v3758
    %5431 = vmatprep.subr.bf16.mxu0 %v3743
    %5432 = vmatpush1.bf16.msra.mxu0 %v3742
    %5433 = vmatprep.subr.bf16.mxu0 %v3727
    %5434 = vmatpush1.bf16.msra.mxu0 %v3726
    %5435 = vmatprep.subr.bf16.mxu0 %v3711
    %5436 = vmatpush1.bf16.msra.mxu0 %v3710
    %5437 = vmatprep.subr.bf16.mxu0 %v3951
    %5438 = vmatpush2.bf16.msra.mxu0 %v3950
    %5439 = vmatprep.subr.bf16.mxu0 %v3935
    %5440 = vmatpush2.bf16.msra.mxu0 %v3934
    %5441 = vmatprep.subr.bf16.mxu0 %v3919
    %5442 = vmatpush2.bf16.msra.mxu0 %v3918
    %5443 = vmatprep.subr.bf16.mxu0 %v3903
    %5444 = vmatpush2.bf16.msra.mxu0 %v3902
    %5445 = vmatprep.subr.bf16.mxu0 %v3887
    %5446 = vmatpush2.bf16.msra.mxu0 %v3886
    %5447 = vmatprep.subr.bf16.mxu0 %v3871
    %5448 = vmatpush2.bf16.msra.mxu0 %v3870
    %5449 = vmatprep.subr.bf16.mxu0 %v3855
    %5450 = vmatpush2.bf16.msra.mxu0 %v3854
    %5451 = vmatprep.subr.bf16.mxu0 %v3839
    %5452 = vmatpush2.bf16.msra.mxu0 %v3838
    %5453 = vmatprep.mubr.bf16.mxu0 %v877
    %5454 = vmatmul.mubr.bf16.gmra.mxu0 %v876
    %v5455 = vpop.f32.mrf.mxu0
    %v5456 = vadd.f32 %v5415, %v5455
    %v5457 = vpop.f32.mrf.mxu0
    %v5458 = vadd.f32 %v5417, %v5457
    %v5459 = vpop.f32.mrf.mxu0
    %v5460 = vpop.f32.mrf.mxu0
    %5461 = vdwg.mxu0
    %5462 = vmatprep.subr.bf16.mxu0 %v3313
    %5463 = vmatpush1.bf16.msra.mxu0 %v3312
    %5464 = vmatprep.subr.bf16.mxu0 %v3297
    %5465 = vmatpush1.bf16.msra.mxu0 %v3296
    %5466 = vmatprep.subr.bf16.mxu0 %v3281
    %5467 = vmatpush1.bf16.msra.mxu0 %v3280
    %5468 = vmatprep.subr.bf16.mxu0 %v3265
    %5469 = vmatpush1.bf16.msra.mxu0 %v3264
    %5470 = vmatprep.subr.bf16.mxu0 %v3249
    %5471 = vmatpush1.bf16.msra.mxu0 %v3248
    %5472 = vmatprep.subr.bf16.mxu0 %v3233
    %5473 = vmatpush1.bf16.msra.mxu0 %v3232
    %5474 = vmatprep.subr.bf16.mxu0 %v3217
    %5475 = vmatpush1.bf16.msra.mxu0 %v3216
    %5476 = vmatprep.subr.bf16.mxu0 %v3201
    %5477 = vmatpush1.bf16.msra.mxu0 %v3200
    %5478 = vmatprep.subr.bf16.mxu0 %v3441
    %5479 = vmatpush2.bf16.msra.mxu0 %v3440
    %5480 = vmatprep.subr.bf16.mxu0 %v3425
    %5481 = vmatpush2.bf16.msra.mxu0 %v3424
    %5482 = vmatprep.subr.bf16.mxu0 %v3409
    %5483 = vmatpush2.bf16.msra.mxu0 %v3408
    %5484 = vmatprep.subr.bf16.mxu0 %v3393
    %5485 = vmatpush2.bf16.msra.mxu0 %v3392
    %5486 = vmatprep.subr.bf16.mxu0 %v3377
    %5487 = vmatpush2.bf16.msra.mxu0 %v3376
    %5488 = vmatprep.subr.bf16.mxu0 %v3361
    %5489 = vmatpush2.bf16.msra.mxu0 %v3360
    %5490 = vmatprep.subr.bf16.mxu0 %v3345
    %5491 = vmatpush2.bf16.msra.mxu0 %v3344
    %5492 = vmatprep.subr.bf16.mxu0 %v3329
    %5493 = vmatpush2.bf16.msra.mxu0 %v3328
    %5494 = vmatprep.mubr.bf16.mxu0 %v873
    %5495 = vmatmul.mubr.bf16.gmra.mxu0 %v872
    %v5496 = vpop.f32.mrf.mxu0
    %v5497 = vadd.f32 0.0, %v5496
    %v5498 = vpop.f32.mrf.mxu0
    %v5499 = vadd.f32 0.0, %v5498
    %v5500 = vpop.f32.mrf.mxu0
    %v5501 = vpop.f32.mrf.mxu0
    %5502 = vdwg.mxu0
    %5503 = vmatprep.subr.bf16.mxu0 %v3569
    %5504 = vmatpush1.bf16.msra.mxu0 %v3568
    %5505 = vmatprep.subr.bf16.mxu0 %v3553
    %5506 = vmatpush1.bf16.msra.mxu0 %v3552
    %5507 = vmatprep.subr.bf16.mxu0 %v3537
    %5508 = vmatpush1.bf16.msra.mxu0 %v3536
    %5509 = vmatprep.subr.bf16.mxu0 %v3521
    %5510 = vmatpush1.bf16.msra.mxu0 %v3520
    %5511 = vmatprep.subr.bf16.mxu0 %v3505
    %5512 = vmatpush1.bf16.msra.mxu0 %v3504
    %5513 = vmatprep.subr.bf16.mxu0 %v3489
    %5514 = vmatpush1.bf16.msra.mxu0 %v3488
    %5515 = vmatprep.subr.bf16.mxu0 %v3473
    %5516 = vmatpush1.bf16.msra.mxu0 %v3472
    %5517 = vmatprep.subr.bf16.mxu0 %v3457
    %5518 = vmatpush1.bf16.msra.mxu0 %v3456
    %5519 = vmatprep.subr.bf16.mxu0 %v3697
    %5520 = vmatpush2.bf16.msra.mxu0 %v3696
    %5521 = vmatprep.subr.bf16.mxu0 %v3681
    %5522 = vmatpush2.bf16.msra.mxu0 %v3680
    %5523 = vmatprep.subr.bf16.mxu0 %v3665
    %5524 = vmatpush2.bf16.msra.mxu0 %v3664
    %5525 = vmatprep.subr.bf16.mxu0 %v3649
    %5526 = vmatpush2.bf16.msra.mxu0 %v3648
    %5527 = vmatprep.subr.bf16.mxu0 %v3633
    %5528 = vmatpush2.bf16.msra.mxu0 %v3632
    %5529 = vmatprep.subr.bf16.mxu0 %v3617
    %5530 = vmatpush2.bf16.msra.mxu0 %v3616
    %5531 = vmatprep.subr.bf16.mxu0 %v3601
    %5532 = vmatpush2.bf16.msra.mxu0 %v3600
    %5533 = vmatprep.subr.bf16.mxu0 %v3585
    %5534 = vmatpush2.bf16.msra.mxu0 %v3584
    %5535 = vmatprep.mubr.bf16.mxu0 %v875
    %5536 = vmatmul.mubr.bf16.gmra.mxu0 %v874
    %v5537 = vpop.f32.mrf.mxu0
    %v5538 = vadd.f32 %v5497, %v5537
    %v5539 = vpop.f32.mrf.mxu0
    %v5540 = vadd.f32 %v5499, %v5539
    %v5541 = vpop.f32.mrf.mxu0
    %v5542 = vpop.f32.mrf.mxu0
    %5543 = vdwg.mxu0
    %5544 = vmatprep.subr.bf16.mxu0 %v3825
    %5545 = vmatpush1.bf16.msra.mxu0 %v3824
    %5546 = vmatprep.subr.bf16.mxu0 %v3809
    %5547 = vmatpush1.bf16.msra.mxu0 %v3808
    %5548 = vmatprep.subr.bf16.mxu0 %v3793
    %5549 = vmatpush1.bf16.msra.mxu0 %v3792
    %5550 = vmatprep.subr.bf16.mxu0 %v3777
    %5551 = vmatpush1.bf16.msra.mxu0 %v3776
    %5552 = vmatprep.subr.bf16.mxu0 %v3761
    %5553 = vmatpush1.bf16.msra.mxu0 %v3760
    %5554 = vmatprep.subr.bf16.mxu0 %v3745
    %5555 = vmatpush1.bf16.msra.mxu0 %v3744
    %5556 = vmatprep.subr.bf16.mxu0 %v3729
    %5557 = vmatpush1.bf16.msra.mxu0 %v3728
    %5558 = vmatprep.subr.bf16.mxu0 %v3713
    %5559 = vmatpush1.bf16.msra.mxu0 %v3712
    %5560 = vmatprep.subr.bf16.mxu0 %v3953
    %5561 = vmatpush2.bf16.msra.mxu0 %v3952
    %5562 = vmatprep.subr.bf16.mxu0 %v3937
    %5563 = vmatpush2.bf16.msra.mxu0 %v3936
    %5564 = vmatprep.subr.bf16.mxu0 %v3921
    %5565 = vmatpush2.bf16.msra.mxu0 %v3920
    %5566 = vmatprep.subr.bf16.mxu0 %v3905
    %5567 = vmatpush2.bf16.msra.mxu0 %v3904
    %5568 = vmatprep.subr.bf16.mxu0 %v3889
    %5569 = vmatpush2.bf16.msra.mxu0 %v3888
    %5570 = vmatprep.subr.bf16.mxu0 %v3873
    %5571 = vmatpush2.bf16.msra.mxu0 %v3872
    %5572 = vmatprep.subr.bf16.mxu0 %v3857
    %5573 = vmatpush2.bf16.msra.mxu0 %v3856
    %5574 = vmatprep.subr.bf16.mxu0 %v3841
    %5575 = vmatpush2.bf16.msra.mxu0 %v3840
    %5576 = vmatprep.mubr.bf16.mxu0 %v877
    %5577 = vmatmul.mubr.bf16.gmra.mxu0 %v876
    %v5578 = vpop.f32.mrf.mxu0
    %v5579 = vadd.f32 %v5538, %v5578
    %v5580 = vpop.f32.mrf.mxu0
    %v5581 = vadd.f32 %v5540, %v5580
    %v5582 = vpop.f32.mrf.mxu0
    %v5583 = vpop.f32.mrf.mxu0
    %5584 = vdwg.mxu0
    %5585 = vmatprep.subr.bf16.mxu0 %v3315
    %5586 = vmatpush1.bf16.msra.mxu0 %v3314
    %5587 = vmatprep.subr.bf16.mxu0 %v3299
    %5588 = vmatpush1.bf16.msra.mxu0 %v3298
    %5589 = vmatprep.subr.bf16.mxu0 %v3283
    %5590 = vmatpush1.bf16.msra.mxu0 %v3282
    %5591 = vmatprep.subr.bf16.mxu0 %v3267
    %5592 = vmatpush1.bf16.msra.mxu0 %v3266
    %5593 = vmatprep.subr.bf16.mxu0 %v3251
    %5594 = vmatpush1.bf16.msra.mxu0 %v3250
    %5595 = vmatprep.subr.bf16.mxu0 %v3235
    %5596 = vmatpush1.bf16.msra.mxu0 %v3234
    %5597 = vmatprep.subr.bf16.mxu0 %v3219
    %5598 = vmatpush1.bf16.msra.mxu0 %v3218
    %5599 = vmatprep.subr.bf16.mxu0 %v3203
    %5600 = vmatpush1.bf16.msra.mxu0 %v3202
    %5601 = vmatprep.subr.bf16.mxu0 %v3443
    %5602 = vmatpush2.bf16.msra.mxu0 %v3442
    %5603 = vmatprep.subr.bf16.mxu0 %v3427
    %5604 = vmatpush2.bf16.msra.mxu0 %v3426
    %5605 = vmatprep.subr.bf16.mxu0 %v3411
    %5606 = vmatpush2.bf16.msra.mxu0 %v3410
    %5607 = vmatprep.subr.bf16.mxu0 %v3395
    %5608 = vmatpush2.bf16.msra.mxu0 %v3394
    %5609 = vmatprep.subr.bf16.mxu0 %v3379
    %5610 = vmatpush2.bf16.msra.mxu0 %v3378
    %5611 = vmatprep.subr.bf16.mxu0 %v3363
    %5612 = vmatpush2.bf16.msra.mxu0 %v3362
    %5613 = vmatprep.subr.bf16.mxu0 %v3347
    %5614 = vmatpush2.bf16.msra.mxu0 %v3346
    %5615 = vmatprep.subr.bf16.mxu0 %v3331
    %5616 = vmatpush2.bf16.msra.mxu0 %v3330
    %5617 = vmatprep.mubr.bf16.mxu0 %v873
    %5618 = vmatmul.mubr.bf16.gmra.mxu0 %v872
    %v5619 = vpop.f32.mrf.mxu0
    %v5620 = vadd.f32 0.0, %v5619
    %v5621 = vpop.f32.mrf.mxu0
    %v5622 = vadd.f32 0.0, %v5621
    %v5623 = vpop.f32.mrf.mxu0
    %v5624 = vpop.f32.mrf.mxu0
    %5625 = vdwg.mxu0
    %5626 = vmatprep.subr.bf16.mxu0 %v3571
    %5627 = vmatpush1.bf16.msra.mxu0 %v3570
    %5628 = vmatprep.subr.bf16.mxu0 %v3555
    %5629 = vmatpush1.bf16.msra.mxu0 %v3554
    %5630 = vmatprep.subr.bf16.mxu0 %v3539
    %5631 = vmatpush1.bf16.msra.mxu0 %v3538
    %5632 = vmatprep.subr.bf16.mxu0 %v3523
    %5633 = vmatpush1.bf16.msra.mxu0 %v3522
    %5634 = vmatprep.subr.bf16.mxu0 %v3507
    %5635 = vmatpush1.bf16.msra.mxu0 %v3506
    %5636 = vmatprep.subr.bf16.mxu0 %v3491
    %5637 = vmatpush1.bf16.msra.mxu0 %v3490
    %5638 = vmatprep.subr.bf16.mxu0 %v3475
    %5639 = vmatpush1.bf16.msra.mxu0 %v3474
    %5640 = vmatprep.subr.bf16.mxu0 %v3459
    %5641 = vmatpush1.bf16.msra.mxu0 %v3458
    %5642 = vmatprep.subr.bf16.mxu0 %v3699
    %5643 = vmatpush2.bf16.msra.mxu0 %v3698
    %5644 = vmatprep.subr.bf16.mxu0 %v3683
    %5645 = vmatpush2.bf16.msra.mxu0 %v3682
    %5646 = vmatprep.subr.bf16.mxu0 %v3667
    %5647 = vmatpush2.bf16.msra.mxu0 %v3666
    %5648 = vmatprep.subr.bf16.mxu0 %v3651
    %5649 = vmatpush2.bf16.msra.mxu0 %v3650
    %5650 = vmatprep.subr.bf16.mxu0 %v3635
    %5651 = vmatpush2.bf16.msra.mxu0 %v3634
    %5652 = vmatprep.subr.bf16.mxu0 %v3619
    %5653 = vmatpush2.bf16.msra.mxu0 %v3618
    %5654 = vmatprep.subr.bf16.mxu0 %v3603
    %5655 = vmatpush2.bf16.msra.mxu0 %v3602
    %5656 = vmatprep.subr.bf16.mxu0 %v3587
    %5657 = vmatpush2.bf16.msra.mxu0 %v3586
    %5658 = vmatprep.mubr.bf16.mxu0 %v875
    %5659 = vmatmul.mubr.bf16.gmra.mxu0 %v874
    %v5660 = vpop.f32.mrf.mxu0
    %v5661 = vadd.f32 %v5620, %v5660
    %v5662 = vpop.f32.mrf.mxu0
    %v5663 = vadd.f32 %v5622, %v5662
    %v5664 = vpop.f32.mrf.mxu0
    %v5665 = vpop.f32.mrf.mxu0
    %5666 = vdwg.mxu0
    %5667 = vmatprep.subr.bf16.mxu0 %v3827
    %5668 = vmatpush1.bf16.msra.mxu0 %v3826
    %5669 = vmatprep.subr.bf16.mxu0 %v3811
    %5670 = vmatpush1.bf16.msra.mxu0 %v3810
    %5671 = vmatprep.subr.bf16.mxu0 %v3795
    %5672 = vmatpush1.bf16.msra.mxu0 %v3794
    %5673 = vmatprep.subr.bf16.mxu0 %v3779
    %5674 = vmatpush1.bf16.msra.mxu0 %v3778
    %5675 = vmatprep.subr.bf16.mxu0 %v3763
    %5676 = vmatpush1.bf16.msra.mxu0 %v3762
    %5677 = vmatprep.subr.bf16.mxu0 %v3747
    %5678 = vmatpush1.bf16.msra.mxu0 %v3746
    %5679 = vmatprep.subr.bf16.mxu0 %v3731
    %5680 = vmatpush1.bf16.msra.mxu0 %v3730
    %5681 = vmatprep.subr.bf16.mxu0 %v3715
    %5682 = vmatpush1.bf16.msra.mxu0 %v3714
    %5683 = vmatprep.subr.bf16.mxu0 %v3955
    %5684 = vmatpush2.bf16.msra.mxu0 %v3954
    %5685 = vmatprep.subr.bf16.mxu0 %v3939
    %5686 = vmatpush2.bf16.msra.mxu0 %v3938
    %5687 = vmatprep.subr.bf16.mxu0 %v3923
    %5688 = vmatpush2.bf16.msra.mxu0 %v3922
    %5689 = vmatprep.subr.bf16.mxu0 %v3907
    %5690 = vmatpush2.bf16.msra.mxu0 %v3906
    %5691 = vmatprep.subr.bf16.mxu0 %v3891
    %5692 = vmatpush2.bf16.msra.mxu0 %v3890
    %5693 = vmatprep.subr.bf16.mxu0 %v3875
    %5694 = vmatpush2.bf16.msra.mxu0 %v3874
    %5695 = vmatprep.subr.bf16.mxu0 %v3859
    %5696 = vmatpush2.bf16.msra.mxu0 %v3858
    %5697 = vmatprep.subr.bf16.mxu0 %v3843
    %5698 = vmatpush2.bf16.msra.mxu0 %v3842
    %5699 = vmatprep.mubr.bf16.mxu0 %v877
    %5700 = vmatmul.mubr.bf16.gmra.mxu0 %v876
    %v5701 = vpop.f32.mrf.mxu0
    %v5702 = vadd.f32 %v5661, %v5701
    %v5703 = vpop.f32.mrf.mxu0
    %v5704 = vadd.f32 %v5663, %v5703
    %v5705 = vpop.f32.mrf.mxu0
    %v5706 = vpop.f32.mrf.mxu0
    %5707 = vdwg.mxu0
    %v5708 = vpack.c.bf16 %v4841, %v4841
    %v5709 = vpack.c.bf16 %v4843, %v4843
    %v5710 = vpack.c.bf16 %v4964, %v4964
    %v5711 = vpack.c.bf16 %v4966, %v4966
    %v5712 = vpack.c.bf16 %v5087, %v5087
    %v5713 = vpack.c.bf16 %v5089, %v5089
    %v5714 = vpack.c.bf16 %v5210, %v5210
    %v5715 = vpack.c.bf16 %v5212, %v5212
    %v5716 = vpack.c.bf16 %v5333, %v5333
    %v5717 = vpack.c.bf16 %v5335, %v5335
    %v5718 = vpack.c.bf16 %v5456, %v5456
    %v5719 = vpack.c.bf16 %v5458, %v5458
    %v5720 = vpack.c.bf16 %v5579, %v5579
    %v5721 = vpack.c.bf16 %v5581, %v5581
    %v5722 = vpack.c.bf16 %v5702, %v5702
    %v5723 = vpack.c.bf16 %v5704, %v5704
    %v5724 = vld [vmem:[#allocation4] sm:$0xff]
    %v5725 = vld [vmem:[#allocation4 + $0x8] sm:$0xff]
    %v5726 = vld [vmem:[#allocation4 + $0x10] sm:$0xff]
    %v5727 = vld [vmem:[#allocation4 + $0x18] sm:$0xff]
    %v5728 = vld [vmem:[#allocation4 + $0x20] sm:$0xff]
    %v5729 = vld [vmem:[#allocation4 + $0x28] sm:$0xff]
    %v5730 = vld [vmem:[#allocation4 + $0x30] sm:$0xff]
    %v5731 = vld [vmem:[#allocation4 + $0x38] sm:$0xff]
    %v5732 = vld [vmem:[#allocation4 + $0x40] sm:$0xff]
    %v5733 = vld [vmem:[#allocation4 + $0x48] sm:$0xff]
    %v5734 = vld [vmem:[#allocation4 + $0x50] sm:$0xff]
    %v5735 = vld [vmem:[#allocation4 + $0x58] sm:$0xff]
    %v5736 = vld [vmem:[#allocation4 + $0x60] sm:$0xff]
    %v5737 = vld [vmem:[#allocation4 + $0x68] sm:$0xff]
    %v5738 = vld [vmem:[#allocation4 + $0x70] sm:$0xff]
    %v5739 = vld [vmem:[#allocation4 + $0x78] sm:$0xff]
    %v5740 = vld [vmem:[#allocation4 + $0x80] sm:$0xff]
    %v5741 = vld [vmem:[#allocation4 + $0x88] sm:$0xff]
    %v5742 = vld [vmem:[#allocation4 + $0x90] sm:$0xff]
    %v5743 = vld [vmem:[#allocation4 + $0x98] sm:$0xff]
    %v5744 = vld [vmem:[#allocation4 + $0xa0] sm:$0xff]
    %v5745 = vld [vmem:[#allocation4 + $0xa8] sm:$0xff]
    %v5746 = vld [vmem:[#allocation4 + $0xb0] sm:$0xff]
    %v5747 = vld [vmem:[#allocation4 + $0xb8] sm:$0xff]
    %v5748 = vld [vmem:[#allocation4 + $0xc0] sm:$0xff]
    %v5749 = vld [vmem:[#allocation4 + $0xc8] sm:$0xff]
    %v5750 = vld [vmem:[#allocation4 + $0xd0] sm:$0xff]
    %v5751 = vld [vmem:[#allocation4 + $0xd8] sm:$0xff]
    %v5752 = vld [vmem:[#allocation4 + $0xe0] sm:$0xff]
    %v5753 = vld [vmem:[#allocation4 + $0xe8] sm:$0xff]
    %v5754 = vld [vmem:[#allocation4 + $0xf0] sm:$0xff]
    %v5755 = vld [vmem:[#allocation4 + $0xf8] sm:$0xff]
    %v5756 = vld [vmem:[#allocation4 + $0x100] sm:$0xff]
    %v5757 = vld [vmem:[#allocation4 + $0x108] sm:$0xff]
    %v5758 = vld [vmem:[#allocation4 + $0x110] sm:$0xff]
    %v5759 = vld [vmem:[#allocation4 + $0x118] sm:$0xff]
    %v5760 = vld [vmem:[#allocation4 + $0x120] sm:$0xff]
    %v5761 = vld [vmem:[#allocation4 + $0x128] sm:$0xff]
    %v5762 = vld [vmem:[#allocation4 + $0x130] sm:$0xff]
    %v5763 = vld [vmem:[#allocation4 + $0x138] sm:$0xff]
    %v5764 = vld [vmem:[#allocation4 + $0x140] sm:$0xff]
    %v5765 = vld [vmem:[#allocation4 + $0x148] sm:$0xff]
    %v5766 = vld [vmem:[#allocation4 + $0x150] sm:$0xff]
    %v5767 = vld [vmem:[#allocation4 + $0x158] sm:$0xff]
    %v5768 = vld [vmem:[#allocation4 + $0x160] sm:$0xff]
    %v5769 = vld [vmem:[#allocation4 + $0x168] sm:$0xff]
    %v5770 = vld [vmem:[#allocation4 + $0x170] sm:$0xff]
    %v5771 = vld [vmem:[#allocation4 + $0x178] sm:$0xff]
    %v5772 = vld [vmem:[#allocation4 + $0x180] sm:$0xff]
    %v5773 = vld [vmem:[#allocation4 + $0x188] sm:$0xff]
    %v5774 = vld [vmem:[#allocation4 + $0x190] sm:$0xff]
    %v5775 = vld [vmem:[#allocation4 + $0x198] sm:$0xff]
    %v5776 = vld [vmem:[#allocation4 + $0x1a0] sm:$0xff]
    %v5777 = vld [vmem:[#allocation4 + $0x1a8] sm:$0xff]
    %v5778 = vld [vmem:[#allocation4 + $0x1b0] sm:$0xff]
    %v5779 = vld [vmem:[#allocation4 + $0x1b8] sm:$0xff]
    %v5780 = vld [vmem:[#allocation4 + $0x1c0] sm:$0xff]
    %v5781 = vld [vmem:[#allocation4 + $0x1c8] sm:$0xff]
    %v5782 = vld [vmem:[#allocation4 + $0x1d0] sm:$0xff]
    %v5783 = vld [vmem:[#allocation4 + $0x1d8] sm:$0xff]
    %v5784 = vld [vmem:[#allocation4 + $0x1e0] sm:$0xff]
    %v5785 = vld [vmem:[#allocation4 + $0x1e8] sm:$0xff]
    %v5786 = vld [vmem:[#allocation4 + $0x1f0] sm:$0xff]
    %v5787 = vld [vmem:[#allocation4 + $0x1f8] sm:$0xff]
    %v5788 = vld [vmem:[#allocation4 + $0x200] sm:$0xff]
    %v5789 = vld [vmem:[#allocation4 + $0x208] sm:$0xff]
    %v5790 = vld [vmem:[#allocation4 + $0x210] sm:$0xff]
    %v5791 = vld [vmem:[#allocation4 + $0x218] sm:$0xff]
    %v5792 = vld [vmem:[#allocation4 + $0x220] sm:$0xff]
    %v5793 = vld [vmem:[#allocation4 + $0x228] sm:$0xff]
    %v5794 = vld [vmem:[#allocation4 + $0x230] sm:$0xff]
    %v5795 = vld [vmem:[#allocation4 + $0x238] sm:$0xff]
    %v5796 = vld [vmem:[#allocation4 + $0x240] sm:$0xff]
    %v5797 = vld [vmem:[#allocation4 + $0x248] sm:$0xff]
    %v5798 = vld [vmem:[#allocation4 + $0x250] sm:$0xff]
    %v5799 = vld [vmem:[#allocation4 + $0x258] sm:$0xff]
    %v5800 = vld [vmem:[#allocation4 + $0x260] sm:$0xff]
    %v5801 = vld [vmem:[#allocation4 + $0x268] sm:$0xff]
    %v5802 = vld [vmem:[#allocation4 + $0x270] sm:$0xff]
    %v5803 = vld [vmem:[#allocation4 + $0x278] sm:$0xff]
    %v5804 = vld [vmem:[#allocation4 + $0x280] sm:$0xff]
    %v5805 = vld [vmem:[#allocation4 + $0x288] sm:$0xff]
    %v5806 = vld [vmem:[#allocation4 + $0x290] sm:$0xff]
    %v5807 = vld [vmem:[#allocation4 + $0x298] sm:$0xff]
    %v5808 = vld [vmem:[#allocation4 + $0x2a0] sm:$0xff]
    %v5809 = vld [vmem:[#allocation4 + $0x2a8] sm:$0xff]
    %v5810 = vld [vmem:[#allocation4 + $0x2b0] sm:$0xff]
    %v5811 = vld [vmem:[#allocation4 + $0x2b8] sm:$0xff]
    %v5812 = vld [vmem:[#allocation4 + $0x2c0] sm:$0xff]
    %v5813 = vld [vmem:[#allocation4 + $0x2c8] sm:$0xff]
    %v5814 = vld [vmem:[#allocation4 + $0x2d0] sm:$0xff]
    %v5815 = vld [vmem:[#allocation4 + $0x2d8] sm:$0xff]
    %v5816 = vld [vmem:[#allocation4 + $0x2e0] sm:$0xff]
    %v5817 = vld [vmem:[#allocation4 + $0x2e8] sm:$0xff]
    %v5818 = vld [vmem:[#allocation4 + $0x2f0] sm:$0xff]
    %v5819 = vld [vmem:[#allocation4 + $0x2f8] sm:$0xff]
    %v5820 = vld [vmem:[#allocation4 + $0x300] sm:$0xff]
    %v5821 = vld [vmem:[#allocation4 + $0x308] sm:$0xff]
    %v5822 = vld [vmem:[#allocation4 + $0x310] sm:$0xff]
    %v5823 = vld [vmem:[#allocation4 + $0x318] sm:$0xff]
    %v5824 = vld [vmem:[#allocation4 + $0x320] sm:$0xff]
    %v5825 = vld [vmem:[#allocation4 + $0x328] sm:$0xff]
    %v5826 = vld [vmem:[#allocation4 + $0x330] sm:$0xff]
    %v5827 = vld [vmem:[#allocation4 + $0x338] sm:$0xff]
    %v5828 = vld [vmem:[#allocation4 + $0x340] sm:$0xff]
    %v5829 = vld [vmem:[#allocation4 + $0x348] sm:$0xff]
    %v5830 = vld [vmem:[#allocation4 + $0x350] sm:$0xff]
    %v5831 = vld [vmem:[#allocation4 + $0x358] sm:$0xff]
    %v5832 = vld [vmem:[#allocation4 + $0x360] sm:$0xff]
    %v5833 = vld [vmem:[#allocation4 + $0x368] sm:$0xff]
    %v5834 = vld [vmem:[#allocation4 + $0x370] sm:$0xff]
    %v5835 = vld [vmem:[#allocation4 + $0x378] sm:$0xff]
    %v5836 = vld [vmem:[#allocation4 + $0x380] sm:$0xff]
    %v5837 = vld [vmem:[#allocation4 + $0x388] sm:$0xff]
    %v5838 = vld [vmem:[#allocation4 + $0x390] sm:$0xff]
    %v5839 = vld [vmem:[#allocation4 + $0x398] sm:$0xff]
    %v5840 = vld [vmem:[#allocation4 + $0x3a0] sm:$0xff]
    %v5841 = vld [vmem:[#allocation4 + $0x3a8] sm:$0xff]
    %v5842 = vld [vmem:[#allocation4 + $0x3b0] sm:$0xff]
    %v5843 = vld [vmem:[#allocation4 + $0x3b8] sm:$0xff]
    %v5844 = vld [vmem:[#allocation4 + $0x3c0] sm:$0xff]
    %v5845 = vld [vmem:[#allocation4 + $0x3c8] sm:$0xff]
    %v5846 = vld [vmem:[#allocation4 + $0x3d0] sm:$0xff]
    %v5847 = vld [vmem:[#allocation4 + $0x3d8] sm:$0xff]
    %v5848 = vld [vmem:[#allocation4 + $0x3e0] sm:$0xff]
    %v5849 = vld [vmem:[#allocation4 + $0x3e8] sm:$0xff]
    %v5850 = vld [vmem:[#allocation4 + $0x3f0] sm:$0xff]
    %v5851 = vld [vmem:[#allocation4 + $0x3f8] sm:$0xff]
    %v5852 = vld [vmem:[#allocation4 + $0x400] sm:$0xff]
    %v5853 = vld [vmem:[#allocation4 + $0x408] sm:$0xff]
    %v5854 = vld [vmem:[#allocation4 + $0x410] sm:$0xff]
    %v5855 = vld [vmem:[#allocation4 + $0x418] sm:$0xff]
    %v5856 = vld [vmem:[#allocation4 + $0x420] sm:$0xff]
    %v5857 = vld [vmem:[#allocation4 + $0x428] sm:$0xff]
    %v5858 = vld [vmem:[#allocation4 + $0x430] sm:$0xff]
    %v5859 = vld [vmem:[#allocation4 + $0x438] sm:$0xff]
    %v5860 = vld [vmem:[#allocation4 + $0x440] sm:$0xff]
    %v5861 = vld [vmem:[#allocation4 + $0x448] sm:$0xff]
    %v5862 = vld [vmem:[#allocation4 + $0x450] sm:$0xff]
    %v5863 = vld [vmem:[#allocation4 + $0x458] sm:$0xff]
    %v5864 = vld [vmem:[#allocation4 + $0x460] sm:$0xff]
    %v5865 = vld [vmem:[#allocation4 + $0x468] sm:$0xff]
    %v5866 = vld [vmem:[#allocation4 + $0x470] sm:$0xff]
    %v5867 = vld [vmem:[#allocation4 + $0x478] sm:$0xff]
    %v5868 = vld [vmem:[#allocation4 + $0x480] sm:$0xff]
    %v5869 = vld [vmem:[#allocation4 + $0x488] sm:$0xff]
    %v5870 = vld [vmem:[#allocation4 + $0x490] sm:$0xff]
    %v5871 = vld [vmem:[#allocation4 + $0x498] sm:$0xff]
    %v5872 = vld [vmem:[#allocation4 + $0x4a0] sm:$0xff]
    %v5873 = vld [vmem:[#allocation4 + $0x4a8] sm:$0xff]
    %v5874 = vld [vmem:[#allocation4 + $0x4b0] sm:$0xff]
    %v5875 = vld [vmem:[#allocation4 + $0x4b8] sm:$0xff]
    %v5876 = vld [vmem:[#allocation4 + $0x4c0] sm:$0xff]
    %v5877 = vld [vmem:[#allocation4 + $0x4c8] sm:$0xff]
    %v5878 = vld [vmem:[#allocation4 + $0x4d0] sm:$0xff]
    %v5879 = vld [vmem:[#allocation4 + $0x4d8] sm:$0xff]
    %v5880 = vld [vmem:[#allocation4 + $0x4e0] sm:$0xff]
    %v5881 = vld [vmem:[#allocation4 + $0x4e8] sm:$0xff]
    %v5882 = vld [vmem:[#allocation4 + $0x4f0] sm:$0xff]
    %v5883 = vld [vmem:[#allocation4 + $0x4f8] sm:$0xff]
    %v5884 = vld [vmem:[#allocation4 + $0x500] sm:$0xff]
    %v5885 = vld [vmem:[#allocation4 + $0x508] sm:$0xff]
    %v5886 = vld [vmem:[#allocation4 + $0x510] sm:$0xff]
    %v5887 = vld [vmem:[#allocation4 + $0x518] sm:$0xff]
    %v5888 = vld [vmem:[#allocation4 + $0x520] sm:$0xff]
    %v5889 = vld [vmem:[#allocation4 + $0x528] sm:$0xff]
    %v5890 = vld [vmem:[#allocation4 + $0x530] sm:$0xff]
    %v5891 = vld [vmem:[#allocation4 + $0x538] sm:$0xff]
    %v5892 = vld [vmem:[#allocation4 + $0x540] sm:$0xff]
    %v5893 = vld [vmem:[#allocation4 + $0x548] sm:$0xff]
    %v5894 = vld [vmem:[#allocation4 + $0x550] sm:$0xff]
    %v5895 = vld [vmem:[#allocation4 + $0x558] sm:$0xff]
    %v5896 = vld [vmem:[#allocation4 + $0x560] sm:$0xff]
    %v5897 = vld [vmem:[#allocation4 + $0x568] sm:$0xff]
    %v5898 = vld [vmem:[#allocation4 + $0x570] sm:$0xff]
    %v5899 = vld [vmem:[#allocation4 + $0x578] sm:$0xff]
    %v5900 = vld [vmem:[#allocation4 + $0x580] sm:$0xff]
    %v5901 = vld [vmem:[#allocation4 + $0x588] sm:$0xff]
    %v5902 = vld [vmem:[#allocation4 + $0x590] sm:$0xff]
    %v5903 = vld [vmem:[#allocation4 + $0x598] sm:$0xff]
    %v5904 = vld [vmem:[#allocation4 + $0x5a0] sm:$0xff]
    %v5905 = vld [vmem:[#allocation4 + $0x5a8] sm:$0xff]
    %v5906 = vld [vmem:[#allocation4 + $0x5b0] sm:$0xff]
    %v5907 = vld [vmem:[#allocation4 + $0x5b8] sm:$0xff]
    %v5908 = vld [vmem:[#allocation4 + $0x5c0] sm:$0xff]
    %v5909 = vld [vmem:[#allocation4 + $0x5c8] sm:$0xff]
    %v5910 = vld [vmem:[#allocation4 + $0x5d0] sm:$0xff]
    %v5911 = vld [vmem:[#allocation4 + $0x5d8] sm:$0xff]
    %v5912 = vld [vmem:[#allocation4 + $0x5e0] sm:$0xff]
    %v5913 = vld [vmem:[#allocation4 + $0x5e8] sm:$0xff]
    %v5914 = vld [vmem:[#allocation4 + $0x5f0] sm:$0xff]
    %v5915 = vld [vmem:[#allocation4 + $0x5f8] sm:$0xff]
    %v5916 = vld [vmem:[#allocation4 + $0x600] sm:$0xff]
    %v5917 = vld [vmem:[#allocation4 + $0x608] sm:$0xff]
    %v5918 = vld [vmem:[#allocation4 + $0x610] sm:$0xff]
    %v5919 = vld [vmem:[#allocation4 + $0x618] sm:$0xff]
    %v5920 = vld [vmem:[#allocation4 + $0x620] sm:$0xff]
    %v5921 = vld [vmem:[#allocation4 + $0x628] sm:$0xff]
    %v5922 = vld [vmem:[#allocation4 + $0x630] sm:$0xff]
    %v5923 = vld [vmem:[#allocation4 + $0x638] sm:$0xff]
    %v5924 = vld [vmem:[#allocation4 + $0x640] sm:$0xff]
    %v5925 = vld [vmem:[#allocation4 + $0x648] sm:$0xff]
    %v5926 = vld [vmem:[#allocation4 + $0x650] sm:$0xff]
    %v5927 = vld [vmem:[#allocation4 + $0x658] sm:$0xff]
    %v5928 = vld [vmem:[#allocation4 + $0x660] sm:$0xff]
    %v5929 = vld [vmem:[#allocation4 + $0x668] sm:$0xff]
    %v5930 = vld [vmem:[#allocation4 + $0x670] sm:$0xff]
    %v5931 = vld [vmem:[#allocation4 + $0x678] sm:$0xff]
    %v5932 = vld [vmem:[#allocation4 + $0x680] sm:$0xff]
    %v5933 = vld [vmem:[#allocation4 + $0x688] sm:$0xff]
    %v5934 = vld [vmem:[#allocation4 + $0x690] sm:$0xff]
    %v5935 = vld [vmem:[#allocation4 + $0x698] sm:$0xff]
    %v5936 = vld [vmem:[#allocation4 + $0x6a0] sm:$0xff]
    %v5937 = vld [vmem:[#allocation4 + $0x6a8] sm:$0xff]
    %v5938 = vld [vmem:[#allocation4 + $0x6b0] sm:$0xff]
    %v5939 = vld [vmem:[#allocation4 + $0x6b8] sm:$0xff]
    %v5940 = vld [vmem:[#allocation4 + $0x6c0] sm:$0xff]
    %v5941 = vld [vmem:[#allocation4 + $0x6c8] sm:$0xff]
    %v5942 = vld [vmem:[#allocation4 + $0x6d0] sm:$0xff]
    %v5943 = vld [vmem:[#allocation4 + $0x6d8] sm:$0xff]
    %v5944 = vld [vmem:[#allocation4 + $0x6e0] sm:$0xff]
    %v5945 = vld [vmem:[#allocation4 + $0x6e8] sm:$0xff]
    %v5946 = vld [vmem:[#allocation4 + $0x6f0] sm:$0xff]
    %v5947 = vld [vmem:[#allocation4 + $0x6f8] sm:$0xff]
    %v5948 = vld [vmem:[#allocation4 + $0x700] sm:$0xff]
    %v5949 = vld [vmem:[#allocation4 + $0x708] sm:$0xff]
    %v5950 = vld [vmem:[#allocation4 + $0x710] sm:$0xff]
    %v5951 = vld [vmem:[#allocation4 + $0x718] sm:$0xff]
    %v5952 = vld [vmem:[#allocation4 + $0x720] sm:$0xff]
    %v5953 = vld [vmem:[#allocation4 + $0x728] sm:$0xff]
    %v5954 = vld [vmem:[#allocation4 + $0x730] sm:$0xff]
    %v5955 = vld [vmem:[#allocation4 + $0x738] sm:$0xff]
    %v5956 = vld [vmem:[#allocation4 + $0x740] sm:$0xff]
    %v5957 = vld [vmem:[#allocation4 + $0x748] sm:$0xff]
    %v5958 = vld [vmem:[#allocation4 + $0x750] sm:$0xff]
    %v5959 = vld [vmem:[#allocation4 + $0x758] sm:$0xff]
    %v5960 = vld [vmem:[#allocation4 + $0x760] sm:$0xff]
    %v5961 = vld [vmem:[#allocation4 + $0x768] sm:$0xff]
    %v5962 = vld [vmem:[#allocation4 + $0x770] sm:$0xff]
    %v5963 = vld [vmem:[#allocation4 + $0x778] sm:$0xff]
    %v5964 = vld [vmem:[#allocation4 + $0x780] sm:$0xff]
    %v5965 = vld [vmem:[#allocation4 + $0x788] sm:$0xff]
    %v5966 = vld [vmem:[#allocation4 + $0x790] sm:$0xff]
    %v5967 = vld [vmem:[#allocation4 + $0x798] sm:$0xff]
    %v5968 = vld [vmem:[#allocation4 + $0x7a0] sm:$0xff]
    %v5969 = vld [vmem:[#allocation4 + $0x7a8] sm:$0xff]
    %v5970 = vld [vmem:[#allocation4 + $0x7b0] sm:$0xff]
    %v5971 = vld [vmem:[#allocation4 + $0x7b8] sm:$0xff]
    %v5972 = vld [vmem:[#allocation4 + $0x7c0] sm:$0xff]
    %v5973 = vld [vmem:[#allocation4 + $0x7c8] sm:$0xff]
    %v5974 = vld [vmem:[#allocation4 + $0x7d0] sm:$0xff]
    %v5975 = vld [vmem:[#allocation4 + $0x7d8] sm:$0xff]
    %v5976 = vld [vmem:[#allocation4 + $0x7e0] sm:$0xff]
    %v5977 = vld [vmem:[#allocation4 + $0x7e8] sm:$0xff]
    %v5978 = vld [vmem:[#allocation4 + $0x7f0] sm:$0xff]
    %v5979 = vld [vmem:[#allocation4 + $0x7f8] sm:$0xff]
    %v5980 = vld [vmem:[#allocation4 + $0x800] sm:$0xff]
    %v5981 = vld [vmem:[#allocation4 + $0x808] sm:$0xff]
    %v5982 = vld [vmem:[#allocation4 + $0x810] sm:$0xff]
    %v5983 = vld [vmem:[#allocation4 + $0x818] sm:$0xff]
    %v5984 = vld [vmem:[#allocation4 + $0x820] sm:$0xff]
    %v5985 = vld [vmem:[#allocation4 + $0x828] sm:$0xff]
    %v5986 = vld [vmem:[#allocation4 + $0x830] sm:$0xff]
    %v5987 = vld [vmem:[#allocation4 + $0x838] sm:$0xff]
    %v5988 = vld [vmem:[#allocation4 + $0x840] sm:$0xff]
    %v5989 = vld [vmem:[#allocation4 + $0x848] sm:$0xff]
    %v5990 = vld [vmem:[#allocation4 + $0x850] sm:$0xff]
    %v5991 = vld [vmem:[#allocation4 + $0x858] sm:$0xff]
    %v5992 = vld [vmem:[#allocation4 + $0x860] sm:$0xff]
    %v5993 = vld [vmem:[#allocation4 + $0x868] sm:$0xff]
    %v5994 = vld [vmem:[#allocation4 + $0x870] sm:$0xff]
    %v5995 = vld [vmem:[#allocation4 + $0x878] sm:$0xff]
    %v5996 = vld [vmem:[#allocation4 + $0x880] sm:$0xff]
    %v5997 = vld [vmem:[#allocation4 + $0x888] sm:$0xff]
    %v5998 = vld [vmem:[#allocation4 + $0x890] sm:$0xff]
    %v5999 = vld [vmem:[#allocation4 + $0x898] sm:$0xff]
    %v6000 = vld [vmem:[#allocation4 + $0x8a0] sm:$0xff]
    %v6001 = vld [vmem:[#allocation4 + $0x8a8] sm:$0xff]
    %v6002 = vld [vmem:[#allocation4 + $0x8b0] sm:$0xff]
    %v6003 = vld [vmem:[#allocation4 + $0x8b8] sm:$0xff]
    %v6004 = vld [vmem:[#allocation4 + $0x8c0] sm:$0xff]
    %v6005 = vld [vmem:[#allocation4 + $0x8c8] sm:$0xff]
    %v6006 = vld [vmem:[#allocation4 + $0x8d0] sm:$0xff]
    %v6007 = vld [vmem:[#allocation4 + $0x8d8] sm:$0xff]
    %v6008 = vld [vmem:[#allocation4 + $0x8e0] sm:$0xff]
    %v6009 = vld [vmem:[#allocation4 + $0x8e8] sm:$0xff]
    %v6010 = vld [vmem:[#allocation4 + $0x8f0] sm:$0xff]
    %v6011 = vld [vmem:[#allocation4 + $0x8f8] sm:$0xff]
    %v6012 = vld [vmem:[#allocation4 + $0x900] sm:$0xff]
    %v6013 = vld [vmem:[#allocation4 + $0x908] sm:$0xff]
    %v6014 = vld [vmem:[#allocation4 + $0x910] sm:$0xff]
    %v6015 = vld [vmem:[#allocation4 + $0x918] sm:$0xff]
    %v6016 = vld [vmem:[#allocation4 + $0x920] sm:$0xff]
    %v6017 = vld [vmem:[#allocation4 + $0x928] sm:$0xff]
    %v6018 = vld [vmem:[#allocation4 + $0x930] sm:$0xff]
    %v6019 = vld [vmem:[#allocation4 + $0x938] sm:$0xff]
    %v6020 = vld [vmem:[#allocation4 + $0x940] sm:$0xff]
    %v6021 = vld [vmem:[#allocation4 + $0x948] sm:$0xff]
    %v6022 = vld [vmem:[#allocation4 + $0x950] sm:$0xff]
    %v6023 = vld [vmem:[#allocation4 + $0x958] sm:$0xff]
    %v6024 = vld [vmem:[#allocation4 + $0x960] sm:$0xff]
    %v6025 = vld [vmem:[#allocation4 + $0x968] sm:$0xff]
    %v6026 = vld [vmem:[#allocation4 + $0x970] sm:$0xff]
    %v6027 = vld [vmem:[#allocation4 + $0x978] sm:$0xff]
    %v6028 = vld [vmem:[#allocation4 + $0x980] sm:$0xff]
    %v6029 = vld [vmem:[#allocation4 + $0x988] sm:$0xff]
    %v6030 = vld [vmem:[#allocation4 + $0x990] sm:$0xff]
    %v6031 = vld [vmem:[#allocation4 + $0x998] sm:$0xff]
    %v6032 = vld [vmem:[#allocation4 + $0x9a0] sm:$0xff]
    %v6033 = vld [vmem:[#allocation4 + $0x9a8] sm:$0xff]
    %v6034 = vld [vmem:[#allocation4 + $0x9b0] sm:$0xff]
    %v6035 = vld [vmem:[#allocation4 + $0x9b8] sm:$0xff]
    %v6036 = vld [vmem:[#allocation4 + $0x9c0] sm:$0xff]
    %v6037 = vld [vmem:[#allocation4 + $0x9c8] sm:$0xff]
    %v6038 = vld [vmem:[#allocation4 + $0x9d0] sm:$0xff]
    %v6039 = vld [vmem:[#allocation4 + $0x9d8] sm:$0xff]
    %v6040 = vld [vmem:[#allocation4 + $0x9e0] sm:$0xff]
    %v6041 = vld [vmem:[#allocation4 + $0x9e8] sm:$0xff]
    %v6042 = vld [vmem:[#allocation4 + $0x9f0] sm:$0xff]
    %v6043 = vld [vmem:[#allocation4 + $0x9f8] sm:$0xff]
    %v6044 = vld [vmem:[#allocation4 + $0xa00] sm:$0xff]
    %v6045 = vld [vmem:[#allocation4 + $0xa08] sm:$0xff]
    %v6046 = vld [vmem:[#allocation4 + $0xa10] sm:$0xff]
    %v6047 = vld [vmem:[#allocation4 + $0xa18] sm:$0xff]
    %v6048 = vld [vmem:[#allocation4 + $0xa20] sm:$0xff]
    %v6049 = vld [vmem:[#allocation4 + $0xa28] sm:$0xff]
    %v6050 = vld [vmem:[#allocation4 + $0xa30] sm:$0xff]
    %v6051 = vld [vmem:[#allocation4 + $0xa38] sm:$0xff]
    %v6052 = vld [vmem:[#allocation4 + $0xa40] sm:$0xff]
    %v6053 = vld [vmem:[#allocation4 + $0xa48] sm:$0xff]
    %v6054 = vld [vmem:[#allocation4 + $0xa50] sm:$0xff]
    %v6055 = vld [vmem:[#allocation4 + $0xa58] sm:$0xff]
    %v6056 = vld [vmem:[#allocation4 + $0xa60] sm:$0xff]
    %v6057 = vld [vmem:[#allocation4 + $0xa68] sm:$0xff]
    %v6058 = vld [vmem:[#allocation4 + $0xa70] sm:$0xff]
    %v6059 = vld [vmem:[#allocation4 + $0xa78] sm:$0xff]
    %v6060 = vld [vmem:[#allocation4 + $0xa80] sm:$0xff]
    %v6061 = vld [vmem:[#allocation4 + $0xa88] sm:$0xff]
    %v6062 = vld [vmem:[#allocation4 + $0xa90] sm:$0xff]
    %v6063 = vld [vmem:[#allocation4 + $0xa98] sm:$0xff]
    %v6064 = vld [vmem:[#allocation4 + $0xaa0] sm:$0xff]
    %v6065 = vld [vmem:[#allocation4 + $0xaa8] sm:$0xff]
    %v6066 = vld [vmem:[#allocation4 + $0xab0] sm:$0xff]
    %v6067 = vld [vmem:[#allocation4 + $0xab8] sm:$0xff]
    %v6068 = vld [vmem:[#allocation4 + $0xac0] sm:$0xff]
    %v6069 = vld [vmem:[#allocation4 + $0xac8] sm:$0xff]
    %v6070 = vld [vmem:[#allocation4 + $0xad0] sm:$0xff]
    %v6071 = vld [vmem:[#allocation4 + $0xad8] sm:$0xff]
    %v6072 = vld [vmem:[#allocation4 + $0xae0] sm:$0xff]
    %v6073 = vld [vmem:[#allocation4 + $0xae8] sm:$0xff]
    %v6074 = vld [vmem:[#allocation4 + $0xaf0] sm:$0xff]
    %v6075 = vld [vmem:[#allocation4 + $0xaf8] sm:$0xff]
    %v6076 = vld [vmem:[#allocation4 + $0xb00] sm:$0xff]
    %v6077 = vld [vmem:[#allocation4 + $0xb08] sm:$0xff]
    %v6078 = vld [vmem:[#allocation4 + $0xb10] sm:$0xff]
    %v6079 = vld [vmem:[#allocation4 + $0xb18] sm:$0xff]
    %v6080 = vld [vmem:[#allocation4 + $0xb20] sm:$0xff]
    %v6081 = vld [vmem:[#allocation4 + $0xb28] sm:$0xff]
    %v6082 = vld [vmem:[#allocation4 + $0xb30] sm:$0xff]
    %v6083 = vld [vmem:[#allocation4 + $0xb38] sm:$0xff]
    %v6084 = vld [vmem:[#allocation4 + $0xb40] sm:$0xff]
    %v6085 = vld [vmem:[#allocation4 + $0xb48] sm:$0xff]
    %v6086 = vld [vmem:[#allocation4 + $0xb50] sm:$0xff]
    %v6087 = vld [vmem:[#allocation4 + $0xb58] sm:$0xff]
    %v6088 = vld [vmem:[#allocation4 + $0xb60] sm:$0xff]
    %v6089 = vld [vmem:[#allocation4 + $0xb68] sm:$0xff]
    %v6090 = vld [vmem:[#allocation4 + $0xb70] sm:$0xff]
    %v6091 = vld [vmem:[#allocation4 + $0xb78] sm:$0xff]
    %v6092 = vld [vmem:[#allocation4 + $0xb80] sm:$0xff]
    %v6093 = vld [vmem:[#allocation4 + $0xb88] sm:$0xff]
    %v6094 = vld [vmem:[#allocation4 + $0xb90] sm:$0xff]
    %v6095 = vld [vmem:[#allocation4 + $0xb98] sm:$0xff]
    %v6096 = vld [vmem:[#allocation4 + $0xba0] sm:$0xff]
    %v6097 = vld [vmem:[#allocation4 + $0xba8] sm:$0xff]
    %v6098 = vld [vmem:[#allocation4 + $0xbb0] sm:$0xff]
    %v6099 = vld [vmem:[#allocation4 + $0xbb8] sm:$0xff]
    %v6100 = vld [vmem:[#allocation4 + $0xbc0] sm:$0xff]
    %v6101 = vld [vmem:[#allocation4 + $0xbc8] sm:$0xff]
    %v6102 = vld [vmem:[#allocation4 + $0xbd0] sm:$0xff]
    %v6103 = vld [vmem:[#allocation4 + $0xbd8] sm:$0xff]
    %v6104 = vld [vmem:[#allocation4 + $0xbe0] sm:$0xff]
    %v6105 = vld [vmem:[#allocation4 + $0xbe8] sm:$0xff]
    %v6106 = vld [vmem:[#allocation4 + $0xbf0] sm:$0xff]
    %v6107 = vld [vmem:[#allocation4 + $0xbf8] sm:$0xff]
    %v6108 = vld [vmem:[#allocation4 + $0xc00] sm:$0xff]
    %v6109 = vld [vmem:[#allocation4 + $0xc08] sm:$0xff]
    %v6110 = vld [vmem:[#allocation4 + $0xc10] sm:$0xff]
    %v6111 = vld [vmem:[#allocation4 + $0xc18] sm:$0xff]
    %v6112 = vld [vmem:[#allocation4 + $0xc20] sm:$0xff]
    %v6113 = vld [vmem:[#allocation4 + $0xc28] sm:$0xff]
    %v6114 = vld [vmem:[#allocation4 + $0xc30] sm:$0xff]
    %v6115 = vld [vmem:[#allocation4 + $0xc38] sm:$0xff]
    %v6116 = vld [vmem:[#allocation4 + $0xc40] sm:$0xff]
    %v6117 = vld [vmem:[#allocation4 + $0xc48] sm:$0xff]
    %v6118 = vld [vmem:[#allocation4 + $0xc50] sm:$0xff]
    %v6119 = vld [vmem:[#allocation4 + $0xc58] sm:$0xff]
    %v6120 = vld [vmem:[#allocation4 + $0xc60] sm:$0xff]
    %v6121 = vld [vmem:[#allocation4 + $0xc68] sm:$0xff]
    %v6122 = vld [vmem:[#allocation4 + $0xc70] sm:$0xff]
    %v6123 = vld [vmem:[#allocation4 + $0xc78] sm:$0xff]
    %v6124 = vld [vmem:[#allocation4 + $0xc80] sm:$0xff]
    %v6125 = vld [vmem:[#allocation4 + $0xc88] sm:$0xff]
    %v6126 = vld [vmem:[#allocation4 + $0xc90] sm:$0xff]
    %v6127 = vld [vmem:[#allocation4 + $0xc98] sm:$0xff]
    %v6128 = vld [vmem:[#allocation4 + $0xca0] sm:$0xff]
    %v6129 = vld [vmem:[#allocation4 + $0xca8] sm:$0xff]
    %v6130 = vld [vmem:[#allocation4 + $0xcb0] sm:$0xff]
    %v6131 = vld [vmem:[#allocation4 + $0xcb8] sm:$0xff]
    %v6132 = vld [vmem:[#allocation4 + $0xcc0] sm:$0xff]
    %v6133 = vld [vmem:[#allocation4 + $0xcc8] sm:$0xff]
    %v6134 = vld [vmem:[#allocation4 + $0xcd0] sm:$0xff]
    %v6135 = vld [vmem:[#allocation4 + $0xcd8] sm:$0xff]
    %v6136 = vld [vmem:[#allocation4 + $0xce0] sm:$0xff]
    %v6137 = vld [vmem:[#allocation4 + $0xce8] sm:$0xff]
    %v6138 = vld [vmem:[#allocation4 + $0xcf0] sm:$0xff]
    %v6139 = vld [vmem:[#allocation4 + $0xcf8] sm:$0xff]
    %v6140 = vld [vmem:[#allocation4 + $0xd00] sm:$0xff]
    %v6141 = vld [vmem:[#allocation4 + $0xd08] sm:$0xff]
    %v6142 = vld [vmem:[#allocation4 + $0xd10] sm:$0xff]
    %v6143 = vld [vmem:[#allocation4 + $0xd18] sm:$0xff]
    %v6144 = vld [vmem:[#allocation4 + $0xd20] sm:$0xff]
    %v6145 = vld [vmem:[#allocation4 + $0xd28] sm:$0xff]
    %v6146 = vld [vmem:[#allocation4 + $0xd30] sm:$0xff]
    %v6147 = vld [vmem:[#allocation4 + $0xd38] sm:$0xff]
    %v6148 = vld [vmem:[#allocation4 + $0xd40] sm:$0xff]
    %v6149 = vld [vmem:[#allocation4 + $0xd48] sm:$0xff]
    %v6150 = vld [vmem:[#allocation4 + $0xd50] sm:$0xff]
    %v6151 = vld [vmem:[#allocation4 + $0xd58] sm:$0xff]
    %v6152 = vld [vmem:[#allocation4 + $0xd60] sm:$0xff]
    %v6153 = vld [vmem:[#allocation4 + $0xd68] sm:$0xff]
    %v6154 = vld [vmem:[#allocation4 + $0xd70] sm:$0xff]
    %v6155 = vld [vmem:[#allocation4 + $0xd78] sm:$0xff]
    %v6156 = vld [vmem:[#allocation4 + $0xd80] sm:$0xff]
    %v6157 = vld [vmem:[#allocation4 + $0xd88] sm:$0xff]
    %v6158 = vld [vmem:[#allocation4 + $0xd90] sm:$0xff]
    %v6159 = vld [vmem:[#allocation4 + $0xd98] sm:$0xff]
    %v6160 = vld [vmem:[#allocation4 + $0xda0] sm:$0xff]
    %v6161 = vld [vmem:[#allocation4 + $0xda8] sm:$0xff]
    %v6162 = vld [vmem:[#allocation4 + $0xdb0] sm:$0xff]
    %v6163 = vld [vmem:[#allocation4 + $0xdb8] sm:$0xff]
    %v6164 = vld [vmem:[#allocation4 + $0xdc0] sm:$0xff]
    %v6165 = vld [vmem:[#allocation4 + $0xdc8] sm:$0xff]
    %v6166 = vld [vmem:[#allocation4 + $0xdd0] sm:$0xff]
    %v6167 = vld [vmem:[#allocation4 + $0xdd8] sm:$0xff]
    %v6168 = vld [vmem:[#allocation4 + $0xde0] sm:$0xff]
    %v6169 = vld [vmem:[#allocation4 + $0xde8] sm:$0xff]
    %v6170 = vld [vmem:[#allocation4 + $0xdf0] sm:$0xff]
    %v6171 = vld [vmem:[#allocation4 + $0xdf8] sm:$0xff]
    %v6172 = vld [vmem:[#allocation4 + $0xe00] sm:$0xff]
    %v6173 = vld [vmem:[#allocation4 + $0xe08] sm:$0xff]
    %v6174 = vld [vmem:[#allocation4 + $0xe10] sm:$0xff]
    %v6175 = vld [vmem:[#allocation4 + $0xe18] sm:$0xff]
    %v6176 = vld [vmem:[#allocation4 + $0xe20] sm:$0xff]
    %v6177 = vld [vmem:[#allocation4 + $0xe28] sm:$0xff]
    %v6178 = vld [vmem:[#allocation4 + $0xe30] sm:$0xff]
    %v6179 = vld [vmem:[#allocation4 + $0xe38] sm:$0xff]
    %v6180 = vld [vmem:[#allocation4 + $0xe40] sm:$0xff]
    %v6181 = vld [vmem:[#allocation4 + $0xe48] sm:$0xff]
    %v6182 = vld [vmem:[#allocation4 + $0xe50] sm:$0xff]
    %v6183 = vld [vmem:[#allocation4 + $0xe58] sm:$0xff]
    %v6184 = vld [vmem:[#allocation4 + $0xe60] sm:$0xff]
    %v6185 = vld [vmem:[#allocation4 + $0xe68] sm:$0xff]
    %v6186 = vld [vmem:[#allocation4 + $0xe70] sm:$0xff]
    %v6187 = vld [vmem:[#allocation4 + $0xe78] sm:$0xff]
    %v6188 = vld [vmem:[#allocation4 + $0xe80] sm:$0xff]
    %v6189 = vld [vmem:[#allocation4 + $0xe88] sm:$0xff]
    %v6190 = vld [vmem:[#allocation4 + $0xe90] sm:$0xff]
    %v6191 = vld [vmem:[#allocation4 + $0xe98] sm:$0xff]
    %v6192 = vld [vmem:[#allocation4 + $0xea0] sm:$0xff]
    %v6193 = vld [vmem:[#allocation4 + $0xea8] sm:$0xff]
    %v6194 = vld [vmem:[#allocation4 + $0xeb0] sm:$0xff]
    %v6195 = vld [vmem:[#allocation4 + $0xeb8] sm:$0xff]
    %v6196 = vld [vmem:[#allocation4 + $0xec0] sm:$0xff]
    %v6197 = vld [vmem:[#allocation4 + $0xec8] sm:$0xff]
    %v6198 = vld [vmem:[#allocation4 + $0xed0] sm:$0xff]
    %v6199 = vld [vmem:[#allocation4 + $0xed8] sm:$0xff]
    %v6200 = vld [vmem:[#allocation4 + $0xee0] sm:$0xff]
    %v6201 = vld [vmem:[#allocation4 + $0xee8] sm:$0xff]
    %v6202 = vld [vmem:[#allocation4 + $0xef0] sm:$0xff]
    %v6203 = vld [vmem:[#allocation4 + $0xef8] sm:$0xff]
    %v6204 = vld [vmem:[#allocation4 + $0xf00] sm:$0xff]
    %v6205 = vld [vmem:[#allocation4 + $0xf08] sm:$0xff]
    %v6206 = vld [vmem:[#allocation4 + $0xf10] sm:$0xff]
    %v6207 = vld [vmem:[#allocation4 + $0xf18] sm:$0xff]
    %v6208 = vld [vmem:[#allocation4 + $0xf20] sm:$0xff]
    %v6209 = vld [vmem:[#allocation4 + $0xf28] sm:$0xff]
    %v6210 = vld [vmem:[#allocation4 + $0xf30] sm:$0xff]
    %v6211 = vld [vmem:[#allocation4 + $0xf38] sm:$0xff]
    %v6212 = vld [vmem:[#allocation4 + $0xf40] sm:$0xff]
    %v6213 = vld [vmem:[#allocation4 + $0xf48] sm:$0xff]
    %v6214 = vld [vmem:[#allocation4 + $0xf50] sm:$0xff]
    %v6215 = vld [vmem:[#allocation4 + $0xf58] sm:$0xff]
    %v6216 = vld [vmem:[#allocation4 + $0xf60] sm:$0xff]
    %v6217 = vld [vmem:[#allocation4 + $0xf68] sm:$0xff]
    %v6218 = vld [vmem:[#allocation4 + $0xf70] sm:$0xff]
    %v6219 = vld [vmem:[#allocation4 + $0xf78] sm:$0xff]
    %v6220 = vld [vmem:[#allocation4 + $0xf80] sm:$0xff]
    %v6221 = vld [vmem:[#allocation4 + $0xf88] sm:$0xff]
    %v6222 = vld [vmem:[#allocation4 + $0xf90] sm:$0xff]
    %v6223 = vld [vmem:[#allocation4 + $0xf98] sm:$0xff]
    %v6224 = vld [vmem:[#allocation4 + $0xfa0] sm:$0xff]
    %v6225 = vld [vmem:[#allocation4 + $0xfa8] sm:$0xff]
    %v6226 = vld [vmem:[#allocation4 + $0xfb0] sm:$0xff]
    %v6227 = vld [vmem:[#allocation4 + $0xfb8] sm:$0xff]
    %v6228 = vld [vmem:[#allocation4 + $0xfc0] sm:$0xff]
    %v6229 = vld [vmem:[#allocation4 + $0xfc8] sm:$0xff]
    %v6230 = vld [vmem:[#allocation4 + $0xfd0] sm:$0xff]
    %v6231 = vld [vmem:[#allocation4 + $0xfd8] sm:$0xff]
    %v6232 = vld [vmem:[#allocation4 + $0xfe0] sm:$0xff]
    %v6233 = vld [vmem:[#allocation4 + $0xfe8] sm:$0xff]
    %v6234 = vld [vmem:[#allocation4 + $0xff0] sm:$0xff]
    %v6235 = vld [vmem:[#allocation4 + $0xff8] sm:$0xff]
    %v6236 = vld [vmem:[#allocation6] sm:$0xf]
    %v6238 = vlaneseq
    %v6239 = vshrl.u32 %v6238, 7
    %v6240 = vsub.s32 0, %v6239
    %v6241 = vrot.slane %v6236, %v6240
    %v6242 = vlaneseq
    %v6243 = vshrl.u32 %v6242, 7
    %v6244 = vsub.s32 1, %v6243
    %v6245 = vrot.slane %v6236, %v6244
    %v6246 = vlaneseq
    %v6247 = vshrl.u32 %v6246, 7
    %v6248 = vsub.s32 2, %v6247
    %v6249 = vrot.slane %v6236, %v6248
    %v6250 = vlaneseq
    %v6251 = vshrl.u32 %v6250, 7
    %v6252 = vsub.s32 3, %v6251
    %v6253 = vrot.slane %v6236, %v6252
    %v6770 = vunpack.c.l.b16 %v5724
    %v6771 = vunpack.c.h.b16 %v5724
    %v6772 = vunpack.c.l.b16 %v5725
    %v6773 = vunpack.c.h.b16 %v5725
    %v6774 = vunpack.c.l.b16 %v5726
    %v6775 = vunpack.c.h.b16 %v5726
    %v6776 = vunpack.c.l.b16 %v5727
    %v6777 = vunpack.c.h.b16 %v5727
    %v6778 = vunpack.c.l.b16 %v5728
    %v6779 = vunpack.c.h.b16 %v5728
    %v6780 = vunpack.c.l.b16 %v5729
    %v6781 = vunpack.c.h.b16 %v5729
    %v6782 = vunpack.c.l.b16 %v5730
    %v6783 = vunpack.c.h.b16 %v5730
    %v6784 = vunpack.c.l.b16 %v5731
    %v6785 = vunpack.c.h.b16 %v5731
    %v6786 = vunpack.c.l.b16 %v5732
    %v6787 = vunpack.c.h.b16 %v5732
    %v6788 = vunpack.c.l.b16 %v5733
    %v6789 = vunpack.c.h.b16 %v5733
    %v6790 = vunpack.c.l.b16 %v5734
    %v6791 = vunpack.c.h.b16 %v5734
    %v6792 = vunpack.c.l.b16 %v5735
    %v6793 = vunpack.c.h.b16 %v5735
    %v6794 = vunpack.c.l.b16 %v5736
    %v6795 = vunpack.c.h.b16 %v5736
    %v6796 = vunpack.c.l.b16 %v5737
    %v6797 = vunpack.c.h.b16 %v5737
    %v6798 = vunpack.c.l.b16 %v5738
    %v6799 = vunpack.c.h.b16 %v5738
    %v6800 = vunpack.c.l.b16 %v5739
    %v6801 = vunpack.c.h.b16 %v5739
    %v6802 = vunpack.c.l.b16 %v5740
    %v6803 = vunpack.c.h.b16 %v5740
    %v6804 = vunpack.c.l.b16 %v5741
    %v6805 = vunpack.c.h.b16 %v5741
    %v6806 = vunpack.c.l.b16 %v5742
    %v6807 = vunpack.c.h.b16 %v5742
    %v6808 = vunpack.c.l.b16 %v5743
    %v6809 = vunpack.c.h.b16 %v5743
    %v6810 = vunpack.c.l.b16 %v5744
    %v6811 = vunpack.c.h.b16 %v5744
    %v6812 = vunpack.c.l.b16 %v5745
    %v6813 = vunpack.c.h.b16 %v5745
    %v6814 = vunpack.c.l.b16 %v5746
    %v6815 = vunpack.c.h.b16 %v5746
    %v6816 = vunpack.c.l.b16 %v5747
    %v6817 = vunpack.c.h.b16 %v5747
    %v6818 = vunpack.c.l.b16 %v5748
    %v6819 = vunpack.c.h.b16 %v5748
    %v6820 = vunpack.c.l.b16 %v5749
    %v6821 = vunpack.c.h.b16 %v5749
    %v6822 = vunpack.c.l.b16 %v5750
    %v6823 = vunpack.c.h.b16 %v5750
    %v6824 = vunpack.c.l.b16 %v5751
    %v6825 = vunpack.c.h.b16 %v5751
    %v6826 = vunpack.c.l.b16 %v5752
    %v6827 = vunpack.c.h.b16 %v5752
    %v6828 = vunpack.c.l.b16 %v5753
    %v6829 = vunpack.c.h.b16 %v5753
    %v6830 = vunpack.c.l.b16 %v5754
    %v6831 = vunpack.c.h.b16 %v5754
    %v6832 = vunpack.c.l.b16 %v5755
    %v6833 = vunpack.c.h.b16 %v5755
    %v6834 = vunpack.c.l.b16 %v5756
    %v6835 = vunpack.c.h.b16 %v5756
    %v6836 = vunpack.c.l.b16 %v5757
    %v6837 = vunpack.c.h.b16 %v5757
    %v6838 = vunpack.c.l.b16 %v5758
    %v6839 = vunpack.c.h.b16 %v5758
    %v6840 = vunpack.c.l.b16 %v5759
    %v6841 = vunpack.c.h.b16 %v5759
    %v6842 = vunpack.c.l.b16 %v5760
    %v6843 = vunpack.c.h.b16 %v5760
    %v6844 = vunpack.c.l.b16 %v5761
    %v6845 = vunpack.c.h.b16 %v5761
    %v6846 = vunpack.c.l.b16 %v5762
    %v6847 = vunpack.c.h.b16 %v5762
    %v6848 = vunpack.c.l.b16 %v5763
    %v6849 = vunpack.c.h.b16 %v5763
    %v6850 = vunpack.c.l.b16 %v5764
    %v6851 = vunpack.c.h.b16 %v5764
    %v6852 = vunpack.c.l.b16 %v5765
    %v6853 = vunpack.c.h.b16 %v5765
    %v6854 = vunpack.c.l.b16 %v5766
    %v6855 = vunpack.c.h.b16 %v5766
    %v6856 = vunpack.c.l.b16 %v5767
    %v6857 = vunpack.c.h.b16 %v5767
    %v6858 = vunpack.c.l.b16 %v5768
    %v6859 = vunpack.c.h.b16 %v5768
    %v6860 = vunpack.c.l.b16 %v5769
    %v6861 = vunpack.c.h.b16 %v5769
    %v6862 = vunpack.c.l.b16 %v5770
    %v6863 = vunpack.c.h.b16 %v5770
    %v6864 = vunpack.c.l.b16 %v5771
    %v6865 = vunpack.c.h.b16 %v5771
    %v6866 = vunpack.c.l.b16 %v5772
    %v6867 = vunpack.c.h.b16 %v5772
    %v6868 = vunpack.c.l.b16 %v5773
    %v6869 = vunpack.c.h.b16 %v5773
    %v6870 = vunpack.c.l.b16 %v5774
    %v6871 = vunpack.c.h.b16 %v5774
    %v6872 = vunpack.c.l.b16 %v5775
    %v6873 = vunpack.c.h.b16 %v5775
    %v6874 = vunpack.c.l.b16 %v5776
    %v6875 = vunpack.c.h.b16 %v5776
    %v6876 = vunpack.c.l.b16 %v5777
    %v6877 = vunpack.c.h.b16 %v5777
    %v6878 = vunpack.c.l.b16 %v5778
    %v6879 = vunpack.c.h.b16 %v5778
    %v6880 = vunpack.c.l.b16 %v5779
    %v6881 = vunpack.c.h.b16 %v5779
    %v6882 = vunpack.c.l.b16 %v5780
    %v6883 = vunpack.c.h.b16 %v5780
    %v6884 = vunpack.c.l.b16 %v5781
    %v6885 = vunpack.c.h.b16 %v5781
    %v6886 = vunpack.c.l.b16 %v5782
    %v6887 = vunpack.c.h.b16 %v5782
    %v6888 = vunpack.c.l.b16 %v5783
    %v6889 = vunpack.c.h.b16 %v5783
    %v6890 = vunpack.c.l.b16 %v5784
    %v6891 = vunpack.c.h.b16 %v5784
    %v6892 = vunpack.c.l.b16 %v5785
    %v6893 = vunpack.c.h.b16 %v5785
    %v6894 = vunpack.c.l.b16 %v5786
    %v6895 = vunpack.c.h.b16 %v5786
    %v6896 = vunpack.c.l.b16 %v5787
    %v6897 = vunpack.c.h.b16 %v5787
    %v6898 = vunpack.c.l.b16 %v5788
    %v6899 = vunpack.c.h.b16 %v5788
    %v6900 = vunpack.c.l.b16 %v5789
    %v6901 = vunpack.c.h.b16 %v5789
    %v6902 = vunpack.c.l.b16 %v5790
    %v6903 = vunpack.c.h.b16 %v5790
    %v6904 = vunpack.c.l.b16 %v5791
    %v6905 = vunpack.c.h.b16 %v5791
    %v6906 = vunpack.c.l.b16 %v5792
    %v6907 = vunpack.c.h.b16 %v5792
    %v6908 = vunpack.c.l.b16 %v5793
    %v6909 = vunpack.c.h.b16 %v5793
    %v6910 = vunpack.c.l.b16 %v5794
    %v6911 = vunpack.c.h.b16 %v5794
    %v6912 = vunpack.c.l.b16 %v5795
    %v6913 = vunpack.c.h.b16 %v5795
    %v6914 = vunpack.c.l.b16 %v5796
    %v6915 = vunpack.c.h.b16 %v5796
    %v6916 = vunpack.c.l.b16 %v5797
    %v6917 = vunpack.c.h.b16 %v5797
    %v6918 = vunpack.c.l.b16 %v5798
    %v6919 = vunpack.c.h.b16 %v5798
    %v6920 = vunpack.c.l.b16 %v5799
    %v6921 = vunpack.c.h.b16 %v5799
    %v6922 = vunpack.c.l.b16 %v5800
    %v6923 = vunpack.c.h.b16 %v5800
    %v6924 = vunpack.c.l.b16 %v5801
    %v6925 = vunpack.c.h.b16 %v5801
    %v6926 = vunpack.c.l.b16 %v5802
    %v6927 = vunpack.c.h.b16 %v5802
    %v6928 = vunpack.c.l.b16 %v5803
    %v6929 = vunpack.c.h.b16 %v5803
    %v6930 = vunpack.c.l.b16 %v5804
    %v6931 = vunpack.c.h.b16 %v5804
    %v6932 = vunpack.c.l.b16 %v5805
    %v6933 = vunpack.c.h.b16 %v5805
    %v6934 = vunpack.c.l.b16 %v5806
    %v6935 = vunpack.c.h.b16 %v5806
    %v6936 = vunpack.c.l.b16 %v5807
    %v6937 = vunpack.c.h.b16 %v5807
    %v6938 = vunpack.c.l.b16 %v5808
    %v6939 = vunpack.c.h.b16 %v5808
    %v6940 = vunpack.c.l.b16 %v5809
    %v6941 = vunpack.c.h.b16 %v5809
    %v6942 = vunpack.c.l.b16 %v5810
    %v6943 = vunpack.c.h.b16 %v5810
    %v6944 = vunpack.c.l.b16 %v5811
    %v6945 = vunpack.c.h.b16 %v5811
    %v6946 = vunpack.c.l.b16 %v5812
    %v6947 = vunpack.c.h.b16 %v5812
    %v6948 = vunpack.c.l.b16 %v5813
    %v6949 = vunpack.c.h.b16 %v5813
    %v6950 = vunpack.c.l.b16 %v5814
    %v6951 = vunpack.c.h.b16 %v5814
    %v6952 = vunpack.c.l.b16 %v5815
    %v6953 = vunpack.c.h.b16 %v5815
    %v6954 = vunpack.c.l.b16 %v5816
    %v6955 = vunpack.c.h.b16 %v5816
    %v6956 = vunpack.c.l.b16 %v5817
    %v6957 = vunpack.c.h.b16 %v5817
    %v6958 = vunpack.c.l.b16 %v5818
    %v6959 = vunpack.c.h.b16 %v5818
    %v6960 = vunpack.c.l.b16 %v5819
    %v6961 = vunpack.c.h.b16 %v5819
    %v6962 = vunpack.c.l.b16 %v5820
    %v6963 = vunpack.c.h.b16 %v5820
    %v6964 = vunpack.c.l.b16 %v5821
    %v6965 = vunpack.c.h.b16 %v5821
    %v6966 = vunpack.c.l.b16 %v5822
    %v6967 = vunpack.c.h.b16 %v5822
    %v6968 = vunpack.c.l.b16 %v5823
    %v6969 = vunpack.c.h.b16 %v5823
    %v6970 = vunpack.c.l.b16 %v5824
    %v6971 = vunpack.c.h.b16 %v5824
    %v6972 = vunpack.c.l.b16 %v5825
    %v6973 = vunpack.c.h.b16 %v5825
    %v6974 = vunpack.c.l.b16 %v5826
    %v6975 = vunpack.c.h.b16 %v5826
    %v6976 = vunpack.c.l.b16 %v5827
    %v6977 = vunpack.c.h.b16 %v5827
    %v6978 = vunpack.c.l.b16 %v5828
    %v6979 = vunpack.c.h.b16 %v5828
    %v6980 = vunpack.c.l.b16 %v5829
    %v6981 = vunpack.c.h.b16 %v5829
    %v6982 = vunpack.c.l.b16 %v5830
    %v6983 = vunpack.c.h.b16 %v5830
    %v6984 = vunpack.c.l.b16 %v5831
    %v6985 = vunpack.c.h.b16 %v5831
    %v6986 = vunpack.c.l.b16 %v5832
    %v6987 = vunpack.c.h.b16 %v5832
    %v6988 = vunpack.c.l.b16 %v5833
    %v6989 = vunpack.c.h.b16 %v5833
    %v6990 = vunpack.c.l.b16 %v5834
    %v6991 = vunpack.c.h.b16 %v5834
    %v6992 = vunpack.c.l.b16 %v5835
    %v6993 = vunpack.c.h.b16 %v5835
    %v6994 = vunpack.c.l.b16 %v5836
    %v6995 = vunpack.c.h.b16 %v5836
    %v6996 = vunpack.c.l.b16 %v5837
    %v6997 = vunpack.c.h.b16 %v5837
    %v6998 = vunpack.c.l.b16 %v5838
    %v6999 = vunpack.c.h.b16 %v5838
    %v7000 = vunpack.c.l.b16 %v5839
    %v7001 = vunpack.c.h.b16 %v5839
    %v7002 = vunpack.c.l.b16 %v5840
    %v7003 = vunpack.c.h.b16 %v5840
    %v7004 = vunpack.c.l.b16 %v5841
    %v7005 = vunpack.c.h.b16 %v5841
    %v7006 = vunpack.c.l.b16 %v5842
    %v7007 = vunpack.c.h.b16 %v5842
    %v7008 = vunpack.c.l.b16 %v5843
    %v7009 = vunpack.c.h.b16 %v5843
    %v7010 = vunpack.c.l.b16 %v5844
    %v7011 = vunpack.c.h.b16 %v5844
    %v7012 = vunpack.c.l.b16 %v5845
    %v7013 = vunpack.c.h.b16 %v5845
    %v7014 = vunpack.c.l.b16 %v5846
    %v7015 = vunpack.c.h.b16 %v5846
    %v7016 = vunpack.c.l.b16 %v5847
    %v7017 = vunpack.c.h.b16 %v5847
    %v7018 = vunpack.c.l.b16 %v5848
    %v7019 = vunpack.c.h.b16 %v5848
    %v7020 = vunpack.c.l.b16 %v5849
    %v7021 = vunpack.c.h.b16 %v5849
    %v7022 = vunpack.c.l.b16 %v5850
    %v7023 = vunpack.c.h.b16 %v5850
    %v7024 = vunpack.c.l.b16 %v5851
    %v7025 = vunpack.c.h.b16 %v5851
    %v7026 = vunpack.c.l.b16 %v5852
    %v7027 = vunpack.c.h.b16 %v5852
    %v7028 = vunpack.c.l.b16 %v5853
    %v7029 = vunpack.c.h.b16 %v5853
    %v7030 = vunpack.c.l.b16 %v5854
    %v7031 = vunpack.c.h.b16 %v5854
    %v7032 = vunpack.c.l.b16 %v5855
    %v7033 = vunpack.c.h.b16 %v5855
    %v7034 = vunpack.c.l.b16 %v5856
    %v7035 = vunpack.c.h.b16 %v5856
    %v7036 = vunpack.c.l.b16 %v5857
    %v7037 = vunpack.c.h.b16 %v5857
    %v7038 = vunpack.c.l.b16 %v5858
    %v7039 = vunpack.c.h.b16 %v5858
    %v7040 = vunpack.c.l.b16 %v5859
    %v7041 = vunpack.c.h.b16 %v5859
    %v7042 = vunpack.c.l.b16 %v5860
    %v7043 = vunpack.c.h.b16 %v5860
    %v7044 = vunpack.c.l.b16 %v5861
    %v7045 = vunpack.c.h.b16 %v5861
    %v7046 = vunpack.c.l.b16 %v5862
    %v7047 = vunpack.c.h.b16 %v5862
    %v7048 = vunpack.c.l.b16 %v5863
    %v7049 = vunpack.c.h.b16 %v5863
    %v7050 = vunpack.c.l.b16 %v5864
    %v7051 = vunpack.c.h.b16 %v5864
    %v7052 = vunpack.c.l.b16 %v5865
    %v7053 = vunpack.c.h.b16 %v5865
    %v7054 = vunpack.c.l.b16 %v5866
    %v7055 = vunpack.c.h.b16 %v5866
    %v7056 = vunpack.c.l.b16 %v5867
    %v7057 = vunpack.c.h.b16 %v5867
    %v7058 = vunpack.c.l.b16 %v5868
    %v7059 = vunpack.c.h.b16 %v5868
    %v7060 = vunpack.c.l.b16 %v5869
    %v7061 = vunpack.c.h.b16 %v5869
    %v7062 = vunpack.c.l.b16 %v5870
    %v7063 = vunpack.c.h.b16 %v5870
    %v7064 = vunpack.c.l.b16 %v5871
    %v7065 = vunpack.c.h.b16 %v5871
    %v7066 = vunpack.c.l.b16 %v5872
    %v7067 = vunpack.c.h.b16 %v5872
    %v7068 = vunpack.c.l.b16 %v5873
    %v7069 = vunpack.c.h.b16 %v5873
    %v7070 = vunpack.c.l.b16 %v5874
    %v7071 = vunpack.c.h.b16 %v5874
    %v7072 = vunpack.c.l.b16 %v5875
    %v7073 = vunpack.c.h.b16 %v5875
    %v7074 = vunpack.c.l.b16 %v5876
    %v7075 = vunpack.c.h.b16 %v5876
    %v7076 = vunpack.c.l.b16 %v5877
    %v7077 = vunpack.c.h.b16 %v5877
    %v7078 = vunpack.c.l.b16 %v5878
    %v7079 = vunpack.c.h.b16 %v5878
    %v7080 = vunpack.c.l.b16 %v5879
    %v7081 = vunpack.c.h.b16 %v5879
    %v7082 = vunpack.c.l.b16 %v5880
    %v7083 = vunpack.c.h.b16 %v5880
    %v7084 = vunpack.c.l.b16 %v5881
    %v7085 = vunpack.c.h.b16 %v5881
    %v7086 = vunpack.c.l.b16 %v5882
    %v7087 = vunpack.c.h.b16 %v5882
    %v7088 = vunpack.c.l.b16 %v5883
    %v7089 = vunpack.c.h.b16 %v5883
    %v7090 = vunpack.c.l.b16 %v5884
    %v7091 = vunpack.c.h.b16 %v5884
    %v7092 = vunpack.c.l.b16 %v5885
    %v7093 = vunpack.c.h.b16 %v5885
    %v7094 = vunpack.c.l.b16 %v5886
    %v7095 = vunpack.c.h.b16 %v5886
    %v7096 = vunpack.c.l.b16 %v5887
    %v7097 = vunpack.c.h.b16 %v5887
    %v7098 = vunpack.c.l.b16 %v5888
    %v7099 = vunpack.c.h.b16 %v5888
    %v7100 = vunpack.c.l.b16 %v5889
    %v7101 = vunpack.c.h.b16 %v5889
    %v7102 = vunpack.c.l.b16 %v5890
    %v7103 = vunpack.c.h.b16 %v5890
    %v7104 = vunpack.c.l.b16 %v5891
    %v7105 = vunpack.c.h.b16 %v5891
    %v7106 = vunpack.c.l.b16 %v5892
    %v7107 = vunpack.c.h.b16 %v5892
    %v7108 = vunpack.c.l.b16 %v5893
    %v7109 = vunpack.c.h.b16 %v5893
    %v7110 = vunpack.c.l.b16 %v5894
    %v7111 = vunpack.c.h.b16 %v5894
    %v7112 = vunpack.c.l.b16 %v5895
    %v7113 = vunpack.c.h.b16 %v5895
    %v7114 = vunpack.c.l.b16 %v5896
    %v7115 = vunpack.c.h.b16 %v5896
    %v7116 = vunpack.c.l.b16 %v5897
    %v7117 = vunpack.c.h.b16 %v5897
    %v7118 = vunpack.c.l.b16 %v5898
    %v7119 = vunpack.c.h.b16 %v5898
    %v7120 = vunpack.c.l.b16 %v5899
    %v7121 = vunpack.c.h.b16 %v5899
    %v7122 = vunpack.c.l.b16 %v5900
    %v7123 = vunpack.c.h.b16 %v5900
    %v7124 = vunpack.c.l.b16 %v5901
    %v7125 = vunpack.c.h.b16 %v5901
    %v7126 = vunpack.c.l.b16 %v5902
    %v7127 = vunpack.c.h.b16 %v5902
    %v7128 = vunpack.c.l.b16 %v5903
    %v7129 = vunpack.c.h.b16 %v5903
    %v7130 = vunpack.c.l.b16 %v5904
    %v7131 = vunpack.c.h.b16 %v5904
    %v7132 = vunpack.c.l.b16 %v5905
    %v7133 = vunpack.c.h.b16 %v5905
    %v7134 = vunpack.c.l.b16 %v5906
    %v7135 = vunpack.c.h.b16 %v5906
    %v7136 = vunpack.c.l.b16 %v5907
    %v7137 = vunpack.c.h.b16 %v5907
    %v7138 = vunpack.c.l.b16 %v5908
    %v7139 = vunpack.c.h.b16 %v5908
    %v7140 = vunpack.c.l.b16 %v5909
    %v7141 = vunpack.c.h.b16 %v5909
    %v7142 = vunpack.c.l.b16 %v5910
    %v7143 = vunpack.c.h.b16 %v5910
    %v7144 = vunpack.c.l.b16 %v5911
    %v7145 = vunpack.c.h.b16 %v5911
    %v7146 = vunpack.c.l.b16 %v5912
    %v7147 = vunpack.c.h.b16 %v5912
    %v7148 = vunpack.c.l.b16 %v5913
    %v7149 = vunpack.c.h.b16 %v5913
    %v7150 = vunpack.c.l.b16 %v5914
    %v7151 = vunpack.c.h.b16 %v5914
    %v7152 = vunpack.c.l.b16 %v5915
    %v7153 = vunpack.c.h.b16 %v5915
    %v7154 = vunpack.c.l.b16 %v5916
    %v7155 = vunpack.c.h.b16 %v5916
    %v7156 = vunpack.c.l.b16 %v5917
    %v7157 = vunpack.c.h.b16 %v5917
    %v7158 = vunpack.c.l.b16 %v5918
    %v7159 = vunpack.c.h.b16 %v5918
    %v7160 = vunpack.c.l.b16 %v5919
    %v7161 = vunpack.c.h.b16 %v5919
    %v7162 = vunpack.c.l.b16 %v5920
    %v7163 = vunpack.c.h.b16 %v5920
    %v7164 = vunpack.c.l.b16 %v5921
    %v7165 = vunpack.c.h.b16 %v5921
    %v7166 = vunpack.c.l.b16 %v5922
    %v7167 = vunpack.c.h.b16 %v5922
    %v7168 = vunpack.c.l.b16 %v5923
    %v7169 = vunpack.c.h.b16 %v5923
    %v7170 = vunpack.c.l.b16 %v5924
    %v7171 = vunpack.c.h.b16 %v5924
    %v7172 = vunpack.c.l.b16 %v5925
    %v7173 = vunpack.c.h.b16 %v5925
    %v7174 = vunpack.c.l.b16 %v5926
    %v7175 = vunpack.c.h.b16 %v5926
    %v7176 = vunpack.c.l.b16 %v5927
    %v7177 = vunpack.c.h.b16 %v5927
    %v7178 = vunpack.c.l.b16 %v5928
    %v7179 = vunpack.c.h.b16 %v5928
    %v7180 = vunpack.c.l.b16 %v5929
    %v7181 = vunpack.c.h.b16 %v5929
    %v7182 = vunpack.c.l.b16 %v5930
    %v7183 = vunpack.c.h.b16 %v5930
    %v7184 = vunpack.c.l.b16 %v5931
    %v7185 = vunpack.c.h.b16 %v5931
    %v7186 = vunpack.c.l.b16 %v5932
    %v7187 = vunpack.c.h.b16 %v5932
    %v7188 = vunpack.c.l.b16 %v5933
    %v7189 = vunpack.c.h.b16 %v5933
    %v7190 = vunpack.c.l.b16 %v5934
    %v7191 = vunpack.c.h.b16 %v5934
    %v7192 = vunpack.c.l.b16 %v5935
    %v7193 = vunpack.c.h.b16 %v5935
    %v7194 = vunpack.c.l.b16 %v5936
    %v7195 = vunpack.c.h.b16 %v5936
    %v7196 = vunpack.c.l.b16 %v5937
    %v7197 = vunpack.c.h.b16 %v5937
    %v7198 = vunpack.c.l.b16 %v5938
    %v7199 = vunpack.c.h.b16 %v5938
    %v7200 = vunpack.c.l.b16 %v5939
    %v7201 = vunpack.c.h.b16 %v5939
    %v7202 = vunpack.c.l.b16 %v5940
    %v7203 = vunpack.c.h.b16 %v5940
    %v7204 = vunpack.c.l.b16 %v5941
    %v7205 = vunpack.c.h.b16 %v5941
    %v7206 = vunpack.c.l.b16 %v5942
    %v7207 = vunpack.c.h.b16 %v5942
    %v7208 = vunpack.c.l.b16 %v5943
    %v7209 = vunpack.c.h.b16 %v5943
    %v7210 = vunpack.c.l.b16 %v5944
    %v7211 = vunpack.c.h.b16 %v5944
    %v7212 = vunpack.c.l.b16 %v5945
    %v7213 = vunpack.c.h.b16 %v5945
    %v7214 = vunpack.c.l.b16 %v5946
    %v7215 = vunpack.c.h.b16 %v5946
    %v7216 = vunpack.c.l.b16 %v5947
    %v7217 = vunpack.c.h.b16 %v5947
    %v7218 = vunpack.c.l.b16 %v5948
    %v7219 = vunpack.c.h.b16 %v5948
    %v7220 = vunpack.c.l.b16 %v5949
    %v7221 = vunpack.c.h.b16 %v5949
    %v7222 = vunpack.c.l.b16 %v5950
    %v7223 = vunpack.c.h.b16 %v5950
    %v7224 = vunpack.c.l.b16 %v5951
    %v7225 = vunpack.c.h.b16 %v5951
    %v7226 = vunpack.c.l.b16 %v5952
    %v7227 = vunpack.c.h.b16 %v5952
    %v7228 = vunpack.c.l.b16 %v5953
    %v7229 = vunpack.c.h.b16 %v5953
    %v7230 = vunpack.c.l.b16 %v5954
    %v7231 = vunpack.c.h.b16 %v5954
    %v7232 = vunpack.c.l.b16 %v5955
    %v7233 = vunpack.c.h.b16 %v5955
    %v7234 = vunpack.c.l.b16 %v5956
    %v7235 = vunpack.c.h.b16 %v5956
    %v7236 = vunpack.c.l.b16 %v5957
    %v7237 = vunpack.c.h.b16 %v5957
    %v7238 = vunpack.c.l.b16 %v5958
    %v7239 = vunpack.c.h.b16 %v5958
    %v7240 = vunpack.c.l.b16 %v5959
    %v7241 = vunpack.c.h.b16 %v5959
    %v7242 = vunpack.c.l.b16 %v5960
    %v7243 = vunpack.c.h.b16 %v5960
    %v7244 = vunpack.c.l.b16 %v5961
    %v7245 = vunpack.c.h.b16 %v5961
    %v7246 = vunpack.c.l.b16 %v5962
    %v7247 = vunpack.c.h.b16 %v5962
    %v7248 = vunpack.c.l.b16 %v5963
    %v7249 = vunpack.c.h.b16 %v5963
    %v7250 = vunpack.c.l.b16 %v5964
    %v7251 = vunpack.c.h.b16 %v5964
    %v7252 = vunpack.c.l.b16 %v5965
    %v7253 = vunpack.c.h.b16 %v5965
    %v7254 = vunpack.c.l.b16 %v5966
    %v7255 = vunpack.c.h.b16 %v5966
    %v7256 = vunpack.c.l.b16 %v5967
    %v7257 = vunpack.c.h.b16 %v5967
    %v7258 = vunpack.c.l.b16 %v5968
    %v7259 = vunpack.c.h.b16 %v5968
    %v7260 = vunpack.c.l.b16 %v5969
    %v7261 = vunpack.c.h.b16 %v5969
    %v7262 = vunpack.c.l.b16 %v5970
    %v7263 = vunpack.c.h.b16 %v5970
    %v7264 = vunpack.c.l.b16 %v5971
    %v7265 = vunpack.c.h.b16 %v5971
    %v7266 = vunpack.c.l.b16 %v5972
    %v7267 = vunpack.c.h.b16 %v5972
    %v7268 = vunpack.c.l.b16 %v5973
    %v7269 = vunpack.c.h.b16 %v5973
    %v7270 = vunpack.c.l.b16 %v5974
    %v7271 = vunpack.c.h.b16 %v5974
    %v7272 = vunpack.c.l.b16 %v5975
    %v7273 = vunpack.c.h.b16 %v5975
    %v7274 = vunpack.c.l.b16 %v5976
    %v7275 = vunpack.c.h.b16 %v5976
    %v7276 = vunpack.c.l.b16 %v5977
    %v7277 = vunpack.c.h.b16 %v5977
    %v7278 = vunpack.c.l.b16 %v5978
    %v7279 = vunpack.c.h.b16 %v5978
    %v7280 = vunpack.c.l.b16 %v5979
    %v7281 = vunpack.c.h.b16 %v5979
    %v7282 = vunpack.c.l.b16 %v5980
    %v7283 = vunpack.c.h.b16 %v5980
    %v7284 = vunpack.c.l.b16 %v5981
    %v7285 = vunpack.c.h.b16 %v5981
    %v7286 = vunpack.c.l.b16 %v5982
    %v7287 = vunpack.c.h.b16 %v5982
    %v7288 = vunpack.c.l.b16 %v5983
    %v7289 = vunpack.c.h.b16 %v5983
    %v7290 = vunpack.c.l.b16 %v5984
    %v7291 = vunpack.c.h.b16 %v5984
    %v7292 = vunpack.c.l.b16 %v5985
    %v7293 = vunpack.c.h.b16 %v5985
    %v7294 = vunpack.c.l.b16 %v5986
    %v7295 = vunpack.c.h.b16 %v5986
    %v7296 = vunpack.c.l.b16 %v5987
    %v7297 = vunpack.c.h.b16 %v5987
    %v7298 = vunpack.c.l.b16 %v5988
    %v7299 = vunpack.c.h.b16 %v5988
    %v7300 = vunpack.c.l.b16 %v5989
    %v7301 = vunpack.c.h.b16 %v5989
    %v7302 = vunpack.c.l.b16 %v5990
    %v7303 = vunpack.c.h.b16 %v5990
    %v7304 = vunpack.c.l.b16 %v5991
    %v7305 = vunpack.c.h.b16 %v5991
    %v7306 = vunpack.c.l.b16 %v5992
    %v7307 = vunpack.c.h.b16 %v5992
    %v7308 = vunpack.c.l.b16 %v5993
    %v7309 = vunpack.c.h.b16 %v5993
    %v7310 = vunpack.c.l.b16 %v5994
    %v7311 = vunpack.c.h.b16 %v5994
    %v7312 = vunpack.c.l.b16 %v5995
    %v7313 = vunpack.c.h.b16 %v5995
    %v7314 = vunpack.c.l.b16 %v5996
    %v7315 = vunpack.c.h.b16 %v5996
    %v7316 = vunpack.c.l.b16 %v5997
    %v7317 = vunpack.c.h.b16 %v5997
    %v7318 = vunpack.c.l.b16 %v5998
    %v7319 = vunpack.c.h.b16 %v5998
    %v7320 = vunpack.c.l.b16 %v5999
    %v7321 = vunpack.c.h.b16 %v5999
    %v7322 = vunpack.c.l.b16 %v6000
    %v7323 = vunpack.c.h.b16 %v6000
    %v7324 = vunpack.c.l.b16 %v6001
    %v7325 = vunpack.c.h.b16 %v6001
    %v7326 = vunpack.c.l.b16 %v6002
    %v7327 = vunpack.c.h.b16 %v6002
    %v7328 = vunpack.c.l.b16 %v6003
    %v7329 = vunpack.c.h.b16 %v6003
    %v7330 = vunpack.c.l.b16 %v6004
    %v7331 = vunpack.c.h.b16 %v6004
    %v7332 = vunpack.c.l.b16 %v6005
    %v7333 = vunpack.c.h.b16 %v6005
    %v7334 = vunpack.c.l.b16 %v6006
    %v7335 = vunpack.c.h.b16 %v6006
    %v7336 = vunpack.c.l.b16 %v6007
    %v7337 = vunpack.c.h.b16 %v6007
    %v7338 = vunpack.c.l.b16 %v6008
    %v7339 = vunpack.c.h.b16 %v6008
    %v7340 = vunpack.c.l.b16 %v6009
    %v7341 = vunpack.c.h.b16 %v6009
    %v7342 = vunpack.c.l.b16 %v6010
    %v7343 = vunpack.c.h.b16 %v6010
    %v7344 = vunpack.c.l.b16 %v6011
    %v7345 = vunpack.c.h.b16 %v6011
    %v7346 = vunpack.c.l.b16 %v6012
    %v7347 = vunpack.c.h.b16 %v6012
    %v7348 = vunpack.c.l.b16 %v6013
    %v7349 = vunpack.c.h.b16 %v6013
    %v7350 = vunpack.c.l.b16 %v6014
    %v7351 = vunpack.c.h.b16 %v6014
    %v7352 = vunpack.c.l.b16 %v6015
    %v7353 = vunpack.c.h.b16 %v6015
    %v7354 = vunpack.c.l.b16 %v6016
    %v7355 = vunpack.c.h.b16 %v6016
    %v7356 = vunpack.c.l.b16 %v6017
    %v7357 = vunpack.c.h.b16 %v6017
    %v7358 = vunpack.c.l.b16 %v6018
    %v7359 = vunpack.c.h.b16 %v6018
    %v7360 = vunpack.c.l.b16 %v6019
    %v7361 = vunpack.c.h.b16 %v6019
    %v7362 = vunpack.c.l.b16 %v6020
    %v7363 = vunpack.c.h.b16 %v6020
    %v7364 = vunpack.c.l.b16 %v6021
    %v7365 = vunpack.c.h.b16 %v6021
    %v7366 = vunpack.c.l.b16 %v6022
    %v7367 = vunpack.c.h.b16 %v6022
    %v7368 = vunpack.c.l.b16 %v6023
    %v7369 = vunpack.c.h.b16 %v6023
    %v7370 = vunpack.c.l.b16 %v6024
    %v7371 = vunpack.c.h.b16 %v6024
    %v7372 = vunpack.c.l.b16 %v6025
    %v7373 = vunpack.c.h.b16 %v6025
    %v7374 = vunpack.c.l.b16 %v6026
    %v7375 = vunpack.c.h.b16 %v6026
    %v7376 = vunpack.c.l.b16 %v6027
    %v7377 = vunpack.c.h.b16 %v6027
    %v7378 = vunpack.c.l.b16 %v6028
    %v7379 = vunpack.c.h.b16 %v6028
    %v7380 = vunpack.c.l.b16 %v6029
    %v7381 = vunpack.c.h.b16 %v6029
    %v7382 = vunpack.c.l.b16 %v6030
    %v7383 = vunpack.c.h.b16 %v6030
    %v7384 = vunpack.c.l.b16 %v6031
    %v7385 = vunpack.c.h.b16 %v6031
    %v7386 = vunpack.c.l.b16 %v6032
    %v7387 = vunpack.c.h.b16 %v6032
    %v7388 = vunpack.c.l.b16 %v6033
    %v7389 = vunpack.c.h.b16 %v6033
    %v7390 = vunpack.c.l.b16 %v6034
    %v7391 = vunpack.c.h.b16 %v6034
    %v7392 = vunpack.c.l.b16 %v6035
    %v7393 = vunpack.c.h.b16 %v6035
    %v7394 = vunpack.c.l.b16 %v6036
    %v7395 = vunpack.c.h.b16 %v6036
    %v7396 = vunpack.c.l.b16 %v6037
    %v7397 = vunpack.c.h.b16 %v6037
    %v7398 = vunpack.c.l.b16 %v6038
    %v7399 = vunpack.c.h.b16 %v6038
    %v7400 = vunpack.c.l.b16 %v6039
    %v7401 = vunpack.c.h.b16 %v6039
    %v7402 = vunpack.c.l.b16 %v6040
    %v7403 = vunpack.c.h.b16 %v6040
    %v7404 = vunpack.c.l.b16 %v6041
    %v7405 = vunpack.c.h.b16 %v6041
    %v7406 = vunpack.c.l.b16 %v6042
    %v7407 = vunpack.c.h.b16 %v6042
    %v7408 = vunpack.c.l.b16 %v6043
    %v7409 = vunpack.c.h.b16 %v6043
    %v7410 = vunpack.c.l.b16 %v6044
    %v7411 = vunpack.c.h.b16 %v6044
    %v7412 = vunpack.c.l.b16 %v6045
    %v7413 = vunpack.c.h.b16 %v6045
    %v7414 = vunpack.c.l.b16 %v6046
    %v7415 = vunpack.c.h.b16 %v6046
    %v7416 = vunpack.c.l.b16 %v6047
    %v7417 = vunpack.c.h.b16 %v6047
    %v7418 = vunpack.c.l.b16 %v6048
    %v7419 = vunpack.c.h.b16 %v6048
    %v7420 = vunpack.c.l.b16 %v6049
    %v7421 = vunpack.c.h.b16 %v6049
    %v7422 = vunpack.c.l.b16 %v6050
    %v7423 = vunpack.c.h.b16 %v6050
    %v7424 = vunpack.c.l.b16 %v6051
    %v7425 = vunpack.c.h.b16 %v6051
    %v7426 = vunpack.c.l.b16 %v6052
    %v7427 = vunpack.c.h.b16 %v6052
    %v7428 = vunpack.c.l.b16 %v6053
    %v7429 = vunpack.c.h.b16 %v6053
    %v7430 = vunpack.c.l.b16 %v6054
    %v7431 = vunpack.c.h.b16 %v6054
    %v7432 = vunpack.c.l.b16 %v6055
    %v7433 = vunpack.c.h.b16 %v6055
    %v7434 = vunpack.c.l.b16 %v6056
    %v7435 = vunpack.c.h.b16 %v6056
    %v7436 = vunpack.c.l.b16 %v6057
    %v7437 = vunpack.c.h.b16 %v6057
    %v7438 = vunpack.c.l.b16 %v6058
    %v7439 = vunpack.c.h.b16 %v6058
    %v7440 = vunpack.c.l.b16 %v6059
    %v7441 = vunpack.c.h.b16 %v6059
    %v7442 = vunpack.c.l.b16 %v6060
    %v7443 = vunpack.c.h.b16 %v6060
    %v7444 = vunpack.c.l.b16 %v6061
    %v7445 = vunpack.c.h.b16 %v6061
    %v7446 = vunpack.c.l.b16 %v6062
    %v7447 = vunpack.c.h.b16 %v6062
    %v7448 = vunpack.c.l.b16 %v6063
    %v7449 = vunpack.c.h.b16 %v6063
    %v7450 = vunpack.c.l.b16 %v6064
    %v7451 = vunpack.c.h.b16 %v6064
    %v7452 = vunpack.c.l.b16 %v6065
    %v7453 = vunpack.c.h.b16 %v6065
    %v7454 = vunpack.c.l.b16 %v6066
    %v7455 = vunpack.c.h.b16 %v6066
    %v7456 = vunpack.c.l.b16 %v6067
    %v7457 = vunpack.c.h.b16 %v6067
    %v7458 = vunpack.c.l.b16 %v6068
    %v7459 = vunpack.c.h.b16 %v6068
    %v7460 = vunpack.c.l.b16 %v6069
    %v7461 = vunpack.c.h.b16 %v6069
    %v7462 = vunpack.c.l.b16 %v6070
    %v7463 = vunpack.c.h.b16 %v6070
    %v7464 = vunpack.c.l.b16 %v6071
    %v7465 = vunpack.c.h.b16 %v6071
    %v7466 = vunpack.c.l.b16 %v6072
    %v7467 = vunpack.c.h.b16 %v6072
    %v7468 = vunpack.c.l.b16 %v6073
    %v7469 = vunpack.c.h.b16 %v6073
    %v7470 = vunpack.c.l.b16 %v6074
    %v7471 = vunpack.c.h.b16 %v6074
    %v7472 = vunpack.c.l.b16 %v6075
    %v7473 = vunpack.c.h.b16 %v6075
    %v7474 = vunpack.c.l.b16 %v6076
    %v7475 = vunpack.c.h.b16 %v6076
    %v7476 = vunpack.c.l.b16 %v6077
    %v7477 = vunpack.c.h.b16 %v6077
    %v7478 = vunpack.c.l.b16 %v6078
    %v7479 = vunpack.c.h.b16 %v6078
    %v7480 = vunpack.c.l.b16 %v6079
    %v7481 = vunpack.c.h.b16 %v6079
    %v7482 = vunpack.c.l.b16 %v6080
    %v7483 = vunpack.c.h.b16 %v6080
    %v7484 = vunpack.c.l.b16 %v6081
    %v7485 = vunpack.c.h.b16 %v6081
    %v7486 = vunpack.c.l.b16 %v6082
    %v7487 = vunpack.c.h.b16 %v6082
    %v7488 = vunpack.c.l.b16 %v6083
    %v7489 = vunpack.c.h.b16 %v6083
    %v7490 = vunpack.c.l.b16 %v6084
    %v7491 = vunpack.c.h.b16 %v6084
    %v7492 = vunpack.c.l.b16 %v6085
    %v7493 = vunpack.c.h.b16 %v6085
    %v7494 = vunpack.c.l.b16 %v6086
    %v7495 = vunpack.c.h.b16 %v6086
    %v7496 = vunpack.c.l.b16 %v6087
    %v7497 = vunpack.c.h.b16 %v6087
    %v7498 = vunpack.c.l.b16 %v6088
    %v7499 = vunpack.c.h.b16 %v6088
    %v7500 = vunpack.c.l.b16 %v6089
    %v7501 = vunpack.c.h.b16 %v6089
    %v7502 = vunpack.c.l.b16 %v6090
    %v7503 = vunpack.c.h.b16 %v6090
    %v7504 = vunpack.c.l.b16 %v6091
    %v7505 = vunpack.c.h.b16 %v6091
    %v7506 = vunpack.c.l.b16 %v6092
    %v7507 = vunpack.c.h.b16 %v6092
    %v7508 = vunpack.c.l.b16 %v6093
    %v7509 = vunpack.c.h.b16 %v6093
    %v7510 = vunpack.c.l.b16 %v6094
    %v7511 = vunpack.c.h.b16 %v6094
    %v7512 = vunpack.c.l.b16 %v6095
    %v7513 = vunpack.c.h.b16 %v6095
    %v7514 = vunpack.c.l.b16 %v6096
    %v7515 = vunpack.c.h.b16 %v6096
    %v7516 = vunpack.c.l.b16 %v6097
    %v7517 = vunpack.c.h.b16 %v6097
    %v7518 = vunpack.c.l.b16 %v6098
    %v7519 = vunpack.c.h.b16 %v6098
    %v7520 = vunpack.c.l.b16 %v6099
    %v7521 = vunpack.c.h.b16 %v6099
    %v7522 = vunpack.c.l.b16 %v6100
    %v7523 = vunpack.c.h.b16 %v6100
    %v7524 = vunpack.c.l.b16 %v6101
    %v7525 = vunpack.c.h.b16 %v6101
    %v7526 = vunpack.c.l.b16 %v6102
    %v7527 = vunpack.c.h.b16 %v6102
    %v7528 = vunpack.c.l.b16 %v6103
    %v7529 = vunpack.c.h.b16 %v6103
    %v7530 = vunpack.c.l.b16 %v6104
    %v7531 = vunpack.c.h.b16 %v6104
    %v7532 = vunpack.c.l.b16 %v6105
    %v7533 = vunpack.c.h.b16 %v6105
    %v7534 = vunpack.c.l.b16 %v6106
    %v7535 = vunpack.c.h.b16 %v6106
    %v7536 = vunpack.c.l.b16 %v6107
    %v7537 = vunpack.c.h.b16 %v6107
    %v7538 = vunpack.c.l.b16 %v6108
    %v7539 = vunpack.c.h.b16 %v6108
    %v7540 = vunpack.c.l.b16 %v6109
    %v7541 = vunpack.c.h.b16 %v6109
    %v7542 = vunpack.c.l.b16 %v6110
    %v7543 = vunpack.c.h.b16 %v6110
    %v7544 = vunpack.c.l.b16 %v6111
    %v7545 = vunpack.c.h.b16 %v6111
    %v7546 = vunpack.c.l.b16 %v6112
    %v7547 = vunpack.c.h.b16 %v6112
    %v7548 = vunpack.c.l.b16 %v6113
    %v7549 = vunpack.c.h.b16 %v6113
    %v7550 = vunpack.c.l.b16 %v6114
    %v7551 = vunpack.c.h.b16 %v6114
    %v7552 = vunpack.c.l.b16 %v6115
    %v7553 = vunpack.c.h.b16 %v6115
    %v7554 = vunpack.c.l.b16 %v6116
    %v7555 = vunpack.c.h.b16 %v6116
    %v7556 = vunpack.c.l.b16 %v6117
    %v7557 = vunpack.c.h.b16 %v6117
    %v7558 = vunpack.c.l.b16 %v6118
    %v7559 = vunpack.c.h.b16 %v6118
    %v7560 = vunpack.c.l.b16 %v6119
    %v7561 = vunpack.c.h.b16 %v6119
    %v7562 = vunpack.c.l.b16 %v6120
    %v7563 = vunpack.c.h.b16 %v6120
    %v7564 = vunpack.c.l.b16 %v6121
    %v7565 = vunpack.c.h.b16 %v6121
    %v7566 = vunpack.c.l.b16 %v6122
    %v7567 = vunpack.c.h.b16 %v6122
    %v7568 = vunpack.c.l.b16 %v6123
    %v7569 = vunpack.c.h.b16 %v6123
    %v7570 = vunpack.c.l.b16 %v6124
    %v7571 = vunpack.c.h.b16 %v6124
    %v7572 = vunpack.c.l.b16 %v6125
    %v7573 = vunpack.c.h.b16 %v6125
    %v7574 = vunpack.c.l.b16 %v6126
    %v7575 = vunpack.c.h.b16 %v6126
    %v7576 = vunpack.c.l.b16 %v6127
    %v7577 = vunpack.c.h.b16 %v6127
    %v7578 = vunpack.c.l.b16 %v6128
    %v7579 = vunpack.c.h.b16 %v6128
    %v7580 = vunpack.c.l.b16 %v6129
    %v7581 = vunpack.c.h.b16 %v6129
    %v7582 = vunpack.c.l.b16 %v6130
    %v7583 = vunpack.c.h.b16 %v6130
    %v7584 = vunpack.c.l.b16 %v6131
    %v7585 = vunpack.c.h.b16 %v6131
    %v7586 = vunpack.c.l.b16 %v6132
    %v7587 = vunpack.c.h.b16 %v6132
    %v7588 = vunpack.c.l.b16 %v6133
    %v7589 = vunpack.c.h.b16 %v6133
    %v7590 = vunpack.c.l.b16 %v6134
    %v7591 = vunpack.c.h.b16 %v6134
    %v7592 = vunpack.c.l.b16 %v6135
    %v7593 = vunpack.c.h.b16 %v6135
    %v7594 = vunpack.c.l.b16 %v6136
    %v7595 = vunpack.c.h.b16 %v6136
    %v7596 = vunpack.c.l.b16 %v6137
    %v7597 = vunpack.c.h.b16 %v6137
    %v7598 = vunpack.c.l.b16 %v6138
    %v7599 = vunpack.c.h.b16 %v6138
    %v7600 = vunpack.c.l.b16 %v6139
    %v7601 = vunpack.c.h.b16 %v6139
    %v7602 = vunpack.c.l.b16 %v6140
    %v7603 = vunpack.c.h.b16 %v6140
    %v7604 = vunpack.c.l.b16 %v6141
    %v7605 = vunpack.c.h.b16 %v6141
    %v7606 = vunpack.c.l.b16 %v6142
    %v7607 = vunpack.c.h.b16 %v6142
    %v7608 = vunpack.c.l.b16 %v6143
    %v7609 = vunpack.c.h.b16 %v6143
    %v7610 = vunpack.c.l.b16 %v6144
    %v7611 = vunpack.c.h.b16 %v6144
    %v7612 = vunpack.c.l.b16 %v6145
    %v7613 = vunpack.c.h.b16 %v6145
    %v7614 = vunpack.c.l.b16 %v6146
    %v7615 = vunpack.c.h.b16 %v6146
    %v7616 = vunpack.c.l.b16 %v6147
    %v7617 = vunpack.c.h.b16 %v6147
    %v7618 = vunpack.c.l.b16 %v6148
    %v7619 = vunpack.c.h.b16 %v6148
    %v7620 = vunpack.c.l.b16 %v6149
    %v7621 = vunpack.c.h.b16 %v6149
    %v7622 = vunpack.c.l.b16 %v6150
    %v7623 = vunpack.c.h.b16 %v6150
    %v7624 = vunpack.c.l.b16 %v6151
    %v7625 = vunpack.c.h.b16 %v6151
    %v7626 = vunpack.c.l.b16 %v6152
    %v7627 = vunpack.c.h.b16 %v6152
    %v7628 = vunpack.c.l.b16 %v6153
    %v7629 = vunpack.c.h.b16 %v6153
    %v7630 = vunpack.c.l.b16 %v6154
    %v7631 = vunpack.c.h.b16 %v6154
    %v7632 = vunpack.c.l.b16 %v6155
    %v7633 = vunpack.c.h.b16 %v6155
    %v7634 = vunpack.c.l.b16 %v6156
    %v7635 = vunpack.c.h.b16 %v6156
    %v7636 = vunpack.c.l.b16 %v6157
    %v7637 = vunpack.c.h.b16 %v6157
    %v7638 = vunpack.c.l.b16 %v6158
    %v7639 = vunpack.c.h.b16 %v6158
    %v7640 = vunpack.c.l.b16 %v6159
    %v7641 = vunpack.c.h.b16 %v6159
    %v7642 = vunpack.c.l.b16 %v6160
    %v7643 = vunpack.c.h.b16 %v6160
    %v7644 = vunpack.c.l.b16 %v6161
    %v7645 = vunpack.c.h.b16 %v6161
    %v7646 = vunpack.c.l.b16 %v6162
    %v7647 = vunpack.c.h.b16 %v6162
    %v7648 = vunpack.c.l.b16 %v6163
    %v7649 = vunpack.c.h.b16 %v6163
    %v7650 = vunpack.c.l.b16 %v6164
    %v7651 = vunpack.c.h.b16 %v6164
    %v7652 = vunpack.c.l.b16 %v6165
    %v7653 = vunpack.c.h.b16 %v6165
    %v7654 = vunpack.c.l.b16 %v6166
    %v7655 = vunpack.c.h.b16 %v6166
    %v7656 = vunpack.c.l.b16 %v6167
    %v7657 = vunpack.c.h.b16 %v6167
    %v7658 = vunpack.c.l.b16 %v6168
    %v7659 = vunpack.c.h.b16 %v6168
    %v7660 = vunpack.c.l.b16 %v6169
    %v7661 = vunpack.c.h.b16 %v6169
    %v7662 = vunpack.c.l.b16 %v6170
    %v7663 = vunpack.c.h.b16 %v6170
    %v7664 = vunpack.c.l.b16 %v6171
    %v7665 = vunpack.c.h.b16 %v6171
    %v7666 = vunpack.c.l.b16 %v6172
    %v7667 = vunpack.c.h.b16 %v6172
    %v7668 = vunpack.c.l.b16 %v6173
    %v7669 = vunpack.c.h.b16 %v6173
    %v7670 = vunpack.c.l.b16 %v6174
    %v7671 = vunpack.c.h.b16 %v6174
    %v7672 = vunpack.c.l.b16 %v6175
    %v7673 = vunpack.c.h.b16 %v6175
    %v7674 = vunpack.c.l.b16 %v6176
    %v7675 = vunpack.c.h.b16 %v6176
    %v7676 = vunpack.c.l.b16 %v6177
    %v7677 = vunpack.c.h.b16 %v6177
    %v7678 = vunpack.c.l.b16 %v6178
    %v7679 = vunpack.c.h.b16 %v6178
    %v7680 = vunpack.c.l.b16 %v6179
    %v7681 = vunpack.c.h.b16 %v6179
    %v7682 = vunpack.c.l.b16 %v6180
    %v7683 = vunpack.c.h.b16 %v6180
    %v7684 = vunpack.c.l.b16 %v6181
    %v7685 = vunpack.c.h.b16 %v6181
    %v7686 = vunpack.c.l.b16 %v6182
    %v7687 = vunpack.c.h.b16 %v6182
    %v7688 = vunpack.c.l.b16 %v6183
    %v7689 = vunpack.c.h.b16 %v6183
    %v7690 = vunpack.c.l.b16 %v6184
    %v7691 = vunpack.c.h.b16 %v6184
    %v7692 = vunpack.c.l.b16 %v6185
    %v7693 = vunpack.c.h.b16 %v6185
    %v7694 = vunpack.c.l.b16 %v6186
    %v7695 = vunpack.c.h.b16 %v6186
    %v7696 = vunpack.c.l.b16 %v6187
    %v7697 = vunpack.c.h.b16 %v6187
    %v7698 = vunpack.c.l.b16 %v6188
    %v7699 = vunpack.c.h.b16 %v6188
    %v7700 = vunpack.c.l.b16 %v6189
    %v7701 = vunpack.c.h.b16 %v6189
    %v7702 = vunpack.c.l.b16 %v6190
    %v7703 = vunpack.c.h.b16 %v6190
    %v7704 = vunpack.c.l.b16 %v6191
    %v7705 = vunpack.c.h.b16 %v6191
    %v7706 = vunpack.c.l.b16 %v6192
    %v7707 = vunpack.c.h.b16 %v6192
    %v7708 = vunpack.c.l.b16 %v6193
    %v7709 = vunpack.c.h.b16 %v6193
    %v7710 = vunpack.c.l.b16 %v6194
    %v7711 = vunpack.c.h.b16 %v6194
    %v7712 = vunpack.c.l.b16 %v6195
    %v7713 = vunpack.c.h.b16 %v6195
    %v7714 = vunpack.c.l.b16 %v6196
    %v7715 = vunpack.c.h.b16 %v6196
    %v7716 = vunpack.c.l.b16 %v6197
    %v7717 = vunpack.c.h.b16 %v6197
    %v7718 = vunpack.c.l.b16 %v6198
    %v7719 = vunpack.c.h.b16 %v6198
    %v7720 = vunpack.c.l.b16 %v6199
    %v7721 = vunpack.c.h.b16 %v6199
    %v7722 = vunpack.c.l.b16 %v6200
    %v7723 = vunpack.c.h.b16 %v6200
    %v7724 = vunpack.c.l.b16 %v6201
    %v7725 = vunpack.c.h.b16 %v6201
    %v7726 = vunpack.c.l.b16 %v6202
    %v7727 = vunpack.c.h.b16 %v6202
    %v7728 = vunpack.c.l.b16 %v6203
    %v7729 = vunpack.c.h.b16 %v6203
    %v7730 = vunpack.c.l.b16 %v6204
    %v7731 = vunpack.c.h.b16 %v6204
    %v7732 = vunpack.c.l.b16 %v6205
    %v7733 = vunpack.c.h.b16 %v6205
    %v7734 = vunpack.c.l.b16 %v6206
    %v7735 = vunpack.c.h.b16 %v6206
    %v7736 = vunpack.c.l.b16 %v6207
    %v7737 = vunpack.c.h.b16 %v6207
    %v7738 = vunpack.c.l.b16 %v6208
    %v7739 = vunpack.c.h.b16 %v6208
    %v7740 = vunpack.c.l.b16 %v6209
    %v7741 = vunpack.c.h.b16 %v6209
    %v7742 = vunpack.c.l.b16 %v6210
    %v7743 = vunpack.c.h.b16 %v6210
    %v7744 = vunpack.c.l.b16 %v6211
    %v7745 = vunpack.c.h.b16 %v6211
    %v7746 = vunpack.c.l.b16 %v6212
    %v7747 = vunpack.c.h.b16 %v6212
    %v7748 = vunpack.c.l.b16 %v6213
    %v7749 = vunpack.c.h.b16 %v6213
    %v7750 = vunpack.c.l.b16 %v6214
    %v7751 = vunpack.c.h.b16 %v6214
    %v7752 = vunpack.c.l.b16 %v6215
    %v7753 = vunpack.c.h.b16 %v6215
    %v7754 = vunpack.c.l.b16 %v6216
    %v7755 = vunpack.c.h.b16 %v6216
    %v7756 = vunpack.c.l.b16 %v6217
    %v7757 = vunpack.c.h.b16 %v6217
    %v7758 = vunpack.c.l.b16 %v6218
    %v7759 = vunpack.c.h.b16 %v6218
    %v7760 = vunpack.c.l.b16 %v6219
    %v7761 = vunpack.c.h.b16 %v6219
    %v7762 = vunpack.c.l.b16 %v6220
    %v7763 = vunpack.c.h.b16 %v6220
    %v7764 = vunpack.c.l.b16 %v6221
    %v7765 = vunpack.c.h.b16 %v6221
    %v7766 = vunpack.c.l.b16 %v6222
    %v7767 = vunpack.c.h.b16 %v6222
    %v7768 = vunpack.c.l.b16 %v6223
    %v7769 = vunpack.c.h.b16 %v6223
    %v7770 = vunpack.c.l.b16 %v6224
    %v7771 = vunpack.c.h.b16 %v6224
    %v7772 = vunpack.c.l.b16 %v6225
    %v7773 = vunpack.c.h.b16 %v6225
    %v7774 = vunpack.c.l.b16 %v6226
    %v7775 = vunpack.c.h.b16 %v6226
    %v7776 = vunpack.c.l.b16 %v6227
    %v7777 = vunpack.c.h.b16 %v6227
    %v7778 = vunpack.c.l.b16 %v6228
    %v7779 = vunpack.c.h.b16 %v6228
    %v7780 = vunpack.c.l.b16 %v6229
    %v7781 = vunpack.c.h.b16 %v6229
    %v7782 = vunpack.c.l.b16 %v6230
    %v7783 = vunpack.c.h.b16 %v6230
    %v7784 = vunpack.c.l.b16 %v6231
    %v7785 = vunpack.c.h.b16 %v6231
    %v7786 = vunpack.c.l.b16 %v6232
    %v7787 = vunpack.c.h.b16 %v6232
    %v7788 = vunpack.c.l.b16 %v6233
    %v7789 = vunpack.c.h.b16 %v6233
    %v7790 = vunpack.c.l.b16 %v6234
    %v7791 = vunpack.c.h.b16 %v6234
    %v7792 = vunpack.c.l.b16 %v6235
    %v7793 = vunpack.c.h.b16 %v6235
    %v7794 = vpack.c.b16 %v6774, %v6770
    %v7795 = vpack.c.b16 %v6775, %v6771
    %v7796 = vpack.c.b16 %v6776, %v6772
    %v7797 = vpack.c.b16 %v6777, %v6773
    %v7798 = vpack.c.b16 %v6782, %v6778
    %v7799 = vpack.c.b16 %v6783, %v6779
    %v7800 = vpack.c.b16 %v6784, %v6780
    %v7801 = vpack.c.b16 %v6785, %v6781
    %v7802 = vpack.c.b16 %v6790, %v6786
    %v7803 = vpack.c.b16 %v6791, %v6787
    %v7804 = vpack.c.b16 %v6792, %v6788
    %v7805 = vpack.c.b16 %v6793, %v6789
    %v7806 = vpack.c.b16 %v6798, %v6794
    %v7807 = vpack.c.b16 %v6799, %v6795
    %v7808 = vpack.c.b16 %v6800, %v6796
    %v7809 = vpack.c.b16 %v6801, %v6797
    %v7810 = vpack.c.b16 %v6806, %v6802
    %v7811 = vpack.c.b16 %v6807, %v6803
    %v7812 = vpack.c.b16 %v6808, %v6804
    %v7813 = vpack.c.b16 %v6809, %v6805
    %v7814 = vpack.c.b16 %v6814, %v6810
    %v7815 = vpack.c.b16 %v6815, %v6811
    %v7816 = vpack.c.b16 %v6816, %v6812
    %v7817 = vpack.c.b16 %v6817, %v6813
    %v7818 = vpack.c.b16 %v6822, %v6818
    %v7819 = vpack.c.b16 %v6823, %v6819
    %v7820 = vpack.c.b16 %v6824, %v6820
    %v7821 = vpack.c.b16 %v6825, %v6821
    %v7822 = vpack.c.b16 %v6830, %v6826
    %v7823 = vpack.c.b16 %v6831, %v6827
    %v7824 = vpack.c.b16 %v6832, %v6828
    %v7825 = vpack.c.b16 %v6833, %v6829
    %v7826 = vpack.c.b16 %v6838, %v6834
    %v7827 = vpack.c.b16 %v6839, %v6835
    %v7828 = vpack.c.b16 %v6840, %v6836
    %v7829 = vpack.c.b16 %v6841, %v6837
    %v7830 = vpack.c.b16 %v6846, %v6842
    %v7831 = vpack.c.b16 %v6847, %v6843
    %v7832 = vpack.c.b16 %v6848, %v6844
    %v7833 = vpack.c.b16 %v6849, %v6845
    %v7834 = vpack.c.b16 %v6854, %v6850
    %v7835 = vpack.c.b16 %v6855, %v6851
    %v7836 = vpack.c.b16 %v6856, %v6852
    %v7837 = vpack.c.b16 %v6857, %v6853
    %v7838 = vpack.c.b16 %v6862, %v6858
    %v7839 = vpack.c.b16 %v6863, %v6859
    %v7840 = vpack.c.b16 %v6864, %v6860
    %v7841 = vpack.c.b16 %v6865, %v6861
    %v7842 = vpack.c.b16 %v6870, %v6866
    %v7843 = vpack.c.b16 %v6871, %v6867
    %v7844 = vpack.c.b16 %v6872, %v6868
    %v7845 = vpack.c.b16 %v6873, %v6869
    %v7846 = vpack.c.b16 %v6878, %v6874
    %v7847 = vpack.c.b16 %v6879, %v6875
    %v7848 = vpack.c.b16 %v6880, %v6876
    %v7849 = vpack.c.b16 %v6881, %v6877
    %v7850 = vpack.c.b16 %v6886, %v6882
    %v7851 = vpack.c.b16 %v6887, %v6883
    %v7852 = vpack.c.b16 %v6888, %v6884
    %v7853 = vpack.c.b16 %v6889, %v6885
    %v7854 = vpack.c.b16 %v6894, %v6890
    %v7855 = vpack.c.b16 %v6895, %v6891
    %v7856 = vpack.c.b16 %v6896, %v6892
    %v7857 = vpack.c.b16 %v6897, %v6893
    %v7858 = vpack.c.b16 %v6902, %v6898
    %v7859 = vpack.c.b16 %v6903, %v6899
    %v7860 = vpack.c.b16 %v6904, %v6900
    %v7861 = vpack.c.b16 %v6905, %v6901
    %v7862 = vpack.c.b16 %v6910, %v6906
    %v7863 = vpack.c.b16 %v6911, %v6907
    %v7864 = vpack.c.b16 %v6912, %v6908
    %v7865 = vpack.c.b16 %v6913, %v6909
    %v7866 = vpack.c.b16 %v6918, %v6914
    %v7867 = vpack.c.b16 %v6919, %v6915
    %v7868 = vpack.c.b16 %v6920, %v6916
    %v7869 = vpack.c.b16 %v6921, %v6917
    %v7870 = vpack.c.b16 %v6926, %v6922
    %v7871 = vpack.c.b16 %v6927, %v6923
    %v7872 = vpack.c.b16 %v6928, %v6924
    %v7873 = vpack.c.b16 %v6929, %v6925
    %v7874 = vpack.c.b16 %v6934, %v6930
    %v7875 = vpack.c.b16 %v6935, %v6931
    %v7876 = vpack.c.b16 %v6936, %v6932
    %v7877 = vpack.c.b16 %v6937, %v6933
    %v7878 = vpack.c.b16 %v6942, %v6938
    %v7879 = vpack.c.b16 %v6943, %v6939
    %v7880 = vpack.c.b16 %v6944, %v6940
    %v7881 = vpack.c.b16 %v6945, %v6941
    %v7882 = vpack.c.b16 %v6950, %v6946
    %v7883 = vpack.c.b16 %v6951, %v6947
    %v7884 = vpack.c.b16 %v6952, %v6948
    %v7885 = vpack.c.b16 %v6953, %v6949
    %v7886 = vpack.c.b16 %v6958, %v6954
    %v7887 = vpack.c.b16 %v6959, %v6955
    %v7888 = vpack.c.b16 %v6960, %v6956
    %v7889 = vpack.c.b16 %v6961, %v6957
    %v7890 = vpack.c.b16 %v6966, %v6962
    %v7891 = vpack.c.b16 %v6967, %v6963
    %v7892 = vpack.c.b16 %v6968, %v6964
    %v7893 = vpack.c.b16 %v6969, %v6965
    %v7894 = vpack.c.b16 %v6974, %v6970
    %v7895 = vpack.c.b16 %v6975, %v6971
    %v7896 = vpack.c.b16 %v6976, %v6972
    %v7897 = vpack.c.b16 %v6977, %v6973
    %v7898 = vpack.c.b16 %v6982, %v6978
    %v7899 = vpack.c.b16 %v6983, %v6979
    %v7900 = vpack.c.b16 %v6984, %v6980
    %v7901 = vpack.c.b16 %v6985, %v6981
    %v7902 = vpack.c.b16 %v6990, %v6986
    %v7903 = vpack.c.b16 %v6991, %v6987
    %v7904 = vpack.c.b16 %v6992, %v6988
    %v7905 = vpack.c.b16 %v6993, %v6989
    %v7906 = vpack.c.b16 %v6998, %v6994
    %v7907 = vpack.c.b16 %v6999, %v6995
    %v7908 = vpack.c.b16 %v7000, %v6996
    %v7909 = vpack.c.b16 %v7001, %v6997
    %v7910 = vpack.c.b16 %v7006, %v7002
    %v7911 = vpack.c.b16 %v7007, %v7003
    %v7912 = vpack.c.b16 %v7008, %v7004
    %v7913 = vpack.c.b16 %v7009, %v7005
    %v7914 = vpack.c.b16 %v7014, %v7010
    %v7915 = vpack.c.b16 %v7015, %v7011
    %v7916 = vpack.c.b16 %v7016, %v7012
    %v7917 = vpack.c.b16 %v7017, %v7013
    %v7918 = vpack.c.b16 %v7022, %v7018
    %v7919 = vpack.c.b16 %v7023, %v7019
    %v7920 = vpack.c.b16 %v7024, %v7020
    %v7921 = vpack.c.b16 %v7025, %v7021
    %v7922 = vpack.c.b16 %v7030, %v7026
    %v7923 = vpack.c.b16 %v7031, %v7027
    %v7924 = vpack.c.b16 %v7032, %v7028
    %v7925 = vpack.c.b16 %v7033, %v7029
    %v7926 = vpack.c.b16 %v7038, %v7034
    %v7927 = vpack.c.b16 %v7039, %v7035
    %v7928 = vpack.c.b16 %v7040, %v7036
    %v7929 = vpack.c.b16 %v7041, %v7037
    %v7930 = vpack.c.b16 %v7046, %v7042
    %v7931 = vpack.c.b16 %v7047, %v7043
    %v7932 = vpack.c.b16 %v7048, %v7044
    %v7933 = vpack.c.b16 %v7049, %v7045
    %v7934 = vpack.c.b16 %v7054, %v7050
    %v7935 = vpack.c.b16 %v7055, %v7051
    %v7936 = vpack.c.b16 %v7056, %v7052
    %v7937 = vpack.c.b16 %v7057, %v7053
    %v7938 = vpack.c.b16 %v7062, %v7058
    %v7939 = vpack.c.b16 %v7063, %v7059
    %v7940 = vpack.c.b16 %v7064, %v7060
    %v7941 = vpack.c.b16 %v7065, %v7061
    %v7942 = vpack.c.b16 %v7070, %v7066
    %v7943 = vpack.c.b16 %v7071, %v7067
    %v7944 = vpack.c.b16 %v7072, %v7068
    %v7945 = vpack.c.b16 %v7073, %v7069
    %v7946 = vpack.c.b16 %v7078, %v7074
    %v7947 = vpack.c.b16 %v7079, %v7075
    %v7948 = vpack.c.b16 %v7080, %v7076
    %v7949 = vpack.c.b16 %v7081, %v7077
    %v7950 = vpack.c.b16 %v7086, %v7082
    %v7951 = vpack.c.b16 %v7087, %v7083
    %v7952 = vpack.c.b16 %v7088, %v7084
    %v7953 = vpack.c.b16 %v7089, %v7085
    %v7954 = vpack.c.b16 %v7094, %v7090
    %v7955 = vpack.c.b16 %v7095, %v7091
    %v7956 = vpack.c.b16 %v7096, %v7092
    %v7957 = vpack.c.b16 %v7097, %v7093
    %v7958 = vpack.c.b16 %v7102, %v7098
    %v7959 = vpack.c.b16 %v7103, %v7099
    %v7960 = vpack.c.b16 %v7104, %v7100
    %v7961 = vpack.c.b16 %v7105, %v7101
    %v7962 = vpack.c.b16 %v7110, %v7106
    %v7963 = vpack.c.b16 %v7111, %v7107
    %v7964 = vpack.c.b16 %v7112, %v7108
    %v7965 = vpack.c.b16 %v7113, %v7109
    %v7966 = vpack.c.b16 %v7118, %v7114
    %v7967 = vpack.c.b16 %v7119, %v7115
    %v7968 = vpack.c.b16 %v7120, %v7116
    %v7969 = vpack.c.b16 %v7121, %v7117
    %v7970 = vpack.c.b16 %v7126, %v7122
    %v7971 = vpack.c.b16 %v7127, %v7123
    %v7972 = vpack.c.b16 %v7128, %v7124
    %v7973 = vpack.c.b16 %v7129, %v7125
    %v7974 = vpack.c.b16 %v7134, %v7130
    %v7975 = vpack.c.b16 %v7135, %v7131
    %v7976 = vpack.c.b16 %v7136, %v7132
    %v7977 = vpack.c.b16 %v7137, %v7133
    %v7978 = vpack.c.b16 %v7142, %v7138
    %v7979 = vpack.c.b16 %v7143, %v7139
    %v7980 = vpack.c.b16 %v7144, %v7140
    %v7981 = vpack.c.b16 %v7145, %v7141
    %v7982 = vpack.c.b16 %v7150, %v7146
    %v7983 = vpack.c.b16 %v7151, %v7147
    %v7984 = vpack.c.b16 %v7152, %v7148
    %v7985 = vpack.c.b16 %v7153, %v7149
    %v7986 = vpack.c.b16 %v7158, %v7154
    %v7987 = vpack.c.b16 %v7159, %v7155
    %v7988 = vpack.c.b16 %v7160, %v7156
    %v7989 = vpack.c.b16 %v7161, %v7157
    %v7990 = vpack.c.b16 %v7166, %v7162
    %v7991 = vpack.c.b16 %v7167, %v7163
    %v7992 = vpack.c.b16 %v7168, %v7164
    %v7993 = vpack.c.b16 %v7169, %v7165
    %v7994 = vpack.c.b16 %v7174, %v7170
    %v7995 = vpack.c.b16 %v7175, %v7171
    %v7996 = vpack.c.b16 %v7176, %v7172
    %v7997 = vpack.c.b16 %v7177, %v7173
    %v7998 = vpack.c.b16 %v7182, %v7178
    %v7999 = vpack.c.b16 %v7183, %v7179
    %v8000 = vpack.c.b16 %v7184, %v7180
    %v8001 = vpack.c.b16 %v7185, %v7181
    %v8002 = vpack.c.b16 %v7190, %v7186
    %v8003 = vpack.c.b16 %v7191, %v7187
    %v8004 = vpack.c.b16 %v7192, %v7188
    %v8005 = vpack.c.b16 %v7193, %v7189
    %v8006 = vpack.c.b16 %v7198, %v7194
    %v8007 = vpack.c.b16 %v7199, %v7195
    %v8008 = vpack.c.b16 %v7200, %v7196
    %v8009 = vpack.c.b16 %v7201, %v7197
    %v8010 = vpack.c.b16 %v7206, %v7202
    %v8011 = vpack.c.b16 %v7207, %v7203
    %v8012 = vpack.c.b16 %v7208, %v7204
    %v8013 = vpack.c.b16 %v7209, %v7205
    %v8014 = vpack.c.b16 %v7214, %v7210
    %v8015 = vpack.c.b16 %v7215, %v7211
    %v8016 = vpack.c.b16 %v7216, %v7212
    %v8017 = vpack.c.b16 %v7217, %v7213
    %v8018 = vpack.c.b16 %v7222, %v7218
    %v8019 = vpack.c.b16 %v7223, %v7219
    %v8020 = vpack.c.b16 %v7224, %v7220
    %v8021 = vpack.c.b16 %v7225, %v7221
    %v8022 = vpack.c.b16 %v7230, %v7226
    %v8023 = vpack.c.b16 %v7231, %v7227
    %v8024 = vpack.c.b16 %v7232, %v7228
    %v8025 = vpack.c.b16 %v7233, %v7229
    %v8026 = vpack.c.b16 %v7238, %v7234
    %v8027 = vpack.c.b16 %v7239, %v7235
    %v8028 = vpack.c.b16 %v7240, %v7236
    %v8029 = vpack.c.b16 %v7241, %v7237
    %v8030 = vpack.c.b16 %v7246, %v7242
    %v8031 = vpack.c.b16 %v7247, %v7243
    %v8032 = vpack.c.b16 %v7248, %v7244
    %v8033 = vpack.c.b16 %v7249, %v7245
    %v8034 = vpack.c.b16 %v7254, %v7250
    %v8035 = vpack.c.b16 %v7255, %v7251
    %v8036 = vpack.c.b16 %v7256, %v7252
    %v8037 = vpack.c.b16 %v7257, %v7253
    %v8038 = vpack.c.b16 %v7262, %v7258
    %v8039 = vpack.c.b16 %v7263, %v7259
    %v8040 = vpack.c.b16 %v7264, %v7260
    %v8041 = vpack.c.b16 %v7265, %v7261
    %v8042 = vpack.c.b16 %v7270, %v7266
    %v8043 = vpack.c.b16 %v7271, %v7267
    %v8044 = vpack.c.b16 %v7272, %v7268
    %v8045 = vpack.c.b16 %v7273, %v7269
    %v8046 = vpack.c.b16 %v7278, %v7274
    %v8047 = vpack.c.b16 %v7279, %v7275
    %v8048 = vpack.c.b16 %v7280, %v7276
    %v8049 = vpack.c.b16 %v7281, %v7277
    %v8050 = vpack.c.b16 %v7286, %v7282
    %v8051 = vpack.c.b16 %v7287, %v7283
    %v8052 = vpack.c.b16 %v7288, %v7284
    %v8053 = vpack.c.b16 %v7289, %v7285
    %v8054 = vpack.c.b16 %v7294, %v7290
    %v8055 = vpack.c.b16 %v7295, %v7291
    %v8056 = vpack.c.b16 %v7296, %v7292
    %v8057 = vpack.c.b16 %v7297, %v7293
    %v8058 = vpack.c.b16 %v7302, %v7298
    %v8059 = vpack.c.b16 %v7303, %v7299
    %v8060 = vpack.c.b16 %v7304, %v7300
    %v8061 = vpack.c.b16 %v7305, %v7301
    %v8062 = vpack.c.b16 %v7310, %v7306
    %v8063 = vpack.c.b16 %v7311, %v7307
    %v8064 = vpack.c.b16 %v7312, %v7308
    %v8065 = vpack.c.b16 %v7313, %v7309
    %v8066 = vpack.c.b16 %v7318, %v7314
    %v8067 = vpack.c.b16 %v7319, %v7315
    %v8068 = vpack.c.b16 %v7320, %v7316
    %v8069 = vpack.c.b16 %v7321, %v7317
    %v8070 = vpack.c.b16 %v7326, %v7322
    %v8071 = vpack.c.b16 %v7327, %v7323
    %v8072 = vpack.c.b16 %v7328, %v7324
    %v8073 = vpack.c.b16 %v7329, %v7325
    %v8074 = vpack.c.b16 %v7334, %v7330
    %v8075 = vpack.c.b16 %v7335, %v7331
    %v8076 = vpack.c.b16 %v7336, %v7332
    %v8077 = vpack.c.b16 %v7337, %v7333
    %v8078 = vpack.c.b16 %v7342, %v7338
    %v8079 = vpack.c.b16 %v7343, %v7339
    %v8080 = vpack.c.b16 %v7344, %v7340
    %v8081 = vpack.c.b16 %v7345, %v7341
    %v8082 = vpack.c.b16 %v7350, %v7346
    %v8083 = vpack.c.b16 %v7351, %v7347
    %v8084 = vpack.c.b16 %v7352, %v7348
    %v8085 = vpack.c.b16 %v7353, %v7349
    %v8086 = vpack.c.b16 %v7358, %v7354
    %v8087 = vpack.c.b16 %v7359, %v7355
    %v8088 = vpack.c.b16 %v7360, %v7356
    %v8089 = vpack.c.b16 %v7361, %v7357
    %v8090 = vpack.c.b16 %v7366, %v7362
    %v8091 = vpack.c.b16 %v7367, %v7363
    %v8092 = vpack.c.b16 %v7368, %v7364
    %v8093 = vpack.c.b16 %v7369, %v7365
    %v8094 = vpack.c.b16 %v7374, %v7370
    %v8095 = vpack.c.b16 %v7375, %v7371
    %v8096 = vpack.c.b16 %v7376, %v7372
    %v8097 = vpack.c.b16 %v7377, %v7373
    %v8098 = vpack.c.b16 %v7382, %v7378
    %v8099 = vpack.c.b16 %v7383, %v7379
    %v8100 = vpack.c.b16 %v7384, %v7380
    %v8101 = vpack.c.b16 %v7385, %v7381
    %v8102 = vpack.c.b16 %v7390, %v7386
    %v8103 = vpack.c.b16 %v7391, %v7387
    %v8104 = vpack.c.b16 %v7392, %v7388
    %v8105 = vpack.c.b16 %v7393, %v7389
    %v8106 = vpack.c.b16 %v7398, %v7394
    %v8107 = vpack.c.b16 %v7399, %v7395
    %v8108 = vpack.c.b16 %v7400, %v7396
    %v8109 = vpack.c.b16 %v7401, %v7397
    %v8110 = vpack.c.b16 %v7406, %v7402
    %v8111 = vpack.c.b16 %v7407, %v7403
    %v8112 = vpack.c.b16 %v7408, %v7404
    %v8113 = vpack.c.b16 %v7409, %v7405
    %v8114 = vpack.c.b16 %v7414, %v7410
    %v8115 = vpack.c.b16 %v7415, %v7411
    %v8116 = vpack.c.b16 %v7416, %v7412
    %v8117 = vpack.c.b16 %v7417, %v7413
    %v8118 = vpack.c.b16 %v7422, %v7418
    %v8119 = vpack.c.b16 %v7423, %v7419
    %v8120 = vpack.c.b16 %v7424, %v7420
    %v8121 = vpack.c.b16 %v7425, %v7421
    %v8122 = vpack.c.b16 %v7430, %v7426
    %v8123 = vpack.c.b16 %v7431, %v7427
    %v8124 = vpack.c.b16 %v7432, %v7428
    %v8125 = vpack.c.b16 %v7433, %v7429
    %v8126 = vpack.c.b16 %v7438, %v7434
    %v8127 = vpack.c.b16 %v7439, %v7435
    %v8128 = vpack.c.b16 %v7440, %v7436
    %v8129 = vpack.c.b16 %v7441, %v7437
    %v8130 = vpack.c.b16 %v7446, %v7442
    %v8131 = vpack.c.b16 %v7447, %v7443
    %v8132 = vpack.c.b16 %v7448, %v7444
    %v8133 = vpack.c.b16 %v7449, %v7445
    %v8134 = vpack.c.b16 %v7454, %v7450
    %v8135 = vpack.c.b16 %v7455, %v7451
    %v8136 = vpack.c.b16 %v7456, %v7452
    %v8137 = vpack.c.b16 %v7457, %v7453
    %v8138 = vpack.c.b16 %v7462, %v7458
    %v8139 = vpack.c.b16 %v7463, %v7459
    %v8140 = vpack.c.b16 %v7464, %v7460
    %v8141 = vpack.c.b16 %v7465, %v7461
    %v8142 = vpack.c.b16 %v7470, %v7466
    %v8143 = vpack.c.b16 %v7471, %v7467
    %v8144 = vpack.c.b16 %v7472, %v7468
    %v8145 = vpack.c.b16 %v7473, %v7469
    %v8146 = vpack.c.b16 %v7478, %v7474
    %v8147 = vpack.c.b16 %v7479, %v7475
    %v8148 = vpack.c.b16 %v7480, %v7476
    %v8149 = vpack.c.b16 %v7481, %v7477
    %v8150 = vpack.c.b16 %v7486, %v7482
    %v8151 = vpack.c.b16 %v7487, %v7483
    %v8152 = vpack.c.b16 %v7488, %v7484
    %v8153 = vpack.c.b16 %v7489, %v7485
    %v8154 = vpack.c.b16 %v7494, %v7490
    %v8155 = vpack.c.b16 %v7495, %v7491
    %v8156 = vpack.c.b16 %v7496, %v7492
    %v8157 = vpack.c.b16 %v7497, %v7493
    %v8158 = vpack.c.b16 %v7502, %v7498
    %v8159 = vpack.c.b16 %v7503, %v7499
    %v8160 = vpack.c.b16 %v7504, %v7500
    %v8161 = vpack.c.b16 %v7505, %v7501
    %v8162 = vpack.c.b16 %v7510, %v7506
    %v8163 = vpack.c.b16 %v7511, %v7507
    %v8164 = vpack.c.b16 %v7512, %v7508
    %v8165 = vpack.c.b16 %v7513, %v7509
    %v8166 = vpack.c.b16 %v7518, %v7514
    %v8167 = vpack.c.b16 %v7519, %v7515
    %v8168 = vpack.c.b16 %v7520, %v7516
    %v8169 = vpack.c.b16 %v7521, %v7517
    %v8170 = vpack.c.b16 %v7526, %v7522
    %v8171 = vpack.c.b16 %v7527, %v7523
    %v8172 = vpack.c.b16 %v7528, %v7524
    %v8173 = vpack.c.b16 %v7529, %v7525
    %v8174 = vpack.c.b16 %v7534, %v7530
    %v8175 = vpack.c.b16 %v7535, %v7531
    %v8176 = vpack.c.b16 %v7536, %v7532
    %v8177 = vpack.c.b16 %v7537, %v7533
    %v8178 = vpack.c.b16 %v7542, %v7538
    %v8179 = vpack.c.b16 %v7543, %v7539
    %v8180 = vpack.c.b16 %v7544, %v7540
    %v8181 = vpack.c.b16 %v7545, %v7541
    %v8182 = vpack.c.b16 %v7550, %v7546
    %v8183 = vpack.c.b16 %v7551, %v7547
    %v8184 = vpack.c.b16 %v7552, %v7548
    %v8185 = vpack.c.b16 %v7553, %v7549
    %v8186 = vpack.c.b16 %v7558, %v7554
    %v8187 = vpack.c.b16 %v7559, %v7555
    %v8188 = vpack.c.b16 %v7560, %v7556
    %v8189 = vpack.c.b16 %v7561, %v7557
    %v8190 = vpack.c.b16 %v7566, %v7562
    %v8191 = vpack.c.b16 %v7567, %v7563
    %v8192 = vpack.c.b16 %v7568, %v7564
    %v8193 = vpack.c.b16 %v7569, %v7565
    %v8194 = vpack.c.b16 %v7574, %v7570
    %v8195 = vpack.c.b16 %v7575, %v7571
    %v8196 = vpack.c.b16 %v7576, %v7572
    %v8197 = vpack.c.b16 %v7577, %v7573
    %v8198 = vpack.c.b16 %v7582, %v7578
    %v8199 = vpack.c.b16 %v7583, %v7579
    %v8200 = vpack.c.b16 %v7584, %v7580
    %v8201 = vpack.c.b16 %v7585, %v7581
    %v8202 = vpack.c.b16 %v7590, %v7586
    %v8203 = vpack.c.b16 %v7591, %v7587
    %v8204 = vpack.c.b16 %v7592, %v7588
    %v8205 = vpack.c.b16 %v7593, %v7589
    %v8206 = vpack.c.b16 %v7598, %v7594
    %v8207 = vpack.c.b16 %v7599, %v7595
    %v8208 = vpack.c.b16 %v7600, %v7596
    %v8209 = vpack.c.b16 %v7601, %v7597
    %v8210 = vpack.c.b16 %v7606, %v7602
    %v8211 = vpack.c.b16 %v7607, %v7603
    %v8212 = vpack.c.b16 %v7608, %v7604
    %v8213 = vpack.c.b16 %v7609, %v7605
    %v8214 = vpack.c.b16 %v7614, %v7610
    %v8215 = vpack.c.b16 %v7615, %v7611
    %v8216 = vpack.c.b16 %v7616, %v7612
    %v8217 = vpack.c.b16 %v7617, %v7613
    %v8218 = vpack.c.b16 %v7622, %v7618
    %v8219 = vpack.c.b16 %v7623, %v7619
    %v8220 = vpack.c.b16 %v7624, %v7620
    %v8221 = vpack.c.b16 %v7625, %v7621
    %v8222 = vpack.c.b16 %v7630, %v7626
    %v8223 = vpack.c.b16 %v7631, %v7627
    %v8224 = vpack.c.b16 %v7632, %v7628
    %v8225 = vpack.c.b16 %v7633, %v7629
    %v8226 = vpack.c.b16 %v7638, %v7634
    %v8227 = vpack.c.b16 %v7639, %v7635
    %v8228 = vpack.c.b16 %v7640, %v7636
    %v8229 = vpack.c.b16 %v7641, %v7637
    %v8230 = vpack.c.b16 %v7646, %v7642
    %v8231 = vpack.c.b16 %v7647, %v7643
    %v8232 = vpack.c.b16 %v7648, %v7644
    %v8233 = vpack.c.b16 %v7649, %v7645
    %v8234 = vpack.c.b16 %v7654, %v7650
    %v8235 = vpack.c.b16 %v7655, %v7651
    %v8236 = vpack.c.b16 %v7656, %v7652
    %v8237 = vpack.c.b16 %v7657, %v7653
    %v8238 = vpack.c.b16 %v7662, %v7658
    %v8239 = vpack.c.b16 %v7663, %v7659
    %v8240 = vpack.c.b16 %v7664, %v7660
    %v8241 = vpack.c.b16 %v7665, %v7661
    %v8242 = vpack.c.b16 %v7670, %v7666
    %v8243 = vpack.c.b16 %v7671, %v7667
    %v8244 = vpack.c.b16 %v7672, %v7668
    %v8245 = vpack.c.b16 %v7673, %v7669
    %v8246 = vpack.c.b16 %v7678, %v7674
    %v8247 = vpack.c.b16 %v7679, %v7675
    %v8248 = vpack.c.b16 %v7680, %v7676
    %v8249 = vpack.c.b16 %v7681, %v7677
    %v8250 = vpack.c.b16 %v7686, %v7682
    %v8251 = vpack.c.b16 %v7687, %v7683
    %v8252 = vpack.c.b16 %v7688, %v7684
    %v8253 = vpack.c.b16 %v7689, %v7685
    %v8254 = vpack.c.b16 %v7694, %v7690
    %v8255 = vpack.c.b16 %v7695, %v7691
    %v8256 = vpack.c.b16 %v7696, %v7692
    %v8257 = vpack.c.b16 %v7697, %v7693
    %v8258 = vpack.c.b16 %v7702, %v7698
    %v8259 = vpack.c.b16 %v7703, %v7699
    %v8260 = vpack.c.b16 %v7704, %v7700
    %v8261 = vpack.c.b16 %v7705, %v7701
    %v8262 = vpack.c.b16 %v7710, %v7706
    %v8263 = vpack.c.b16 %v7711, %v7707
    %v8264 = vpack.c.b16 %v7712, %v7708
    %v8265 = vpack.c.b16 %v7713, %v7709
    %v8266 = vpack.c.b16 %v7718, %v7714
    %v8267 = vpack.c.b16 %v7719, %v7715
    %v8268 = vpack.c.b16 %v7720, %v7716
    %v8269 = vpack.c.b16 %v7721, %v7717
    %v8270 = vpack.c.b16 %v7726, %v7722
    %v8271 = vpack.c.b16 %v7727, %v7723
    %v8272 = vpack.c.b16 %v7728, %v7724
    %v8273 = vpack.c.b16 %v7729, %v7725
    %v8274 = vpack.c.b16 %v7734, %v7730
    %v8275 = vpack.c.b16 %v7735, %v7731
    %v8276 = vpack.c.b16 %v7736, %v7732
    %v8277 = vpack.c.b16 %v7737, %v7733
    %v8278 = vpack.c.b16 %v7742, %v7738
    %v8279 = vpack.c.b16 %v7743, %v7739
    %v8280 = vpack.c.b16 %v7744, %v7740
    %v8281 = vpack.c.b16 %v7745, %v7741
    %v8282 = vpack.c.b16 %v7750, %v7746
    %v8283 = vpack.c.b16 %v7751, %v7747
    %v8284 = vpack.c.b16 %v7752, %v7748
    %v8285 = vpack.c.b16 %v7753, %v7749
    %v8286 = vpack.c.b16 %v7758, %v7754
    %v8287 = vpack.c.b16 %v7759, %v7755
    %v8288 = vpack.c.b16 %v7760, %v7756
    %v8289 = vpack.c.b16 %v7761, %v7757
    %v8290 = vpack.c.b16 %v7766, %v7762
    %v8291 = vpack.c.b16 %v7767, %v7763
    %v8292 = vpack.c.b16 %v7768, %v7764
    %v8293 = vpack.c.b16 %v7769, %v7765
    %v8294 = vpack.c.b16 %v7774, %v7770
    %v8295 = vpack.c.b16 %v7775, %v7771
    %v8296 = vpack.c.b16 %v7776, %v7772
    %v8297 = vpack.c.b16 %v7777, %v7773
    %v8298 = vpack.c.b16 %v7782, %v7778
    %v8299 = vpack.c.b16 %v7783, %v7779
    %v8300 = vpack.c.b16 %v7784, %v7780
    %v8301 = vpack.c.b16 %v7785, %v7781
    %v8302 = vpack.c.b16 %v7790, %v7786
    %v8303 = vpack.c.b16 %v7791, %v7787
    %v8304 = vpack.c.b16 %v7792, %v7788
    %v8305 = vpack.c.b16 %v7793, %v7789
    %8818 = vmatprep.subr.bf16.mxu0 %v7823
    %8819 = vmatpush1.bf16.msra.mxu0 %v7822
    %8820 = vmatprep.subr.bf16.mxu0 %v7819
    %8821 = vmatpush1.bf16.msra.mxu0 %v7818
    %8822 = vmatprep.subr.bf16.mxu0 %v7815
    %8823 = vmatpush1.bf16.msra.mxu0 %v7814
    %8824 = vmatprep.subr.bf16.mxu0 %v7811
    %8825 = vmatpush1.bf16.msra.mxu0 %v7810
    %8826 = vmatprep.subr.bf16.mxu0 %v7807
    %8827 = vmatpush1.bf16.msra.mxu0 %v7806
    %8828 = vmatprep.subr.bf16.mxu0 %v7803
    %8829 = vmatpush1.bf16.msra.mxu0 %v7802
    %8830 = vmatprep.subr.bf16.mxu0 %v7799
    %8831 = vmatpush1.bf16.msra.mxu0 %v7798
    %8832 = vmatprep.subr.bf16.mxu0 %v7795
    %8833 = vmatpush1.bf16.msra.mxu0 %v7794
    %8834 = vmatprep.subr.bf16.mxu0 %v7855
    %8835 = vmatpush2.bf16.msra.mxu0 %v7854
    %8836 = vmatprep.subr.bf16.mxu0 %v7851
    %8837 = vmatpush2.bf16.msra.mxu0 %v7850
    %8838 = vmatprep.subr.bf16.mxu0 %v7847
    %8839 = vmatpush2.bf16.msra.mxu0 %v7846
    %8840 = vmatprep.subr.bf16.mxu0 %v7843
    %8841 = vmatpush2.bf16.msra.mxu0 %v7842
    %8842 = vmatprep.subr.bf16.mxu0 %v7839
    %8843 = vmatpush2.bf16.msra.mxu0 %v7838
    %8844 = vmatprep.subr.bf16.mxu0 %v7835
    %8845 = vmatpush2.bf16.msra.mxu0 %v7834
    %8846 = vmatprep.subr.bf16.mxu0 %v7831
    %8847 = vmatpush2.bf16.msra.mxu0 %v7830
    %8848 = vmatprep.subr.bf16.mxu0 %v7827
    %8849 = vmatpush2.bf16.msra.mxu0 %v7826
    %8850 = vmatprep.mubr.bf16.mxu0 %v5709
    %8851 = vmatmul.mubr.bf16.gmra.mxu0 %v5708
    %v8852 = vpop.f32.mrf.mxu0
    %v8853 = vadd.f32 %v6241, %v8852
    %v8854 = vpop.f32.mrf.mxu0
    %v8855 = vadd.f32 %v6245, %v8854
    %v8856 = vpop.f32.mrf.mxu0
    %v8857 = vpop.f32.mrf.mxu0
    %8858 = vdwg.mxu0
    %8859 = vmatprep.subr.bf16.mxu0 %v7887
    %8860 = vmatpush1.bf16.msra.mxu0 %v7886
    %8861 = vmatprep.subr.bf16.mxu0 %v7883
    %8862 = vmatpush1.bf16.msra.mxu0 %v7882
    %8863 = vmatprep.subr.bf16.mxu0 %v7879
    %8864 = vmatpush1.bf16.msra.mxu0 %v7878
    %8865 = vmatprep.subr.bf16.mxu0 %v7875
    %8866 = vmatpush1.bf16.msra.mxu0 %v7874
    %8867 = vmatprep.subr.bf16.mxu0 %v7871
    %8868 = vmatpush1.bf16.msra.mxu0 %v7870
    %8869 = vmatprep.subr.bf16.mxu0 %v7867
    %8870 = vmatpush1.bf16.msra.mxu0 %v7866
    %8871 = vmatprep.subr.bf16.mxu0 %v7863
    %8872 = vmatpush1.bf16.msra.mxu0 %v7862
    %8873 = vmatprep.subr.bf16.mxu0 %v7859
    %8874 = vmatpush1.bf16.msra.mxu0 %v7858
    %8875 = vmatprep.subr.bf16.mxu0 %v7919
    %8876 = vmatpush2.bf16.msra.mxu0 %v7918
    %8877 = vmatprep.subr.bf16.mxu0 %v7915
    %8878 = vmatpush2.bf16.msra.mxu0 %v7914
    %8879 = vmatprep.subr.bf16.mxu0 %v7911
    %8880 = vmatpush2.bf16.msra.mxu0 %v7910
    %8881 = vmatprep.subr.bf16.mxu0 %v7907
    %8882 = vmatpush2.bf16.msra.mxu0 %v7906
    %8883 = vmatprep.subr.bf16.mxu0 %v7903
    %8884 = vmatpush2.bf16.msra.mxu0 %v7902
    %8885 = vmatprep.subr.bf16.mxu0 %v7899
    %8886 = vmatpush2.bf16.msra.mxu0 %v7898
    %8887 = vmatprep.subr.bf16.mxu0 %v7895
    %8888 = vmatpush2.bf16.msra.mxu0 %v7894
    %8889 = vmatprep.subr.bf16.mxu0 %v7891
    %8890 = vmatpush2.bf16.msra.mxu0 %v7890
    %8891 = vmatprep.mubr.bf16.mxu0 %v5711
    %8892 = vmatmul.mubr.bf16.gmra.mxu0 %v5710
    %v8893 = vpop.f32.mrf.mxu0
    %v8894 = vadd.f32 %v8853, %v8893
    %v8895 = vpop.f32.mrf.mxu0
    %v8896 = vadd.f32 %v8855, %v8895
    %v8897 = vpop.f32.mrf.mxu0
    %v8898 = vpop.f32.mrf.mxu0
    %8899 = vdwg.mxu0
    %8900 = vmatprep.subr.bf16.mxu0 %v7951
    %8901 = vmatpush1.bf16.msra.mxu0 %v7950
    %8902 = vmatprep.subr.bf16.mxu0 %v7947
    %8903 = vmatpush1.bf16.msra.mxu0 %v7946
    %8904 = vmatprep.subr.bf16.mxu0 %v7943
    %8905 = vmatpush1.bf16.msra.mxu0 %v7942
    %8906 = vmatprep.subr.bf16.mxu0 %v7939
    %8907 = vmatpush1.bf16.msra.mxu0 %v7938
    %8908 = vmatprep.subr.bf16.mxu0 %v7935
    %8909 = vmatpush1.bf16.msra.mxu0 %v7934
    %8910 = vmatprep.subr.bf16.mxu0 %v7931
    %8911 = vmatpush1.bf16.msra.mxu0 %v7930
    %8912 = vmatprep.subr.bf16.mxu0 %v7927
    %8913 = vmatpush1.bf16.msra.mxu0 %v7926
    %8914 = vmatprep.subr.bf16.mxu0 %v7923
    %8915 = vmatpush1.bf16.msra.mxu0 %v7922
    %8916 = vmatprep.subr.bf16.mxu0 %v7983
    %8917 = vmatpush2.bf16.msra.mxu0 %v7982
    %8918 = vmatprep.subr.bf16.mxu0 %v7979
    %8919 = vmatpush2.bf16.msra.mxu0 %v7978
    %8920 = vmatprep.subr.bf16.mxu0 %v7975
    %8921 = vmatpush2.bf16.msra.mxu0 %v7974
    %8922 = vmatprep.subr.bf16.mxu0 %v7971
    %8923 = vmatpush2.bf16.msra.mxu0 %v7970
    %8924 = vmatprep.subr.bf16.mxu0 %v7967
    %8925 = vmatpush2.bf16.msra.mxu0 %v7966
    %8926 = vmatprep.subr.bf16.mxu0 %v7963
    %8927 = vmatpush2.bf16.msra.mxu0 %v7962
    %8928 = vmatprep.subr.bf16.mxu0 %v7959
    %8929 = vmatpush2.bf16.msra.mxu0 %v7958
    %8930 = vmatprep.subr.bf16.mxu0 %v7955
    %8931 = vmatpush2.bf16.msra.mxu0 %v7954
    %8932 = vmatprep.mubr.bf16.mxu0 %v5713
    %8933 = vmatmul.mubr.bf16.gmra.mxu0 %v5712
    %v8934 = vpop.f32.mrf.mxu0
    %v8935 = vadd.f32 %v8894, %v8934
    %v8936 = vpop.f32.mrf.mxu0
    %v8937 = vadd.f32 %v8896, %v8936
    %v8938 = vpop.f32.mrf.mxu0
    %v8939 = vpop.f32.mrf.mxu0
    %8940 = vdwg.mxu0
    %8941 = vmatprep.subr.bf16.mxu0 %v8015
    %8942 = vmatpush1.bf16.msra.mxu0 %v8014
    %8943 = vmatprep.subr.bf16.mxu0 %v8011
    %8944 = vmatpush1.bf16.msra.mxu0 %v8010
    %8945 = vmatprep.subr.bf16.mxu0 %v8007
    %8946 = vmatpush1.bf16.msra.mxu0 %v8006
    %8947 = vmatprep.subr.bf16.mxu0 %v8003
    %8948 = vmatpush1.bf16.msra.mxu0 %v8002
    %8949 = vmatprep.subr.bf16.mxu0 %v7999
    %8950 = vmatpush1.bf16.msra.mxu0 %v7998
    %8951 = vmatprep.subr.bf16.mxu0 %v7995
    %8952 = vmatpush1.bf16.msra.mxu0 %v7994
    %8953 = vmatprep.subr.bf16.mxu0 %v7991
    %8954 = vmatpush1.bf16.msra.mxu0 %v7990
    %8955 = vmatprep.subr.bf16.mxu0 %v7987
    %8956 = vmatpush1.bf16.msra.mxu0 %v7986
    %8957 = vmatprep.subr.bf16.mxu0 %v8047
    %8958 = vmatpush2.bf16.msra.mxu0 %v8046
    %8959 = vmatprep.subr.bf16.mxu0 %v8043
    %8960 = vmatpush2.bf16.msra.mxu0 %v8042
    %8961 = vmatprep.subr.bf16.mxu0 %v8039
    %8962 = vmatpush2.bf16.msra.mxu0 %v8038
    %8963 = vmatprep.subr.bf16.mxu0 %v8035
    %8964 = vmatpush2.bf16.msra.mxu0 %v8034
    %8965 = vmatprep.subr.bf16.mxu0 %v8031
    %8966 = vmatpush2.bf16.msra.mxu0 %v8030
    %8967 = vmatprep.subr.bf16.mxu0 %v8027
    %8968 = vmatpush2.bf16.msra.mxu0 %v8026
    %8969 = vmatprep.subr.bf16.mxu0 %v8023
    %8970 = vmatpush2.bf16.msra.mxu0 %v8022
    %8971 = vmatprep.subr.bf16.mxu0 %v8019
    %8972 = vmatpush2.bf16.msra.mxu0 %v8018
    %8973 = vmatprep.mubr.bf16.mxu0 %v5715
    %8974 = vmatmul.mubr.bf16.gmra.mxu0 %v5714
    %v8975 = vpop.f32.mrf.mxu0
    %v8976 = vadd.f32 %v8935, %v8975
    %v8977 = vpop.f32.mrf.mxu0
    %v8978 = vadd.f32 %v8937, %v8977
    %v8979 = vpop.f32.mrf.mxu0
    %v8980 = vpop.f32.mrf.mxu0
    %8981 = vdwg.mxu0
    %8982 = vmatprep.subr.bf16.mxu0 %v8079
    %8983 = vmatpush1.bf16.msra.mxu0 %v8078
    %8984 = vmatprep.subr.bf16.mxu0 %v8075
    %8985 = vmatpush1.bf16.msra.mxu0 %v8074
    %8986 = vmatprep.subr.bf16.mxu0 %v8071
    %8987 = vmatpush1.bf16.msra.mxu0 %v8070
    %8988 = vmatprep.subr.bf16.mxu0 %v8067
    %8989 = vmatpush1.bf16.msra.mxu0 %v8066
    %8990 = vmatprep.subr.bf16.mxu0 %v8063
    %8991 = vmatpush1.bf16.msra.mxu0 %v8062
    %8992 = vmatprep.subr.bf16.mxu0 %v8059
    %8993 = vmatpush1.bf16.msra.mxu0 %v8058
    %8994 = vmatprep.subr.bf16.mxu0 %v8055
    %8995 = vmatpush1.bf16.msra.mxu0 %v8054
    %8996 = vmatprep.subr.bf16.mxu0 %v8051
    %8997 = vmatpush1.bf16.msra.mxu0 %v8050
    %8998 = vmatprep.subr.bf16.mxu0 %v8111
    %8999 = vmatpush2.bf16.msra.mxu0 %v8110
    %9000 = vmatprep.subr.bf16.mxu0 %v8107
    %9001 = vmatpush2.bf16.msra.mxu0 %v8106
    %9002 = vmatprep.subr.bf16.mxu0 %v8103
    %9003 = vmatpush2.bf16.msra.mxu0 %v8102
    %9004 = vmatprep.subr.bf16.mxu0 %v8099
    %9005 = vmatpush2.bf16.msra.mxu0 %v8098
    %9006 = vmatprep.subr.bf16.mxu0 %v8095
    %9007 = vmatpush2.bf16.msra.mxu0 %v8094
    %9008 = vmatprep.subr.bf16.mxu0 %v8091
    %9009 = vmatpush2.bf16.msra.mxu0 %v8090
    %9010 = vmatprep.subr.bf16.mxu0 %v8087
    %9011 = vmatpush2.bf16.msra.mxu0 %v8086
    %9012 = vmatprep.subr.bf16.mxu0 %v8083
    %9013 = vmatpush2.bf16.msra.mxu0 %v8082
    %9014 = vmatprep.mubr.bf16.mxu0 %v5717
    %9015 = vmatmul.mubr.bf16.gmra.mxu0 %v5716
    %v9016 = vpop.f32.mrf.mxu0
    %v9017 = vadd.f32 %v8976, %v9016
    %v9018 = vpop.f32.mrf.mxu0
    %v9019 = vadd.f32 %v8978, %v9018
    %v9020 = vpop.f32.mrf.mxu0
    %v9021 = vpop.f32.mrf.mxu0
    %9022 = vdwg.mxu0
    %9023 = vmatprep.subr.bf16.mxu0 %v8143
    %9024 = vmatpush1.bf16.msra.mxu0 %v8142
    %9025 = vmatprep.subr.bf16.mxu0 %v8139
    %9026 = vmatpush1.bf16.msra.mxu0 %v8138
    %9027 = vmatprep.subr.bf16.mxu0 %v8135
    %9028 = vmatpush1.bf16.msra.mxu0 %v8134
    %9029 = vmatprep.subr.bf16.mxu0 %v8131
    %9030 = vmatpush1.bf16.msra.mxu0 %v8130
    %9031 = vmatprep.subr.bf16.mxu0 %v8127
    %9032 = vmatpush1.bf16.msra.mxu0 %v8126
    %9033 = vmatprep.subr.bf16.mxu0 %v8123
    %9034 = vmatpush1.bf16.msra.mxu0 %v8122
    %9035 = vmatprep.subr.bf16.mxu0 %v8119
    %9036 = vmatpush1.bf16.msra.mxu0 %v8118
    %9037 = vmatprep.subr.bf16.mxu0 %v8115
    %9038 = vmatpush1.bf16.msra.mxu0 %v8114
    %9039 = vmatprep.subr.bf16.mxu0 %v8175
    %9040 = vmatpush2.bf16.msra.mxu0 %v8174
    %9041 = vmatprep.subr.bf16.mxu0 %v8171
    %9042 = vmatpush2.bf16.msra.mxu0 %v8170
    %9043 = vmatprep.subr.bf16.mxu0 %v8167
    %9044 = vmatpush2.bf16.msra.mxu0 %v8166
    %9045 = vmatprep.subr.bf16.mxu0 %v8163
    %9046 = vmatpush2.bf16.msra.mxu0 %v8162
    %9047 = vmatprep.subr.bf16.mxu0 %v8159
    %9048 = vmatpush2.bf16.msra.mxu0 %v8158
    %9049 = vmatprep.subr.bf16.mxu0 %v8155
    %9050 = vmatpush2.bf16.msra.mxu0 %v8154
    %9051 = vmatprep.subr.bf16.mxu0 %v8151
    %9052 = vmatpush2.bf16.msra.mxu0 %v8150
    %9053 = vmatprep.subr.bf16.mxu0 %v8147
    %9054 = vmatpush2.bf16.msra.mxu0 %v8146
    %9055 = vmatprep.mubr.bf16.mxu0 %v5719
    %9056 = vmatmul.mubr.bf16.gmra.mxu0 %v5718
    %v9057 = vpop.f32.mrf.mxu0
    %v9058 = vadd.f32 %v9017, %v9057
    %v9059 = vpop.f32.mrf.mxu0
    %v9060 = vadd.f32 %v9019, %v9059
    %v9061 = vpop.f32.mrf.mxu0
    %v9062 = vpop.f32.mrf.mxu0
    %9063 = vdwg.mxu0
    %9064 = vmatprep.subr.bf16.mxu0 %v8207
    %9065 = vmatpush1.bf16.msra.mxu0 %v8206
    %9066 = vmatprep.subr.bf16.mxu0 %v8203
    %9067 = vmatpush1.bf16.msra.mxu0 %v8202
    %9068 = vmatprep.subr.bf16.mxu0 %v8199
    %9069 = vmatpush1.bf16.msra.mxu0 %v8198
    %9070 = vmatprep.subr.bf16.mxu0 %v8195
    %9071 = vmatpush1.bf16.msra.mxu0 %v8194
    %9072 = vmatprep.subr.bf16.mxu0 %v8191
    %9073 = vmatpush1.bf16.msra.mxu0 %v8190
    %9074 = vmatprep.subr.bf16.mxu0 %v8187
    %9075 = vmatpush1.bf16.msra.mxu0 %v8186
    %9076 = vmatprep.subr.bf16.mxu0 %v8183
    %9077 = vmatpush1.bf16.msra.mxu0 %v8182
    %9078 = vmatprep.subr.bf16.mxu0 %v8179
    %9079 = vmatpush1.bf16.msra.mxu0 %v8178
    %9080 = vmatprep.subr.bf16.mxu0 %v8239
    %9081 = vmatpush2.bf16.msra.mxu0 %v8238
    %9082 = vmatprep.subr.bf16.mxu0 %v8235
    %9083 = vmatpush2.bf16.msra.mxu0 %v8234
    %9084 = vmatprep.subr.bf16.mxu0 %v8231
    %9085 = vmatpush2.bf16.msra.mxu0 %v8230
    %9086 = vmatprep.subr.bf16.mxu0 %v8227
    %9087 = vmatpush2.bf16.msra.mxu0 %v8226
    %9088 = vmatprep.subr.bf16.mxu0 %v8223
    %9089 = vmatpush2.bf16.msra.mxu0 %v8222
    %9090 = vmatprep.subr.bf16.mxu0 %v8219
    %9091 = vmatpush2.bf16.msra.mxu0 %v8218
    %9092 = vmatprep.subr.bf16.mxu0 %v8215
    %9093 = vmatpush2.bf16.msra.mxu0 %v8214
    %9094 = vmatprep.subr.bf16.mxu0 %v8211
    %9095 = vmatpush2.bf16.msra.mxu0 %v8210
    %9096 = vmatprep.mubr.bf16.mxu0 %v5721
    %9097 = vmatmul.mubr.bf16.gmra.mxu0 %v5720
    %v9098 = vpop.f32.mrf.mxu0
    %v9099 = vadd.f32 %v9058, %v9098
    %v9100 = vpop.f32.mrf.mxu0
    %v9101 = vadd.f32 %v9060, %v9100
    %v9102 = vpop.f32.mrf.mxu0
    %v9103 = vpop.f32.mrf.mxu0
    %9104 = vdwg.mxu0
    %9105 = vmatprep.subr.bf16.mxu0 %v8271
    %9106 = vmatpush1.bf16.msra.mxu0 %v8270
    %9107 = vmatprep.subr.bf16.mxu0 %v8267
    %9108 = vmatpush1.bf16.msra.mxu0 %v8266
    %9109 = vmatprep.subr.bf16.mxu0 %v8263
    %9110 = vmatpush1.bf16.msra.mxu0 %v8262
    %9111 = vmatprep.subr.bf16.mxu0 %v8259
    %9112 = vmatpush1.bf16.msra.mxu0 %v8258
    %9113 = vmatprep.subr.bf16.mxu0 %v8255
    %9114 = vmatpush1.bf16.msra.mxu0 %v8254
    %9115 = vmatprep.subr.bf16.mxu0 %v8251
    %9116 = vmatpush1.bf16.msra.mxu0 %v8250
    %9117 = vmatprep.subr.bf16.mxu0 %v8247
    %9118 = vmatpush1.bf16.msra.mxu0 %v8246
    %9119 = vmatprep.subr.bf16.mxu0 %v8243
    %9120 = vmatpush1.bf16.msra.mxu0 %v8242
    %9121 = vmatprep.subr.bf16.mxu0 %v8303
    %9122 = vmatpush2.bf16.msra.mxu0 %v8302
    %9123 = vmatprep.subr.bf16.mxu0 %v8299
    %9124 = vmatpush2.bf16.msra.mxu0 %v8298
    %9125 = vmatprep.subr.bf16.mxu0 %v8295
    %9126 = vmatpush2.bf16.msra.mxu0 %v8294
    %9127 = vmatprep.subr.bf16.mxu0 %v8291
    %9128 = vmatpush2.bf16.msra.mxu0 %v8290
    %9129 = vmatprep.subr.bf16.mxu0 %v8287
    %9130 = vmatpush2.bf16.msra.mxu0 %v8286
    %9131 = vmatprep.subr.bf16.mxu0 %v8283
    %9132 = vmatpush2.bf16.msra.mxu0 %v8282
    %9133 = vmatprep.subr.bf16.mxu0 %v8279
    %9134 = vmatpush2.bf16.msra.mxu0 %v8278
    %9135 = vmatprep.subr.bf16.mxu0 %v8275
    %9136 = vmatpush2.bf16.msra.mxu0 %v8274
    %9137 = vmatprep.mubr.bf16.mxu0 %v5723
    %9138 = vmatmul.mubr.bf16.gmra.mxu0 %v5722
    %v9139 = vpop.f32.mrf.mxu0
    %v9140 = vadd.f32 %v9099, %v9139
    %v9141 = vpop.f32.mrf.mxu0
    %v9142 = vadd.f32 %v9101, %v9141
    %v9143 = vpop.f32.mrf.mxu0
    %v9144 = vpop.f32.mrf.mxu0
    %9145 = vdwg.mxu0
    %9146 = vmatprep.subr.bf16.mxu0 %v7825
    %9147 = vmatpush1.bf16.msra.mxu0 %v7824
    %9148 = vmatprep.subr.bf16.mxu0 %v7821
    %9149 = vmatpush1.bf16.msra.mxu0 %v7820
    %9150 = vmatprep.subr.bf16.mxu0 %v7817
    %9151 = vmatpush1.bf16.msra.mxu0 %v7816
    %9152 = vmatprep.subr.bf16.mxu0 %v7813
    %9153 = vmatpush1.bf16.msra.mxu0 %v7812
    %9154 = vmatprep.subr.bf16.mxu0 %v7809
    %9155 = vmatpush1.bf16.msra.mxu0 %v7808
    %9156 = vmatprep.subr.bf16.mxu0 %v7805
    %9157 = vmatpush1.bf16.msra.mxu0 %v7804
    %9158 = vmatprep.subr.bf16.mxu0 %v7801
    %9159 = vmatpush1.bf16.msra.mxu0 %v7800
    %9160 = vmatprep.subr.bf16.mxu0 %v7797
    %9161 = vmatpush1.bf16.msra.mxu0 %v7796
    %9162 = vmatprep.subr.bf16.mxu0 %v7857
    %9163 = vmatpush2.bf16.msra.mxu0 %v7856
    %9164 = vmatprep.subr.bf16.mxu0 %v7853
    %9165 = vmatpush2.bf16.msra.mxu0 %v7852
    %9166 = vmatprep.subr.bf16.mxu0 %v7849
    %9167 = vmatpush2.bf16.msra.mxu0 %v7848
    %9168 = vmatprep.subr.bf16.mxu0 %v7845
    %9169 = vmatpush2.bf16.msra.mxu0 %v7844
    %9170 = vmatprep.subr.bf16.mxu0 %v7841
    %9171 = vmatpush2.bf16.msra.mxu0 %v7840
    %9172 = vmatprep.subr.bf16.mxu0 %v7837
    %9173 = vmatpush2.bf16.msra.mxu0 %v7836
    %9174 = vmatprep.subr.bf16.mxu0 %v7833
    %9175 = vmatpush2.bf16.msra.mxu0 %v7832
    %9176 = vmatprep.subr.bf16.mxu0 %v7829
    %9177 = vmatpush2.bf16.msra.mxu0 %v7828
    %9178 = vmatprep.mubr.bf16.mxu0 %v5709
    %9179 = vmatmul.mubr.bf16.gmra.mxu0 %v5708
    %v9180 = vpop.f32.mrf.mxu0
    %v9181 = vadd.f32 %v6249, %v9180
    %v9182 = vpop.f32.mrf.mxu0
    %v9183 = vadd.f32 %v6253, %v9182
    %v9184 = vpop.f32.mrf.mxu0
    %v9185 = vpop.f32.mrf.mxu0
    %9186 = vdwg.mxu0
    %9187 = vmatprep.subr.bf16.mxu0 %v7889
    %9188 = vmatpush1.bf16.msra.mxu0 %v7888
    %9189 = vmatprep.subr.bf16.mxu0 %v7885
    %9190 = vmatpush1.bf16.msra.mxu0 %v7884
    %9191 = vmatprep.subr.bf16.mxu0 %v7881
    %9192 = vmatpush1.bf16.msra.mxu0 %v7880
    %9193 = vmatprep.subr.bf16.mxu0 %v7877
    %9194 = vmatpush1.bf16.msra.mxu0 %v7876
    %9195 = vmatprep.subr.bf16.mxu0 %v7873
    %9196 = vmatpush1.bf16.msra.mxu0 %v7872
    %9197 = vmatprep.subr.bf16.mxu0 %v7869
    %9198 = vmatpush1.bf16.msra.mxu0 %v7868
    %9199 = vmatprep.subr.bf16.mxu0 %v7865
    %9200 = vmatpush1.bf16.msra.mxu0 %v7864
    %9201 = vmatprep.subr.bf16.mxu0 %v7861
    %9202 = vmatpush1.bf16.msra.mxu0 %v7860
    %9203 = vmatprep.subr.bf16.mxu0 %v7921
    %9204 = vmatpush2.bf16.msra.mxu0 %v7920
    %9205 = vmatprep.subr.bf16.mxu0 %v7917
    %9206 = vmatpush2.bf16.msra.mxu0 %v7916
    %9207 = vmatprep.subr.bf16.mxu0 %v7913
    %9208 = vmatpush2.bf16.msra.mxu0 %v7912
    %9209 = vmatprep.subr.bf16.mxu0 %v7909
    %9210 = vmatpush2.bf16.msra.mxu0 %v7908
    %9211 = vmatprep.subr.bf16.mxu0 %v7905
    %9212 = vmatpush2.bf16.msra.mxu0 %v7904
    %9213 = vmatprep.subr.bf16.mxu0 %v7901
    %9214 = vmatpush2.bf16.msra.mxu0 %v7900
    %9215 = vmatprep.subr.bf16.mxu0 %v7897
    %9216 = vmatpush2.bf16.msra.mxu0 %v7896
    %9217 = vmatprep.subr.bf16.mxu0 %v7893
    %9218 = vmatpush2.bf16.msra.mxu0 %v7892
    %9219 = vmatprep.mubr.bf16.mxu0 %v5711
    %9220 = vmatmul.mubr.bf16.gmra.mxu0 %v5710
    %v9221 = vpop.f32.mrf.mxu0
    %v9222 = vadd.f32 %v9181, %v9221
    %v9223 = vpop.f32.mrf.mxu0
    %v9224 = vadd.f32 %v9183, %v9223
    %v9225 = vpop.f32.mrf.mxu0
    %v9226 = vpop.f32.mrf.mxu0
    %9227 = vdwg.mxu0
    %9228 = vmatprep.subr.bf16.mxu0 %v7953
    %9229 = vmatpush1.bf16.msra.mxu0 %v7952
    %9230 = vmatprep.subr.bf16.mxu0 %v7949
    %9231 = vmatpush1.bf16.msra.mxu0 %v7948
    %9232 = vmatprep.subr.bf16.mxu0 %v7945
    %9233 = vmatpush1.bf16.msra.mxu0 %v7944
    %9234 = vmatprep.subr.bf16.mxu0 %v7941
    %9235 = vmatpush1.bf16.msra.mxu0 %v7940
    %9236 = vmatprep.subr.bf16.mxu0 %v7937
    %9237 = vmatpush1.bf16.msra.mxu0 %v7936
    %9238 = vmatprep.subr.bf16.mxu0 %v7933
    %9239 = vmatpush1.bf16.msra.mxu0 %v7932
    %9240 = vmatprep.subr.bf16.mxu0 %v7929
    %9241 = vmatpush1.bf16.msra.mxu0 %v7928
    %9242 = vmatprep.subr.bf16.mxu0 %v7925
    %9243 = vmatpush1.bf16.msra.mxu0 %v7924
    %9244 = vmatprep.subr.bf16.mxu0 %v7985
    %9245 = vmatpush2.bf16.msra.mxu0 %v7984
    %9246 = vmatprep.subr.bf16.mxu0 %v7981
    %9247 = vmatpush2.bf16.msra.mxu0 %v7980
    %9248 = vmatprep.subr.bf16.mxu0 %v7977
    %9249 = vmatpush2.bf16.msra.mxu0 %v7976
    %9250 = vmatprep.subr.bf16.mxu0 %v7973
    %9251 = vmatpush2.bf16.msra.mxu0 %v7972
    %9252 = vmatprep.subr.bf16.mxu0 %v7969
    %9253 = vmatpush2.bf16.msra.mxu0 %v7968
    %9254 = vmatprep.subr.bf16.mxu0 %v7965
    %9255 = vmatpush2.bf16.msra.mxu0 %v7964
    %9256 = vmatprep.subr.bf16.mxu0 %v7961
    %9257 = vmatpush2.bf16.msra.mxu0 %v7960
    %9258 = vmatprep.subr.bf16.mxu0 %v7957
    %9259 = vmatpush2.bf16.msra.mxu0 %v7956
    %9260 = vmatprep.mubr.bf16.mxu0 %v5713
    %9261 = vmatmul.mubr.bf16.gmra.mxu0 %v5712
    %v9262 = vpop.f32.mrf.mxu0
    %v9263 = vadd.f32 %v9222, %v9262
    %v9264 = vpop.f32.mrf.mxu0
    %v9265 = vadd.f32 %v9224, %v9264
    %v9266 = vpop.f32.mrf.mxu0
    %v9267 = vpop.f32.mrf.mxu0
    %9268 = vdwg.mxu0
    %9269 = vmatprep.subr.bf16.mxu0 %v8017
    %9270 = vmatpush1.bf16.msra.mxu0 %v8016
    %9271 = vmatprep.subr.bf16.mxu0 %v8013
    %9272 = vmatpush1.bf16.msra.mxu0 %v8012
    %9273 = vmatprep.subr.bf16.mxu0 %v8009
    %9274 = vmatpush1.bf16.msra.mxu0 %v8008
    %9275 = vmatprep.subr.bf16.mxu0 %v8005
    %9276 = vmatpush1.bf16.msra.mxu0 %v8004
    %9277 = vmatprep.subr.bf16.mxu0 %v8001
    %9278 = vmatpush1.bf16.msra.mxu0 %v8000
    %9279 = vmatprep.subr.bf16.mxu0 %v7997
    %9280 = vmatpush1.bf16.msra.mxu0 %v7996
    %9281 = vmatprep.subr.bf16.mxu0 %v7993
    %9282 = vmatpush1.bf16.msra.mxu0 %v7992
    %9283 = vmatprep.subr.bf16.mxu0 %v7989
    %9284 = vmatpush1.bf16.msra.mxu0 %v7988
    %9285 = vmatprep.subr.bf16.mxu0 %v8049
    %9286 = vmatpush2.bf16.msra.mxu0 %v8048
    %9287 = vmatprep.subr.bf16.mxu0 %v8045
    %9288 = vmatpush2.bf16.msra.mxu0 %v8044
    %9289 = vmatprep.subr.bf16.mxu0 %v8041
    %9290 = vmatpush2.bf16.msra.mxu0 %v8040
    %9291 = vmatprep.subr.bf16.mxu0 %v8037
    %9292 = vmatpush2.bf16.msra.mxu0 %v8036
    %9293 = vmatprep.subr.bf16.mxu0 %v8033
    %9294 = vmatpush2.bf16.msra.mxu0 %v8032
    %9295 = vmatprep.subr.bf16.mxu0 %v8029
    %9296 = vmatpush2.bf16.msra.mxu0 %v8028
    %9297 = vmatprep.subr.bf16.mxu0 %v8025
    %9298 = vmatpush2.bf16.msra.mxu0 %v8024
    %9299 = vmatprep.subr.bf16.mxu0 %v8021
    %9300 = vmatpush2.bf16.msra.mxu0 %v8020
    %9301 = vmatprep.mubr.bf16.mxu0 %v5715
    %9302 = vmatmul.mubr.bf16.gmra.mxu0 %v5714
    %v9303 = vpop.f32.mrf.mxu0
    %v9304 = vadd.f32 %v9263, %v9303
    %v9305 = vpop.f32.mrf.mxu0
    %v9306 = vadd.f32 %v9265, %v9305
    %v9307 = vpop.f32.mrf.mxu0
    %v9308 = vpop.f32.mrf.mxu0
    %9309 = vdwg.mxu0
    %9310 = vmatprep.subr.bf16.mxu0 %v8081
    %9311 = vmatpush1.bf16.msra.mxu0 %v8080
    %9312 = vmatprep.subr.bf16.mxu0 %v8077
    %9313 = vmatpush1.bf16.msra.mxu0 %v8076
    %9314 = vmatprep.subr.bf16.mxu0 %v8073
    %9315 = vmatpush1.bf16.msra.mxu0 %v8072
    %9316 = vmatprep.subr.bf16.mxu0 %v8069
    %9317 = vmatpush1.bf16.msra.mxu0 %v8068
    %9318 = vmatprep.subr.bf16.mxu0 %v8065
    %9319 = vmatpush1.bf16.msra.mxu0 %v8064
    %9320 = vmatprep.subr.bf16.mxu0 %v8061
    %9321 = vmatpush1.bf16.msra.mxu0 %v8060
    %9322 = vmatprep.subr.bf16.mxu0 %v8057
    %9323 = vmatpush1.bf16.msra.mxu0 %v8056
    %9324 = vmatprep.subr.bf16.mxu0 %v8053
    %9325 = vmatpush1.bf16.msra.mxu0 %v8052
    %9326 = vmatprep.subr.bf16.mxu0 %v8113
    %9327 = vmatpush2.bf16.msra.mxu0 %v8112
    %9328 = vmatprep.subr.bf16.mxu0 %v8109
    %9329 = vmatpush2.bf16.msra.mxu0 %v8108
    %9330 = vmatprep.subr.bf16.mxu0 %v8105
    %9331 = vmatpush2.bf16.msra.mxu0 %v8104
    %9332 = vmatprep.subr.bf16.mxu0 %v8101
    %9333 = vmatpush2.bf16.msra.mxu0 %v8100
    %9334 = vmatprep.subr.bf16.mxu0 %v8097
    %9335 = vmatpush2.bf16.msra.mxu0 %v8096
    %9336 = vmatprep.subr.bf16.mxu0 %v8093
    %9337 = vmatpush2.bf16.msra.mxu0 %v8092
    %9338 = vmatprep.subr.bf16.mxu0 %v8089
    %9339 = vmatpush2.bf16.msra.mxu0 %v8088
    %9340 = vmatprep.subr.bf16.mxu0 %v8085
    %9341 = vmatpush2.bf16.msra.mxu0 %v8084
    %9342 = vmatprep.mubr.bf16.mxu0 %v5717
    %9343 = vmatmul.mubr.bf16.gmra.mxu0 %v5716
    %v9344 = vpop.f32.mrf.mxu0
    %v9345 = vadd.f32 %v9304, %v9344
    %v9346 = vpop.f32.mrf.mxu0
    %v9347 = vadd.f32 %v9306, %v9346
    %v9348 = vpop.f32.mrf.mxu0
    %v9349 = vpop.f32.mrf.mxu0
    %9350 = vdwg.mxu0
    %9351 = vmatprep.subr.bf16.mxu0 %v8145
    %9352 = vmatpush1.bf16.msra.mxu0 %v8144
    %9353 = vmatprep.subr.bf16.mxu0 %v8141
    %9354 = vmatpush1.bf16.msra.mxu0 %v8140
    %9355 = vmatprep.subr.bf16.mxu0 %v8137
    %9356 = vmatpush1.bf16.msra.mxu0 %v8136
    %9357 = vmatprep.subr.bf16.mxu0 %v8133
    %9358 = vmatpush1.bf16.msra.mxu0 %v8132
    %9359 = vmatprep.subr.bf16.mxu0 %v8129
    %9360 = vmatpush1.bf16.msra.mxu0 %v8128
    %9361 = vmatprep.subr.bf16.mxu0 %v8125
    %9362 = vmatpush1.bf16.msra.mxu0 %v8124
    %9363 = vmatprep.subr.bf16.mxu0 %v8121
    %9364 = vmatpush1.bf16.msra.mxu0 %v8120
    %9365 = vmatprep.subr.bf16.mxu0 %v8117
    %9366 = vmatpush1.bf16.msra.mxu0 %v8116
    %9367 = vmatprep.subr.bf16.mxu0 %v8177
    %9368 = vmatpush2.bf16.msra.mxu0 %v8176
    %9369 = vmatprep.subr.bf16.mxu0 %v8173
    %9370 = vmatpush2.bf16.msra.mxu0 %v8172
    %9371 = vmatprep.subr.bf16.mxu0 %v8169
    %9372 = vmatpush2.bf16.msra.mxu0 %v8168
    %9373 = vmatprep.subr.bf16.mxu0 %v8165
    %9374 = vmatpush2.bf16.msra.mxu0 %v8164
    %9375 = vmatprep.subr.bf16.mxu0 %v8161
    %9376 = vmatpush2.bf16.msra.mxu0 %v8160
    %9377 = vmatprep.subr.bf16.mxu0 %v8157
    %9378 = vmatpush2.bf16.msra.mxu0 %v8156
    %9379 = vmatprep.subr.bf16.mxu0 %v8153
    %9380 = vmatpush2.bf16.msra.mxu0 %v8152
    %9381 = vmatprep.subr.bf16.mxu0 %v8149
    %9382 = vmatpush2.bf16.msra.mxu0 %v8148
    %9383 = vmatprep.mubr.bf16.mxu0 %v5719
    %9384 = vmatmul.mubr.bf16.gmra.mxu0 %v5718
    %v9385 = vpop.f32.mrf.mxu0
    %v9386 = vadd.f32 %v9345, %v9385
    %v9387 = vpop.f32.mrf.mxu0
    %v9388 = vadd.f32 %v9347, %v9387
    %v9389 = vpop.f32.mrf.mxu0
    %v9390 = vpop.f32.mrf.mxu0
    %9391 = vdwg.mxu0
    %9392 = vmatprep.subr.bf16.mxu0 %v8209
    %9393 = vmatpush1.bf16.msra.mxu0 %v8208
    %9394 = vmatprep.subr.bf16.mxu0 %v8205
    %9395 = vmatpush1.bf16.msra.mxu0 %v8204
    %9396 = vmatprep.subr.bf16.mxu0 %v8201
    %9397 = vmatpush1.bf16.msra.mxu0 %v8200
    %9398 = vmatprep.subr.bf16.mxu0 %v8197
    %9399 = vmatpush1.bf16.msra.mxu0 %v8196
    %9400 = vmatprep.subr.bf16.mxu0 %v8193
    %9401 = vmatpush1.bf16.msra.mxu0 %v8192
    %9402 = vmatprep.subr.bf16.mxu0 %v8189
    %9403 = vmatpush1.bf16.msra.mxu0 %v8188
    %9404 = vmatprep.subr.bf16.mxu0 %v8185
    %9405 = vmatpush1.bf16.msra.mxu0 %v8184
    %9406 = vmatprep.subr.bf16.mxu0 %v8181
    %9407 = vmatpush1.bf16.msra.mxu0 %v8180
    %9408 = vmatprep.subr.bf16.mxu0 %v8241
    %9409 = vmatpush2.bf16.msra.mxu0 %v8240
    %9410 = vmatprep.subr.bf16.mxu0 %v8237
    %9411 = vmatpush2.bf16.msra.mxu0 %v8236
    %9412 = vmatprep.subr.bf16.mxu0 %v8233
    %9413 = vmatpush2.bf16.msra.mxu0 %v8232
    %9414 = vmatprep.subr.bf16.mxu0 %v8229
    %9415 = vmatpush2.bf16.msra.mxu0 %v8228
    %9416 = vmatprep.subr.bf16.mxu0 %v8225
    %9417 = vmatpush2.bf16.msra.mxu0 %v8224
    %9418 = vmatprep.subr.bf16.mxu0 %v8221
    %9419 = vmatpush2.bf16.msra.mxu0 %v8220
    %9420 = vmatprep.subr.bf16.mxu0 %v8217
    %9421 = vmatpush2.bf16.msra.mxu0 %v8216
    %9422 = vmatprep.subr.bf16.mxu0 %v8213
    %9423 = vmatpush2.bf16.msra.mxu0 %v8212
    %9424 = vmatprep.mubr.bf16.mxu0 %v5721
    %9425 = vmatmul.mubr.bf16.gmra.mxu0 %v5720
    %v9426 = vpop.f32.mrf.mxu0
    %v9427 = vadd.f32 %v9386, %v9426
    %v9428 = vpop.f32.mrf.mxu0
    %v9429 = vadd.f32 %v9388, %v9428
    %v9430 = vpop.f32.mrf.mxu0
    %v9431 = vpop.f32.mrf.mxu0
    %9432 = vdwg.mxu0
    %9433 = vmatprep.subr.bf16.mxu0 %v8273
    %9434 = vmatpush1.bf16.msra.mxu0 %v8272
    %9435 = vmatprep.subr.bf16.mxu0 %v8269
    %9436 = vmatpush1.bf16.msra.mxu0 %v8268
    %9437 = vmatprep.subr.bf16.mxu0 %v8265
    %9438 = vmatpush1.bf16.msra.mxu0 %v8264
    %9439 = vmatprep.subr.bf16.mxu0 %v8261
    %9440 = vmatpush1.bf16.msra.mxu0 %v8260
    %9441 = vmatprep.subr.bf16.mxu0 %v8257
    %9442 = vmatpush1.bf16.msra.mxu0 %v8256
    %9443 = vmatprep.subr.bf16.mxu0 %v8253
    %9444 = vmatpush1.bf16.msra.mxu0 %v8252
    %9445 = vmatprep.subr.bf16.mxu0 %v8249
    %9446 = vmatpush1.bf16.msra.mxu0 %v8248
    %9447 = vmatprep.subr.bf16.mxu0 %v8245
    %9448 = vmatpush1.bf16.msra.mxu0 %v8244
    %9449 = vmatprep.subr.bf16.mxu0 %v8305
    %9450 = vmatpush2.bf16.msra.mxu0 %v8304
    %9451 = vmatprep.subr.bf16.mxu0 %v8301
    %9452 = vmatpush2.bf16.msra.mxu0 %v8300
    %9453 = vmatprep.subr.bf16.mxu0 %v8297
    %9454 = vmatpush2.bf16.msra.mxu0 %v8296
    %9455 = vmatprep.subr.bf16.mxu0 %v8293
    %9456 = vmatpush2.bf16.msra.mxu0 %v8292
    %9457 = vmatprep.subr.bf16.mxu0 %v8289
    %9458 = vmatpush2.bf16.msra.mxu0 %v8288
    %9459 = vmatprep.subr.bf16.mxu0 %v8285
    %9460 = vmatpush2.bf16.msra.mxu0 %v8284
    %9461 = vmatprep.subr.bf16.mxu0 %v8281
    %9462 = vmatpush2.bf16.msra.mxu0 %v8280
    %9463 = vmatprep.subr.bf16.mxu0 %v8277
    %9464 = vmatpush2.bf16.msra.mxu0 %v8276
    %9465 = vmatprep.mubr.bf16.mxu0 %v5723
    %9466 = vmatmul.mubr.bf16.gmra.mxu0 %v5722
    %v9467 = vpop.f32.mrf.mxu0
    %v9468 = vadd.f32 %v9427, %v9467
    %v9469 = vpop.f32.mrf.mxu0
    %v9470 = vadd.f32 %v9429, %v9469
    %v9471 = vpop.f32.mrf.mxu0
    %v9472 = vpop.f32.mrf.mxu0
    %9473 = vdwg.mxu0
    %v9474 = vmax.f32 %v9140, 0.0
    %v9475 = vmax.f32 %v9142, 0.0
    %v9476 = vmax.f32 %v9468, 0.0
    %v9477 = vmax.f32 %v9470, 0.0
    %v9478 = vmul.f32 %v9474, %v9474
    %v9479 = vmul.f32 %v9475, %v9475
    %v9480 = vmul.f32 %v9476, %v9476
    %v9481 = vmul.f32 %v9477, %v9477
    %v9482 = vadd.f32 %v9478, %v9479
    %v9483 = vadd.f32 %v9482, %v9480
    %v9484 = vadd.f32 %v9483, %v9481
    %9485 = vadd.xlane.f32.xlu0 %v9484
    %v9486 = vpop.xlane.xlu0 %9485
    %v9487 = vmax.f32 %v9486, 1e-24
    %v9488 = vrsqrt.pop %v9487
    %v9489 = vmul.f32 %v9474, %v9488
    %v9490 = vmul.f32 %v9475, %v9488
    %v9491 = vmul.f32 %v9476, %v9488
    %v9492 = vmul.f32 %v9477, %v9488
    %9493 = vst [vmem:[%s7] sm:$0xff] %v9489
    %9494 = vst [vmem:[%s7 + $0x8] sm:$0xff] %v9490
    %9495 = vst [vmem:[%s7 + $0x10] sm:$0xff] %v9491
    %9496 = vst [vmem:[%s7 + $0x18] sm:$0xff] %v9492
    %v9497 = vld [vmem:[%s4] sm:$0xff]
    %v9498 = vld [vmem:[%s4 + $0x8] sm:$0xff]
    %v9499 = vld [vmem:[%s4 + $0x10] sm:$0xff]
    %v9500 = vld [vmem:[#allocation7] sm:$0xff]
    %v9501 = vld [vmem:[#allocation7 + $0x8] sm:$0xff]
    %v9502 = vld [vmem:[#allocation7 + $0x10] sm:$0xff]
    %v9503 = vld [vmem:[#allocation7 + $0x18] sm:$0xff]
    %v9504 = vld [vmem:[#allocation7 + $0x20] sm:$0xff]
    %v9505 = vld [vmem:[#allocation7 + $0x28] sm:$0xff]
    %v9506 = vld [vmem:[#allocation7 + $0x30] sm:$0xff]
    %v9507 = vld [vmem:[#allocation7 + $0x38] sm:$0xff]
    %v9508 = vld [vmem:[#allocation7 + $0x40] sm:$0xff]
    %v9509 = vld [vmem:[#allocation7 + $0x48] sm:$0xff]
    %v9510 = vld [vmem:[#allocation7 + $0x50] sm:$0xff]
    %v9511 = vld [vmem:[#allocation7 + $0x58] sm:$0xff]
    %v9512 = vld [vmem:[#allocation7 + $0x60] sm:$0xff]
    %v9513 = vld [vmem:[#allocation7 + $0x68] sm:$0xff]
    %v9514 = vld [vmem:[#allocation7 + $0x70] sm:$0xff]
    %v9515 = vld [vmem:[#allocation7 + $0x78] sm:$0xff]
    %v9516 = vld [vmem:[#allocation7 + $0x80] sm:$0xff]
    %v9517 = vld [vmem:[#allocation7 + $0x88] sm:$0xff]
    %v9518 = vld [vmem:[#allocation7 + $0x90] sm:$0xff]
    %v9519 = vld [vmem:[#allocation7 + $0x98] sm:$0xff]
    %v9520 = vld [vmem:[#allocation7 + $0xa0] sm:$0xff]
    %v9521 = vld [vmem:[#allocation7 + $0xa8] sm:$0xff]
    %v9522 = vld [vmem:[#allocation7 + $0xb0] sm:$0xff]
    %v9523 = vld [vmem:[#allocation7 + $0xb8] sm:$0xff]
    %v9524 = vld [vmem:[#allocation7 + $0xc0] sm:$0xff]
    %v9525 = vld [vmem:[#allocation7 + $0xc8] sm:$0xff]
    %v9526 = vld [vmem:[#allocation7 + $0xd0] sm:$0xff]
    %v9527 = vld [vmem:[#allocation7 + $0xd8] sm:$0xff]
    %v9528 = vld [vmem:[#allocation7 + $0xe0] sm:$0xff]
    %v9529 = vld [vmem:[#allocation7 + $0xe8] sm:$0xff]
    %v9530 = vld [vmem:[#allocation7 + $0xf0] sm:$0xff]
    %v9531 = vld [vmem:[#allocation7 + $0xf8] sm:$0xff]
    %v9532 = vld [vmem:[#allocation7 + $0x100] sm:$0xff]
    %v9533 = vld [vmem:[#allocation7 + $0x108] sm:$0xff]
    %v9534 = vld [vmem:[#allocation7 + $0x110] sm:$0xff]
    %v9535 = vld [vmem:[#allocation7 + $0x118] sm:$0xff]
    %v9536 = vld [vmem:[#allocation7 + $0x120] sm:$0xff]
    %v9537 = vld [vmem:[#allocation7 + $0x128] sm:$0xff]
    %v9538 = vld [vmem:[#allocation7 + $0x130] sm:$0xff]
    %v9539 = vld [vmem:[#allocation7 + $0x138] sm:$0xff]
    %v9540 = vld [vmem:[#allocation7 + $0x140] sm:$0xff]
    %v9541 = vld [vmem:[#allocation7 + $0x148] sm:$0xff]
    %v9542 = vld [vmem:[#allocation7 + $0x150] sm:$0xff]
    %v9543 = vld [vmem:[#allocation7 + $0x158] sm:$0xff]
    %v9544 = vld [vmem:[#allocation7 + $0x160] sm:$0xff]
    %v9545 = vld [vmem:[#allocation7 + $0x168] sm:$0xff]
    %v9546 = vld [vmem:[#allocation7 + $0x170] sm:$0xff]
    %v9547 = vld [vmem:[#allocation7 + $0x178] sm:$0xff]
    %v9548 = vld [vmem:[#allocation7 + $0x180] sm:$0xff]
    %v9549 = vld [vmem:[#allocation7 + $0x188] sm:$0xff]
    %v9550 = vld [vmem:[#allocation7 + $0x190] sm:$0xff]
    %v9551 = vld [vmem:[#allocation7 + $0x198] sm:$0xff]
    %v9552 = vld [vmem:[#allocation7 + $0x1a0] sm:$0xff]
    %v9553 = vld [vmem:[#allocation7 + $0x1a8] sm:$0xff]
    %v9554 = vld [vmem:[#allocation7 + $0x1b0] sm:$0xff]
    %v9555 = vld [vmem:[#allocation7 + $0x1b8] sm:$0xff]
    %v9556 = vld [vmem:[#allocation7 + $0x1c0] sm:$0xff]
    %v9557 = vld [vmem:[#allocation7 + $0x1c8] sm:$0xff]
    %v9558 = vld [vmem:[#allocation7 + $0x1d0] sm:$0xff]
    %v9559 = vld [vmem:[#allocation7 + $0x1d8] sm:$0xff]
    %v9560 = vld [vmem:[#allocation7 + $0x1e0] sm:$0xff]
    %v9561 = vld [vmem:[#allocation7 + $0x1e8] sm:$0xff]
    %v9562 = vld [vmem:[#allocation7 + $0x1f0] sm:$0xff]
    %v9563 = vld [vmem:[#allocation7 + $0x1f8] sm:$0xff]
    %v9564 = vld [vmem:[#allocation7 + $0x200] sm:$0xff]
    %v9565 = vld [vmem:[#allocation7 + $0x208] sm:$0xff]
    %v9566 = vld [vmem:[#allocation7 + $0x210] sm:$0xff]
    %v9567 = vld [vmem:[#allocation7 + $0x218] sm:$0xff]
    %v9568 = vld [vmem:[#allocation7 + $0x220] sm:$0xff]
    %v9569 = vld [vmem:[#allocation7 + $0x228] sm:$0xff]
    %v9570 = vld [vmem:[#allocation7 + $0x230] sm:$0xff]
    %v9571 = vld [vmem:[#allocation7 + $0x238] sm:$0xff]
    %v9572 = vld [vmem:[#allocation7 + $0x240] sm:$0xff]
    %v9573 = vld [vmem:[#allocation7 + $0x248] sm:$0xff]
    %v9574 = vld [vmem:[#allocation7 + $0x250] sm:$0xff]
    %v9575 = vld [vmem:[#allocation7 + $0x258] sm:$0xff]
    %v9576 = vld [vmem:[#allocation7 + $0x260] sm:$0xff]
    %v9577 = vld [vmem:[#allocation7 + $0x268] sm:$0xff]
    %v9578 = vld [vmem:[#allocation7 + $0x270] sm:$0xff]
    %v9579 = vld [vmem:[#allocation7 + $0x278] sm:$0xff]
    %v9580 = vld [vmem:[#allocation7 + $0x280] sm:$0xff]
    %v9581 = vld [vmem:[#allocation7 + $0x288] sm:$0xff]
    %v9582 = vld [vmem:[#allocation7 + $0x290] sm:$0xff]
    %v9583 = vld [vmem:[#allocation7 + $0x298] sm:$0xff]
    %v9584 = vld [vmem:[#allocation7 + $0x2a0] sm:$0xff]
    %v9585 = vld [vmem:[#allocation7 + $0x2a8] sm:$0xff]
    %v9586 = vld [vmem:[#allocation7 + $0x2b0] sm:$0xff]
    %v9587 = vld [vmem:[#allocation7 + $0x2b8] sm:$0xff]
    %v9588 = vld [vmem:[#allocation7 + $0x2c0] sm:$0xff]
    %v9589 = vld [vmem:[#allocation7 + $0x2c8] sm:$0xff]
    %v9590 = vld [vmem:[#allocation7 + $0x2d0] sm:$0xff]
    %v9591 = vld [vmem:[#allocation7 + $0x2d8] sm:$0xff]
    %v9592 = vld [vmem:[#allocation7 + $0x2e0] sm:$0xff]
    %v9593 = vld [vmem:[#allocation7 + $0x2e8] sm:$0xff]
    %v9594 = vld [vmem:[#allocation7 + $0x2f0] sm:$0xff]
    %v9595 = vld [vmem:[#allocation7 + $0x2f8] sm:$0xff]
    %v9596 = vld [vmem:[#allocation7 + $0x300] sm:$0xff]
    %v9597 = vld [vmem:[#allocation7 + $0x308] sm:$0xff]
    %v9598 = vld [vmem:[#allocation7 + $0x310] sm:$0xff]
    %v9599 = vld [vmem:[#allocation7 + $0x318] sm:$0xff]
    %v9600 = vld [vmem:[#allocation7 + $0x320] sm:$0xff]
    %v9601 = vld [vmem:[#allocation7 + $0x328] sm:$0xff]
    %v9602 = vld [vmem:[#allocation7 + $0x330] sm:$0xff]
    %v9603 = vld [vmem:[#allocation7 + $0x338] sm:$0xff]
    %v9604 = vld [vmem:[#allocation7 + $0x340] sm:$0xff]
    %v9605 = vld [vmem:[#allocation7 + $0x348] sm:$0xff]
    %v9606 = vld [vmem:[#allocation7 + $0x350] sm:$0xff]
    %v9607 = vld [vmem:[#allocation7 + $0x358] sm:$0xff]
    %v9608 = vld [vmem:[#allocation7 + $0x360] sm:$0xff]
    %v9609 = vld [vmem:[#allocation7 + $0x368] sm:$0xff]
    %v9610 = vld [vmem:[#allocation7 + $0x370] sm:$0xff]
    %v9611 = vld [vmem:[#allocation7 + $0x378] sm:$0xff]
    %v9612 = vld [vmem:[#allocation7 + $0x380] sm:$0xff]
    %v9613 = vld [vmem:[#allocation7 + $0x388] sm:$0xff]
    %v9614 = vld [vmem:[#allocation7 + $0x390] sm:$0xff]
    %v9615 = vld [vmem:[#allocation7 + $0x398] sm:$0xff]
    %v9616 = vld [vmem:[#allocation7 + $0x3a0] sm:$0xff]
    %v9617 = vld [vmem:[#allocation7 + $0x3a8] sm:$0xff]
    %v9618 = vld [vmem:[#allocation7 + $0x3b0] sm:$0xff]
    %v9619 = vld [vmem:[#allocation7 + $0x3b8] sm:$0xff]
    %v9620 = vld [vmem:[#allocation7 + $0x3c0] sm:$0xff]
    %v9621 = vld [vmem:[#allocation7 + $0x3c8] sm:$0xff]
    %v9622 = vld [vmem:[#allocation7 + $0x3d0] sm:$0xff]
    %v9623 = vld [vmem:[#allocation7 + $0x3d8] sm:$0xff]
    %v9624 = vld [vmem:[#allocation7 + $0x3e0] sm:$0xff]
    %v9625 = vld [vmem:[#allocation7 + $0x3e8] sm:$0xff]
    %v9626 = vld [vmem:[#allocation7 + $0x3f0] sm:$0xff]
    %v9627 = vld [vmem:[#allocation7 + $0x3f8] sm:$0xff]
    %v9628 = vld [vmem:[#allocation7 + $0x400] sm:$0xff]
    %v9629 = vld [vmem:[#allocation7 + $0x408] sm:$0xff]
    %v9630 = vld [vmem:[#allocation7 + $0x410] sm:$0xff]
    %v9631 = vld [vmem:[#allocation7 + $0x418] sm:$0xff]
    %v9632 = vld [vmem:[#allocation7 + $0x420] sm:$0xff]
    %v9633 = vld [vmem:[#allocation7 + $0x428] sm:$0xff]
    %v9634 = vld [vmem:[#allocation7 + $0x430] sm:$0xff]
    %v9635 = vld [vmem:[#allocation7 + $0x438] sm:$0xff]
    %v9636 = vld [vmem:[#allocation7 + $0x440] sm:$0xff]
    %v9637 = vld [vmem:[#allocation7 + $0x448] sm:$0xff]
    %v9638 = vld [vmem:[#allocation7 + $0x450] sm:$0xff]
    %v9639 = vld [vmem:[#allocation7 + $0x458] sm:$0xff]
    %v9640 = vld [vmem:[#allocation7 + $0x460] sm:$0xff]
    %v9641 = vld [vmem:[#allocation7 + $0x468] sm:$0xff]
    %v9642 = vld [vmem:[#allocation7 + $0x470] sm:$0xff]
    %v9643 = vld [vmem:[#allocation7 + $0x478] sm:$0xff]
    %v9644 = vld [vmem:[#allocation7 + $0x480] sm:$0xff]
    %v9645 = vld [vmem:[#allocation7 + $0x488] sm:$0xff]
    %v9646 = vld [vmem:[#allocation7 + $0x490] sm:$0xff]
    %v9647 = vld [vmem:[#allocation7 + $0x498] sm:$0xff]
    %v9648 = vld [vmem:[#allocation7 + $0x4a0] sm:$0xff]
    %v9649 = vld [vmem:[#allocation7 + $0x4a8] sm:$0xff]
    %v9650 = vld [vmem:[#allocation7 + $0x4b0] sm:$0xff]
    %v9651 = vld [vmem:[#allocation7 + $0x4b8] sm:$0xff]
    %v9652 = vld [vmem:[#allocation7 + $0x4c0] sm:$0xff]
    %v9653 = vld [vmem:[#allocation7 + $0x4c8] sm:$0xff]
    %v9654 = vld [vmem:[#allocation7 + $0x4d0] sm:$0xff]
    %v9655 = vld [vmem:[#allocation7 + $0x4d8] sm:$0xff]
    %v9656 = vld [vmem:[#allocation7 + $0x4e0] sm:$0xff]
    %v9657 = vld [vmem:[#allocation7 + $0x4e8] sm:$0xff]
    %v9658 = vld [vmem:[#allocation7 + $0x4f0] sm:$0xff]
    %v9659 = vld [vmem:[#allocation7 + $0x4f8] sm:$0xff]
    %v9660 = vld [vmem:[#allocation7 + $0x500] sm:$0xff]
    %v9661 = vld [vmem:[#allocation7 + $0x508] sm:$0xff]
    %v9662 = vld [vmem:[#allocation7 + $0x510] sm:$0xff]
    %v9663 = vld [vmem:[#allocation7 + $0x518] sm:$0xff]
    %v9664 = vld [vmem:[#allocation7 + $0x520] sm:$0xff]
    %v9665 = vld [vmem:[#allocation7 + $0x528] sm:$0xff]
    %v9666 = vld [vmem:[#allocation7 + $0x530] sm:$0xff]
    %v9667 = vld [vmem:[#allocation7 + $0x538] sm:$0xff]
    %v9668 = vld [vmem:[#allocation7 + $0x540] sm:$0xff]
    %v9669 = vld [vmem:[#allocation7 + $0x548] sm:$0xff]
    %v9670 = vld [vmem:[#allocation7 + $0x550] sm:$0xff]
    %v9671 = vld [vmem:[#allocation7 + $0x558] sm:$0xff]
    %v9672 = vld [vmem:[#allocation7 + $0x560] sm:$0xff]
    %v9673 = vld [vmem:[#allocation7 + $0x568] sm:$0xff]
    %v9674 = vld [vmem:[#allocation7 + $0x570] sm:$0xff]
    %v9675 = vld [vmem:[#allocation7 + $0x578] sm:$0xff]
    %v9676 = vld [vmem:[#allocation7 + $0x580] sm:$0xff]
    %v9677 = vld [vmem:[#allocation7 + $0x588] sm:$0xff]
    %v9678 = vld [vmem:[#allocation7 + $0x590] sm:$0xff]
    %v9679 = vld [vmem:[#allocation7 + $0x598] sm:$0xff]
    %v9680 = vld [vmem:[#allocation7 + $0x5a0] sm:$0xff]
    %v9681 = vld [vmem:[#allocation7 + $0x5a8] sm:$0xff]
    %v9682 = vld [vmem:[#allocation7 + $0x5b0] sm:$0xff]
    %v9683 = vld [vmem:[#allocation7 + $0x5b8] sm:$0xff]
    %v9684 = vld [vmem:[#allocation7 + $0x5c0] sm:$0xff]
    %v9685 = vld [vmem:[#allocation7 + $0x5c8] sm:$0xff]
    %v9686 = vld [vmem:[#allocation7 + $0x5d0] sm:$0xff]
    %v9687 = vld [vmem:[#allocation7 + $0x5d8] sm:$0xff]
    %v9688 = vld [vmem:[#allocation7 + $0x5e0] sm:$0xff]
    %v9689 = vld [vmem:[#allocation7 + $0x5e8] sm:$0xff]
    %v9690 = vld [vmem:[#allocation7 + $0x5f0] sm:$0xff]
    %v9691 = vld [vmem:[#allocation7 + $0x5f8] sm:$0xff]
    %v9692 = vld [vmem:[#allocation9] sm:$0xf]
    %v9694 = vlaneseq
    %v9695 = vshrl.u32 %v9694, 7
    %v9696 = vsub.s32 0, %v9695
    %v9697 = vrot.slane %v9692, %v9696
    %v9698 = vlaneseq
    %v9699 = vshrl.u32 %v9698, 7
    %v9700 = vsub.s32 1, %v9699
    %v9701 = vrot.slane %v9692, %v9700
    %v9702 = vlaneseq
    %v9703 = vshrl.u32 %v9702, 7
    %v9704 = vsub.s32 2, %v9703
    %v9705 = vrot.slane %v9692, %v9704
    %v9706 = vlaneseq
    %v9707 = vshrl.u32 %v9706, 7
    %v9708 = vsub.s32 3, %v9707
    %v9709 = vrot.slane %v9692, %v9708
    %v9717 = vunpack.c.l.b16 %v9497
    %v9718 = vunpack.c.h.b16 %v9497
    %v9719 = vunpack.c.l.b16 %v9498
    %v9720 = vunpack.c.h.b16 %v9498
    %v9721 = vunpack.c.l.b16 %v9499
    %v9722 = vunpack.c.h.b16 %v9499
    %v9723 = vpack.c.b16 %v9717, %v9717
    %v9724 = vpack.c.b16 %v9718, %v9718
    %v9725 = vpack.c.b16 %v9719, %v9719
    %v9726 = vpack.c.b16 %v9720, %v9720
    %v9727 = vpack.c.b16 %v9721, %v9721
    %v9728 = vpack.c.b16 %v9722, %v9722
    %v9927 = vunpack.c.l.b16 %v9500
    %v9928 = vunpack.c.h.b16 %v9500
    %v9929 = vunpack.c.l.b16 %v9501
    %v9930 = vunpack.c.h.b16 %v9501
    %v9931 = vunpack.c.l.b16 %v9502
    %v9932 = vunpack.c.h.b16 %v9502
    %v9933 = vunpack.c.l.b16 %v9503
    %v9934 = vunpack.c.h.b16 %v9503
    %v9935 = vunpack.c.l.b16 %v9504
    %v9936 = vunpack.c.h.b16 %v9504
    %v9937 = vunpack.c.l.b16 %v9505
    %v9938 = vunpack.c.h.b16 %v9505
    %v9939 = vunpack.c.l.b16 %v9506
    %v9940 = vunpack.c.h.b16 %v9506
    %v9941 = vunpack.c.l.b16 %v9507
    %v9942 = vunpack.c.h.b16 %v9507
    %v9943 = vunpack.c.l.b16 %v9508
    %v9944 = vunpack.c.h.b16 %v9508
    %v9945 = vunpack.c.l.b16 %v9509
    %v9946 = vunpack.c.h.b16 %v9509
    %v9947 = vunpack.c.l.b16 %v9510
    %v9948 = vunpack.c.h.b16 %v9510
    %v9949 = vunpack.c.l.b16 %v9511
    %v9950 = vunpack.c.h.b16 %v9511
    %v9951 = vunpack.c.l.b16 %v9512
    %v9952 = vunpack.c.h.b16 %v9512
    %v9953 = vunpack.c.l.b16 %v9513
    %v9954 = vunpack.c.h.b16 %v9513
    %v9955 = vunpack.c.l.b16 %v9514
    %v9956 = vunpack.c.h.b16 %v9514
    %v9957 = vunpack.c.l.b16 %v9515
    %v9958 = vunpack.c.h.b16 %v9515
    %v9959 = vunpack.c.l.b16 %v9516
    %v9960 = vunpack.c.h.b16 %v9516
    %v9961 = vunpack.c.l.b16 %v9517
    %v9962 = vunpack.c.h.b16 %v9517
    %v9963 = vunpack.c.l.b16 %v9518
    %v9964 = vunpack.c.h.b16 %v9518
    %v9965 = vunpack.c.l.b16 %v9519
    %v9966 = vunpack.c.h.b16 %v9519
    %v9967 = vunpack.c.l.b16 %v9520
    %v9968 = vunpack.c.h.b16 %v9520
    %v9969 = vunpack.c.l.b16 %v9521
    %v9970 = vunpack.c.h.b16 %v9521
    %v9971 = vunpack.c.l.b16 %v9522
    %v9972 = vunpack.c.h.b16 %v9522
    %v9973 = vunpack.c.l.b16 %v9523
    %v9974 = vunpack.c.h.b16 %v9523
    %v9975 = vunpack.c.l.b16 %v9524
    %v9976 = vunpack.c.h.b16 %v9524
    %v9977 = vunpack.c.l.b16 %v9525
    %v9978 = vunpack.c.h.b16 %v9525
    %v9979 = vunpack.c.l.b16 %v9526
    %v9980 = vunpack.c.h.b16 %v9526
    %v9981 = vunpack.c.l.b16 %v9527
    %v9982 = vunpack.c.h.b16 %v9527
    %v9983 = vunpack.c.l.b16 %v9528
    %v9984 = vunpack.c.h.b16 %v9528
    %v9985 = vunpack.c.l.b16 %v9529
    %v9986 = vunpack.c.h.b16 %v9529
    %v9987 = vunpack.c.l.b16 %v9530
    %v9988 = vunpack.c.h.b16 %v9530
    %v9989 = vunpack.c.l.b16 %v9531
    %v9990 = vunpack.c.h.b16 %v9531
    %v9991 = vunpack.c.l.b16 %v9532
    %v9992 = vunpack.c.h.b16 %v9532
    %v9993 = vunpack.c.l.b16 %v9533
    %v9994 = vunpack.c.h.b16 %v9533
    %v9995 = vunpack.c.l.b16 %v9534
    %v9996 = vunpack.c.h.b16 %v9534
    %v9997 = vunpack.c.l.b16 %v9535
    %v9998 = vunpack.c.h.b16 %v9535
    %v9999 = vunpack.c.l.b16 %v9536
    %v10000 = vunpack.c.h.b16 %v9536
    %v10001 = vunpack.c.l.b16 %v9537
    %v10002 = vunpack.c.h.b16 %v9537
    %v10003 = vunpack.c.l.b16 %v9538
    %v10004 = vunpack.c.h.b16 %v9538
    %v10005 = vunpack.c.l.b16 %v9539
    %v10006 = vunpack.c.h.b16 %v9539
    %v10007 = vunpack.c.l.b16 %v9540
    %v10008 = vunpack.c.h.b16 %v9540
    %v10009 = vunpack.c.l.b16 %v9541
    %v10010 = vunpack.c.h.b16 %v9541
    %v10011 = vunpack.c.l.b16 %v9542
    %v10012 = vunpack.c.h.b16 %v9542
    %v10013 = vunpack.c.l.b16 %v9543
    %v10014 = vunpack.c.h.b16 %v9543
    %v10015 = vunpack.c.l.b16 %v9544
    %v10016 = vunpack.c.h.b16 %v9544
    %v10017 = vunpack.c.l.b16 %v9545
    %v10018 = vunpack.c.h.b16 %v9545
    %v10019 = vunpack.c.l.b16 %v9546
    %v10020 = vunpack.c.h.b16 %v9546
    %v10021 = vunpack.c.l.b16 %v9547
    %v10022 = vunpack.c.h.b16 %v9547
    %v10023 = vunpack.c.l.b16 %v9548
    %v10024 = vunpack.c.h.b16 %v9548
    %v10025 = vunpack.c.l.b16 %v9549
    %v10026 = vunpack.c.h.b16 %v9549
    %v10027 = vunpack.c.l.b16 %v9550
    %v10028 = vunpack.c.h.b16 %v9550
    %v10029 = vunpack.c.l.b16 %v9551
    %v10030 = vunpack.c.h.b16 %v9551
    %v10031 = vunpack.c.l.b16 %v9552
    %v10032 = vunpack.c.h.b16 %v9552
    %v10033 = vunpack.c.l.b16 %v9553
    %v10034 = vunpack.c.h.b16 %v9553
    %v10035 = vunpack.c.l.b16 %v9554
    %v10036 = vunpack.c.h.b16 %v9554
    %v10037 = vunpack.c.l.b16 %v9555
    %v10038 = vunpack.c.h.b16 %v9555
    %v10039 = vunpack.c.l.b16 %v9556
    %v10040 = vunpack.c.h.b16 %v9556
    %v10041 = vunpack.c.l.b16 %v9557
    %v10042 = vunpack.c.h.b16 %v9557
    %v10043 = vunpack.c.l.b16 %v9558
    %v10044 = vunpack.c.h.b16 %v9558
    %v10045 = vunpack.c.l.b16 %v9559
    %v10046 = vunpack.c.h.b16 %v9559
    %v10047 = vunpack.c.l.b16 %v9560
    %v10048 = vunpack.c.h.b16 %v9560
    %v10049 = vunpack.c.l.b16 %v9561
    %v10050 = vunpack.c.h.b16 %v9561
    %v10051 = vunpack.c.l.b16 %v9562
    %v10052 = vunpack.c.h.b16 %v9562
    %v10053 = vunpack.c.l.b16 %v9563
    %v10054 = vunpack.c.h.b16 %v9563
    %v10055 = vunpack.c.l.b16 %v9564
    %v10056 = vunpack.c.h.b16 %v9564
    %v10057 = vunpack.c.l.b16 %v9565
    %v10058 = vunpack.c.h.b16 %v9565
    %v10059 = vunpack.c.l.b16 %v9566
    %v10060 = vunpack.c.h.b16 %v9566
    %v10061 = vunpack.c.l.b16 %v9567
    %v10062 = vunpack.c.h.b16 %v9567
    %v10063 = vunpack.c.l.b16 %v9568
    %v10064 = vunpack.c.h.b16 %v9568
    %v10065 = vunpack.c.l.b16 %v9569
    %v10066 = vunpack.c.h.b16 %v9569
    %v10067 = vunpack.c.l.b16 %v9570
    %v10068 = vunpack.c.h.b16 %v9570
    %v10069 = vunpack.c.l.b16 %v9571
    %v10070 = vunpack.c.h.b16 %v9571
    %v10071 = vunpack.c.l.b16 %v9572
    %v10072 = vunpack.c.h.b16 %v9572
    %v10073 = vunpack.c.l.b16 %v9573
    %v10074 = vunpack.c.h.b16 %v9573
    %v10075 = vunpack.c.l.b16 %v9574
    %v10076 = vunpack.c.h.b16 %v9574
    %v10077 = vunpack.c.l.b16 %v9575
    %v10078 = vunpack.c.h.b16 %v9575
    %v10079 = vunpack.c.l.b16 %v9576
    %v10080 = vunpack.c.h.b16 %v9576
    %v10081 = vunpack.c.l.b16 %v9577
    %v10082 = vunpack.c.h.b16 %v9577
    %v10083 = vunpack.c.l.b16 %v9578
    %v10084 = vunpack.c.h.b16 %v9578
    %v10085 = vunpack.c.l.b16 %v9579
    %v10086 = vunpack.c.h.b16 %v9579
    %v10087 = vunpack.c.l.b16 %v9580
    %v10088 = vunpack.c.h.b16 %v9580
    %v10089 = vunpack.c.l.b16 %v9581
    %v10090 = vunpack.c.h.b16 %v9581
    %v10091 = vunpack.c.l.b16 %v9582
    %v10092 = vunpack.c.h.b16 %v9582
    %v10093 = vunpack.c.l.b16 %v9583
    %v10094 = vunpack.c.h.b16 %v9583
    %v10095 = vunpack.c.l.b16 %v9584
    %v10096 = vunpack.c.h.b16 %v9584
    %v10097 = vunpack.c.l.b16 %v9585
    %v10098 = vunpack.c.h.b16 %v9585
    %v10099 = vunpack.c.l.b16 %v9586
    %v10100 = vunpack.c.h.b16 %v9586
    %v10101 = vunpack.c.l.b16 %v9587
    %v10102 = vunpack.c.h.b16 %v9587
    %v10103 = vunpack.c.l.b16 %v9588
    %v10104 = vunpack.c.h.b16 %v9588
    %v10105 = vunpack.c.l.b16 %v9589
    %v10106 = vunpack.c.h.b16 %v9589
    %v10107 = vunpack.c.l.b16 %v9590
    %v10108 = vunpack.c.h.b16 %v9590
    %v10109 = vunpack.c.l.b16 %v9591
    %v10110 = vunpack.c.h.b16 %v9591
    %v10111 = vunpack.c.l.b16 %v9592
    %v10112 = vunpack.c.h.b16 %v9592
    %v10113 = vunpack.c.l.b16 %v9593
    %v10114 = vunpack.c.h.b16 %v9593
    %v10115 = vunpack.c.l.b16 %v9594
    %v10116 = vunpack.c.h.b16 %v9594
    %v10117 = vunpack.c.l.b16 %v9595
    %v10118 = vunpack.c.h.b16 %v9595
    %v10119 = vunpack.c.l.b16 %v9596
    %v10120 = vunpack.c.h.b16 %v9596
    %v10121 = vunpack.c.l.b16 %v9597
    %v10122 = vunpack.c.h.b16 %v9597
    %v10123 = vunpack.c.l.b16 %v9598
    %v10124 = vunpack.c.h.b16 %v9598
    %v10125 = vunpack.c.l.b16 %v9599
    %v10126 = vunpack.c.h.b16 %v9599
    %v10127 = vunpack.c.l.b16 %v9600
    %v10128 = vunpack.c.h.b16 %v9600
    %v10129 = vunpack.c.l.b16 %v9601
    %v10130 = vunpack.c.h.b16 %v9601
    %v10131 = vunpack.c.l.b16 %v9602
    %v10132 = vunpack.c.h.b16 %v9602
    %v10133 = vunpack.c.l.b16 %v9603
    %v10134 = vunpack.c.h.b16 %v9603
    %v10135 = vunpack.c.l.b16 %v9604
    %v10136 = vunpack.c.h.b16 %v9604
    %v10137 = vunpack.c.l.b16 %v9605
    %v10138 = vunpack.c.h.b16 %v9605
    %v10139 = vunpack.c.l.b16 %v9606
    %v10140 = vunpack.c.h.b16 %v9606
    %v10141 = vunpack.c.l.b16 %v9607
    %v10142 = vunpack.c.h.b16 %v9607
    %v10143 = vunpack.c.l.b16 %v9608
    %v10144 = vunpack.c.h.b16 %v9608
    %v10145 = vunpack.c.l.b16 %v9609
    %v10146 = vunpack.c.h.b16 %v9609
    %v10147 = vunpack.c.l.b16 %v9610
    %v10148 = vunpack.c.h.b16 %v9610
    %v10149 = vunpack.c.l.b16 %v9611
    %v10150 = vunpack.c.h.b16 %v9611
    %v10151 = vunpack.c.l.b16 %v9612
    %v10152 = vunpack.c.h.b16 %v9612
    %v10153 = vunpack.c.l.b16 %v9613
    %v10154 = vunpack.c.h.b16 %v9613
    %v10155 = vunpack.c.l.b16 %v9614
    %v10156 = vunpack.c.h.b16 %v9614
    %v10157 = vunpack.c.l.b16 %v9615
    %v10158 = vunpack.c.h.b16 %v9615
    %v10159 = vunpack.c.l.b16 %v9616
    %v10160 = vunpack.c.h.b16 %v9616
    %v10161 = vunpack.c.l.b16 %v9617
    %v10162 = vunpack.c.h.b16 %v9617
    %v10163 = vunpack.c.l.b16 %v9618
    %v10164 = vunpack.c.h.b16 %v9618
    %v10165 = vunpack.c.l.b16 %v9619
    %v10166 = vunpack.c.h.b16 %v9619
    %v10167 = vunpack.c.l.b16 %v9620
    %v10168 = vunpack.c.h.b16 %v9620
    %v10169 = vunpack.c.l.b16 %v9621
    %v10170 = vunpack.c.h.b16 %v9621
    %v10171 = vunpack.c.l.b16 %v9622
    %v10172 = vunpack.c.h.b16 %v9622
    %v10173 = vunpack.c.l.b16 %v9623
    %v10174 = vunpack.c.h.b16 %v9623
    %v10175 = vunpack.c.l.b16 %v9624
    %v10176 = vunpack.c.h.b16 %v9624
    %v10177 = vunpack.c.l.b16 %v9625
    %v10178 = vunpack.c.h.b16 %v9625
    %v10179 = vunpack.c.l.b16 %v9626
    %v10180 = vunpack.c.h.b16 %v9626
    %v10181 = vunpack.c.l.b16 %v9627
    %v10182 = vunpack.c.h.b16 %v9627
    %v10183 = vunpack.c.l.b16 %v9628
    %v10184 = vunpack.c.h.b16 %v9628
    %v10185 = vunpack.c.l.b16 %v9629
    %v10186 = vunpack.c.h.b16 %v9629
    %v10187 = vunpack.c.l.b16 %v9630
    %v10188 = vunpack.c.h.b16 %v9630
    %v10189 = vunpack.c.l.b16 %v9631
    %v10190 = vunpack.c.h.b16 %v9631
    %v10191 = vunpack.c.l.b16 %v9632
    %v10192 = vunpack.c.h.b16 %v9632
    %v10193 = vunpack.c.l.b16 %v9633
    %v10194 = vunpack.c.h.b16 %v9633
    %v10195 = vunpack.c.l.b16 %v9634
    %v10196 = vunpack.c.h.b16 %v9634
    %v10197 = vunpack.c.l.b16 %v9635
    %v10198 = vunpack.c.h.b16 %v9635
    %v10199 = vunpack.c.l.b16 %v9636
    %v10200 = vunpack.c.h.b16 %v9636
    %v10201 = vunpack.c.l.b16 %v9637
    %v10202 = vunpack.c.h.b16 %v9637
    %v10203 = vunpack.c.l.b16 %v9638
    %v10204 = vunpack.c.h.b16 %v9638
    %v10205 = vunpack.c.l.b16 %v9639
    %v10206 = vunpack.c.h.b16 %v9639
    %v10207 = vunpack.c.l.b16 %v9640
    %v10208 = vunpack.c.h.b16 %v9640
    %v10209 = vunpack.c.l.b16 %v9641
    %v10210 = vunpack.c.h.b16 %v9641
    %v10211 = vunpack.c.l.b16 %v9642
    %v10212 = vunpack.c.h.b16 %v9642
    %v10213 = vunpack.c.l.b16 %v9643
    %v10214 = vunpack.c.h.b16 %v9643
    %v10215 = vunpack.c.l.b16 %v9644
    %v10216 = vunpack.c.h.b16 %v9644
    %v10217 = vunpack.c.l.b16 %v9645
    %v10218 = vunpack.c.h.b16 %v9645
    %v10219 = vunpack.c.l.b16 %v9646
    %v10220 = vunpack.c.h.b16 %v9646
    %v10221 = vunpack.c.l.b16 %v9647
    %v10222 = vunpack.c.h.b16 %v9647
    %v10223 = vunpack.c.l.b16 %v9648
    %v10224 = vunpack.c.h.b16 %v9648
    %v10225 = vunpack.c.l.b16 %v9649
    %v10226 = vunpack.c.h.b16 %v9649
    %v10227 = vunpack.c.l.b16 %v9650
    %v10228 = vunpack.c.h.b16 %v9650
    %v10229 = vunpack.c.l.b16 %v9651
    %v10230 = vunpack.c.h.b16 %v9651
    %v10231 = vunpack.c.l.b16 %v9652
    %v10232 = vunpack.c.h.b16 %v9652
    %v10233 = vunpack.c.l.b16 %v9653
    %v10234 = vunpack.c.h.b16 %v9653
    %v10235 = vunpack.c.l.b16 %v9654
    %v10236 = vunpack.c.h.b16 %v9654
    %v10237 = vunpack.c.l.b16 %v9655
    %v10238 = vunpack.c.h.b16 %v9655
    %v10239 = vunpack.c.l.b16 %v9656
    %v10240 = vunpack.c.h.b16 %v9656
    %v10241 = vunpack.c.l.b16 %v9657
    %v10242 = vunpack.c.h.b16 %v9657
    %v10243 = vunpack.c.l.b16 %v9658
    %v10244 = vunpack.c.h.b16 %v9658
    %v10245 = vunpack.c.l.b16 %v9659
    %v10246 = vunpack.c.h.b16 %v9659
    %v10247 = vunpack.c.l.b16 %v9660
    %v10248 = vunpack.c.h.b16 %v9660
    %v10249 = vunpack.c.l.b16 %v9661
    %v10250 = vunpack.c.h.b16 %v9661
    %v10251 = vunpack.c.l.b16 %v9662
    %v10252 = vunpack.c.h.b16 %v9662
    %v10253 = vunpack.c.l.b16 %v9663
    %v10254 = vunpack.c.h.b16 %v9663
    %v10255 = vunpack.c.l.b16 %v9664
    %v10256 = vunpack.c.h.b16 %v9664
    %v10257 = vunpack.c.l.b16 %v9665
    %v10258 = vunpack.c.h.b16 %v9665
    %v10259 = vunpack.c.l.b16 %v9666
    %v10260 = vunpack.c.h.b16 %v9666
    %v10261 = vunpack.c.l.b16 %v9667
    %v10262 = vunpack.c.h.b16 %v9667
    %v10263 = vunpack.c.l.b16 %v9668
    %v10264 = vunpack.c.h.b16 %v9668
    %v10265 = vunpack.c.l.b16 %v9669
    %v10266 = vunpack.c.h.b16 %v9669
    %v10267 = vunpack.c.l.b16 %v9670
    %v10268 = vunpack.c.h.b16 %v9670
    %v10269 = vunpack.c.l.b16 %v9671
    %v10270 = vunpack.c.h.b16 %v9671
    %v10271 = vunpack.c.l.b16 %v9672
    %v10272 = vunpack.c.h.b16 %v9672
    %v10273 = vunpack.c.l.b16 %v9673
    %v10274 = vunpack.c.h.b16 %v9673
    %v10275 = vunpack.c.l.b16 %v9674
    %v10276 = vunpack.c.h.b16 %v9674
    %v10277 = vunpack.c.l.b16 %v9675
    %v10278 = vunpack.c.h.b16 %v9675
    %v10279 = vunpack.c.l.b16 %v9676
    %v10280 = vunpack.c.h.b16 %v9676
    %v10281 = vunpack.c.l.b16 %v9677
    %v10282 = vunpack.c.h.b16 %v9677
    %v10283 = vunpack.c.l.b16 %v9678
    %v10284 = vunpack.c.h.b16 %v9678
    %v10285 = vunpack.c.l.b16 %v9679
    %v10286 = vunpack.c.h.b16 %v9679
    %v10287 = vunpack.c.l.b16 %v9680
    %v10288 = vunpack.c.h.b16 %v9680
    %v10289 = vunpack.c.l.b16 %v9681
    %v10290 = vunpack.c.h.b16 %v9681
    %v10291 = vunpack.c.l.b16 %v9682
    %v10292 = vunpack.c.h.b16 %v9682
    %v10293 = vunpack.c.l.b16 %v9683
    %v10294 = vunpack.c.h.b16 %v9683
    %v10295 = vunpack.c.l.b16 %v9684
    %v10296 = vunpack.c.h.b16 %v9684
    %v10297 = vunpack.c.l.b16 %v9685
    %v10298 = vunpack.c.h.b16 %v9685
    %v10299 = vunpack.c.l.b16 %v9686
    %v10300 = vunpack.c.h.b16 %v9686
    %v10301 = vunpack.c.l.b16 %v9687
    %v10302 = vunpack.c.h.b16 %v9687
    %v10303 = vunpack.c.l.b16 %v9688
    %v10304 = vunpack.c.h.b16 %v9688
    %v10305 = vunpack.c.l.b16 %v9689
    %v10306 = vunpack.c.h.b16 %v9689
    %v10307 = vunpack.c.l.b16 %v9690
    %v10308 = vunpack.c.h.b16 %v9690
    %v10309 = vunpack.c.l.b16 %v9691
    %v10310 = vunpack.c.h.b16 %v9691
    %v10311 = vpack.c.b16 %v9931, %v9927
    %v10312 = vpack.c.b16 %v9932, %v9928
    %v10313 = vpack.c.b16 %v9933, %v9929
    %v10314 = vpack.c.b16 %v9934, %v9930
    %v10315 = vpack.c.b16 %v9939, %v9935
    %v10316 = vpack.c.b16 %v9940, %v9936
    %v10317 = vpack.c.b16 %v9941, %v9937
    %v10318 = vpack.c.b16 %v9942, %v9938
    %v10319 = vpack.c.b16 %v9947, %v9943
    %v10320 = vpack.c.b16 %v9948, %v9944
    %v10321 = vpack.c.b16 %v9949, %v9945
    %v10322 = vpack.c.b16 %v9950, %v9946
    %v10323 = vpack.c.b16 %v9955, %v9951
    %v10324 = vpack.c.b16 %v9956, %v9952
    %v10325 = vpack.c.b16 %v9957, %v9953
    %v10326 = vpack.c.b16 %v9958, %v9954
    %v10327 = vpack.c.b16 %v9963, %v9959
    %v10328 = vpack.c.b16 %v9964, %v9960
    %v10329 = vpack.c.b16 %v9965, %v9961
    %v10330 = vpack.c.b16 %v9966, %v9962
    %v10331 = vpack.c.b16 %v9971, %v9967
    %v10332 = vpack.c.b16 %v9972, %v9968
    %v10333 = vpack.c.b16 %v9973, %v9969
    %v10334 = vpack.c.b16 %v9974, %v9970
    %v10335 = vpack.c.b16 %v9979, %v9975
    %v10336 = vpack.c.b16 %v9980, %v9976
    %v10337 = vpack.c.b16 %v9981, %v9977
    %v10338 = vpack.c.b16 %v9982, %v9978
    %v10339 = vpack.c.b16 %v9987, %v9983
    %v10340 = vpack.c.b16 %v9988, %v9984
    %v10341 = vpack.c.b16 %v9989, %v9985
    %v10342 = vpack.c.b16 %v9990, %v9986
    %v10343 = vpack.c.b16 %v9995, %v9991
    %v10344 = vpack.c.b16 %v9996, %v9992
    %v10345 = vpack.c.b16 %v9997, %v9993
    %v10346 = vpack.c.b16 %v9998, %v9994
    %v10347 = vpack.c.b16 %v10003, %v9999
    %v10348 = vpack.c.b16 %v10004, %v10000
    %v10349 = vpack.c.b16 %v10005, %v10001
    %v10350 = vpack.c.b16 %v10006, %v10002
    %v10351 = vpack.c.b16 %v10011, %v10007
    %v10352 = vpack.c.b16 %v10012, %v10008
    %v10353 = vpack.c.b16 %v10013, %v10009
    %v10354 = vpack.c.b16 %v10014, %v10010
    %v10355 = vpack.c.b16 %v10019, %v10015
    %v10356 = vpack.c.b16 %v10020, %v10016
    %v10357 = vpack.c.b16 %v10021, %v10017
    %v10358 = vpack.c.b16 %v10022, %v10018
    %v10359 = vpack.c.b16 %v10027, %v10023
    %v10360 = vpack.c.b16 %v10028, %v10024
    %v10361 = vpack.c.b16 %v10029, %v10025
    %v10362 = vpack.c.b16 %v10030, %v10026
    %v10363 = vpack.c.b16 %v10035, %v10031
    %v10364 = vpack.c.b16 %v10036, %v10032
    %v10365 = vpack.c.b16 %v10037, %v10033
    %v10366 = vpack.c.b16 %v10038, %v10034
    %v10367 = vpack.c.b16 %v10043, %v10039
    %v10368 = vpack.c.b16 %v10044, %v10040
    %v10369 = vpack.c.b16 %v10045, %v10041
    %v10370 = vpack.c.b16 %v10046, %v10042
    %v10371 = vpack.c.b16 %v10051, %v10047
    %v10372 = vpack.c.b16 %v10052, %v10048
    %v10373 = vpack.c.b16 %v10053, %v10049
    %v10374 = vpack.c.b16 %v10054, %v10050
    %v10375 = vpack.c.b16 %v10059, %v10055
    %v10376 = vpack.c.b16 %v10060, %v10056
    %v10377 = vpack.c.b16 %v10061, %v10057
    %v10378 = vpack.c.b16 %v10062, %v10058
    %v10379 = vpack.c.b16 %v10067, %v10063
    %v10380 = vpack.c.b16 %v10068, %v10064
    %v10381 = vpack.c.b16 %v10069, %v10065
    %v10382 = vpack.c.b16 %v10070, %v10066
    %v10383 = vpack.c.b16 %v10075, %v10071
    %v10384 = vpack.c.b16 %v10076, %v10072
    %v10385 = vpack.c.b16 %v10077, %v10073
    %v10386 = vpack.c.b16 %v10078, %v10074
    %v10387 = vpack.c.b16 %v10083, %v10079
    %v10388 = vpack.c.b16 %v10084, %v10080
    %v10389 = vpack.c.b16 %v10085, %v10081
    %v10390 = vpack.c.b16 %v10086, %v10082
    %v10391 = vpack.c.b16 %v10091, %v10087
    %v10392 = vpack.c.b16 %v10092, %v10088
    %v10393 = vpack.c.b16 %v10093, %v10089
    %v10394 = vpack.c.b16 %v10094, %v10090
    %v10395 = vpack.c.b16 %v10099, %v10095
    %v10396 = vpack.c.b16 %v10100, %v10096
    %v10397 = vpack.c.b16 %v10101, %v10097
    %v10398 = vpack.c.b16 %v10102, %v10098
    %v10399 = vpack.c.b16 %v10107, %v10103
    %v10400 = vpack.c.b16 %v10108, %v10104
    %v10401 = vpack.c.b16 %v10109, %v10105
    %v10402 = vpack.c.b16 %v10110, %v10106
    %v10403 = vpack.c.b16 %v10115, %v10111
    %v10404 = vpack.c.b16 %v10116, %v10112
    %v10405 = vpack.c.b16 %v10117, %v10113
    %v10406 = vpack.c.b16 %v10118, %v10114
    %v10407 = vpack.c.b16 %v10123, %v10119
    %v10408 = vpack.c.b16 %v10124, %v10120
    %v10409 = vpack.c.b16 %v10125, %v10121
    %v10410 = vpack.c.b16 %v10126, %v10122
    %v10411 = vpack.c.b16 %v10131, %v10127
    %v10412 = vpack.c.b16 %v10132, %v10128
    %v10413 = vpack.c.b16 %v10133, %v10129
    %v10414 = vpack.c.b16 %v10134, %v10130
    %v10415 = vpack.c.b16 %v10139, %v10135
    %v10416 = vpack.c.b16 %v10140, %v10136
    %v10417 = vpack.c.b16 %v10141, %v10137
    %v10418 = vpack.c.b16 %v10142, %v10138
    %v10419 = vpack.c.b16 %v10147, %v10143
    %v10420 = vpack.c.b16 %v10148, %v10144
    %v10421 = vpack.c.b16 %v10149, %v10145
    %v10422 = vpack.c.b16 %v10150, %v10146
    %v10423 = vpack.c.b16 %v10155, %v10151
    %v10424 = vpack.c.b16 %v10156, %v10152
    %v10425 = vpack.c.b16 %v10157, %v10153
    %v10426 = vpack.c.b16 %v10158, %v10154
    %v10427 = vpack.c.b16 %v10163, %v10159
    %v10428 = vpack.c.b16 %v10164, %v10160
    %v10429 = vpack.c.b16 %v10165, %v10161
    %v10430 = vpack.c.b16 %v10166, %v10162
    %v10431 = vpack.c.b16 %v10171, %v10167
    %v10432 = vpack.c.b16 %v10172, %v10168
    %v10433 = vpack.c.b16 %v10173, %v10169
    %v10434 = vpack.c.b16 %v10174, %v10170
    %v10435 = vpack.c.b16 %v10179, %v10175
    %v10436 = vpack.c.b16 %v10180, %v10176
    %v10437 = vpack.c.b16 %v10181, %v10177
    %v10438 = vpack.c.b16 %v10182, %v10178
    %v10439 = vpack.c.b16 %v10187, %v10183
    %v10440 = vpack.c.b16 %v10188, %v10184
    %v10441 = vpack.c.b16 %v10189, %v10185
    %v10442 = vpack.c.b16 %v10190, %v10186
    %v10443 = vpack.c.b16 %v10195, %v10191
    %v10444 = vpack.c.b16 %v10196, %v10192
    %v10445 = vpack.c.b16 %v10197, %v10193
    %v10446 = vpack.c.b16 %v10198, %v10194
    %v10447 = vpack.c.b16 %v10203, %v10199
    %v10448 = vpack.c.b16 %v10204, %v10200
    %v10449 = vpack.c.b16 %v10205, %v10201
    %v10450 = vpack.c.b16 %v10206, %v10202
    %v10451 = vpack.c.b16 %v10211, %v10207
    %v10452 = vpack.c.b16 %v10212, %v10208
    %v10453 = vpack.c.b16 %v10213, %v10209
    %v10454 = vpack.c.b16 %v10214, %v10210
    %v10455 = vpack.c.b16 %v10219, %v10215
    %v10456 = vpack.c.b16 %v10220, %v10216
    %v10457 = vpack.c.b16 %v10221, %v10217
    %v10458 = vpack.c.b16 %v10222, %v10218
    %v10459 = vpack.c.b16 %v10227, %v10223
    %v10460 = vpack.c.b16 %v10228, %v10224
    %v10461 = vpack.c.b16 %v10229, %v10225
    %v10462 = vpack.c.b16 %v10230, %v10226
    %v10463 = vpack.c.b16 %v10235, %v10231
    %v10464 = vpack.c.b16 %v10236, %v10232
    %v10465 = vpack.c.b16 %v10237, %v10233
    %v10466 = vpack.c.b16 %v10238, %v10234
    %v10467 = vpack.c.b16 %v10243, %v10239
    %v10468 = vpack.c.b16 %v10244, %v10240
    %v10469 = vpack.c.b16 %v10245, %v10241
    %v10470 = vpack.c.b16 %v10246, %v10242
    %v10471 = vpack.c.b16 %v10251, %v10247
    %v10472 = vpack.c.b16 %v10252, %v10248
    %v10473 = vpack.c.b16 %v10253, %v10249
    %v10474 = vpack.c.b16 %v10254, %v10250
    %v10475 = vpack.c.b16 %v10259, %v10255
    %v10476 = vpack.c.b16 %v10260, %v10256
    %v10477 = vpack.c.b16 %v10261, %v10257
    %v10478 = vpack.c.b16 %v10262, %v10258
    %v10479 = vpack.c.b16 %v10267, %v10263
    %v10480 = vpack.c.b16 %v10268, %v10264
    %v10481 = vpack.c.b16 %v10269, %v10265
    %v10482 = vpack.c.b16 %v10270, %v10266
    %v10483 = vpack.c.b16 %v10275, %v10271
    %v10484 = vpack.c.b16 %v10276, %v10272
    %v10485 = vpack.c.b16 %v10277, %v10273
    %v10486 = vpack.c.b16 %v10278, %v10274
    %v10487 = vpack.c.b16 %v10283, %v10279
    %v10488 = vpack.c.b16 %v10284, %v10280
    %v10489 = vpack.c.b16 %v10285, %v10281
    %v10490 = vpack.c.b16 %v10286, %v10282
    %v10491 = vpack.c.b16 %v10291, %v10287
    %v10492 = vpack.c.b16 %v10292, %v10288
    %v10493 = vpack.c.b16 %v10293, %v10289
    %v10494 = vpack.c.b16 %v10294, %v10290
    %v10495 = vpack.c.b16 %v10299, %v10295
    %v10496 = vpack.c.b16 %v10300, %v10296
    %v10497 = vpack.c.b16 %v10301, %v10297
    %v10498 = vpack.c.b16 %v10302, %v10298
    %v10499 = vpack.c.b16 %v10307, %v10303
    %v10500 = vpack.c.b16 %v10308, %v10304
    %v10501 = vpack.c.b16 %v10309, %v10305
    %v10502 = vpack.c.b16 %v10310, %v10306
    %10695 = vmatprep.subr.bf16.mxu0 %v10340
    %10696 = vmatpush1.bf16.msra.mxu0 %v10339
    %10697 = vmatprep.subr.bf16.mxu0 %v10336
    %10698 = vmatpush1.bf16.msra.mxu0 %v10335
    %10699 = vmatprep.subr.bf16.mxu0 %v10332
    %10700 = vmatpush1.bf16.msra.mxu0 %v10331
    %10701 = vmatprep.subr.bf16.mxu0 %v10328
    %10702 = vmatpush1.bf16.msra.mxu0 %v10327
    %10703 = vmatprep.subr.bf16.mxu0 %v10324
    %10704 = vmatpush1.bf16.msra.mxu0 %v10323
    %10705 = vmatprep.subr.bf16.mxu0 %v10320
    %10706 = vmatpush1.bf16.msra.mxu0 %v10319
    %10707 = vmatprep.subr.bf16.mxu0 %v10316
    %10708 = vmatpush1.bf16.msra.mxu0 %v10315
    %10709 = vmatprep.subr.bf16.mxu0 %v10312
    %10710 = vmatpush1.bf16.msra.mxu0 %v10311
    %10711 = vmatprep.subr.bf16.mxu0 %v10372
    %10712 = vmatpush2.bf16.msra.mxu0 %v10371
    %10713 = vmatprep.subr.bf16.mxu0 %v10368
    %10714 = vmatpush2.bf16.msra.mxu0 %v10367
    %10715 = vmatprep.subr.bf16.mxu0 %v10364
    %10716 = vmatpush2.bf16.msra.mxu0 %v10363
    %10717 = vmatprep.subr.bf16.mxu0 %v10360
    %10718 = vmatpush2.bf16.msra.mxu0 %v10359
    %10719 = vmatprep.subr.bf16.mxu0 %v10356
    %10720 = vmatpush2.bf16.msra.mxu0 %v10355
    %10721 = vmatprep.subr.bf16.mxu0 %v10352
    %10722 = vmatpush2.bf16.msra.mxu0 %v10351
    %10723 = vmatprep.subr.bf16.mxu0 %v10348
    %10724 = vmatpush2.bf16.msra.mxu0 %v10347
    %10725 = vmatprep.subr.bf16.mxu0 %v10344
    %10726 = vmatpush2.bf16.msra.mxu0 %v10343
    %10727 = vmatprep.mubr.bf16.mxu0 %v9724
    %10728 = vmatmul.mubr.bf16.gmra.mxu0 %v9723
    %v10729 = vpop.f32.mrf.mxu0
    %v10730 = vadd.f32 %v9697, %v10729
    %v10731 = vpop.f32.mrf.mxu0
    %v10732 = vadd.f32 %v9701, %v10731
    %v10733 = vpop.f32.mrf.mxu0
    %v10734 = vpop.f32.mrf.mxu0
    %10735 = vdwg.mxu0
    %10736 = vmatprep.subr.bf16.mxu0 %v10404
    %10737 = vmatpush1.bf16.msra.mxu0 %v10403
    %10738 = vmatprep.subr.bf16.mxu0 %v10400
    %10739 = vmatpush1.bf16.msra.mxu0 %v10399
    %10740 = vmatprep.subr.bf16.mxu0 %v10396
    %10741 = vmatpush1.bf16.msra.mxu0 %v10395
    %10742 = vmatprep.subr.bf16.mxu0 %v10392
    %10743 = vmatpush1.bf16.msra.mxu0 %v10391
    %10744 = vmatprep.subr.bf16.mxu0 %v10388
    %10745 = vmatpush1.bf16.msra.mxu0 %v10387
    %10746 = vmatprep.subr.bf16.mxu0 %v10384
    %10747 = vmatpush1.bf16.msra.mxu0 %v10383
    %10748 = vmatprep.subr.bf16.mxu0 %v10380
    %10749 = vmatpush1.bf16.msra.mxu0 %v10379
    %10750 = vmatprep.subr.bf16.mxu0 %v10376
    %10751 = vmatpush1.bf16.msra.mxu0 %v10375
    %10752 = vmatprep.subr.bf16.mxu0 %v10436
    %10753 = vmatpush2.bf16.msra.mxu0 %v10435
    %10754 = vmatprep.subr.bf16.mxu0 %v10432
    %10755 = vmatpush2.bf16.msra.mxu0 %v10431
    %10756 = vmatprep.subr.bf16.mxu0 %v10428
    %10757 = vmatpush2.bf16.msra.mxu0 %v10427
    %10758 = vmatprep.subr.bf16.mxu0 %v10424
    %10759 = vmatpush2.bf16.msra.mxu0 %v10423
    %10760 = vmatprep.subr.bf16.mxu0 %v10420
    %10761 = vmatpush2.bf16.msra.mxu0 %v10419
    %10762 = vmatprep.subr.bf16.mxu0 %v10416
    %10763 = vmatpush2.bf16.msra.mxu0 %v10415
    %10764 = vmatprep.subr.bf16.mxu0 %v10412
    %10765 = vmatpush2.bf16.msra.mxu0 %v10411
    %10766 = vmatprep.subr.bf16.mxu0 %v10408
    %10767 = vmatpush2.bf16.msra.mxu0 %v10407
    %10768 = vmatprep.mubr.bf16.mxu0 %v9726
    %10769 = vmatmul.mubr.bf16.gmra.mxu0 %v9725
    %v10770 = vpop.f32.mrf.mxu0
    %v10771 = vadd.f32 %v10730, %v10770
    %v10772 = vpop.f32.mrf.mxu0
    %v10773 = vadd.f32 %v10732, %v10772
    %v10774 = vpop.f32.mrf.mxu0
    %v10775 = vpop.f32.mrf.mxu0
    %10776 = vdwg.mxu0
    %10777 = vmatprep.subr.bf16.mxu0 %v10468
    %10778 = vmatpush1.bf16.msra.mxu0 %v10467
    %10779 = vmatprep.subr.bf16.mxu0 %v10464
    %10780 = vmatpush1.bf16.msra.mxu0 %v10463
    %10781 = vmatprep.subr.bf16.mxu0 %v10460
    %10782 = vmatpush1.bf16.msra.mxu0 %v10459
    %10783 = vmatprep.subr.bf16.mxu0 %v10456
    %10784 = vmatpush1.bf16.msra.mxu0 %v10455
    %10785 = vmatprep.subr.bf16.mxu0 %v10452
    %10786 = vmatpush1.bf16.msra.mxu0 %v10451
    %10787 = vmatprep.subr.bf16.mxu0 %v10448
    %10788 = vmatpush1.bf16.msra.mxu0 %v10447
    %10789 = vmatprep.subr.bf16.mxu0 %v10444
    %10790 = vmatpush1.bf16.msra.mxu0 %v10443
    %10791 = vmatprep.subr.bf16.mxu0 %v10440
    %10792 = vmatpush1.bf16.msra.mxu0 %v10439
    %10793 = vmatprep.subr.bf16.mxu0 %v10500
    %10794 = vmatpush2.bf16.msra.mxu0 %v10499
    %10795 = vmatprep.subr.bf16.mxu0 %v10496
    %10796 = vmatpush2.bf16.msra.mxu0 %v10495
    %10797 = vmatprep.subr.bf16.mxu0 %v10492
    %10798 = vmatpush2.bf16.msra.mxu0 %v10491
    %10799 = vmatprep.subr.bf16.mxu0 %v10488
    %10800 = vmatpush2.bf16.msra.mxu0 %v10487
    %10801 = vmatprep.subr.bf16.mxu0 %v10484
    %10802 = vmatpush2.bf16.msra.mxu0 %v10483
    %10803 = vmatprep.subr.bf16.mxu0 %v10480
    %10804 = vmatpush2.bf16.msra.mxu0 %v10479
    %10805 = vmatprep.subr.bf16.mxu0 %v10476
    %10806 = vmatpush2.bf16.msra.mxu0 %v10475
    %10807 = vmatprep.subr.bf16.mxu0 %v10472
    %10808 = vmatpush2.bf16.msra.mxu0 %v10471
    %10809 = vmatprep.mubr.bf16.mxu0 %v9728
    %10810 = vmatmul.mubr.bf16.gmra.mxu0 %v9727
    %v10811 = vpop.f32.mrf.mxu0
    %v10812 = vadd.f32 %v10771, %v10811
    %v10813 = vpop.f32.mrf.mxu0
    %v10814 = vadd.f32 %v10773, %v10813
    %v10815 = vpop.f32.mrf.mxu0
    %v10816 = vpop.f32.mrf.mxu0
    %10817 = vdwg.mxu0
    %10818 = vmatprep.subr.bf16.mxu0 %v10342
    %10819 = vmatpush1.bf16.msra.mxu0 %v10341
    %10820 = vmatprep.subr.bf16.mxu0 %v10338
    %10821 = vmatpush1.bf16.msra.mxu0 %v10337
    %10822 = vmatprep.subr.bf16.mxu0 %v10334
    %10823 = vmatpush1.bf16.msra.mxu0 %v10333
    %10824 = vmatprep.subr.bf16.mxu0 %v10330
    %10825 = vmatpush1.bf16.msra.mxu0 %v10329
    %10826 = vmatprep.subr.bf16.mxu0 %v10326
    %10827 = vmatpush1.bf16.msra.mxu0 %v10325
    %10828 = vmatprep.subr.bf16.mxu0 %v10322
    %10829 = vmatpush1.bf16.msra.mxu0 %v10321
    %10830 = vmatprep.subr.bf16.mxu0 %v10318
    %10831 = vmatpush1.bf16.msra.mxu0 %v10317
    %10832 = vmatprep.subr.bf16.mxu0 %v10314
    %10833 = vmatpush1.bf16.msra.mxu0 %v10313
    %10834 = vmatprep.subr.bf16.mxu0 %v10374
    %10835 = vmatpush2.bf16.msra.mxu0 %v10373
    %10836 = vmatprep.subr.bf16.mxu0 %v10370
    %10837 = vmatpush2.bf16.msra.mxu0 %v10369
    %10838 = vmatprep.subr.bf16.mxu0 %v10366
    %10839 = vmatpush2.bf16.msra.mxu0 %v10365
    %10840 = vmatprep.subr.bf16.mxu0 %v10362
    %10841 = vmatpush2.bf16.msra.mxu0 %v10361
    %10842 = vmatprep.subr.bf16.mxu0 %v10358
    %10843 = vmatpush2.bf16.msra.mxu0 %v10357
    %10844 = vmatprep.subr.bf16.mxu0 %v10354
    %10845 = vmatpush2.bf16.msra.mxu0 %v10353
    %10846 = vmatprep.subr.bf16.mxu0 %v10350
    %10847 = vmatpush2.bf16.msra.mxu0 %v10349
    %10848 = vmatprep.subr.bf16.mxu0 %v10346
    %10849 = vmatpush2.bf16.msra.mxu0 %v10345
    %10850 = vmatprep.mubr.bf16.mxu0 %v9724
    %10851 = vmatmul.mubr.bf16.gmra.mxu0 %v9723
    %v10852 = vpop.f32.mrf.mxu0
    %v10853 = vadd.f32 %v9705, %v10852
    %v10854 = vpop.f32.mrf.mxu0
    %v10855 = vadd.f32 %v9709, %v10854
    %v10856 = vpop.f32.mrf.mxu0
    %v10857 = vpop.f32.mrf.mxu0
    %10858 = vdwg.mxu0
    %10859 = vmatprep.subr.bf16.mxu0 %v10406
    %10860 = vmatpush1.bf16.msra.mxu0 %v10405
    %10861 = vmatprep.subr.bf16.mxu0 %v10402
    %10862 = vmatpush1.bf16.msra.mxu0 %v10401
    %10863 = vmatprep.subr.bf16.mxu0 %v10398
    %10864 = vmatpush1.bf16.msra.mxu0 %v10397
    %10865 = vmatprep.subr.bf16.mxu0 %v10394
    %10866 = vmatpush1.bf16.msra.mxu0 %v10393
    %10867 = vmatprep.subr.bf16.mxu0 %v10390
    %10868 = vmatpush1.bf16.msra.mxu0 %v10389
    %10869 = vmatprep.subr.bf16.mxu0 %v10386
    %10870 = vmatpush1.bf16.msra.mxu0 %v10385
    %10871 = vmatprep.subr.bf16.mxu0 %v10382
    %10872 = vmatpush1.bf16.msra.mxu0 %v10381
    %10873 = vmatprep.subr.bf16.mxu0 %v10378
    %10874 = vmatpush1.bf16.msra.mxu0 %v10377
    %10875 = vmatprep.subr.bf16.mxu0 %v10438
    %10876 = vmatpush2.bf16.msra.mxu0 %v10437
    %10877 = vmatprep.subr.bf16.mxu0 %v10434
    %10878 = vmatpush2.bf16.msra.mxu0 %v10433
    %10879 = vmatprep.subr.bf16.mxu0 %v10430
    %10880 = vmatpush2.bf16.msra.mxu0 %v10429
    %10881 = vmatprep.subr.bf16.mxu0 %v10426
    %10882 = vmatpush2.bf16.msra.mxu0 %v10425
    %10883 = vmatprep.subr.bf16.mxu0 %v10422
    %10884 = vmatpush2.bf16.msra.mxu0 %v10421
    %10885 = vmatprep.subr.bf16.mxu0 %v10418
    %10886 = vmatpush2.bf16.msra.mxu0 %v10417
    %10887 = vmatprep.subr.bf16.mxu0 %v10414
    %10888 = vmatpush2.bf16.msra.mxu0 %v10413
    %10889 = vmatprep.subr.bf16.mxu0 %v10410
    %10890 = vmatpush2.bf16.msra.mxu0 %v10409
    %10891 = vmatprep.mubr.bf16.mxu0 %v9726
    %10892 = vmatmul.mubr.bf16.gmra.mxu0 %v9725
    %v10893 = vpop.f32.mrf.mxu0
    %v10894 = vadd.f32 %v10853, %v10893
    %v10895 = vpop.f32.mrf.mxu0
    %v10896 = vadd.f32 %v10855, %v10895
    %v10897 = vpop.f32.mrf.mxu0
    %v10898 = vpop.f32.mrf.mxu0
    %10899 = vdwg.mxu0
    %10900 = vmatprep.subr.bf16.mxu0 %v10470
    %10901 = vmatpush1.bf16.msra.mxu0 %v10469
    %10902 = vmatprep.subr.bf16.mxu0 %v10466
    %10903 = vmatpush1.bf16.msra.mxu0 %v10465
    %10904 = vmatprep.subr.bf16.mxu0 %v10462
    %10905 = vmatpush1.bf16.msra.mxu0 %v10461
    %10906 = vmatprep.subr.bf16.mxu0 %v10458
    %10907 = vmatpush1.bf16.msra.mxu0 %v10457
    %10908 = vmatprep.subr.bf16.mxu0 %v10454
    %10909 = vmatpush1.bf16.msra.mxu0 %v10453
    %10910 = vmatprep.subr.bf16.mxu0 %v10450
    %10911 = vmatpush1.bf16.msra.mxu0 %v10449
    %10912 = vmatprep.subr.bf16.mxu0 %v10446
    %10913 = vmatpush1.bf16.msra.mxu0 %v10445
    %10914 = vmatprep.subr.bf16.mxu0 %v10442
    %10915 = vmatpush1.bf16.msra.mxu0 %v10441
    %10916 = vmatprep.subr.bf16.mxu0 %v10502
    %10917 = vmatpush2.bf16.msra.mxu0 %v10501
    %10918 = vmatprep.subr.bf16.mxu0 %v10498
    %10919 = vmatpush2.bf16.msra.mxu0 %v10497
    %10920 = vmatprep.subr.bf16.mxu0 %v10494
    %10921 = vmatpush2.bf16.msra.mxu0 %v10493
    %10922 = vmatprep.subr.bf16.mxu0 %v10490
    %10923 = vmatpush2.bf16.msra.mxu0 %v10489
    %10924 = vmatprep.subr.bf16.mxu0 %v10486
    %10925 = vmatpush2.bf16.msra.mxu0 %v10485
    %10926 = vmatprep.subr.bf16.mxu0 %v10482
    %10927 = vmatpush2.bf16.msra.mxu0 %v10481
    %10928 = vmatprep.subr.bf16.mxu0 %v10478
    %10929 = vmatpush2.bf16.msra.mxu0 %v10477
    %10930 = vmatprep.subr.bf16.mxu0 %v10474
    %10931 = vmatpush2.bf16.msra.mxu0 %v10473
    %10932 = vmatprep.mubr.bf16.mxu0 %v9728
    %10933 = vmatmul.mubr.bf16.gmra.mxu0 %v9727
    %v10934 = vpop.f32.mrf.mxu0
    %v10935 = vadd.f32 %v10894, %v10934
    %v10936 = vpop.f32.mrf.mxu0
    %v10937 = vadd.f32 %v10896, %v10936
    %v10938 = vpop.f32.mrf.mxu0
    %v10939 = vpop.f32.mrf.mxu0
    %10940 = vdwg.mxu0
    %v10941 = vmax.f32 %v10812, 0.0
    %v10942 = vmax.f32 %v10814, 0.0
    %v10943 = vmax.f32 %v10935, 0.0
    %v10944 = vmax.f32 %v10937, 0.0
    %v10945 = vmul.f32 %v10941, %v10941
    %v10946 = vmul.f32 %v10942, %v10942
    %v10947 = vmul.f32 %v10943, %v10943
    %v10948 = vmul.f32 %v10944, %v10944
    %v10949 = vadd.f32 %v10945, %v10946
    %v10950 = vadd.f32 %v10949, %v10947
    %v10951 = vadd.f32 %v10950, %v10948
    %10952 = vadd.xlane.f32.xlu0 %v10951
    %v10953 = vpop.xlane.xlu0 %10952
    %v10954 = vmax.f32 %v10953, 1e-24
    %v10955 = vrsqrt.pop %v10954
    %v10956 = vmul.f32 %v10941, %v10955
    %v10957 = vmul.f32 %v10942, %v10955
    %v10958 = vmul.f32 %v10943, %v10955
    %v10959 = vmul.f32 %v10944, %v10955
    %10960 = vst [vmem:[%s8] sm:$0xff] %v10956
    %10961 = vst [vmem:[%s8 + $0x8] sm:$0xff] %v10957
    %10962 = vst [vmem:[%s8 + $0x10] sm:$0xff] %v10958
    %10963 = vst [vmem:[%s8 + $0x18] sm:$0xff] %v10959
    // Predicated region
    $region50: #{forward.1} parent=1 // pred_check
      _
    $region51: #{forward.1} parent=1 // pred_check_branch
      %10965 = sbr.rel (0) target = $region53
    $region52: #{forward.1} parent=1 // pred_region
      _
    $region53: #{forward.1} parent=1 // pred_fallthru
      _
    // Predicated region
    $region54: #{forward.1} parent=1 // pred_check
      _
    $region55: #{forward.1} parent=1 // pred_check_branch
      %10967 = sbr.rel (0) target = $region57
    $region56: #{forward.1} parent=1 // pred_region
      _
    $region57: #{forward.1} parent=1 // pred_fallthru
      _
    // Predicated region
    $region58: #{forward.1} parent=1 // pred_check
      _
    $region59: #{forward.1} parent=1 // pred_check_branch
      %10969 = sbr.rel (0) target = $region61
    $region60: #{forward.1} parent=1 // pred_region
      _
    $region61: #{forward.1} parent=1 // pred_fallthru
      _
    // Predicated region
    $region62: #{forward.1} parent=1 // pred_check
      _
    $region63: #{forward.1} parent=1 // pred_check_branch
      %10971 = sbr.rel (0) target = $region65
    $region64: #{forward.1} parent=1 // pred_region
      _
    $region65: #{forward.1} parent=1 // pred_fallthru
      _
    %10972 = vsyncpa [#allocation3], 1
    %10973 = vsyncpa [#allocation5], 1
    %10974 = vsyncpa [#allocation8], 1

</llo_original>
